<compile_context>
chip_gen: v7x
topology: tpu7x:2x2x1
jax: 0.10.0
libtpu: 0.0.40
codegen_flags: <defaults>
</compile_context>

<pallas_src>
import jax
import jax.numpy as jnp
from jax.experimental import pallas as pl
from jax.experimental.pallas import tpu as pltpu

NUM_CLASSES = 10
D_IN, D_H1, D_H2 = 2048, 1024, 512
BN_EPS = 1e-5


def _classifier_kernel(x_ref,
                       w1_ref, b1_ref,
                       w2_ref, b2_ref,
                       w3_ref, b3_ref,
                       out_ref):
    # Block 1: (BN-folded) Linear + ReLU.  bf16 operands, f32 accumulation.
    h = jnp.dot(x_ref[...], w1_ref[...],
                preferred_element_type=jnp.float32) + b1_ref[...]
    h = jnp.maximum(h, 0.0).astype(jnp.bfloat16)
    # Block 2
    h = jnp.dot(h, w2_ref[...],
                preferred_element_type=jnp.float32) + b2_ref[...]
    h = jnp.maximum(h, 0.0).astype(jnp.bfloat16)
    # Block 3
    h = jnp.dot(h, w3_ref[...],
                preferred_element_type=jnp.float32) + b3_ref[...]
    h = jnp.maximum(h, 0.0)
    # Softmax over the class axis (numerically stable, f32).
    m = jnp.max(h, axis=-1, keepdims=True)
    e = jnp.exp(h - m)
    out_ref[...] = e / jnp.sum(e, axis=-1, keepdims=True)


def _round_up(n, m):
    return ((n + m - 1) // m) * m


def _fold_bn_into_linear(w, b, gamma, beta, mean, var):
    """Fold eval-mode BatchNorm1d into the preceding Linear layer."""
    s = gamma / jnp.sqrt(var + BN_EPS)             # per-output-feature scale
    t = beta - mean * s                            # per-output-feature shift
    w_f = (w * s[None, :]).astype(jnp.bfloat16)    # (in, out) for the MXU
    b_f = (b * s + t).astype(jnp.float32).reshape(1, -1)
    return w_f, b_f


def classifer_cifar_forward(x_nchw, params):
    """x_nchw: (B, C, H, W) with C*H*W == 2048."""
    B = x_nchw.shape[0]
    x = x_nchw.reshape(B, -1).astype(jnp.float32)      # torch.flatten(x, 1)
    assert x.shape[1] == D_IN

    w1, b1 = _fold_bn_into_linear(params["w1"], params["b1"], *params["bn1"])
    w2, b2 = _fold_bn_into_linear(params["w2"], params["b2"], *params["bn2"])
    w3, b3 = _fold_bn_into_linear(params["w3"], params["b3"], *params["bn3"])

    # Batch tiling: weights use a constant index_map, so they are DMA'd into
    # VMEM once and reused while the batch tiles stream through.
    TB = min(256, _round_up(B, 8))     # 256 rows feeds the 256-wide MXU well
    Bp = _round_up(B, TB)
    if Bp != B:
        x = jnp.pad(x, ((0, Bp - B), (0, 0)))
    x = x.astype(jnp.bfloat16)

    const = lambda i: (0, 0)
    in_specs = [
        pl.BlockSpec((TB, D_IN), lambda i: (i, 0)),
        pl.BlockSpec((D_IN, D_H1), const), pl.BlockSpec((1, D_H1), const),
        pl.BlockSpec((D_H1, D_H2), const), pl.BlockSpec((1, D_H2), const),
        pl.BlockSpec((D_H2, NUM_CLASSES), const),
        pl.BlockSpec((1, NUM_CLASSES), const),
    ]

    out = pl.pallas_call(
        _classifier_kernel,
        out_shape=jax.ShapeDtypeStruct((Bp, NUM_CLASSES), jnp.float32),
        grid_spec=pl.GridSpec(
            grid=(Bp // TB,),
            in_specs=in_specs,
            out_specs=pl.BlockSpec((TB, NUM_CLASSES), lambda i: (i, 0)),
        ),
        compiler_params=pltpu.CompilerParams(
            # Batch tiles are independent -> shard across v7x's 2 TensorCores.
            dimension_semantics=("parallel",),
            # ~5.3 MiB bf16 weights (double-buffered) + activation tiles fits
            # easily; stays under v7x's 64 MiB physical VMEM.
            vmem_limit_bytes=48 * 1024 * 1024,
        ),
    )(x, w1, b1, w2, b2, w3, b3)
    return out[:B]


def init_params(key):
    """Matches the module's __init__:
       Linear: weight ~ N(0, 0.01) (stored transposed as (in, out)), bias = 0.
       BatchNorm1d: gamma=1, beta=0, running_mean=0, running_var=1."""
    k1, k2, k3 = jax.random.split(key, 3)

    def linear(k, d_in, d_out):
        w = 0.01 * jax.random.normal(k, (d_in, d_out), dtype=jnp.float32)
        b = jnp.zeros((d_out,), dtype=jnp.float32)
        return w, b

    def bn(d):
        return (jnp.ones((d,), jnp.float32), jnp.zeros((d,), jnp.float32),
                jnp.zeros((d,), jnp.float32), jnp.ones((d,), jnp.float32))

    w1, b1 = linear(k1, D_IN, D_H1)
    w2, b2 = linear(k2, D_H1, D_H2)
    w3, b3 = linear(k3, D_H2, NUM_CLASSES)
    return dict(w1=w1, b1=b1, bn1=bn(D_H1),
                w2=w2, b2=b2, bn2=bn(D_H2),
                w3=w3, b3=b3, bn3=bn(NUM_CLASSES))


def _reference(x_nchw, params):
    """Pure-JAX f32 reference with explicit (unfolded) BatchNorm."""
    x = x_nchw.reshape(x_nchw.shape[0], -1).astype(jnp.float32)

    def block(h, w, b, bn_params):
        gamma, beta, mean, var = bn_params
        h = h @ w + b
        h = (h - mean) / jnp.sqrt(var + BN_EPS) * gamma + beta
        return jnp.maximum(h, 0.0)

    h = block(x, params["w1"], params["b1"], params["bn1"])
    h = block(h, params["w2"], params["b2"], params["bn2"])
    h = block(h, params["w3"], params["b3"], params["bn3"])
    return jax.nn.softmax(h, axis=-1)


if __name__ == "__main__":
    key = jax.random.PRNGKey(0)
    kx, kp = jax.random.split(key)

    # (B=8, C=8, H=16, W=16) -> flatten to (8, 2048) features.
    x = jax.random.normal(kx, (8, 8, 16, 16), dtype=jnp.float32)
    params = init_params(kp)

    out = jax.block_until_ready(classifer_cifar_forward(x, params))
    ref = _reference(x, params)

    assert out.shape == (8, NUM_CLASSES)
    assert jnp.allclose(jnp.sum(out, axis=-1), 1.0, atol=1e-5)
    # bf16 weights/activations drift slightly from the pure-f32 reference.
    assert jnp.allclose(out, ref, atol=5e-3, rtol=5e-2)

    print("KERNEL_OK")
</pallas_src>

<mosaic_0001>
module attributes {stable_mosaic.version = 11 : i64} {
  func.func @_classifier_kernel(%arg0: i32, %arg1: memref<8x2048xbf16, #tpu.memory_space<vmem>>, %arg2: memref<2048x1024xbf16, #tpu.memory_space<vmem>>, %arg3: memref<1x1024xf32, #tpu.memory_space<vmem>>, %arg4: memref<1024x512xbf16, #tpu.memory_space<vmem>>, %arg5: memref<1x512xf32, #tpu.memory_space<vmem>>, %arg6: memref<512x10xbf16, #tpu.memory_space<vmem>>, %arg7: memref<1x10xf32, #tpu.memory_space<vmem>>, %arg8: memref<8x10xf32, #tpu.memory_space<vmem>>) attributes {dimension_semantics = [#tpu.dimension_semantics<parallel>], iteration_bounds = array<i64: 1>, scalar_prefetch = 0 : i64, scratch_operands = 0 : i64, tpu.core_type = #tpu.core_type<tc>, window_params = [{transform_indices = @transform_0, window_bounds = array<i64: 8, 2048>}, {pipeline_mode = #tpu.pipeline_mode<synchronous>, transform_indices = @transform_1, window_bounds = array<i64: 2048, 1024>}, {pipeline_mode = #tpu.pipeline_mode<synchronous>, transform_indices = @transform_2, window_bounds = array<i64: 1, 1024>}, {pipeline_mode = #tpu.pipeline_mode<synchronous>, transform_indices = @transform_3, window_bounds = array<i64: 1024, 512>}, {pipeline_mode = #tpu.pipeline_mode<synchronous>, transform_indices = @transform_4, window_bounds = array<i64: 1, 512>}, {pipeline_mode = #tpu.pipeline_mode<synchronous>, transform_indices = @transform_5, window_bounds = array<i64: 512, 10>}, {pipeline_mode = #tpu.pipeline_mode<synchronous>, transform_indices = @transform_6, window_bounds = array<i64: 1, 10>}, {transform_indices = @transform_7, window_bounds = array<i64: 8, 10>}]} {
    %c0 = arith.constant 0 : index
    %c0_0 = arith.constant 0 : index
    %0 = vector.load %arg1[%c0, %c0_0] : memref<8x2048xbf16, #tpu.memory_space<vmem>>, vector<8x2048xbf16>
    %c0_1 = arith.constant 0 : index
    %c0_2 = arith.constant 0 : index
    %1 = vector.load %arg2[%c0_1, %c0_2] : memref<2048x1024xbf16, #tpu.memory_space<vmem>>, vector<2048x1024xbf16>
    %cst = arith.constant dense<0.000000e+00> : vector<8x1024xf32>
    %2 = tpu.matmul %0, %1, %cst {dimension_numbers = #tpu.dot_dimension_numbers<[1], [0], [0], [1], [0, 0, 1, 1], [], []>} : vector<8x2048xbf16>, vector<2048x1024xbf16>, vector<8x1024xf32> -> vector<8x1024xf32>
    %c0_3 = arith.constant 0 : index
    %c0_4 = arith.constant 0 : index
    %3 = vector.load %arg3[%c0_3, %c0_4] : memref<1x1024xf32, #tpu.memory_space<vmem>>, vector<1x1024xf32>
    %4 = vector.broadcast %3 : vector<1x1024xf32> to vector<8x1024xf32>
    %5 = arith.addf %2, %4 : vector<8x1024xf32>
    %cst_5 = arith.constant 0.000000e+00 : f32
    %6 = vector.broadcast %cst_5 : f32 to vector<8x1024xf32>
    %7 = arith.maximumf %5, %6 : vector<8x1024xf32>
    %8 = arith.truncf %7 : vector<8x1024xf32> to vector<8x1024xbf16>
    %c0_6 = arith.constant 0 : index
    %c0_7 = arith.constant 0 : index
    %9 = vector.load %arg4[%c0_6, %c0_7] : memref<1024x512xbf16, #tpu.memory_space<vmem>>, vector<1024x512xbf16>
    %cst_8 = arith.constant dense<0.000000e+00> : vector<8x512xf32>
    %10 = tpu.matmul %8, %9, %cst_8 {dimension_numbers = #tpu.dot_dimension_numbers<[1], [0], [0], [1], [0, 0, 1, 1], [], []>} : vector<8x1024xbf16>, vector<1024x512xbf16>, vector<8x512xf32> -> vector<8x512xf32>
    %c0_9 = arith.constant 0 : index
    %c0_10 = arith.constant 0 : index
    %11 = vector.load %arg5[%c0_9, %c0_10] : memref<1x512xf32, #tpu.memory_space<vmem>>, vector<1x512xf32>
    %12 = vector.broadcast %11 : vector<1x512xf32> to vector<8x512xf32>
    %13 = arith.addf %10, %12 : vector<8x512xf32>
    %cst_11 = arith.constant 0.000000e+00 : f32
    %14 = vector.broadcast %cst_11 : f32 to vector<8x512xf32>
    %15 = arith.maximumf %13, %14 : vector<8x512xf32>
    %16 = arith.truncf %15 : vector<8x512xf32> to vector<8x512xbf16>
    %c0_12 = arith.constant 0 : index
    %c0_13 = arith.constant 0 : index
    %17 = vector.load %arg6[%c0_12, %c0_13] : memref<512x10xbf16, #tpu.memory_space<vmem>>, vector<512x10xbf16>
    %cst_14 = arith.constant dense<0.000000e+00> : vector<8x10xf32>
    %18 = tpu.matmul %16, %17, %cst_14 {dimension_numbers = #tpu.dot_dimension_numbers<[1], [0], [0], [1], [0, 0, 1, 1], [], []>} : vector<8x512xbf16>, vector<512x10xbf16>, vector<8x10xf32> -> vector<8x10xf32>
    %c0_15 = arith.constant 0 : index
    %c0_16 = arith.constant 0 : index
    %19 = vector.load %arg7[%c0_15, %c0_16] : memref<1x10xf32, #tpu.memory_space<vmem>>, vector<1x10xf32>
    %20 = vector.broadcast %19 : vector<1x10xf32> to vector<8x10xf32>
    %21 = arith.addf %18, %20 : vector<8x10xf32>
    %cst_17 = arith.constant 0.000000e+00 : f32
    %22 = vector.broadcast %cst_17 : f32 to vector<8x10xf32>
    %23 = arith.maximumf %21, %22 : vector<8x10xf32>
    %cst_18 = arith.constant dense<0xFF800000> : vector<8xf32>
    %24 = vector.multi_reduction <maximumf>, %23, %cst_18 [1] : vector<8x10xf32> to vector<8xf32>
    %25 = vector.shape_cast %24 : vector<8xf32> to vector<8x1xf32>
    %26 = vector.broadcast %25 : vector<8x1xf32> to vector<8x10xf32>
    %27 = arith.subf %23, %26 : vector<8x10xf32>
    %28 = math.exp %27 : vector<8x10xf32>
    %cst_19 = arith.constant dense<0.000000e+00> : vector<8xf32>
    %29 = vector.multi_reduction <add>, %28, %cst_19 [1] : vector<8x10xf32> to vector<8xf32>
    %30 = vector.shape_cast %29 : vector<8xf32> to vector<8x1xf32>
    %31 = vector.broadcast %30 : vector<8x1xf32> to vector<8x10xf32>
    %32 = arith.divf %28, %31 : vector<8x10xf32>
    %c0_20 = arith.constant 0 : index
    %c0_21 = arith.constant 0 : index
    %33 = vector.load %arg8[%c0_20, %c0_21] : memref<8x10xf32, #tpu.memory_space<vmem>>, vector<8x10xf32>
    tpu.vector_store %arg8[%c0_20, %c0_21], %32 {strides = array<i32>} : memref<8x10xf32, #tpu.memory_space<vmem>>, vector<8x10xf32>,
    return
  }
  func.func @transform_0(%arg0: i32) -> (i32, i32) {
    %c0_i32 = arith.constant 0 : i32
    %c0_i32_0 = arith.constant 0 : i32
    return %arg0, %c0_i32 : i32, i32
  }
  func.func @transform_1(%arg0: i32) -> (i32, i32) {
    %c0_i32 = arith.constant 0 : i32
    %c0_i32_0 = arith.constant 0 : i32
    %c0_i32_1 = arith.constant 0 : i32
    return %c0_i32, %c0_i32_0 : i32, i32
  }
  func.func @transform_2(%arg0: i32) -> (i32, i32) {
    %c0_i32 = arith.constant 0 : i32
    %c0_i32_0 = arith.constant 0 : i32
    %c0_i32_1 = arith.constant 0 : i32
    return %c0_i32, %c0_i32_0 : i32, i32
  }
  func.func @transform_3(%arg0: i32) -> (i32, i32) {
    %c0_i32 = arith.constant 0 : i32
    %c0_i32_0 = arith.constant 0 : i32
    %c0_i32_1 = arith.constant 0 : i32
    return %c0_i32, %c0_i32_0 : i32, i32
  }
  func.func @transform_4(%arg0: i32) -> (i32, i32) {
    %c0_i32 = arith.constant 0 : i32
    %c0_i32_0 = arith.constant 0 : i32
    %c0_i32_1 = arith.constant 0 : i32
    return %c0_i32, %c0_i32_0 : i32, i32
  }
  func.func @transform_5(%arg0: i32) -> (i32, i32) {
    %c0_i32 = arith.constant 0 : i32
    %c0_i32_0 = arith.constant 0 : i32
    %c0_i32_1 = arith.constant 0 : i32
    return %c0_i32, %c0_i32_0 : i32, i32
  }
  func.func @transform_6(%arg0: i32) -> (i32, i32) {
    %c0_i32 = arith.constant 0 : i32
    %c0_i32_0 = arith.constant 0 : i32
    %c0_i32_1 = arith.constant 0 : i32
    return %c0_i32, %c0_i32_0 : i32, i32
  }
  func.func @transform_7(%arg0: i32) -> (i32, i32) {
    %c0_i32 = arith.constant 0 : i32
    %c0_i32_0 = arith.constant 0 : i32
    return %arg0, %c0_i32 : i32, i32
  }
}

</mosaic_0001>

<llo_original>
// kernel: tpu_custom_call.1
$region0: #{tpu_custom_call.1}
  #allocation0 [shape = 'u32[]', space=smem, size = 0x4, offset = 0x4, fixed_abs, tag = 'smem constant byte address 0x4 - core index']
  #allocation1 [shape = 'u32[144,128]{1,0:T(1,128)}', space=vmem, size = 0x12000, scoped, tag = 'internal scratch']
  %s0 = inlined_call_operand.hbm [shape: bf16[8,2048], index: 0, kind: input, shape index: {}]
  %s1 = inlined_call_operand.hbm [shape: bf16[2048,1024], index: 1, kind: input, shape index: {}]
  %s2 = inlined_call_operand.hbm [shape: f32[1,1024], index: 2, kind: input, shape index: {}]
  %s3 = inlined_call_operand.hbm [shape: bf16[1024,512], index: 3, kind: input, shape index: {}]
  %s4 = inlined_call_operand.hbm [shape: f32[1,512], index: 4, kind: input, shape index: {}]
  %s5 = inlined_call_operand.vmem [shape: bf16[512,10], index: 5, kind: input, shape index: {}]
  %s6 = inlined_call_operand.hbm [shape: f32[1,10], index: 6, kind: input, shape index: {}]
  %s7 = inlined_call_operand.hbm [shape: f32[8,10], index: 7, kind: output, shape index: {}]
  %s8 = sld [smem:[#allocation0]]
  $region62: #{tpu_custom_call.1} parent=0
    _
  %s10 = ssub.s32 1, %s8
  %s11 = scalar_select 0, %s10, %s8
  $region1: #{tpu_custom_call.1} parent=0
    #allocation2 [shape = 'u8[32768]{0}', space=vmem, size = 0x8000, scoped, tag = 'input window, operand 0, single buffered']
    #allocation3 [shape = 's32[1]{0}', space=sflag, size = 0x4, scoped, tag = 'scoped memory for tpu_custom_call.1']
    #allocation4 [shape = 's32[1]{0}', space=sflag, size = 0x4, scoped, tag = 'scoped memory for tpu_custom_call.1']
    #allocation5 [shape = 'u8[4194304]{0}', space=vmem, size = 0x400000, scoped, tag = 'input window, operand 1, single buffered']
    #allocation6 [shape = 's32[1]{0}', space=sflag, size = 0x4, scoped, tag = 'scoped memory for tpu_custom_call.1']
    #allocation7 [shape = 'u8[4096]{0}', space=vmem, size = 0x1000, scoped, tag = 'input window, operand 2, single buffered']
    #allocation8 [shape = 'u8[1048576]{0}', space=vmem, size = 0x100000, scoped, tag = 'input window, operand 3, single buffered']
    #allocation9 [shape = 's32[1]{0}', space=sflag, size = 0x4, scoped, tag = 'scoped memory for tpu_custom_call.1']
    #allocation10 [shape = 'u8[2048]{0}', space=vmem, size = 0x800, scoped, tag = 'input window, operand 4, single buffered']
    #allocation11 [shape = 'u8[512]{0}', space=vmem, size = 0x400, scoped, tag = 'input window, operand 6, single buffered']
    #allocation12 [shape = 's32[1]{0}', space=sflag, size = 0x4, scoped, tag = 'scoped memory for tpu_custom_call.1']
    #allocation13 [shape = 'u8[4096]{0}', space=vmem, size = 0x1000, scoped, tag = 'output window, operand 0, single buffered']
    %12 = vsyncpa [#allocation3], 0
    %13 = vsyncpa [#allocation6], 0
    %14 = vsyncpa [#allocation9], 0
    %15 = vsyncpa [#allocation12], 0
    %16 = vsyncpa [#allocation4], 0
    // Predicated region
    $region2: #{tpu_custom_call.1} parent=1 // pred_check
      _
    $region3: #{tpu_custom_call.1} parent=1 // pred_check_branch
      %18 = sbr.rel (0) target = $region5
    $region4: #{tpu_custom_call.1} parent=1 // pred_region
      %s20 = ssub.s32 1024, 1024
      %21 = vsyncadd [#allocation3], %s20
      %s23 = sshll.u32 [#allocation2], 4
      %s24 = int_to_ptr.vmem [resolvable:$true] %s23
      %26 = dma.hbm_to_vmem [thread:$0]  %s0, 1024, %s24, [#allocation3]
    $region5: #{tpu_custom_call.1} parent=1 // pred_fallthru
      _
    // Predicated region
    $region6: #{tpu_custom_call.1} parent=1 // pred_check
      _
    $region7: #{tpu_custom_call.1} parent=1 // pred_check_branch
      %28 = sbr.rel (0) target = $region9
    $region8: #{tpu_custom_call.1} parent=1 // pred_region
      %s30 = ssub.s32 131072, 131072
      %31 = vsyncadd [#allocation6], %s30
      %s32 = sshll.u32 [#allocation5], 4
      %s33 = int_to_ptr.vmem [resolvable:$true] %s32
      %38 = dma.hbm_to_vmem [thread:$0]  %s1, 131072, %s33, [#allocation6], 512, 512, 32
    $region9: #{tpu_custom_call.1} parent=1 // pred_fallthru
      _
    // Predicated region
    $region10: #{tpu_custom_call.1} parent=1 // pred_check
      _
    $region11: #{tpu_custom_call.1} parent=1 // pred_check_branch
      %40 = sbr.rel (0) target = $region13
    $region12: #{tpu_custom_call.1} parent=1 // pred_region
      %s42 = ssub.s32 128, 128
      %43 = vsyncadd [#allocation6], %s42
      %s45 = sshll.u32 [#allocation7], 4
      %s46 = int_to_ptr.vmem [resolvable:$true] %s45
      %48 = dma.hbm_to_vmem [thread:$0]  %s2, 128, %s46, [#allocation6]
    $region13: #{tpu_custom_call.1} parent=1 // pred_fallthru
      _
    // Predicated region
    $region14: #{tpu_custom_call.1} parent=1 // pred_check
      _
    $region15: #{tpu_custom_call.1} parent=1 // pred_check_branch
      %50 = sbr.rel (0) target = $region17
    $region16: #{tpu_custom_call.1} parent=1 // pred_region
      %s52 = ssub.s32 32768, 32768
      %53 = vsyncadd [#allocation9], %s52
      %s54 = sshll.u32 [#allocation8], 4
      %s55 = int_to_ptr.vmem [resolvable:$true] %s54
      %60 = dma.hbm_to_vmem [thread:$0]  %s3, 32768, %s55, [#allocation9], 256, 256, 16
    $region17: #{tpu_custom_call.1} parent=1 // pred_fallthru
      _
    // Predicated region
    $region18: #{tpu_custom_call.1} parent=1 // pred_check
      _
    $region19: #{tpu_custom_call.1} parent=1 // pred_check_branch
      %62 = sbr.rel (0) target = $region21
    $region20: #{tpu_custom_call.1} parent=1 // pred_region
      %s64 = ssub.s32 64, 64
      %65 = vsyncadd [#allocation9], %s64
      %s67 = sshll.u32 [#allocation10], 4
      %s68 = int_to_ptr.vmem [resolvable:$true] %s67
      %70 = dma.hbm_to_vmem [thread:$0]  %s4, 64, %s68, [#allocation9]
    $region21: #{tpu_custom_call.1} parent=1 // pred_fallthru
      _
    // Predicated region
    $region22: #{tpu_custom_call.1} parent=1 // pred_check
      _
    $region23: #{tpu_custom_call.1} parent=1 // pred_check_branch
      %72 = sbr.rel (0) target = $region25
    $region24: #{tpu_custom_call.1} parent=1 // pred_region
      _
    $region25: #{tpu_custom_call.1} parent=1 // pred_fallthru
      _
    // Predicated region
    $region26: #{tpu_custom_call.1} parent=1 // pred_check
      _
    $region27: #{tpu_custom_call.1} parent=1 // pred_check_branch
      %74 = sbr.rel (0) target = $region29
    $region28: #{tpu_custom_call.1} parent=1 // pred_region
      %s76 = ssub.s32 16, 16
      %77 = vsyncadd [#allocation12], %s76
      %s79 = sshll.u32 [#allocation11], 4
      %s80 = int_to_ptr.vmem [resolvable:$true] %s79
      %82 = dma.hbm_to_vmem [thread:$0]  %s6, 16, %s80, [#allocation12]
    $region29: #{tpu_custom_call.1} parent=1 // pred_fallthru
      _
    // Predicated region
    $region30: #{tpu_custom_call.1} parent=1 // pred_check
      _
    $region31: #{tpu_custom_call.1} parent=1 // pred_check_branch
      %84 = sbr.rel (0) target = $region33
    $region32: #{tpu_custom_call.1} parent=1 // pred_region
      %85 = dma.done [#allocation3], 1024
    $region33: #{tpu_custom_call.1} parent=1 // pred_fallthru
      _
    // Predicated region
    $region34: #{tpu_custom_call.1} parent=1 // pred_check
      _
    $region35: #{tpu_custom_call.1} parent=1 // pred_check_branch
      %87 = sbr.rel (0) target = $region37
    $region36: #{tpu_custom_call.1} parent=1 // pred_region
      %88 = dma.done [#allocation6], 131072
    $region37: #{tpu_custom_call.1} parent=1 // pred_fallthru
      _
    // Predicated region
    $region38: #{tpu_custom_call.1} parent=1 // pred_check
      _
    $region39: #{tpu_custom_call.1} parent=1 // pred_check_branch
      %90 = sbr.rel (0) target = $region41
    $region40: #{tpu_custom_call.1} parent=1 // pred_region
      %91 = dma.done [#allocation6], 128
    $region41: #{tpu_custom_call.1} parent=1 // pred_fallthru
      _
    // Predicated region
    $region42: #{tpu_custom_call.1} parent=1 // pred_check
      _
    $region43: #{tpu_custom_call.1} parent=1 // pred_check_branch
      %93 = sbr.rel (0) target = $region45
    $region44: #{tpu_custom_call.1} parent=1 // pred_region
      %94 = dma.done [#allocation9], 32768
    $region45: #{tpu_custom_call.1} parent=1 // pred_fallthru
      _
    // Predicated region
    $region46: #{tpu_custom_call.1} parent=1 // pred_check
      _
    $region47: #{tpu_custom_call.1} parent=1 // pred_check_branch
      %96 = sbr.rel (0) target = $region49
    $region48: #{tpu_custom_call.1} parent=1 // pred_region
      %97 = dma.done [#allocation9], 64
    $region49: #{tpu_custom_call.1} parent=1 // pred_fallthru
      _
    // Predicated region
    $region50: #{tpu_custom_call.1} parent=1 // pred_check
      _
    $region51: #{tpu_custom_call.1} parent=1 // pred_check_branch
      %99 = sbr.rel (0) target = $region53
    $region52: #{tpu_custom_call.1} parent=1 // pred_region
      %100 = dma.done [#allocation12], 16
    $region53: #{tpu_custom_call.1} parent=1 // pred_fallthru
      _
    %v102 = vld [vmem:[#allocation2] sm:$0xff]
    %v103 = vld [vmem:[#allocation2 + $0x8] sm:$0xff]
    %v104 = vld [vmem:[#allocation2 + $0x10] sm:$0xff]
    %v105 = vld [vmem:[#allocation2 + $0x18] sm:$0xff]
    %v106 = vld [vmem:[#allocation2 + $0x20] sm:$0xff]
    %v107 = vld [vmem:[#allocation2 + $0x28] sm:$0xff]
    %v108 = vld [vmem:[#allocation2 + $0x30] sm:$0xff]
    %v109 = vld [vmem:[#allocation2 + $0x38] sm:$0xff]
    %v110 = vld [vmem:[#allocation5] sm:$0xff]
    %v111 = vld [vmem:[#allocation5 + $0x8] sm:$0xff]
    %v112 = vld [vmem:[#allocation5 + $0x10] sm:$0xff]
    %v113 = vld [vmem:[#allocation5 + $0x18] sm:$0xff]
    %v114 = vld [vmem:[#allocation5 + $0x20] sm:$0xff]
    %v115 = vld [vmem:[#allocation5 + $0x28] sm:$0xff]
    %v116 = vld [vmem:[#allocation5 + $0x30] sm:$0xff]
    %v117 = vld [vmem:[#allocation5 + $0x38] sm:$0xff]
    %v118 = vld [vmem:[#allocation5 + $0x40] sm:$0xff]
    %v119 = vld [vmem:[#allocation5 + $0x48] sm:$0xff]
    %v120 = vld [vmem:[#allocation5 + $0x50] sm:$0xff]
    %v121 = vld [vmem:[#allocation5 + $0x58] sm:$0xff]
    %v122 = vld [vmem:[#allocation5 + $0x60] sm:$0xff]
    %v123 = vld [vmem:[#allocation5 + $0x68] sm:$0xff]
    %v124 = vld [vmem:[#allocation5 + $0x70] sm:$0xff]
    %v125 = vld [vmem:[#allocation5 + $0x78] sm:$0xff]
    %v126 = vld [vmem:[#allocation5 + $0x80] sm:$0xff]
    %v127 = vld [vmem:[#allocation5 + $0x88] sm:$0xff]
    %v128 = vld [vmem:[#allocation5 + $0x90] sm:$0xff]
    %v129 = vld [vmem:[#allocation5 + $0x98] sm:$0xff]
    %v130 = vld [vmem:[#allocation5 + $0xa0] sm:$0xff]
    %v131 = vld [vmem:[#allocation5 + $0xa8] sm:$0xff]
    %v132 = vld [vmem:[#allocation5 + $0xb0] sm:$0xff]
    %v133 = vld [vmem:[#allocation5 + $0xb8] sm:$0xff]
    %v134 = vld [vmem:[#allocation5 + $0xc0] sm:$0xff]
    %v135 = vld [vmem:[#allocation5 + $0xc8] sm:$0xff]
    %v136 = vld [vmem:[#allocation5 + $0xd0] sm:$0xff]
    %v137 = vld [vmem:[#allocation5 + $0xd8] sm:$0xff]
    %v138 = vld [vmem:[#allocation5 + $0xe0] sm:$0xff]
    %v139 = vld [vmem:[#allocation5 + $0xe8] sm:$0xff]
    %v140 = vld [vmem:[#allocation5 + $0xf0] sm:$0xff]
    %v141 = vld [vmem:[#allocation5 + $0xf8] sm:$0xff]
    %v142 = vld [vmem:[#allocation5 + $0x100] sm:$0xff]
    %v143 = vld [vmem:[#allocation5 + $0x108] sm:$0xff]
    %v144 = vld [vmem:[#allocation5 + $0x110] sm:$0xff]
    %v145 = vld [vmem:[#allocation5 + $0x118] sm:$0xff]
    %v146 = vld [vmem:[#allocation5 + $0x120] sm:$0xff]
    %v147 = vld [vmem:[#allocation5 + $0x128] sm:$0xff]
    %v148 = vld [vmem:[#allocation5 + $0x130] sm:$0xff]
    %v149 = vld [vmem:[#allocation5 + $0x138] sm:$0xff]
    %v150 = vld [vmem:[#allocation5 + $0x140] sm:$0xff]
    %v151 = vld [vmem:[#allocation5 + $0x148] sm:$0xff]
    %v152 = vld [vmem:[#allocation5 + $0x150] sm:$0xff]
    %v153 = vld [vmem:[#allocation5 + $0x158] sm:$0xff]
    %v154 = vld [vmem:[#allocation5 + $0x160] sm:$0xff]
    %v155 = vld [vmem:[#allocation5 + $0x168] sm:$0xff]
    %v156 = vld [vmem:[#allocation5 + $0x170] sm:$0xff]
    %v157 = vld [vmem:[#allocation5 + $0x178] sm:$0xff]
    %v158 = vld [vmem:[#allocation5 + $0x180] sm:$0xff]
    %v159 = vld [vmem:[#allocation5 + $0x188] sm:$0xff]
    %v160 = vld [vmem:[#allocation5 + $0x190] sm:$0xff]
    %v161 = vld [vmem:[#allocation5 + $0x198] sm:$0xff]
    %v162 = vld [vmem:[#allocation5 + $0x1a0] sm:$0xff]
    %v163 = vld [vmem:[#allocation5 + $0x1a8] sm:$0xff]
    %v164 = vld [vmem:[#allocation5 + $0x1b0] sm:$0xff]
    %v165 = vld [vmem:[#allocation5 + $0x1b8] sm:$0xff]
    %v166 = vld [vmem:[#allocation5 + $0x1c0] sm:$0xff]
    %v167 = vld [vmem:[#allocation5 + $0x1c8] sm:$0xff]
    %v168 = vld [vmem:[#allocation5 + $0x1d0] sm:$0xff]
    %v169 = vld [vmem:[#allocation5 + $0x1d8] sm:$0xff]
    %v170 = vld [vmem:[#allocation5 + $0x1e0] sm:$0xff]
    %v171 = vld [vmem:[#allocation5 + $0x1e8] sm:$0xff]
    %v172 = vld [vmem:[#allocation5 + $0x1f0] sm:$0xff]
    %v173 = vld [vmem:[#allocation5 + $0x1f8] sm:$0xff]
    %v174 = vld [vmem:[#allocation5 + $0x200] sm:$0xff]
    %v175 = vld [vmem:[#allocation5 + $0x208] sm:$0xff]
    %v176 = vld [vmem:[#allocation5 + $0x210] sm:$0xff]
    %v177 = vld [vmem:[#allocation5 + $0x218] sm:$0xff]
    %v178 = vld [vmem:[#allocation5 + $0x220] sm:$0xff]
    %v179 = vld [vmem:[#allocation5 + $0x228] sm:$0xff]
    %v180 = vld [vmem:[#allocation5 + $0x230] sm:$0xff]
    %v181 = vld [vmem:[#allocation5 + $0x238] sm:$0xff]
    %v182 = vld [vmem:[#allocation5 + $0x240] sm:$0xff]
    %v183 = vld [vmem:[#allocation5 + $0x248] sm:$0xff]
    %v184 = vld [vmem:[#allocation5 + $0x250] sm:$0xff]
    %v185 = vld [vmem:[#allocation5 + $0x258] sm:$0xff]
    %v186 = vld [vmem:[#allocation5 + $0x260] sm:$0xff]
    %v187 = vld [vmem:[#allocation5 + $0x268] sm:$0xff]
    %v188 = vld [vmem:[#allocation5 + $0x270] sm:$0xff]
    %v189 = vld [vmem:[#allocation5 + $0x278] sm:$0xff]
    %v190 = vld [vmem:[#allocation5 + $0x280] sm:$0xff]
    %v191 = vld [vmem:[#allocation5 + $0x288] sm:$0xff]
    %v192 = vld [vmem:[#allocation5 + $0x290] sm:$0xff]
    %v193 = vld [vmem:[#allocation5 + $0x298] sm:$0xff]
    %v194 = vld [vmem:[#allocation5 + $0x2a0] sm:$0xff]
    %v195 = vld [vmem:[#allocation5 + $0x2a8] sm:$0xff]
    %v196 = vld [vmem:[#allocation5 + $0x2b0] sm:$0xff]
    %v197 = vld [vmem:[#allocation5 + $0x2b8] sm:$0xff]
    %v198 = vld [vmem:[#allocation5 + $0x2c0] sm:$0xff]
    %v199 = vld [vmem:[#allocation5 + $0x2c8] sm:$0xff]
    %v200 = vld [vmem:[#allocation5 + $0x2d0] sm:$0xff]
    %v201 = vld [vmem:[#allocation5 + $0x2d8] sm:$0xff]
    %v202 = vld [vmem:[#allocation5 + $0x2e0] sm:$0xff]
    %v203 = vld [vmem:[#allocation5 + $0x2e8] sm:$0xff]
    %v204 = vld [vmem:[#allocation5 + $0x2f0] sm:$0xff]
    %v205 = vld [vmem:[#allocation5 + $0x2f8] sm:$0xff]
    %v206 = vld [vmem:[#allocation5 + $0x300] sm:$0xff]
    %v207 = vld [vmem:[#allocation5 + $0x308] sm:$0xff]
    %v208 = vld [vmem:[#allocation5 + $0x310] sm:$0xff]
    %v209 = vld [vmem:[#allocation5 + $0x318] sm:$0xff]
    %v210 = vld [vmem:[#allocation5 + $0x320] sm:$0xff]
    %v211 = vld [vmem:[#allocation5 + $0x328] sm:$0xff]
    %v212 = vld [vmem:[#allocation5 + $0x330] sm:$0xff]
    %v213 = vld [vmem:[#allocation5 + $0x338] sm:$0xff]
    %v214 = vld [vmem:[#allocation5 + $0x340] sm:$0xff]
    %v215 = vld [vmem:[#allocation5 + $0x348] sm:$0xff]
    %v216 = vld [vmem:[#allocation5 + $0x350] sm:$0xff]
    %v217 = vld [vmem:[#allocation5 + $0x358] sm:$0xff]
    %v218 = vld [vmem:[#allocation5 + $0x360] sm:$0xff]
    %v219 = vld [vmem:[#allocation5 + $0x368] sm:$0xff]
    %v220 = vld [vmem:[#allocation5 + $0x370] sm:$0xff]
    %v221 = vld [vmem:[#allocation5 + $0x378] sm:$0xff]
    %v222 = vld [vmem:[#allocation5 + $0x380] sm:$0xff]
    %v223 = vld [vmem:[#allocation5 + $0x388] sm:$0xff]
    %v224 = vld [vmem:[#allocation5 + $0x390] sm:$0xff]
    %v225 = vld [vmem:[#allocation5 + $0x398] sm:$0xff]
    %v226 = vld [vmem:[#allocation5 + $0x3a0] sm:$0xff]
    %v227 = vld [vmem:[#allocation5 + $0x3a8] sm:$0xff]
    %v228 = vld [vmem:[#allocation5 + $0x3b0] sm:$0xff]
    %v229 = vld [vmem:[#allocation5 + $0x3b8] sm:$0xff]
    %v230 = vld [vmem:[#allocation5 + $0x3c0] sm:$0xff]
    %v231 = vld [vmem:[#allocation5 + $0x3c8] sm:$0xff]
    %v232 = vld [vmem:[#allocation5 + $0x3d0] sm:$0xff]
    %v233 = vld [vmem:[#allocation5 + $0x3d8] sm:$0xff]
    %v234 = vld [vmem:[#allocation5 + $0x3e0] sm:$0xff]
    %v235 = vld [vmem:[#allocation5 + $0x3e8] sm:$0xff]
    %v236 = vld [vmem:[#allocation5 + $0x3f0] sm:$0xff]
    %v237 = vld [vmem:[#allocation5 + $0x3f8] sm:$0xff]
    %v238 = vld [vmem:[#allocation5 + $0x400] sm:$0xff]
    %v239 = vld [vmem:[#allocation5 + $0x408] sm:$0xff]
    %v240 = vld [vmem:[#allocation5 + $0x410] sm:$0xff]
    %v241 = vld [vmem:[#allocation5 + $0x418] sm:$0xff]
    %v242 = vld [vmem:[#allocation5 + $0x420] sm:$0xff]
    %v243 = vld [vmem:[#allocation5 + $0x428] sm:$0xff]
    %v244 = vld [vmem:[#allocation5 + $0x430] sm:$0xff]
    %v245 = vld [vmem:[#allocation5 + $0x438] sm:$0xff]
    %v246 = vld [vmem:[#allocation5 + $0x440] sm:$0xff]
    %v247 = vld [vmem:[#allocation5 + $0x448] sm:$0xff]
    %v248 = vld [vmem:[#allocation5 + $0x450] sm:$0xff]
    %v249 = vld [vmem:[#allocation5 + $0x458] sm:$0xff]
    %v250 = vld [vmem:[#allocation5 + $0x460] sm:$0xff]
    %v251 = vld [vmem:[#allocation5 + $0x468] sm:$0xff]
    %v252 = vld [vmem:[#allocation5 + $0x470] sm:$0xff]
    %v253 = vld [vmem:[#allocation5 + $0x478] sm:$0xff]
    %v254 = vld [vmem:[#allocation5 + $0x480] sm:$0xff]
    %v255 = vld [vmem:[#allocation5 + $0x488] sm:$0xff]
    %v256 = vld [vmem:[#allocation5 + $0x490] sm:$0xff]
    %v257 = vld [vmem:[#allocation5 + $0x498] sm:$0xff]
    %v258 = vld [vmem:[#allocation5 + $0x4a0] sm:$0xff]
    %v259 = vld [vmem:[#allocation5 + $0x4a8] sm:$0xff]
    %v260 = vld [vmem:[#allocation5 + $0x4b0] sm:$0xff]
    %v261 = vld [vmem:[#allocation5 + $0x4b8] sm:$0xff]
    %v262 = vld [vmem:[#allocation5 + $0x4c0] sm:$0xff]
    %v263 = vld [vmem:[#allocation5 + $0x4c8] sm:$0xff]
    %v264 = vld [vmem:[#allocation5 + $0x4d0] sm:$0xff]
    %v265 = vld [vmem:[#allocation5 + $0x4d8] sm:$0xff]
    %v266 = vld [vmem:[#allocation5 + $0x4e0] sm:$0xff]
    %v267 = vld [vmem:[#allocation5 + $0x4e8] sm:$0xff]
    %v268 = vld [vmem:[#allocation5 + $0x4f0] sm:$0xff]
    %v269 = vld [vmem:[#allocation5 + $0x4f8] sm:$0xff]
    %v270 = vld [vmem:[#allocation5 + $0x500] sm:$0xff]
    %v271 = vld [vmem:[#allocation5 + $0x508] sm:$0xff]
    %v272 = vld [vmem:[#allocation5 + $0x510] sm:$0xff]
    %v273 = vld [vmem:[#allocation5 + $0x518] sm:$0xff]
    %v274 = vld [vmem:[#allocation5 + $0x520] sm:$0xff]
    %v275 = vld [vmem:[#allocation5 + $0x528] sm:$0xff]
    %v276 = vld [vmem:[#allocation5 + $0x530] sm:$0xff]
    %v277 = vld [vmem:[#allocation5 + $0x538] sm:$0xff]
    %v278 = vld [vmem:[#allocation5 + $0x540] sm:$0xff]
    %v279 = vld [vmem:[#allocation5 + $0x548] sm:$0xff]
    %v280 = vld [vmem:[#allocation5 + $0x550] sm:$0xff]
    %v281 = vld [vmem:[#allocation5 + $0x558] sm:$0xff]
    %v282 = vld [vmem:[#allocation5 + $0x560] sm:$0xff]
    %v283 = vld [vmem:[#allocation5 + $0x568] sm:$0xff]
    %v284 = vld [vmem:[#allocation5 + $0x570] sm:$0xff]
    %v285 = vld [vmem:[#allocation5 + $0x578] sm:$0xff]
    %v286 = vld [vmem:[#allocation5 + $0x580] sm:$0xff]
    %v287 = vld [vmem:[#allocation5 + $0x588] sm:$0xff]
    %v288 = vld [vmem:[#allocation5 + $0x590] sm:$0xff]
    %v289 = vld [vmem:[#allocation5 + $0x598] sm:$0xff]
    %v290 = vld [vmem:[#allocation5 + $0x5a0] sm:$0xff]
    %v291 = vld [vmem:[#allocation5 + $0x5a8] sm:$0xff]
    %v292 = vld [vmem:[#allocation5 + $0x5b0] sm:$0xff]
    %v293 = vld [vmem:[#allocation5 + $0x5b8] sm:$0xff]
    %v294 = vld [vmem:[#allocation5 + $0x5c0] sm:$0xff]
    %v295 = vld [vmem:[#allocation5 + $0x5c8] sm:$0xff]
    %v296 = vld [vmem:[#allocation5 + $0x5d0] sm:$0xff]
    %v297 = vld [vmem:[#allocation5 + $0x5d8] sm:$0xff]
    %v298 = vld [vmem:[#allocation5 + $0x5e0] sm:$0xff]
    %v299 = vld [vmem:[#allocation5 + $0x5e8] sm:$0xff]
    %v300 = vld [vmem:[#allocation5 + $0x5f0] sm:$0xff]
    %v301 = vld [vmem:[#allocation5 + $0x5f8] sm:$0xff]
    %v302 = vld [vmem:[#allocation5 + $0x600] sm:$0xff]
    %v303 = vld [vmem:[#allocation5 + $0x608] sm:$0xff]
    %v304 = vld [vmem:[#allocation5 + $0x610] sm:$0xff]
    %v305 = vld [vmem:[#allocation5 + $0x618] sm:$0xff]
    %v306 = vld [vmem:[#allocation5 + $0x620] sm:$0xff]
    %v307 = vld [vmem:[#allocation5 + $0x628] sm:$0xff]
    %v308 = vld [vmem:[#allocation5 + $0x630] sm:$0xff]
    %v309 = vld [vmem:[#allocation5 + $0x638] sm:$0xff]
    %v310 = vld [vmem:[#allocation5 + $0x640] sm:$0xff]
    %v311 = vld [vmem:[#allocation5 + $0x648] sm:$0xff]
    %v312 = vld [vmem:[#allocation5 + $0x650] sm:$0xff]
    %v313 = vld [vmem:[#allocation5 + $0x658] sm:$0xff]
    %v314 = vld [vmem:[#allocation5 + $0x660] sm:$0xff]
    %v315 = vld [vmem:[#allocation5 + $0x668] sm:$0xff]
    %v316 = vld [vmem:[#allocation5 + $0x670] sm:$0xff]
    %v317 = vld [vmem:[#allocation5 + $0x678] sm:$0xff]
    %v318 = vld [vmem:[#allocation5 + $0x680] sm:$0xff]
    %v319 = vld [vmem:[#allocation5 + $0x688] sm:$0xff]
    %v320 = vld [vmem:[#allocation5 + $0x690] sm:$0xff]
    %v321 = vld [vmem:[#allocation5 + $0x698] sm:$0xff]
    %v322 = vld [vmem:[#allocation5 + $0x6a0] sm:$0xff]
    %v323 = vld [vmem:[#allocation5 + $0x6a8] sm:$0xff]
    %v324 = vld [vmem:[#allocation5 + $0x6b0] sm:$0xff]
    %v325 = vld [vmem:[#allocation5 + $0x6b8] sm:$0xff]
    %v326 = vld [vmem:[#allocation5 + $0x6c0] sm:$0xff]
    %v327 = vld [vmem:[#allocation5 + $0x6c8] sm:$0xff]
    %v328 = vld [vmem:[#allocation5 + $0x6d0] sm:$0xff]
    %v329 = vld [vmem:[#allocation5 + $0x6d8] sm:$0xff]
    %v330 = vld [vmem:[#allocation5 + $0x6e0] sm:$0xff]
    %v331 = vld [vmem:[#allocation5 + $0x6e8] sm:$0xff]
    %v332 = vld [vmem:[#allocation5 + $0x6f0] sm:$0xff]
    %v333 = vld [vmem:[#allocation5 + $0x6f8] sm:$0xff]
    %v334 = vld [vmem:[#allocation5 + $0x700] sm:$0xff]
    %v335 = vld [vmem:[#allocation5 + $0x708] sm:$0xff]
    %v336 = vld [vmem:[#allocation5 + $0x710] sm:$0xff]
    %v337 = vld [vmem:[#allocation5 + $0x718] sm:$0xff]
    %v338 = vld [vmem:[#allocation5 + $0x720] sm:$0xff]
    %v339 = vld [vmem:[#allocation5 + $0x728] sm:$0xff]
    %v340 = vld [vmem:[#allocation5 + $0x730] sm:$0xff]
    %v341 = vld [vmem:[#allocation5 + $0x738] sm:$0xff]
    %v342 = vld [vmem:[#allocation5 + $0x740] sm:$0xff]
    %v343 = vld [vmem:[#allocation5 + $0x748] sm:$0xff]
    %v344 = vld [vmem:[#allocation5 + $0x750] sm:$0xff]
    %v345 = vld [vmem:[#allocation5 + $0x758] sm:$0xff]
    %v346 = vld [vmem:[#allocation5 + $0x760] sm:$0xff]
    %v347 = vld [vmem:[#allocation5 + $0x768] sm:$0xff]
    %v348 = vld [vmem:[#allocation5 + $0x770] sm:$0xff]
    %v349 = vld [vmem:[#allocation5 + $0x778] sm:$0xff]
    %v350 = vld [vmem:[#allocation5 + $0x780] sm:$0xff]
    %v351 = vld [vmem:[#allocation5 + $0x788] sm:$0xff]
    %v352 = vld [vmem:[#allocation5 + $0x790] sm:$0xff]
    %v353 = vld [vmem:[#allocation5 + $0x798] sm:$0xff]
    %v354 = vld [vmem:[#allocation5 + $0x7a0] sm:$0xff]
    %v355 = vld [vmem:[#allocation5 + $0x7a8] sm:$0xff]
    %v356 = vld [vmem:[#allocation5 + $0x7b0] sm:$0xff]
    %v357 = vld [vmem:[#allocation5 + $0x7b8] sm:$0xff]
    %v358 = vld [vmem:[#allocation5 + $0x7c0] sm:$0xff]
    %v359 = vld [vmem:[#allocation5 + $0x7c8] sm:$0xff]
    %v360 = vld [vmem:[#allocation5 + $0x7d0] sm:$0xff]
    %v361 = vld [vmem:[#allocation5 + $0x7d8] sm:$0xff]
    %v362 = vld [vmem:[#allocation5 + $0x7e0] sm:$0xff]
    %v363 = vld [vmem:[#allocation5 + $0x7e8] sm:$0xff]
    %v364 = vld [vmem:[#allocation5 + $0x7f0] sm:$0xff]
    %v365 = vld [vmem:[#allocation5 + $0x7f8] sm:$0xff]
    %v366 = vld [vmem:[#allocation5 + $0x800] sm:$0xff]
    %v367 = vld [vmem:[#allocation5 + $0x808] sm:$0xff]
    %v368 = vld [vmem:[#allocation5 + $0x810] sm:$0xff]
    %v369 = vld [vmem:[#allocation5 + $0x818] sm:$0xff]
    %v370 = vld [vmem:[#allocation5 + $0x820] sm:$0xff]
    %v371 = vld [vmem:[#allocation5 + $0x828] sm:$0xff]
    %v372 = vld [vmem:[#allocation5 + $0x830] sm:$0xff]
    %v373 = vld [vmem:[#allocation5 + $0x838] sm:$0xff]
    %v374 = vld [vmem:[#allocation5 + $0x840] sm:$0xff]
    %v375 = vld [vmem:[#allocation5 + $0x848] sm:$0xff]
    %v376 = vld [vmem:[#allocation5 + $0x850] sm:$0xff]
    %v377 = vld [vmem:[#allocation5 + $0x858] sm:$0xff]
    %v378 = vld [vmem:[#allocation5 + $0x860] sm:$0xff]
    %v379 = vld [vmem:[#allocation5 + $0x868] sm:$0xff]
    %v380 = vld [vmem:[#allocation5 + $0x870] sm:$0xff]
    %v381 = vld [vmem:[#allocation5 + $0x878] sm:$0xff]
    %v382 = vld [vmem:[#allocation5 + $0x880] sm:$0xff]
    %v383 = vld [vmem:[#allocation5 + $0x888] sm:$0xff]
    %v384 = vld [vmem:[#allocation5 + $0x890] sm:$0xff]
    %v385 = vld [vmem:[#allocation5 + $0x898] sm:$0xff]
    %v386 = vld [vmem:[#allocation5 + $0x8a0] sm:$0xff]
    %v387 = vld [vmem:[#allocation5 + $0x8a8] sm:$0xff]
    %v388 = vld [vmem:[#allocation5 + $0x8b0] sm:$0xff]
    %v389 = vld [vmem:[#allocation5 + $0x8b8] sm:$0xff]
    %v390 = vld [vmem:[#allocation5 + $0x8c0] sm:$0xff]
    %v391 = vld [vmem:[#allocation5 + $0x8c8] sm:$0xff]
    %v392 = vld [vmem:[#allocation5 + $0x8d0] sm:$0xff]
    %v393 = vld [vmem:[#allocation5 + $0x8d8] sm:$0xff]
    %v394 = vld [vmem:[#allocation5 + $0x8e0] sm:$0xff]
    %v395 = vld [vmem:[#allocation5 + $0x8e8] sm:$0xff]
    %v396 = vld [vmem:[#allocation5 + $0x8f0] sm:$0xff]
    %v397 = vld [vmem:[#allocation5 + $0x8f8] sm:$0xff]
    %v398 = vld [vmem:[#allocation5 + $0x900] sm:$0xff]
    %v399 = vld [vmem:[#allocation5 + $0x908] sm:$0xff]
    %v400 = vld [vmem:[#allocation5 + $0x910] sm:$0xff]
    %v401 = vld [vmem:[#allocation5 + $0x918] sm:$0xff]
    %v402 = vld [vmem:[#allocation5 + $0x920] sm:$0xff]
    %v403 = vld [vmem:[#allocation5 + $0x928] sm:$0xff]
    %v404 = vld [vmem:[#allocation5 + $0x930] sm:$0xff]
    %v405 = vld [vmem:[#allocation5 + $0x938] sm:$0xff]
    %v406 = vld [vmem:[#allocation5 + $0x940] sm:$0xff]
    %v407 = vld [vmem:[#allocation5 + $0x948] sm:$0xff]
    %v408 = vld [vmem:[#allocation5 + $0x950] sm:$0xff]
    %v409 = vld [vmem:[#allocation5 + $0x958] sm:$0xff]
    %v410 = vld [vmem:[#allocation5 + $0x960] sm:$0xff]
    %v411 = vld [vmem:[#allocation5 + $0x968] sm:$0xff]
    %v412 = vld [vmem:[#allocation5 + $0x970] sm:$0xff]
    %v413 = vld [vmem:[#allocation5 + $0x978] sm:$0xff]
    %v414 = vld [vmem:[#allocation5 + $0x980] sm:$0xff]
    %v415 = vld [vmem:[#allocation5 + $0x988] sm:$0xff]
    %v416 = vld [vmem:[#allocation5 + $0x990] sm:$0xff]
    %v417 = vld [vmem:[#allocation5 + $0x998] sm:$0xff]
    %v418 = vld [vmem:[#allocation5 + $0x9a0] sm:$0xff]
    %v419 = vld [vmem:[#allocation5 + $0x9a8] sm:$0xff]
    %v420 = vld [vmem:[#allocation5 + $0x9b0] sm:$0xff]
    %v421 = vld [vmem:[#allocation5 + $0x9b8] sm:$0xff]
    %v422 = vld [vmem:[#allocation5 + $0x9c0] sm:$0xff]
    %v423 = vld [vmem:[#allocation5 + $0x9c8] sm:$0xff]
    %v424 = vld [vmem:[#allocation5 + $0x9d0] sm:$0xff]
    %v425 = vld [vmem:[#allocation5 + $0x9d8] sm:$0xff]
    %v426 = vld [vmem:[#allocation5 + $0x9e0] sm:$0xff]
    %v427 = vld [vmem:[#allocation5 + $0x9e8] sm:$0xff]
    %v428 = vld [vmem:[#allocation5 + $0x9f0] sm:$0xff]
    %v429 = vld [vmem:[#allocation5 + $0x9f8] sm:$0xff]
    %v430 = vld [vmem:[#allocation5 + $0xa00] sm:$0xff]
    %v431 = vld [vmem:[#allocation5 + $0xa08] sm:$0xff]
    %v432 = vld [vmem:[#allocation5 + $0xa10] sm:$0xff]
    %v433 = vld [vmem:[#allocation5 + $0xa18] sm:$0xff]
    %v434 = vld [vmem:[#allocation5 + $0xa20] sm:$0xff]
    %v435 = vld [vmem:[#allocation5 + $0xa28] sm:$0xff]
    %v436 = vld [vmem:[#allocation5 + $0xa30] sm:$0xff]
    %v437 = vld [vmem:[#allocation5 + $0xa38] sm:$0xff]
    %v438 = vld [vmem:[#allocation5 + $0xa40] sm:$0xff]
    %v439 = vld [vmem:[#allocation5 + $0xa48] sm:$0xff]
    %v440 = vld [vmem:[#allocation5 + $0xa50] sm:$0xff]
    %v441 = vld [vmem:[#allocation5 + $0xa58] sm:$0xff]
    %v442 = vld [vmem:[#allocation5 + $0xa60] sm:$0xff]
    %v443 = vld [vmem:[#allocation5 + $0xa68] sm:$0xff]
    %v444 = vld [vmem:[#allocation5 + $0xa70] sm:$0xff]
    %v445 = vld [vmem:[#allocation5 + $0xa78] sm:$0xff]
    %v446 = vld [vmem:[#allocation5 + $0xa80] sm:$0xff]
    %v447 = vld [vmem:[#allocation5 + $0xa88] sm:$0xff]
    %v448 = vld [vmem:[#allocation5 + $0xa90] sm:$0xff]
    %v449 = vld [vmem:[#allocation5 + $0xa98] sm:$0xff]
    %v450 = vld [vmem:[#allocation5 + $0xaa0] sm:$0xff]
    %v451 = vld [vmem:[#allocation5 + $0xaa8] sm:$0xff]
    %v452 = vld [vmem:[#allocation5 + $0xab0] sm:$0xff]
    %v453 = vld [vmem:[#allocation5 + $0xab8] sm:$0xff]
    %v454 = vld [vmem:[#allocation5 + $0xac0] sm:$0xff]
    %v455 = vld [vmem:[#allocation5 + $0xac8] sm:$0xff]
    %v456 = vld [vmem:[#allocation5 + $0xad0] sm:$0xff]
    %v457 = vld [vmem:[#allocation5 + $0xad8] sm:$0xff]
    %v458 = vld [vmem:[#allocation5 + $0xae0] sm:$0xff]
    %v459 = vld [vmem:[#allocation5 + $0xae8] sm:$0xff]
    %v460 = vld [vmem:[#allocation5 + $0xaf0] sm:$0xff]
    %v461 = vld [vmem:[#allocation5 + $0xaf8] sm:$0xff]
    %v462 = vld [vmem:[#allocation5 + $0xb00] sm:$0xff]
    %v463 = vld [vmem:[#allocation5 + $0xb08] sm:$0xff]
    %v464 = vld [vmem:[#allocation5 + $0xb10] sm:$0xff]
    %v465 = vld [vmem:[#allocation5 + $0xb18] sm:$0xff]
    %v466 = vld [vmem:[#allocation5 + $0xb20] sm:$0xff]
    %v467 = vld [vmem:[#allocation5 + $0xb28] sm:$0xff]
    %v468 = vld [vmem:[#allocation5 + $0xb30] sm:$0xff]
    %v469 = vld [vmem:[#allocation5 + $0xb38] sm:$0xff]
    %v470 = vld [vmem:[#allocation5 + $0xb40] sm:$0xff]
    %v471 = vld [vmem:[#allocation5 + $0xb48] sm:$0xff]
    %v472 = vld [vmem:[#allocation5 + $0xb50] sm:$0xff]
    %v473 = vld [vmem:[#allocation5 + $0xb58] sm:$0xff]
    %v474 = vld [vmem:[#allocation5 + $0xb60] sm:$0xff]
    %v475 = vld [vmem:[#allocation5 + $0xb68] sm:$0xff]
    %v476 = vld [vmem:[#allocation5 + $0xb70] sm:$0xff]
    %v477 = vld [vmem:[#allocation5 + $0xb78] sm:$0xff]
    %v478 = vld [vmem:[#allocation5 + $0xb80] sm:$0xff]
    %v479 = vld [vmem:[#allocation5 + $0xb88] sm:$0xff]
    %v480 = vld [vmem:[#allocation5 + $0xb90] sm:$0xff]
    %v481 = vld [vmem:[#allocation5 + $0xb98] sm:$0xff]
    %v482 = vld [vmem:[#allocation5 + $0xba0] sm:$0xff]
    %v483 = vld [vmem:[#allocation5 + $0xba8] sm:$0xff]
    %v484 = vld [vmem:[#allocation5 + $0xbb0] sm:$0xff]
    %v485 = vld [vmem:[#allocation5 + $0xbb8] sm:$0xff]
    %v486 = vld [vmem:[#allocation5 + $0xbc0] sm:$0xff]
    %v487 = vld [vmem:[#allocation5 + $0xbc8] sm:$0xff]
    %v488 = vld [vmem:[#allocation5 + $0xbd0] sm:$0xff]
    %v489 = vld [vmem:[#allocation5 + $0xbd8] sm:$0xff]
    %v490 = vld [vmem:[#allocation5 + $0xbe0] sm:$0xff]
    %v491 = vld [vmem:[#allocation5 + $0xbe8] sm:$0xff]
    %v492 = vld [vmem:[#allocation5 + $0xbf0] sm:$0xff]
    %v493 = vld [vmem:[#allocation5 + $0xbf8] sm:$0xff]
    %v494 = vld [vmem:[#allocation5 + $0xc00] sm:$0xff]
    %v495 = vld [vmem:[#allocation5 + $0xc08] sm:$0xff]
    %v496 = vld [vmem:[#allocation5 + $0xc10] sm:$0xff]
    %v497 = vld [vmem:[#allocation5 + $0xc18] sm:$0xff]
    %v498 = vld [vmem:[#allocation5 + $0xc20] sm:$0xff]
    %v499 = vld [vmem:[#allocation5 + $0xc28] sm:$0xff]
    %v500 = vld [vmem:[#allocation5 + $0xc30] sm:$0xff]
    %v501 = vld [vmem:[#allocation5 + $0xc38] sm:$0xff]
    %v502 = vld [vmem:[#allocation5 + $0xc40] sm:$0xff]
    %v503 = vld [vmem:[#allocation5 + $0xc48] sm:$0xff]
    %v504 = vld [vmem:[#allocation5 + $0xc50] sm:$0xff]
    %v505 = vld [vmem:[#allocation5 + $0xc58] sm:$0xff]
    %v506 = vld [vmem:[#allocation5 + $0xc60] sm:$0xff]
    %v507 = vld [vmem:[#allocation5 + $0xc68] sm:$0xff]
    %v508 = vld [vmem:[#allocation5 + $0xc70] sm:$0xff]
    %v509 = vld [vmem:[#allocation5 + $0xc78] sm:$0xff]
    %v510 = vld [vmem:[#allocation5 + $0xc80] sm:$0xff]
    %v511 = vld [vmem:[#allocation5 + $0xc88] sm:$0xff]
    %v512 = vld [vmem:[#allocation5 + $0xc90] sm:$0xff]
    %v513 = vld [vmem:[#allocation5 + $0xc98] sm:$0xff]
    %v514 = vld [vmem:[#allocation5 + $0xca0] sm:$0xff]
    %v515 = vld [vmem:[#allocation5 + $0xca8] sm:$0xff]
    %v516 = vld [vmem:[#allocation5 + $0xcb0] sm:$0xff]
    %v517 = vld [vmem:[#allocation5 + $0xcb8] sm:$0xff]
    %v518 = vld [vmem:[#allocation5 + $0xcc0] sm:$0xff]
    %v519 = vld [vmem:[#allocation5 + $0xcc8] sm:$0xff]
    %v520 = vld [vmem:[#allocation5 + $0xcd0] sm:$0xff]
    %v521 = vld [vmem:[#allocation5 + $0xcd8] sm:$0xff]
    %v522 = vld [vmem:[#allocation5 + $0xce0] sm:$0xff]
    %v523 = vld [vmem:[#allocation5 + $0xce8] sm:$0xff]
    %v524 = vld [vmem:[#allocation5 + $0xcf0] sm:$0xff]
    %v525 = vld [vmem:[#allocation5 + $0xcf8] sm:$0xff]
    %v526 = vld [vmem:[#allocation5 + $0xd00] sm:$0xff]
    %v527 = vld [vmem:[#allocation5 + $0xd08] sm:$0xff]
    %v528 = vld [vmem:[#allocation5 + $0xd10] sm:$0xff]
    %v529 = vld [vmem:[#allocation5 + $0xd18] sm:$0xff]
    %v530 = vld [vmem:[#allocation5 + $0xd20] sm:$0xff]
    %v531 = vld [vmem:[#allocation5 + $0xd28] sm:$0xff]
    %v532 = vld [vmem:[#allocation5 + $0xd30] sm:$0xff]
    %v533 = vld [vmem:[#allocation5 + $0xd38] sm:$0xff]
    %v534 = vld [vmem:[#allocation5 + $0xd40] sm:$0xff]
    %v535 = vld [vmem:[#allocation5 + $0xd48] sm:$0xff]
    %v536 = vld [vmem:[#allocation5 + $0xd50] sm:$0xff]
    %v537 = vld [vmem:[#allocation5 + $0xd58] sm:$0xff]
    %v538 = vld [vmem:[#allocation5 + $0xd60] sm:$0xff]
    %v539 = vld [vmem:[#allocation5 + $0xd68] sm:$0xff]
    %v540 = vld [vmem:[#allocation5 + $0xd70] sm:$0xff]
    %v541 = vld [vmem:[#allocation5 + $0xd78] sm:$0xff]
    %v542 = vld [vmem:[#allocation5 + $0xd80] sm:$0xff]
    %v543 = vld [vmem:[#allocation5 + $0xd88] sm:$0xff]
    %v544 = vld [vmem:[#allocation5 + $0xd90] sm:$0xff]
    %v545 = vld [vmem:[#allocation5 + $0xd98] sm:$0xff]
    %v546 = vld [vmem:[#allocation5 + $0xda0] sm:$0xff]
    %v547 = vld [vmem:[#allocation5 + $0xda8] sm:$0xff]
    %v548 = vld [vmem:[#allocation5 + $0xdb0] sm:$0xff]
    %v549 = vld [vmem:[#allocation5 + $0xdb8] sm:$0xff]
    %v550 = vld [vmem:[#allocation5 + $0xdc0] sm:$0xff]
    %v551 = vld [vmem:[#allocation5 + $0xdc8] sm:$0xff]
    %v552 = vld [vmem:[#allocation5 + $0xdd0] sm:$0xff]
    %v553 = vld [vmem:[#allocation5 + $0xdd8] sm:$0xff]
    %v554 = vld [vmem:[#allocation5 + $0xde0] sm:$0xff]
    %v555 = vld [vmem:[#allocation5 + $0xde8] sm:$0xff]
    %v556 = vld [vmem:[#allocation5 + $0xdf0] sm:$0xff]
    %v557 = vld [vmem:[#allocation5 + $0xdf8] sm:$0xff]
    %v558 = vld [vmem:[#allocation5 + $0xe00] sm:$0xff]
    %v559 = vld [vmem:[#allocation5 + $0xe08] sm:$0xff]
    %v560 = vld [vmem:[#allocation5 + $0xe10] sm:$0xff]
    %v561 = vld [vmem:[#allocation5 + $0xe18] sm:$0xff]
    %v562 = vld [vmem:[#allocation5 + $0xe20] sm:$0xff]
    %v563 = vld [vmem:[#allocation5 + $0xe28] sm:$0xff]
    %v564 = vld [vmem:[#allocation5 + $0xe30] sm:$0xff]
    %v565 = vld [vmem:[#allocation5 + $0xe38] sm:$0xff]
    %v566 = vld [vmem:[#allocation5 + $0xe40] sm:$0xff]
    %v567 = vld [vmem:[#allocation5 + $0xe48] sm:$0xff]
    %v568 = vld [vmem:[#allocation5 + $0xe50] sm:$0xff]
    %v569 = vld [vmem:[#allocation5 + $0xe58] sm:$0xff]
    %v570 = vld [vmem:[#allocation5 + $0xe60] sm:$0xff]
    %v571 = vld [vmem:[#allocation5 + $0xe68] sm:$0xff]
    %v572 = vld [vmem:[#allocation5 + $0xe70] sm:$0xff]
    %v573 = vld [vmem:[#allocation5 + $0xe78] sm:$0xff]
    %v574 = vld [vmem:[#allocation5 + $0xe80] sm:$0xff]
    %v575 = vld [vmem:[#allocation5 + $0xe88] sm:$0xff]
    %v576 = vld [vmem:[#allocation5 + $0xe90] sm:$0xff]
    %v577 = vld [vmem:[#allocation5 + $0xe98] sm:$0xff]
    %v578 = vld [vmem:[#allocation5 + $0xea0] sm:$0xff]
    %v579 = vld [vmem:[#allocation5 + $0xea8] sm:$0xff]
    %v580 = vld [vmem:[#allocation5 + $0xeb0] sm:$0xff]
    %v581 = vld [vmem:[#allocation5 + $0xeb8] sm:$0xff]
    %v582 = vld [vmem:[#allocation5 + $0xec0] sm:$0xff]
    %v583 = vld [vmem:[#allocation5 + $0xec8] sm:$0xff]
    %v584 = vld [vmem:[#allocation5 + $0xed0] sm:$0xff]
    %v585 = vld [vmem:[#allocation5 + $0xed8] sm:$0xff]
    %v586 = vld [vmem:[#allocation5 + $0xee0] sm:$0xff]
    %v587 = vld [vmem:[#allocation5 + $0xee8] sm:$0xff]
    %v588 = vld [vmem:[#allocation5 + $0xef0] sm:$0xff]
    %v589 = vld [vmem:[#allocation5 + $0xef8] sm:$0xff]
    %v590 = vld [vmem:[#allocation5 + $0xf00] sm:$0xff]
    %v591 = vld [vmem:[#allocation5 + $0xf08] sm:$0xff]
    %v592 = vld [vmem:[#allocation5 + $0xf10] sm:$0xff]
    %v593 = vld [vmem:[#allocation5 + $0xf18] sm:$0xff]
    %v594 = vld [vmem:[#allocation5 + $0xf20] sm:$0xff]
    %v595 = vld [vmem:[#allocation5 + $0xf28] sm:$0xff]
    %v596 = vld [vmem:[#allocation5 + $0xf30] sm:$0xff]
    %v597 = vld [vmem:[#allocation5 + $0xf38] sm:$0xff]
    %v598 = vld [vmem:[#allocation5 + $0xf40] sm:$0xff]
    %v599 = vld [vmem:[#allocation5 + $0xf48] sm:$0xff]
    %v600 = vld [vmem:[#allocation5 + $0xf50] sm:$0xff]
    %v601 = vld [vmem:[#allocation5 + $0xf58] sm:$0xff]
    %v602 = vld [vmem:[#allocation5 + $0xf60] sm:$0xff]
    %v603 = vld [vmem:[#allocation5 + $0xf68] sm:$0xff]
    %v604 = vld [vmem:[#allocation5 + $0xf70] sm:$0xff]
    %v605 = vld [vmem:[#allocation5 + $0xf78] sm:$0xff]
    %v606 = vld [vmem:[#allocation5 + $0xf80] sm:$0xff]
    %v607 = vld [vmem:[#allocation5 + $0xf88] sm:$0xff]
    %v608 = vld [vmem:[#allocation5 + $0xf90] sm:$0xff]
    %v609 = vld [vmem:[#allocation5 + $0xf98] sm:$0xff]
    %v610 = vld [vmem:[#allocation5 + $0xfa0] sm:$0xff]
    %v611 = vld [vmem:[#allocation5 + $0xfa8] sm:$0xff]
    %v612 = vld [vmem:[#allocation5 + $0xfb0] sm:$0xff]
    %v613 = vld [vmem:[#allocation5 + $0xfb8] sm:$0xff]
    %v614 = vld [vmem:[#allocation5 + $0xfc0] sm:$0xff]
    %v615 = vld [vmem:[#allocation5 + $0xfc8] sm:$0xff]
    %v616 = vld [vmem:[#allocation5 + $0xfd0] sm:$0xff]
    %v617 = vld [vmem:[#allocation5 + $0xfd8] sm:$0xff]
    %v618 = vld [vmem:[#allocation5 + $0xfe0] sm:$0xff]
    %v619 = vld [vmem:[#allocation5 + $0xfe8] sm:$0xff]
    %v620 = vld [vmem:[#allocation5 + $0xff0] sm:$0xff]
    %v621 = vld [vmem:[#allocation5 + $0xff8] sm:$0xff]
    %v622 = vld [vmem:[#allocation5 + $0x1000] sm:$0xff]
    %v623 = vld [vmem:[#allocation5 + $0x1008] sm:$0xff]
    %v624 = vld [vmem:[#allocation5 + $0x1010] sm:$0xff]
    %v625 = vld [vmem:[#allocation5 + $0x1018] sm:$0xff]
    %v626 = vld [vmem:[#allocation5 + $0x1020] sm:$0xff]
    %v627 = vld [vmem:[#allocation5 + $0x1028] sm:$0xff]
    %v628 = vld [vmem:[#allocation5 + $0x1030] sm:$0xff]
    %v629 = vld [vmem:[#allocation5 + $0x1038] sm:$0xff]
    %v630 = vld [vmem:[#allocation5 + $0x1040] sm:$0xff]
    %v631 = vld [vmem:[#allocation5 + $0x1048] sm:$0xff]
    %v632 = vld [vmem:[#allocation5 + $0x1050] sm:$0xff]
    %v633 = vld [vmem:[#allocation5 + $0x1058] sm:$0xff]
    %v634 = vld [vmem:[#allocation5 + $0x1060] sm:$0xff]
    %v635 = vld [vmem:[#allocation5 + $0x1068] sm:$0xff]
    %v636 = vld [vmem:[#allocation5 + $0x1070] sm:$0xff]
    %v637 = vld [vmem:[#allocation5 + $0x1078] sm:$0xff]
    %v638 = vld [vmem:[#allocation5 + $0x1080] sm:$0xff]
    %v639 = vld [vmem:[#allocation5 + $0x1088] sm:$0xff]
    %v640 = vld [vmem:[#allocation5 + $0x1090] sm:$0xff]
    %v641 = vld [vmem:[#allocation5 + $0x1098] sm:$0xff]
    %v642 = vld [vmem:[#allocation5 + $0x10a0] sm:$0xff]
    %v643 = vld [vmem:[#allocation5 + $0x10a8] sm:$0xff]
    %v644 = vld [vmem:[#allocation5 + $0x10b0] sm:$0xff]
    %v645 = vld [vmem:[#allocation5 + $0x10b8] sm:$0xff]
    %v646 = vld [vmem:[#allocation5 + $0x10c0] sm:$0xff]
    %v647 = vld [vmem:[#allocation5 + $0x10c8] sm:$0xff]
    %v648 = vld [vmem:[#allocation5 + $0x10d0] sm:$0xff]
    %v649 = vld [vmem:[#allocation5 + $0x10d8] sm:$0xff]
    %v650 = vld [vmem:[#allocation5 + $0x10e0] sm:$0xff]
    %v651 = vld [vmem:[#allocation5 + $0x10e8] sm:$0xff]
    %v652 = vld [vmem:[#allocation5 + $0x10f0] sm:$0xff]
    %v653 = vld [vmem:[#allocation5 + $0x10f8] sm:$0xff]
    %v654 = vld [vmem:[#allocation5 + $0x1100] sm:$0xff]
    %v655 = vld [vmem:[#allocation5 + $0x1108] sm:$0xff]
    %v656 = vld [vmem:[#allocation5 + $0x1110] sm:$0xff]
    %v657 = vld [vmem:[#allocation5 + $0x1118] sm:$0xff]
    %v658 = vld [vmem:[#allocation5 + $0x1120] sm:$0xff]
    %v659 = vld [vmem:[#allocation5 + $0x1128] sm:$0xff]
    %v660 = vld [vmem:[#allocation5 + $0x1130] sm:$0xff]
    %v661 = vld [vmem:[#allocation5 + $0x1138] sm:$0xff]
    %v662 = vld [vmem:[#allocation5 + $0x1140] sm:$0xff]
    %v663 = vld [vmem:[#allocation5 + $0x1148] sm:$0xff]
    %v664 = vld [vmem:[#allocation5 + $0x1150] sm:$0xff]
    %v665 = vld [vmem:[#allocation5 + $0x1158] sm:$0xff]
    %v666 = vld [vmem:[#allocation5 + $0x1160] sm:$0xff]
    %v667 = vld [vmem:[#allocation5 + $0x1168] sm:$0xff]
    %v668 = vld [vmem:[#allocation5 + $0x1170] sm:$0xff]
    %v669 = vld [vmem:[#allocation5 + $0x1178] sm:$0xff]
    %v670 = vld [vmem:[#allocation5 + $0x1180] sm:$0xff]
    %v671 = vld [vmem:[#allocation5 + $0x1188] sm:$0xff]
    %v672 = vld [vmem:[#allocation5 + $0x1190] sm:$0xff]
    %v673 = vld [vmem:[#allocation5 + $0x1198] sm:$0xff]
    %v674 = vld [vmem:[#allocation5 + $0x11a0] sm:$0xff]
    %v675 = vld [vmem:[#allocation5 + $0x11a8] sm:$0xff]
    %v676 = vld [vmem:[#allocation5 + $0x11b0] sm:$0xff]
    %v677 = vld [vmem:[#allocation5 + $0x11b8] sm:$0xff]
    %v678 = vld [vmem:[#allocation5 + $0x11c0] sm:$0xff]
    %v679 = vld [vmem:[#allocation5 + $0x11c8] sm:$0xff]
    %v680 = vld [vmem:[#allocation5 + $0x11d0] sm:$0xff]
    %v681 = vld [vmem:[#allocation5 + $0x11d8] sm:$0xff]
    %v682 = vld [vmem:[#allocation5 + $0x11e0] sm:$0xff]
    %v683 = vld [vmem:[#allocation5 + $0x11e8] sm:$0xff]
    %v684 = vld [vmem:[#allocation5 + $0x11f0] sm:$0xff]
    %v685 = vld [vmem:[#allocation5 + $0x11f8] sm:$0xff]
    %v686 = vld [vmem:[#allocation5 + $0x1200] sm:$0xff]
    %v687 = vld [vmem:[#allocation5 + $0x1208] sm:$0xff]
    %v688 = vld [vmem:[#allocation5 + $0x1210] sm:$0xff]
    %v689 = vld [vmem:[#allocation5 + $0x1218] sm:$0xff]
    %v690 = vld [vmem:[#allocation5 + $0x1220] sm:$0xff]
    %v691 = vld [vmem:[#allocation5 + $0x1228] sm:$0xff]
    %v692 = vld [vmem:[#allocation5 + $0x1230] sm:$0xff]
    %v693 = vld [vmem:[#allocation5 + $0x1238] sm:$0xff]
    %v694 = vld [vmem:[#allocation5 + $0x1240] sm:$0xff]
    %v695 = vld [vmem:[#allocation5 + $0x1248] sm:$0xff]
    %v696 = vld [vmem:[#allocation5 + $0x1250] sm:$0xff]
    %v697 = vld [vmem:[#allocation5 + $0x1258] sm:$0xff]
    %v698 = vld [vmem:[#allocation5 + $0x1260] sm:$0xff]
    %v699 = vld [vmem:[#allocation5 + $0x1268] sm:$0xff]
    %v700 = vld [vmem:[#allocation5 + $0x1270] sm:$0xff]
    %v701 = vld [vmem:[#allocation5 + $0x1278] sm:$0xff]
    %v702 = vld [vmem:[#allocation5 + $0x1280] sm:$0xff]
    %v703 = vld [vmem:[#allocation5 + $0x1288] sm:$0xff]
    %v704 = vld [vmem:[#allocation5 + $0x1290] sm:$0xff]
    %v705 = vld [vmem:[#allocation5 + $0x1298] sm:$0xff]
    %v706 = vld [vmem:[#allocation5 + $0x12a0] sm:$0xff]
    %v707 = vld [vmem:[#allocation5 + $0x12a8] sm:$0xff]
    %v708 = vld [vmem:[#allocation5 + $0x12b0] sm:$0xff]
    %v709 = vld [vmem:[#allocation5 + $0x12b8] sm:$0xff]
    %v710 = vld [vmem:[#allocation5 + $0x12c0] sm:$0xff]
    %v711 = vld [vmem:[#allocation5 + $0x12c8] sm:$0xff]
    %v712 = vld [vmem:[#allocation5 + $0x12d0] sm:$0xff]
    %v713 = vld [vmem:[#allocation5 + $0x12d8] sm:$0xff]
    %v714 = vld [vmem:[#allocation5 + $0x12e0] sm:$0xff]
    %v715 = vld [vmem:[#allocation5 + $0x12e8] sm:$0xff]
    %v716 = vld [vmem:[#allocation5 + $0x12f0] sm:$0xff]
    %v717 = vld [vmem:[#allocation5 + $0x12f8] sm:$0xff]
    %v718 = vld [vmem:[#allocation5 + $0x1300] sm:$0xff]
    %v719 = vld [vmem:[#allocation5 + $0x1308] sm:$0xff]
    %v720 = vld [vmem:[#allocation5 + $0x1310] sm:$0xff]
    %v721 = vld [vmem:[#allocation5 + $0x1318] sm:$0xff]
    %v722 = vld [vmem:[#allocation5 + $0x1320] sm:$0xff]
    %v723 = vld [vmem:[#allocation5 + $0x1328] sm:$0xff]
    %v724 = vld [vmem:[#allocation5 + $0x1330] sm:$0xff]
    %v725 = vld [vmem:[#allocation5 + $0x1338] sm:$0xff]
    %v726 = vld [vmem:[#allocation5 + $0x1340] sm:$0xff]
    %v727 = vld [vmem:[#allocation5 + $0x1348] sm:$0xff]
    %v728 = vld [vmem:[#allocation5 + $0x1350] sm:$0xff]
    %v729 = vld [vmem:[#allocation5 + $0x1358] sm:$0xff]
    %v730 = vld [vmem:[#allocation5 + $0x1360] sm:$0xff]
    %v731 = vld [vmem:[#allocation5 + $0x1368] sm:$0xff]
    %v732 = vld [vmem:[#allocation5 + $0x1370] sm:$0xff]
    %v733 = vld [vmem:[#allocation5 + $0x1378] sm:$0xff]
    %v734 = vld [vmem:[#allocation5 + $0x1380] sm:$0xff]
    %v735 = vld [vmem:[#allocation5 + $0x1388] sm:$0xff]
    %v736 = vld [vmem:[#allocation5 + $0x1390] sm:$0xff]
    %v737 = vld [vmem:[#allocation5 + $0x1398] sm:$0xff]
    %v738 = vld [vmem:[#allocation5 + $0x13a0] sm:$0xff]
    %v739 = vld [vmem:[#allocation5 + $0x13a8] sm:$0xff]
    %v740 = vld [vmem:[#allocation5 + $0x13b0] sm:$0xff]
    %v741 = vld [vmem:[#allocation5 + $0x13b8] sm:$0xff]
    %v742 = vld [vmem:[#allocation5 + $0x13c0] sm:$0xff]
    %v743 = vld [vmem:[#allocation5 + $0x13c8] sm:$0xff]
    %v744 = vld [vmem:[#allocation5 + $0x13d0] sm:$0xff]
    %v745 = vld [vmem:[#allocation5 + $0x13d8] sm:$0xff]
    %v746 = vld [vmem:[#allocation5 + $0x13e0] sm:$0xff]
    %v747 = vld [vmem:[#allocation5 + $0x13e8] sm:$0xff]
    %v748 = vld [vmem:[#allocation5 + $0x13f0] sm:$0xff]
    %v749 = vld [vmem:[#allocation5 + $0x13f8] sm:$0xff]
    %v750 = vld [vmem:[#allocation5 + $0x1400] sm:$0xff]
    %v751 = vld [vmem:[#allocation5 + $0x1408] sm:$0xff]
    %v752 = vld [vmem:[#allocation5 + $0x1410] sm:$0xff]
    %v753 = vld [vmem:[#allocation5 + $0x1418] sm:$0xff]
    %v754 = vld [vmem:[#allocation5 + $0x1420] sm:$0xff]
    %v755 = vld [vmem:[#allocation5 + $0x1428] sm:$0xff]
    %v756 = vld [vmem:[#allocation5 + $0x1430] sm:$0xff]
    %v757 = vld [vmem:[#allocation5 + $0x1438] sm:$0xff]
    %v758 = vld [vmem:[#allocation5 + $0x1440] sm:$0xff]
    %v759 = vld [vmem:[#allocation5 + $0x1448] sm:$0xff]
    %v760 = vld [vmem:[#allocation5 + $0x1450] sm:$0xff]
    %v761 = vld [vmem:[#allocation5 + $0x1458] sm:$0xff]
    %v762 = vld [vmem:[#allocation5 + $0x1460] sm:$0xff]
    %v763 = vld [vmem:[#allocation5 + $0x1468] sm:$0xff]
    %v764 = vld [vmem:[#allocation5 + $0x1470] sm:$0xff]
    %v765 = vld [vmem:[#allocation5 + $0x1478] sm:$0xff]
    %v766 = vld [vmem:[#allocation5 + $0x1480] sm:$0xff]
    %v767 = vld [vmem:[#allocation5 + $0x1488] sm:$0xff]
    %v768 = vld [vmem:[#allocation5 + $0x1490] sm:$0xff]
    %v769 = vld [vmem:[#allocation5 + $0x1498] sm:$0xff]
    %v770 = vld [vmem:[#allocation5 + $0x14a0] sm:$0xff]
    %v771 = vld [vmem:[#allocation5 + $0x14a8] sm:$0xff]
    %v772 = vld [vmem:[#allocation5 + $0x14b0] sm:$0xff]
    %v773 = vld [vmem:[#allocation5 + $0x14b8] sm:$0xff]
    %v774 = vld [vmem:[#allocation5 + $0x14c0] sm:$0xff]
    %v775 = vld [vmem:[#allocation5 + $0x14c8] sm:$0xff]
    %v776 = vld [vmem:[#allocation5 + $0x14d0] sm:$0xff]
    %v777 = vld [vmem:[#allocation5 + $0x14d8] sm:$0xff]
    %v778 = vld [vmem:[#allocation5 + $0x14e0] sm:$0xff]
    %v779 = vld [vmem:[#allocation5 + $0x14e8] sm:$0xff]
    %v780 = vld [vmem:[#allocation5 + $0x14f0] sm:$0xff]
    %v781 = vld [vmem:[#allocation5 + $0x14f8] sm:$0xff]
    %v782 = vld [vmem:[#allocation5 + $0x1500] sm:$0xff]
    %v783 = vld [vmem:[#allocation5 + $0x1508] sm:$0xff]
    %v784 = vld [vmem:[#allocation5 + $0x1510] sm:$0xff]
    %v785 = vld [vmem:[#allocation5 + $0x1518] sm:$0xff]
    %v786 = vld [vmem:[#allocation5 + $0x1520] sm:$0xff]
    %v787 = vld [vmem:[#allocation5 + $0x1528] sm:$0xff]
    %v788 = vld [vmem:[#allocation5 + $0x1530] sm:$0xff]
    %v789 = vld [vmem:[#allocation5 + $0x1538] sm:$0xff]
    %v790 = vld [vmem:[#allocation5 + $0x1540] sm:$0xff]
    %v791 = vld [vmem:[#allocation5 + $0x1548] sm:$0xff]
    %v792 = vld [vmem:[#allocation5 + $0x1550] sm:$0xff]
    %v793 = vld [vmem:[#allocation5 + $0x1558] sm:$0xff]
    %v794 = vld [vmem:[#allocation5 + $0x1560] sm:$0xff]
    %v795 = vld [vmem:[#allocation5 + $0x1568] sm:$0xff]
    %v796 = vld [vmem:[#allocation5 + $0x1570] sm:$0xff]
    %v797 = vld [vmem:[#allocation5 + $0x1578] sm:$0xff]
    %v798 = vld [vmem:[#allocation5 + $0x1580] sm:$0xff]
    %v799 = vld [vmem:[#allocation5 + $0x1588] sm:$0xff]
    %v800 = vld [vmem:[#allocation5 + $0x1590] sm:$0xff]
    %v801 = vld [vmem:[#allocation5 + $0x1598] sm:$0xff]
    %v802 = vld [vmem:[#allocation5 + $0x15a0] sm:$0xff]
    %v803 = vld [vmem:[#allocation5 + $0x15a8] sm:$0xff]
    %v804 = vld [vmem:[#allocation5 + $0x15b0] sm:$0xff]
    %v805 = vld [vmem:[#allocation5 + $0x15b8] sm:$0xff]
    %v806 = vld [vmem:[#allocation5 + $0x15c0] sm:$0xff]
    %v807 = vld [vmem:[#allocation5 + $0x15c8] sm:$0xff]
    %v808 = vld [vmem:[#allocation5 + $0x15d0] sm:$0xff]
    %v809 = vld [vmem:[#allocation5 + $0x15d8] sm:$0xff]
    %v810 = vld [vmem:[#allocation5 + $0x15e0] sm:$0xff]
    %v811 = vld [vmem:[#allocation5 + $0x15e8] sm:$0xff]
    %v812 = vld [vmem:[#allocation5 + $0x15f0] sm:$0xff]
    %v813 = vld [vmem:[#allocation5 + $0x15f8] sm:$0xff]
    %v814 = vld [vmem:[#allocation5 + $0x1600] sm:$0xff]
    %v815 = vld [vmem:[#allocation5 + $0x1608] sm:$0xff]
    %v816 = vld [vmem:[#allocation5 + $0x1610] sm:$0xff]
    %v817 = vld [vmem:[#allocation5 + $0x1618] sm:$0xff]
    %v818 = vld [vmem:[#allocation5 + $0x1620] sm:$0xff]
    %v819 = vld [vmem:[#allocation5 + $0x1628] sm:$0xff]
    %v820 = vld [vmem:[#allocation5 + $0x1630] sm:$0xff]
    %v821 = vld [vmem:[#allocation5 + $0x1638] sm:$0xff]
    %v822 = vld [vmem:[#allocation5 + $0x1640] sm:$0xff]
    %v823 = vld [vmem:[#allocation5 + $0x1648] sm:$0xff]
    %v824 = vld [vmem:[#allocation5 + $0x1650] sm:$0xff]
    %v825 = vld [vmem:[#allocation5 + $0x1658] sm:$0xff]
    %v826 = vld [vmem:[#allocation5 + $0x1660] sm:$0xff]
    %v827 = vld [vmem:[#allocation5 + $0x1668] sm:$0xff]
    %v828 = vld [vmem:[#allocation5 + $0x1670] sm:$0xff]
    %v829 = vld [vmem:[#allocation5 + $0x1678] sm:$0xff]
    %v830 = vld [vmem:[#allocation5 + $0x1680] sm:$0xff]
    %v831 = vld [vmem:[#allocation5 + $0x1688] sm:$0xff]
    %v832 = vld [vmem:[#allocation5 + $0x1690] sm:$0xff]
    %v833 = vld [vmem:[#allocation5 + $0x1698] sm:$0xff]
    %v834 = vld [vmem:[#allocation5 + $0x16a0] sm:$0xff]
    %v835 = vld [vmem:[#allocation5 + $0x16a8] sm:$0xff]
    %v836 = vld [vmem:[#allocation5 + $0x16b0] sm:$0xff]
    %v837 = vld [vmem:[#allocation5 + $0x16b8] sm:$0xff]
    %v838 = vld [vmem:[#allocation5 + $0x16c0] sm:$0xff]
    %v839 = vld [vmem:[#allocation5 + $0x16c8] sm:$0xff]
    %v840 = vld [vmem:[#allocation5 + $0x16d0] sm:$0xff]
    %v841 = vld [vmem:[#allocation5 + $0x16d8] sm:$0xff]
    %v842 = vld [vmem:[#allocation5 + $0x16e0] sm:$0xff]
    %v843 = vld [vmem:[#allocation5 + $0x16e8] sm:$0xff]
    %v844 = vld [vmem:[#allocation5 + $0x16f0] sm:$0xff]
    %v845 = vld [vmem:[#allocation5 + $0x16f8] sm:$0xff]
    %v846 = vld [vmem:[#allocation5 + $0x1700] sm:$0xff]
    %v847 = vld [vmem:[#allocation5 + $0x1708] sm:$0xff]
    %v848 = vld [vmem:[#allocation5 + $0x1710] sm:$0xff]
    %v849 = vld [vmem:[#allocation5 + $0x1718] sm:$0xff]
    %v850 = vld [vmem:[#allocation5 + $0x1720] sm:$0xff]
    %v851 = vld [vmem:[#allocation5 + $0x1728] sm:$0xff]
    %v852 = vld [vmem:[#allocation5 + $0x1730] sm:$0xff]
    %v853 = vld [vmem:[#allocation5 + $0x1738] sm:$0xff]
    %v854 = vld [vmem:[#allocation5 + $0x1740] sm:$0xff]
    %v855 = vld [vmem:[#allocation5 + $0x1748] sm:$0xff]
    %v856 = vld [vmem:[#allocation5 + $0x1750] sm:$0xff]
    %v857 = vld [vmem:[#allocation5 + $0x1758] sm:$0xff]
    %v858 = vld [vmem:[#allocation5 + $0x1760] sm:$0xff]
    %v859 = vld [vmem:[#allocation5 + $0x1768] sm:$0xff]
    %v860 = vld [vmem:[#allocation5 + $0x1770] sm:$0xff]
    %v861 = vld [vmem:[#allocation5 + $0x1778] sm:$0xff]
    %v862 = vld [vmem:[#allocation5 + $0x1780] sm:$0xff]
    %v863 = vld [vmem:[#allocation5 + $0x1788] sm:$0xff]
    %v864 = vld [vmem:[#allocation5 + $0x1790] sm:$0xff]
    %v865 = vld [vmem:[#allocation5 + $0x1798] sm:$0xff]
    %v866 = vld [vmem:[#allocation5 + $0x17a0] sm:$0xff]
    %v867 = vld [vmem:[#allocation5 + $0x17a8] sm:$0xff]
    %v868 = vld [vmem:[#allocation5 + $0x17b0] sm:$0xff]
    %v869 = vld [vmem:[#allocation5 + $0x17b8] sm:$0xff]
    %v870 = vld [vmem:[#allocation5 + $0x17c0] sm:$0xff]
    %v871 = vld [vmem:[#allocation5 + $0x17c8] sm:$0xff]
    %v872 = vld [vmem:[#allocation5 + $0x17d0] sm:$0xff]
    %v873 = vld [vmem:[#allocation5 + $0x17d8] sm:$0xff]
    %v874 = vld [vmem:[#allocation5 + $0x17e0] sm:$0xff]
    %v875 = vld [vmem:[#allocation5 + $0x17e8] sm:$0xff]
    %v876 = vld [vmem:[#allocation5 + $0x17f0] sm:$0xff]
    %v877 = vld [vmem:[#allocation5 + $0x17f8] sm:$0xff]
    %v878 = vld [vmem:[#allocation5 + $0x1800] sm:$0xff]
    %v879 = vld [vmem:[#allocation5 + $0x1808] sm:$0xff]
    %v880 = vld [vmem:[#allocation5 + $0x1810] sm:$0xff]
    %v881 = vld [vmem:[#allocation5 + $0x1818] sm:$0xff]
    %v882 = vld [vmem:[#allocation5 + $0x1820] sm:$0xff]
    %v883 = vld [vmem:[#allocation5 + $0x1828] sm:$0xff]
    %v884 = vld [vmem:[#allocation5 + $0x1830] sm:$0xff]
    %v885 = vld [vmem:[#allocation5 + $0x1838] sm:$0xff]
    %v886 = vld [vmem:[#allocation5 + $0x1840] sm:$0xff]
    %v887 = vld [vmem:[#allocation5 + $0x1848] sm:$0xff]
    %v888 = vld [vmem:[#allocation5 + $0x1850] sm:$0xff]
    %v889 = vld [vmem:[#allocation5 + $0x1858] sm:$0xff]
    %v890 = vld [vmem:[#allocation5 + $0x1860] sm:$0xff]
    %v891 = vld [vmem:[#allocation5 + $0x1868] sm:$0xff]
    %v892 = vld [vmem:[#allocation5 + $0x1870] sm:$0xff]
    %v893 = vld [vmem:[#allocation5 + $0x1878] sm:$0xff]
    %v894 = vld [vmem:[#allocation5 + $0x1880] sm:$0xff]
    %v895 = vld [vmem:[#allocation5 + $0x1888] sm:$0xff]
    %v896 = vld [vmem:[#allocation5 + $0x1890] sm:$0xff]
    %v897 = vld [vmem:[#allocation5 + $0x1898] sm:$0xff]
    %v898 = vld [vmem:[#allocation5 + $0x18a0] sm:$0xff]
    %v899 = vld [vmem:[#allocation5 + $0x18a8] sm:$0xff]
    %v900 = vld [vmem:[#allocation5 + $0x18b0] sm:$0xff]
    %v901 = vld [vmem:[#allocation5 + $0x18b8] sm:$0xff]
    %v902 = vld [vmem:[#allocation5 + $0x18c0] sm:$0xff]
    %v903 = vld [vmem:[#allocation5 + $0x18c8] sm:$0xff]
    %v904 = vld [vmem:[#allocation5 + $0x18d0] sm:$0xff]
    %v905 = vld [vmem:[#allocation5 + $0x18d8] sm:$0xff]
    %v906 = vld [vmem:[#allocation5 + $0x18e0] sm:$0xff]
    %v907 = vld [vmem:[#allocation5 + $0x18e8] sm:$0xff]
    %v908 = vld [vmem:[#allocation5 + $0x18f0] sm:$0xff]
    %v909 = vld [vmem:[#allocation5 + $0x18f8] sm:$0xff]
    %v910 = vld [vmem:[#allocation5 + $0x1900] sm:$0xff]
    %v911 = vld [vmem:[#allocation5 + $0x1908] sm:$0xff]
    %v912 = vld [vmem:[#allocation5 + $0x1910] sm:$0xff]
    %v913 = vld [vmem:[#allocation5 + $0x1918] sm:$0xff]
    %v914 = vld [vmem:[#allocation5 + $0x1920] sm:$0xff]
    %v915 = vld [vmem:[#allocation5 + $0x1928] sm:$0xff]
    %v916 = vld [vmem:[#allocation5 + $0x1930] sm:$0xff]
    %v917 = vld [vmem:[#allocation5 + $0x1938] sm:$0xff]
    %v918 = vld [vmem:[#allocation5 + $0x1940] sm:$0xff]
    %v919 = vld [vmem:[#allocation5 + $0x1948] sm:$0xff]
    %v920 = vld [vmem:[#allocation5 + $0x1950] sm:$0xff]
    %v921 = vld [vmem:[#allocation5 + $0x1958] sm:$0xff]
    %v922 = vld [vmem:[#allocation5 + $0x1960] sm:$0xff]
    %v923 = vld [vmem:[#allocation5 + $0x1968] sm:$0xff]
    %v924 = vld [vmem:[#allocation5 + $0x1970] sm:$0xff]
    %v925 = vld [vmem:[#allocation5 + $0x1978] sm:$0xff]
    %v926 = vld [vmem:[#allocation5 + $0x1980] sm:$0xff]
    %v927 = vld [vmem:[#allocation5 + $0x1988] sm:$0xff]
    %v928 = vld [vmem:[#allocation5 + $0x1990] sm:$0xff]
    %v929 = vld [vmem:[#allocation5 + $0x1998] sm:$0xff]
    %v930 = vld [vmem:[#allocation5 + $0x19a0] sm:$0xff]
    %v931 = vld [vmem:[#allocation5 + $0x19a8] sm:$0xff]
    %v932 = vld [vmem:[#allocation5 + $0x19b0] sm:$0xff]
    %v933 = vld [vmem:[#allocation5 + $0x19b8] sm:$0xff]
    %v934 = vld [vmem:[#allocation5 + $0x19c0] sm:$0xff]
    %v935 = vld [vmem:[#allocation5 + $0x19c8] sm:$0xff]
    %v936 = vld [vmem:[#allocation5 + $0x19d0] sm:$0xff]
    %v937 = vld [vmem:[#allocation5 + $0x19d8] sm:$0xff]
    %v938 = vld [vmem:[#allocation5 + $0x19e0] sm:$0xff]
    %v939 = vld [vmem:[#allocation5 + $0x19e8] sm:$0xff]
    %v940 = vld [vmem:[#allocation5 + $0x19f0] sm:$0xff]
    %v941 = vld [vmem:[#allocation5 + $0x19f8] sm:$0xff]
    %v942 = vld [vmem:[#allocation5 + $0x1a00] sm:$0xff]
    %v943 = vld [vmem:[#allocation5 + $0x1a08] sm:$0xff]
    %v944 = vld [vmem:[#allocation5 + $0x1a10] sm:$0xff]
    %v945 = vld [vmem:[#allocation5 + $0x1a18] sm:$0xff]
    %v946 = vld [vmem:[#allocation5 + $0x1a20] sm:$0xff]
    %v947 = vld [vmem:[#allocation5 + $0x1a28] sm:$0xff]
    %v948 = vld [vmem:[#allocation5 + $0x1a30] sm:$0xff]
    %v949 = vld [vmem:[#allocation5 + $0x1a38] sm:$0xff]
    %v950 = vld [vmem:[#allocation5 + $0x1a40] sm:$0xff]
    %v951 = vld [vmem:[#allocation5 + $0x1a48] sm:$0xff]
    %v952 = vld [vmem:[#allocation5 + $0x1a50] sm:$0xff]
    %v953 = vld [vmem:[#allocation5 + $0x1a58] sm:$0xff]
    %v954 = vld [vmem:[#allocation5 + $0x1a60] sm:$0xff]
    %v955 = vld [vmem:[#allocation5 + $0x1a68] sm:$0xff]
    %v956 = vld [vmem:[#allocation5 + $0x1a70] sm:$0xff]
    %v957 = vld [vmem:[#allocation5 + $0x1a78] sm:$0xff]
    %v958 = vld [vmem:[#allocation5 + $0x1a80] sm:$0xff]
    %v959 = vld [vmem:[#allocation5 + $0x1a88] sm:$0xff]
    %v960 = vld [vmem:[#allocation5 + $0x1a90] sm:$0xff]
    %v961 = vld [vmem:[#allocation5 + $0x1a98] sm:$0xff]
    %v962 = vld [vmem:[#allocation5 + $0x1aa0] sm:$0xff]
    %v963 = vld [vmem:[#allocation5 + $0x1aa8] sm:$0xff]
    %v964 = vld [vmem:[#allocation5 + $0x1ab0] sm:$0xff]
    %v965 = vld [vmem:[#allocation5 + $0x1ab8] sm:$0xff]
    %v966 = vld [vmem:[#allocation5 + $0x1ac0] sm:$0xff]
    %v967 = vld [vmem:[#allocation5 + $0x1ac8] sm:$0xff]
    %v968 = vld [vmem:[#allocation5 + $0x1ad0] sm:$0xff]
    %v969 = vld [vmem:[#allocation5 + $0x1ad8] sm:$0xff]
    %v970 = vld [vmem:[#allocation5 + $0x1ae0] sm:$0xff]
    %v971 = vld [vmem:[#allocation5 + $0x1ae8] sm:$0xff]
    %v972 = vld [vmem:[#allocation5 + $0x1af0] sm:$0xff]
    %v973 = vld [vmem:[#allocation5 + $0x1af8] sm:$0xff]
    %v974 = vld [vmem:[#allocation5 + $0x1b00] sm:$0xff]
    %v975 = vld [vmem:[#allocation5 + $0x1b08] sm:$0xff]
    %v976 = vld [vmem:[#allocation5 + $0x1b10] sm:$0xff]
    %v977 = vld [vmem:[#allocation5 + $0x1b18] sm:$0xff]
    %v978 = vld [vmem:[#allocation5 + $0x1b20] sm:$0xff]
    %v979 = vld [vmem:[#allocation5 + $0x1b28] sm:$0xff]
    %v980 = vld [vmem:[#allocation5 + $0x1b30] sm:$0xff]
    %v981 = vld [vmem:[#allocation5 + $0x1b38] sm:$0xff]
    %v982 = vld [vmem:[#allocation5 + $0x1b40] sm:$0xff]
    %v983 = vld [vmem:[#allocation5 + $0x1b48] sm:$0xff]
    %v984 = vld [vmem:[#allocation5 + $0x1b50] sm:$0xff]
    %v985 = vld [vmem:[#allocation5 + $0x1b58] sm:$0xff]
    %v986 = vld [vmem:[#allocation5 + $0x1b60] sm:$0xff]
    %v987 = vld [vmem:[#allocation5 + $0x1b68] sm:$0xff]
    %v988 = vld [vmem:[#allocation5 + $0x1b70] sm:$0xff]
    %v989 = vld [vmem:[#allocation5 + $0x1b78] sm:$0xff]
    %v990 = vld [vmem:[#allocation5 + $0x1b80] sm:$0xff]
    %v991 = vld [vmem:[#allocation5 + $0x1b88] sm:$0xff]
    %v992 = vld [vmem:[#allocation5 + $0x1b90] sm:$0xff]
    %v993 = vld [vmem:[#allocation5 + $0x1b98] sm:$0xff]
    %v994 = vld [vmem:[#allocation5 + $0x1ba0] sm:$0xff]
    %v995 = vld [vmem:[#allocation5 + $0x1ba8] sm:$0xff]
    %v996 = vld [vmem:[#allocation5 + $0x1bb0] sm:$0xff]
    %v997 = vld [vmem:[#allocation5 + $0x1bb8] sm:$0xff]
    %v998 = vld [vmem:[#allocation5 + $0x1bc0] sm:$0xff]
    %v999 = vld [vmem:[#allocation5 + $0x1bc8] sm:$0xff]
    %v1000 = vld [vmem:[#allocation5 + $0x1bd0] sm:$0xff]
    %v1001 = vld [vmem:[#allocation5 + $0x1bd8] sm:$0xff]
    %v1002 = vld [vmem:[#allocation5 + $0x1be0] sm:$0xff]
    %v1003 = vld [vmem:[#allocation5 + $0x1be8] sm:$0xff]
    %v1004 = vld [vmem:[#allocation5 + $0x1bf0] sm:$0xff]
    %v1005 = vld [vmem:[#allocation5 + $0x1bf8] sm:$0xff]
    %v1006 = vld [vmem:[#allocation5 + $0x1c00] sm:$0xff]
    %v1007 = vld [vmem:[#allocation5 + $0x1c08] sm:$0xff]
    %v1008 = vld [vmem:[#allocation5 + $0x1c10] sm:$0xff]
    %v1009 = vld [vmem:[#allocation5 + $0x1c18] sm:$0xff]
    %v1010 = vld [vmem:[#allocation5 + $0x1c20] sm:$0xff]
    %v1011 = vld [vmem:[#allocation5 + $0x1c28] sm:$0xff]
    %v1012 = vld [vmem:[#allocation5 + $0x1c30] sm:$0xff]
    %v1013 = vld [vmem:[#allocation5 + $0x1c38] sm:$0xff]
    %v1014 = vld [vmem:[#allocation5 + $0x1c40] sm:$0xff]
    %v1015 = vld [vmem:[#allocation5 + $0x1c48] sm:$0xff]
    %v1016 = vld [vmem:[#allocation5 + $0x1c50] sm:$0xff]
    %v1017 = vld [vmem:[#allocation5 + $0x1c58] sm:$0xff]
    %v1018 = vld [vmem:[#allocation5 + $0x1c60] sm:$0xff]
    %v1019 = vld [vmem:[#allocation5 + $0x1c68] sm:$0xff]
    %v1020 = vld [vmem:[#allocation5 + $0x1c70] sm:$0xff]
    %v1021 = vld [vmem:[#allocation5 + $0x1c78] sm:$0xff]
    %v1022 = vld [vmem:[#allocation5 + $0x1c80] sm:$0xff]
    %v1023 = vld [vmem:[#allocation5 + $0x1c88] sm:$0xff]
    %v1024 = vld [vmem:[#allocation5 + $0x1c90] sm:$0xff]
    %v1025 = vld [vmem:[#allocation5 + $0x1c98] sm:$0xff]
    %v1026 = vld [vmem:[#allocation5 + $0x1ca0] sm:$0xff]
    %v1027 = vld [vmem:[#allocation5 + $0x1ca8] sm:$0xff]
    %v1028 = vld [vmem:[#allocation5 + $0x1cb0] sm:$0xff]
    %v1029 = vld [vmem:[#allocation5 + $0x1cb8] sm:$0xff]
    %v1030 = vld [vmem:[#allocation5 + $0x1cc0] sm:$0xff]
    %v1031 = vld [vmem:[#allocation5 + $0x1cc8] sm:$0xff]
    %v1032 = vld [vmem:[#allocation5 + $0x1cd0] sm:$0xff]
    %v1033 = vld [vmem:[#allocation5 + $0x1cd8] sm:$0xff]
    %v1034 = vld [vmem:[#allocation5 + $0x1ce0] sm:$0xff]
    %v1035 = vld [vmem:[#allocation5 + $0x1ce8] sm:$0xff]
    %v1036 = vld [vmem:[#allocation5 + $0x1cf0] sm:$0xff]
    %v1037 = vld [vmem:[#allocation5 + $0x1cf8] sm:$0xff]
    %v1038 = vld [vmem:[#allocation5 + $0x1d00] sm:$0xff]
    %v1039 = vld [vmem:[#allocation5 + $0x1d08] sm:$0xff]
    %v1040 = vld [vmem:[#allocation5 + $0x1d10] sm:$0xff]
    %v1041 = vld [vmem:[#allocation5 + $0x1d18] sm:$0xff]
    %v1042 = vld [vmem:[#allocation5 + $0x1d20] sm:$0xff]
    %v1043 = vld [vmem:[#allocation5 + $0x1d28] sm:$0xff]
    %v1044 = vld [vmem:[#allocation5 + $0x1d30] sm:$0xff]
    %v1045 = vld [vmem:[#allocation5 + $0x1d38] sm:$0xff]
    %v1046 = vld [vmem:[#allocation5 + $0x1d40] sm:$0xff]
    %v1047 = vld [vmem:[#allocation5 + $0x1d48] sm:$0xff]
    %v1048 = vld [vmem:[#allocation5 + $0x1d50] sm:$0xff]
    %v1049 = vld [vmem:[#allocation5 + $0x1d58] sm:$0xff]
    %v1050 = vld [vmem:[#allocation5 + $0x1d60] sm:$0xff]
    %v1051 = vld [vmem:[#allocation5 + $0x1d68] sm:$0xff]
    %v1052 = vld [vmem:[#allocation5 + $0x1d70] sm:$0xff]
    %v1053 = vld [vmem:[#allocation5 + $0x1d78] sm:$0xff]
    %v1054 = vld [vmem:[#allocation5 + $0x1d80] sm:$0xff]
    %v1055 = vld [vmem:[#allocation5 + $0x1d88] sm:$0xff]
    %v1056 = vld [vmem:[#allocation5 + $0x1d90] sm:$0xff]
    %v1057 = vld [vmem:[#allocation5 + $0x1d98] sm:$0xff]
    %v1058 = vld [vmem:[#allocation5 + $0x1da0] sm:$0xff]
    %v1059 = vld [vmem:[#allocation5 + $0x1da8] sm:$0xff]
    %v1060 = vld [vmem:[#allocation5 + $0x1db0] sm:$0xff]
    %v1061 = vld [vmem:[#allocation5 + $0x1db8] sm:$0xff]
    %v1062 = vld [vmem:[#allocation5 + $0x1dc0] sm:$0xff]
    %v1063 = vld [vmem:[#allocation5 + $0x1dc8] sm:$0xff]
    %v1064 = vld [vmem:[#allocation5 + $0x1dd0] sm:$0xff]
    %v1065 = vld [vmem:[#allocation5 + $0x1dd8] sm:$0xff]
    %v1066 = vld [vmem:[#allocation5 + $0x1de0] sm:$0xff]
    %v1067 = vld [vmem:[#allocation5 + $0x1de8] sm:$0xff]
    %v1068 = vld [vmem:[#allocation5 + $0x1df0] sm:$0xff]
    %v1069 = vld [vmem:[#allocation5 + $0x1df8] sm:$0xff]
    %v1070 = vld [vmem:[#allocation5 + $0x1e00] sm:$0xff]
    %v1071 = vld [vmem:[#allocation5 + $0x1e08] sm:$0xff]
    %v1072 = vld [vmem:[#allocation5 + $0x1e10] sm:$0xff]
    %v1073 = vld [vmem:[#allocation5 + $0x1e18] sm:$0xff]
    %v1074 = vld [vmem:[#allocation5 + $0x1e20] sm:$0xff]
    %v1075 = vld [vmem:[#allocation5 + $0x1e28] sm:$0xff]
    %v1076 = vld [vmem:[#allocation5 + $0x1e30] sm:$0xff]
    %v1077 = vld [vmem:[#allocation5 + $0x1e38] sm:$0xff]
    %v1078 = vld [vmem:[#allocation5 + $0x1e40] sm:$0xff]
    %v1079 = vld [vmem:[#allocation5 + $0x1e48] sm:$0xff]
    %v1080 = vld [vmem:[#allocation5 + $0x1e50] sm:$0xff]
    %v1081 = vld [vmem:[#allocation5 + $0x1e58] sm:$0xff]
    %v1082 = vld [vmem:[#allocation5 + $0x1e60] sm:$0xff]
    %v1083 = vld [vmem:[#allocation5 + $0x1e68] sm:$0xff]
    %v1084 = vld [vmem:[#allocation5 + $0x1e70] sm:$0xff]
    %v1085 = vld [vmem:[#allocation5 + $0x1e78] sm:$0xff]
    %v1086 = vld [vmem:[#allocation5 + $0x1e80] sm:$0xff]
    %v1087 = vld [vmem:[#allocation5 + $0x1e88] sm:$0xff]
    %v1088 = vld [vmem:[#allocation5 + $0x1e90] sm:$0xff]
    %v1089 = vld [vmem:[#allocation5 + $0x1e98] sm:$0xff]
    %v1090 = vld [vmem:[#allocation5 + $0x1ea0] sm:$0xff]
    %v1091 = vld [vmem:[#allocation5 + $0x1ea8] sm:$0xff]
    %v1092 = vld [vmem:[#allocation5 + $0x1eb0] sm:$0xff]
    %v1093 = vld [vmem:[#allocation5 + $0x1eb8] sm:$0xff]
    %v1094 = vld [vmem:[#allocation5 + $0x1ec0] sm:$0xff]
    %v1095 = vld [vmem:[#allocation5 + $0x1ec8] sm:$0xff]
    %v1096 = vld [vmem:[#allocation5 + $0x1ed0] sm:$0xff]
    %v1097 = vld [vmem:[#allocation5 + $0x1ed8] sm:$0xff]
    %v1098 = vld [vmem:[#allocation5 + $0x1ee0] sm:$0xff]
    %v1099 = vld [vmem:[#allocation5 + $0x1ee8] sm:$0xff]
    %v1100 = vld [vmem:[#allocation5 + $0x1ef0] sm:$0xff]
    %v1101 = vld [vmem:[#allocation5 + $0x1ef8] sm:$0xff]
    %v1102 = vld [vmem:[#allocation5 + $0x1f00] sm:$0xff]
    %v1103 = vld [vmem:[#allocation5 + $0x1f08] sm:$0xff]
    %v1104 = vld [vmem:[#allocation5 + $0x1f10] sm:$0xff]
    %v1105 = vld [vmem:[#allocation5 + $0x1f18] sm:$0xff]
    %v1106 = vld [vmem:[#allocation5 + $0x1f20] sm:$0xff]
    %v1107 = vld [vmem:[#allocation5 + $0x1f28] sm:$0xff]
    %v1108 = vld [vmem:[#allocation5 + $0x1f30] sm:$0xff]
    %v1109 = vld [vmem:[#allocation5 + $0x1f38] sm:$0xff]
    %v1110 = vld [vmem:[#allocation5 + $0x1f40] sm:$0xff]
    %v1111 = vld [vmem:[#allocation5 + $0x1f48] sm:$0xff]
    %v1112 = vld [vmem:[#allocation5 + $0x1f50] sm:$0xff]
    %v1113 = vld [vmem:[#allocation5 + $0x1f58] sm:$0xff]
    %v1114 = vld [vmem:[#allocation5 + $0x1f60] sm:$0xff]
    %v1115 = vld [vmem:[#allocation5 + $0x1f68] sm:$0xff]
    %v1116 = vld [vmem:[#allocation5 + $0x1f70] sm:$0xff]
    %v1117 = vld [vmem:[#allocation5 + $0x1f78] sm:$0xff]
    %v1118 = vld [vmem:[#allocation5 + $0x1f80] sm:$0xff]
    %v1119 = vld [vmem:[#allocation5 + $0x1f88] sm:$0xff]
    %v1120 = vld [vmem:[#allocation5 + $0x1f90] sm:$0xff]
    %v1121 = vld [vmem:[#allocation5 + $0x1f98] sm:$0xff]
    %v1122 = vld [vmem:[#allocation5 + $0x1fa0] sm:$0xff]
    %v1123 = vld [vmem:[#allocation5 + $0x1fa8] sm:$0xff]
    %v1124 = vld [vmem:[#allocation5 + $0x1fb0] sm:$0xff]
    %v1125 = vld [vmem:[#allocation5 + $0x1fb8] sm:$0xff]
    %v1126 = vld [vmem:[#allocation5 + $0x1fc0] sm:$0xff]
    %v1127 = vld [vmem:[#allocation5 + $0x1fc8] sm:$0xff]
    %v1128 = vld [vmem:[#allocation5 + $0x1fd0] sm:$0xff]
    %v1129 = vld [vmem:[#allocation5 + $0x1fd8] sm:$0xff]
    %v1130 = vld [vmem:[#allocation5 + $0x1fe0] sm:$0xff]
    %v1131 = vld [vmem:[#allocation5 + $0x1fe8] sm:$0xff]
    %v1132 = vld [vmem:[#allocation5 + $0x1ff0] sm:$0xff]
    %v1133 = vld [vmem:[#allocation5 + $0x1ff8] sm:$0xff]
    %v1134 = vld [vmem:[#allocation7] sm:$0xff]
    %v1136 = vlaneseq
    %v1137 = vshrl.u32 %v1136, 7
    %v1138 = vsub.s32 0, %v1137
    %v1139 = vrot.slane %v1134, %v1138
    %v1140 = vlaneseq
    %v1141 = vshrl.u32 %v1140, 7
    %v1142 = vsub.s32 1, %v1141
    %v1143 = vrot.slane %v1134, %v1142
    %v1144 = vlaneseq
    %v1145 = vshrl.u32 %v1144, 7
    %v1146 = vsub.s32 2, %v1145
    %v1147 = vrot.slane %v1134, %v1146
    %v1148 = vlaneseq
    %v1149 = vshrl.u32 %v1148, 7
    %v1150 = vsub.s32 3, %v1149
    %v1151 = vrot.slane %v1134, %v1150
    %v1152 = vlaneseq
    %v1153 = vshrl.u32 %v1152, 7
    %v1154 = vsub.s32 4, %v1153
    %v1155 = vrot.slane %v1134, %v1154
    %v1156 = vlaneseq
    %v1157 = vshrl.u32 %v1156, 7
    %v1158 = vsub.s32 5, %v1157
    %v1159 = vrot.slane %v1134, %v1158
    %v1160 = vlaneseq
    %v1161 = vshrl.u32 %v1160, 7
    %v1162 = vsub.s32 6, %v1161
    %v1163 = vrot.slane %v1134, %v1162
    %v1164 = vlaneseq
    %v1165 = vshrl.u32 %v1164, 7
    %v1166 = vsub.s32 7, %v1165
    %v1167 = vrot.slane %v1134, %v1166
    %v1184 = vunpack.c.l.b16 %v102
    %v1185 = vunpack.c.h.b16 %v102
    %v1186 = vunpack.c.l.b16 %v103
    %v1187 = vunpack.c.h.b16 %v103
    %v1188 = vunpack.c.l.b16 %v104
    %v1189 = vunpack.c.h.b16 %v104
    %v1190 = vunpack.c.l.b16 %v105
    %v1191 = vunpack.c.h.b16 %v105
    %v1192 = vunpack.c.l.b16 %v106
    %v1193 = vunpack.c.h.b16 %v106
    %v1194 = vunpack.c.l.b16 %v107
    %v1195 = vunpack.c.h.b16 %v107
    %v1196 = vunpack.c.l.b16 %v108
    %v1197 = vunpack.c.h.b16 %v108
    %v1198 = vunpack.c.l.b16 %v109
    %v1199 = vunpack.c.h.b16 %v109
    %v1200 = vpack.c.b16 %v1184, %v1184
    %v1201 = vpack.c.b16 %v1185, %v1185
    %v1202 = vpack.c.b16 %v1186, %v1186
    %v1203 = vpack.c.b16 %v1187, %v1187
    %v1204 = vpack.c.b16 %v1188, %v1188
    %v1205 = vpack.c.b16 %v1189, %v1189
    %v1206 = vpack.c.b16 %v1190, %v1190
    %v1207 = vpack.c.b16 %v1191, %v1191
    %v1208 = vpack.c.b16 %v1192, %v1192
    %v1209 = vpack.c.b16 %v1193, %v1193
    %v1210 = vpack.c.b16 %v1194, %v1194
    %v1211 = vpack.c.b16 %v1195, %v1195
    %v1212 = vpack.c.b16 %v1196, %v1196
    %v1213 = vpack.c.b16 %v1197, %v1197
    %v1214 = vpack.c.b16 %v1198, %v1198
    %v1215 = vpack.c.b16 %v1199, %v1199
    %v2256 = vunpack.c.l.b16 %v110
    %v2257 = vunpack.c.h.b16 %v110
    %v2258 = vunpack.c.l.b16 %v111
    %v2259 = vunpack.c.h.b16 %v111
    %v2260 = vunpack.c.l.b16 %v112
    %v2261 = vunpack.c.h.b16 %v112
    %v2262 = vunpack.c.l.b16 %v113
    %v2263 = vunpack.c.h.b16 %v113
    %v2264 = vunpack.c.l.b16 %v114
    %v2265 = vunpack.c.h.b16 %v114
    %v2266 = vunpack.c.l.b16 %v115
    %v2267 = vunpack.c.h.b16 %v115
    %v2268 = vunpack.c.l.b16 %v116
    %v2269 = vunpack.c.h.b16 %v116
    %v2270 = vunpack.c.l.b16 %v117
    %v2271 = vunpack.c.h.b16 %v117
    %v2272 = vunpack.c.l.b16 %v118
    %v2273 = vunpack.c.h.b16 %v118
    %v2274 = vunpack.c.l.b16 %v119
    %v2275 = vunpack.c.h.b16 %v119
    %v2276 = vunpack.c.l.b16 %v120
    %v2277 = vunpack.c.h.b16 %v120
    %v2278 = vunpack.c.l.b16 %v121
    %v2279 = vunpack.c.h.b16 %v121
    %v2280 = vunpack.c.l.b16 %v122
    %v2281 = vunpack.c.h.b16 %v122
    %v2282 = vunpack.c.l.b16 %v123
    %v2283 = vunpack.c.h.b16 %v123
    %v2284 = vunpack.c.l.b16 %v124
    %v2285 = vunpack.c.h.b16 %v124
    %v2286 = vunpack.c.l.b16 %v125
    %v2287 = vunpack.c.h.b16 %v125
    %v2288 = vunpack.c.l.b16 %v126
    %v2289 = vunpack.c.h.b16 %v126
    %v2290 = vunpack.c.l.b16 %v127
    %v2291 = vunpack.c.h.b16 %v127
    %v2292 = vunpack.c.l.b16 %v128
    %v2293 = vunpack.c.h.b16 %v128
    %v2294 = vunpack.c.l.b16 %v129
    %v2295 = vunpack.c.h.b16 %v129
    %v2296 = vunpack.c.l.b16 %v130
    %v2297 = vunpack.c.h.b16 %v130
    %v2298 = vunpack.c.l.b16 %v131
    %v2299 = vunpack.c.h.b16 %v131
    %v2300 = vunpack.c.l.b16 %v132
    %v2301 = vunpack.c.h.b16 %v132
    %v2302 = vunpack.c.l.b16 %v133
    %v2303 = vunpack.c.h.b16 %v133
    %v2304 = vunpack.c.l.b16 %v134
    %v2305 = vunpack.c.h.b16 %v134
    %v2306 = vunpack.c.l.b16 %v135
    %v2307 = vunpack.c.h.b16 %v135
    %v2308 = vunpack.c.l.b16 %v136
    %v2309 = vunpack.c.h.b16 %v136
    %v2310 = vunpack.c.l.b16 %v137
    %v2311 = vunpack.c.h.b16 %v137
    %v2312 = vunpack.c.l.b16 %v138
    %v2313 = vunpack.c.h.b16 %v138
    %v2314 = vunpack.c.l.b16 %v139
    %v2315 = vunpack.c.h.b16 %v139
    %v2316 = vunpack.c.l.b16 %v140
    %v2317 = vunpack.c.h.b16 %v140
    %v2318 = vunpack.c.l.b16 %v141
    %v2319 = vunpack.c.h.b16 %v141
    %v2320 = vunpack.c.l.b16 %v142
    %v2321 = vunpack.c.h.b16 %v142
    %v2322 = vunpack.c.l.b16 %v143
    %v2323 = vunpack.c.h.b16 %v143
    %v2324 = vunpack.c.l.b16 %v144
    %v2325 = vunpack.c.h.b16 %v144
    %v2326 = vunpack.c.l.b16 %v145
    %v2327 = vunpack.c.h.b16 %v145
    %v2328 = vunpack.c.l.b16 %v146
    %v2329 = vunpack.c.h.b16 %v146
    %v2330 = vunpack.c.l.b16 %v147
    %v2331 = vunpack.c.h.b16 %v147
    %v2332 = vunpack.c.l.b16 %v148
    %v2333 = vunpack.c.h.b16 %v148
    %v2334 = vunpack.c.l.b16 %v149
    %v2335 = vunpack.c.h.b16 %v149
    %v2336 = vunpack.c.l.b16 %v150
    %v2337 = vunpack.c.h.b16 %v150
    %v2338 = vunpack.c.l.b16 %v151
    %v2339 = vunpack.c.h.b16 %v151
    %v2340 = vunpack.c.l.b16 %v152
    %v2341 = vunpack.c.h.b16 %v152
    %v2342 = vunpack.c.l.b16 %v153
    %v2343 = vunpack.c.h.b16 %v153
    %v2344 = vunpack.c.l.b16 %v154
    %v2345 = vunpack.c.h.b16 %v154
    %v2346 = vunpack.c.l.b16 %v155
    %v2347 = vunpack.c.h.b16 %v155
    %v2348 = vunpack.c.l.b16 %v156
    %v2349 = vunpack.c.h.b16 %v156
    %v2350 = vunpack.c.l.b16 %v157
    %v2351 = vunpack.c.h.b16 %v157
    %v2352 = vunpack.c.l.b16 %v158
    %v2353 = vunpack.c.h.b16 %v158
    %v2354 = vunpack.c.l.b16 %v159
    %v2355 = vunpack.c.h.b16 %v159
    %v2356 = vunpack.c.l.b16 %v160
    %v2357 = vunpack.c.h.b16 %v160
    %v2358 = vunpack.c.l.b16 %v161
    %v2359 = vunpack.c.h.b16 %v161
    %v2360 = vunpack.c.l.b16 %v162
    %v2361 = vunpack.c.h.b16 %v162
    %v2362 = vunpack.c.l.b16 %v163
    %v2363 = vunpack.c.h.b16 %v163
    %v2364 = vunpack.c.l.b16 %v164
    %v2365 = vunpack.c.h.b16 %v164
    %v2366 = vunpack.c.l.b16 %v165
    %v2367 = vunpack.c.h.b16 %v165
    %v2368 = vunpack.c.l.b16 %v166
    %v2369 = vunpack.c.h.b16 %v166
    %v2370 = vunpack.c.l.b16 %v167
    %v2371 = vunpack.c.h.b16 %v167
    %v2372 = vunpack.c.l.b16 %v168
    %v2373 = vunpack.c.h.b16 %v168
    %v2374 = vunpack.c.l.b16 %v169
    %v2375 = vunpack.c.h.b16 %v169
    %v2376 = vunpack.c.l.b16 %v170
    %v2377 = vunpack.c.h.b16 %v170
    %v2378 = vunpack.c.l.b16 %v171
    %v2379 = vunpack.c.h.b16 %v171
    %v2380 = vunpack.c.l.b16 %v172
    %v2381 = vunpack.c.h.b16 %v172
    %v2382 = vunpack.c.l.b16 %v173
    %v2383 = vunpack.c.h.b16 %v173
    %v2384 = vunpack.c.l.b16 %v174
    %v2385 = vunpack.c.h.b16 %v174
    %v2386 = vunpack.c.l.b16 %v175
    %v2387 = vunpack.c.h.b16 %v175
    %v2388 = vunpack.c.l.b16 %v176
    %v2389 = vunpack.c.h.b16 %v176
    %v2390 = vunpack.c.l.b16 %v177
    %v2391 = vunpack.c.h.b16 %v177
    %v2392 = vunpack.c.l.b16 %v178
    %v2393 = vunpack.c.h.b16 %v178
    %v2394 = vunpack.c.l.b16 %v179
    %v2395 = vunpack.c.h.b16 %v179
    %v2396 = vunpack.c.l.b16 %v180
    %v2397 = vunpack.c.h.b16 %v180
    %v2398 = vunpack.c.l.b16 %v181
    %v2399 = vunpack.c.h.b16 %v181
    %v2400 = vunpack.c.l.b16 %v182
    %v2401 = vunpack.c.h.b16 %v182
    %v2402 = vunpack.c.l.b16 %v183
    %v2403 = vunpack.c.h.b16 %v183
    %v2404 = vunpack.c.l.b16 %v184
    %v2405 = vunpack.c.h.b16 %v184
    %v2406 = vunpack.c.l.b16 %v185
    %v2407 = vunpack.c.h.b16 %v185
    %v2408 = vunpack.c.l.b16 %v186
    %v2409 = vunpack.c.h.b16 %v186
    %v2410 = vunpack.c.l.b16 %v187
    %v2411 = vunpack.c.h.b16 %v187
    %v2412 = vunpack.c.l.b16 %v188
    %v2413 = vunpack.c.h.b16 %v188
    %v2414 = vunpack.c.l.b16 %v189
    %v2415 = vunpack.c.h.b16 %v189
    %v2416 = vunpack.c.l.b16 %v190
    %v2417 = vunpack.c.h.b16 %v190
    %v2418 = vunpack.c.l.b16 %v191
    %v2419 = vunpack.c.h.b16 %v191
    %v2420 = vunpack.c.l.b16 %v192
    %v2421 = vunpack.c.h.b16 %v192
    %v2422 = vunpack.c.l.b16 %v193
    %v2423 = vunpack.c.h.b16 %v193
    %v2424 = vunpack.c.l.b16 %v194
    %v2425 = vunpack.c.h.b16 %v194
    %v2426 = vunpack.c.l.b16 %v195
    %v2427 = vunpack.c.h.b16 %v195
    %v2428 = vunpack.c.l.b16 %v196
    %v2429 = vunpack.c.h.b16 %v196
    %v2430 = vunpack.c.l.b16 %v197
    %v2431 = vunpack.c.h.b16 %v197
    %v2432 = vunpack.c.l.b16 %v198
    %v2433 = vunpack.c.h.b16 %v198
    %v2434 = vunpack.c.l.b16 %v199
    %v2435 = vunpack.c.h.b16 %v199
    %v2436 = vunpack.c.l.b16 %v200
    %v2437 = vunpack.c.h.b16 %v200
    %v2438 = vunpack.c.l.b16 %v201
    %v2439 = vunpack.c.h.b16 %v201
    %v2440 = vunpack.c.l.b16 %v202
    %v2441 = vunpack.c.h.b16 %v202
    %v2442 = vunpack.c.l.b16 %v203
    %v2443 = vunpack.c.h.b16 %v203
    %v2444 = vunpack.c.l.b16 %v204
    %v2445 = vunpack.c.h.b16 %v204
    %v2446 = vunpack.c.l.b16 %v205
    %v2447 = vunpack.c.h.b16 %v205
    %v2448 = vunpack.c.l.b16 %v206
    %v2449 = vunpack.c.h.b16 %v206
    %v2450 = vunpack.c.l.b16 %v207
    %v2451 = vunpack.c.h.b16 %v207
    %v2452 = vunpack.c.l.b16 %v208
    %v2453 = vunpack.c.h.b16 %v208
    %v2454 = vunpack.c.l.b16 %v209
    %v2455 = vunpack.c.h.b16 %v209
    %v2456 = vunpack.c.l.b16 %v210
    %v2457 = vunpack.c.h.b16 %v210
    %v2458 = vunpack.c.l.b16 %v211
    %v2459 = vunpack.c.h.b16 %v211
    %v2460 = vunpack.c.l.b16 %v212
    %v2461 = vunpack.c.h.b16 %v212
    %v2462 = vunpack.c.l.b16 %v213
    %v2463 = vunpack.c.h.b16 %v213
    %v2464 = vunpack.c.l.b16 %v214
    %v2465 = vunpack.c.h.b16 %v214
    %v2466 = vunpack.c.l.b16 %v215
    %v2467 = vunpack.c.h.b16 %v215
    %v2468 = vunpack.c.l.b16 %v216
    %v2469 = vunpack.c.h.b16 %v216
    %v2470 = vunpack.c.l.b16 %v217
    %v2471 = vunpack.c.h.b16 %v217
    %v2472 = vunpack.c.l.b16 %v218
    %v2473 = vunpack.c.h.b16 %v218
    %v2474 = vunpack.c.l.b16 %v219
    %v2475 = vunpack.c.h.b16 %v219
    %v2476 = vunpack.c.l.b16 %v220
    %v2477 = vunpack.c.h.b16 %v220
    %v2478 = vunpack.c.l.b16 %v221
    %v2479 = vunpack.c.h.b16 %v221
    %v2480 = vunpack.c.l.b16 %v222
    %v2481 = vunpack.c.h.b16 %v222
    %v2482 = vunpack.c.l.b16 %v223
    %v2483 = vunpack.c.h.b16 %v223
    %v2484 = vunpack.c.l.b16 %v224
    %v2485 = vunpack.c.h.b16 %v224
    %v2486 = vunpack.c.l.b16 %v225
    %v2487 = vunpack.c.h.b16 %v225
    %v2488 = vunpack.c.l.b16 %v226
    %v2489 = vunpack.c.h.b16 %v226
    %v2490 = vunpack.c.l.b16 %v227
    %v2491 = vunpack.c.h.b16 %v227
    %v2492 = vunpack.c.l.b16 %v228
    %v2493 = vunpack.c.h.b16 %v228
    %v2494 = vunpack.c.l.b16 %v229
    %v2495 = vunpack.c.h.b16 %v229
    %v2496 = vunpack.c.l.b16 %v230
    %v2497 = vunpack.c.h.b16 %v230
    %v2498 = vunpack.c.l.b16 %v231
    %v2499 = vunpack.c.h.b16 %v231
    %v2500 = vunpack.c.l.b16 %v232
    %v2501 = vunpack.c.h.b16 %v232
    %v2502 = vunpack.c.l.b16 %v233
    %v2503 = vunpack.c.h.b16 %v233
    %v2504 = vunpack.c.l.b16 %v234
    %v2505 = vunpack.c.h.b16 %v234
    %v2506 = vunpack.c.l.b16 %v235
    %v2507 = vunpack.c.h.b16 %v235
    %v2508 = vunpack.c.l.b16 %v236
    %v2509 = vunpack.c.h.b16 %v236
    %v2510 = vunpack.c.l.b16 %v237
    %v2511 = vunpack.c.h.b16 %v237
    %v2512 = vunpack.c.l.b16 %v238
    %v2513 = vunpack.c.h.b16 %v238
    %v2514 = vunpack.c.l.b16 %v239
    %v2515 = vunpack.c.h.b16 %v239
    %v2516 = vunpack.c.l.b16 %v240
    %v2517 = vunpack.c.h.b16 %v240
    %v2518 = vunpack.c.l.b16 %v241
    %v2519 = vunpack.c.h.b16 %v241
    %v2520 = vunpack.c.l.b16 %v242
    %v2521 = vunpack.c.h.b16 %v242
    %v2522 = vunpack.c.l.b16 %v243
    %v2523 = vunpack.c.h.b16 %v243
    %v2524 = vunpack.c.l.b16 %v244
    %v2525 = vunpack.c.h.b16 %v244
    %v2526 = vunpack.c.l.b16 %v245
    %v2527 = vunpack.c.h.b16 %v245
    %v2528 = vunpack.c.l.b16 %v246
    %v2529 = vunpack.c.h.b16 %v246
    %v2530 = vunpack.c.l.b16 %v247
    %v2531 = vunpack.c.h.b16 %v247
    %v2532 = vunpack.c.l.b16 %v248
    %v2533 = vunpack.c.h.b16 %v248
    %v2534 = vunpack.c.l.b16 %v249
    %v2535 = vunpack.c.h.b16 %v249
    %v2536 = vunpack.c.l.b16 %v250
    %v2537 = vunpack.c.h.b16 %v250
    %v2538 = vunpack.c.l.b16 %v251
    %v2539 = vunpack.c.h.b16 %v251
    %v2540 = vunpack.c.l.b16 %v252
    %v2541 = vunpack.c.h.b16 %v252
    %v2542 = vunpack.c.l.b16 %v253
    %v2543 = vunpack.c.h.b16 %v253
    %v2544 = vunpack.c.l.b16 %v254
    %v2545 = vunpack.c.h.b16 %v254
    %v2546 = vunpack.c.l.b16 %v255
    %v2547 = vunpack.c.h.b16 %v255
    %v2548 = vunpack.c.l.b16 %v256
    %v2549 = vunpack.c.h.b16 %v256
    %v2550 = vunpack.c.l.b16 %v257
    %v2551 = vunpack.c.h.b16 %v257
    %v2552 = vunpack.c.l.b16 %v258
    %v2553 = vunpack.c.h.b16 %v258
    %v2554 = vunpack.c.l.b16 %v259
    %v2555 = vunpack.c.h.b16 %v259
    %v2556 = vunpack.c.l.b16 %v260
    %v2557 = vunpack.c.h.b16 %v260
    %v2558 = vunpack.c.l.b16 %v261
    %v2559 = vunpack.c.h.b16 %v261
    %v2560 = vunpack.c.l.b16 %v262
    %v2561 = vunpack.c.h.b16 %v262
    %v2562 = vunpack.c.l.b16 %v263
    %v2563 = vunpack.c.h.b16 %v263
    %v2564 = vunpack.c.l.b16 %v264
    %v2565 = vunpack.c.h.b16 %v264
    %v2566 = vunpack.c.l.b16 %v265
    %v2567 = vunpack.c.h.b16 %v265
    %v2568 = vunpack.c.l.b16 %v266
    %v2569 = vunpack.c.h.b16 %v266
    %v2570 = vunpack.c.l.b16 %v267
    %v2571 = vunpack.c.h.b16 %v267
    %v2572 = vunpack.c.l.b16 %v268
    %v2573 = vunpack.c.h.b16 %v268
    %v2574 = vunpack.c.l.b16 %v269
    %v2575 = vunpack.c.h.b16 %v269
    %v2576 = vunpack.c.l.b16 %v270
    %v2577 = vunpack.c.h.b16 %v270
    %v2578 = vunpack.c.l.b16 %v271
    %v2579 = vunpack.c.h.b16 %v271
    %v2580 = vunpack.c.l.b16 %v272
    %v2581 = vunpack.c.h.b16 %v272
    %v2582 = vunpack.c.l.b16 %v273
    %v2583 = vunpack.c.h.b16 %v273
    %v2584 = vunpack.c.l.b16 %v274
    %v2585 = vunpack.c.h.b16 %v274
    %v2586 = vunpack.c.l.b16 %v275
    %v2587 = vunpack.c.h.b16 %v275
    %v2588 = vunpack.c.l.b16 %v276
    %v2589 = vunpack.c.h.b16 %v276
    %v2590 = vunpack.c.l.b16 %v277
    %v2591 = vunpack.c.h.b16 %v277
    %v2592 = vunpack.c.l.b16 %v278
    %v2593 = vunpack.c.h.b16 %v278
    %v2594 = vunpack.c.l.b16 %v279
    %v2595 = vunpack.c.h.b16 %v279
    %v2596 = vunpack.c.l.b16 %v280
    %v2597 = vunpack.c.h.b16 %v280
    %v2598 = vunpack.c.l.b16 %v281
    %v2599 = vunpack.c.h.b16 %v281
    %v2600 = vunpack.c.l.b16 %v282
    %v2601 = vunpack.c.h.b16 %v282
    %v2602 = vunpack.c.l.b16 %v283
    %v2603 = vunpack.c.h.b16 %v283
    %v2604 = vunpack.c.l.b16 %v284
    %v2605 = vunpack.c.h.b16 %v284
    %v2606 = vunpack.c.l.b16 %v285
    %v2607 = vunpack.c.h.b16 %v285
    %v2608 = vunpack.c.l.b16 %v286
    %v2609 = vunpack.c.h.b16 %v286
    %v2610 = vunpack.c.l.b16 %v287
    %v2611 = vunpack.c.h.b16 %v287
    %v2612 = vunpack.c.l.b16 %v288
    %v2613 = vunpack.c.h.b16 %v288
    %v2614 = vunpack.c.l.b16 %v289
    %v2615 = vunpack.c.h.b16 %v289
    %v2616 = vunpack.c.l.b16 %v290
    %v2617 = vunpack.c.h.b16 %v290
    %v2618 = vunpack.c.l.b16 %v291
    %v2619 = vunpack.c.h.b16 %v291
    %v2620 = vunpack.c.l.b16 %v292
    %v2621 = vunpack.c.h.b16 %v292
    %v2622 = vunpack.c.l.b16 %v293
    %v2623 = vunpack.c.h.b16 %v293
    %v2624 = vunpack.c.l.b16 %v294
    %v2625 = vunpack.c.h.b16 %v294
    %v2626 = vunpack.c.l.b16 %v295
    %v2627 = vunpack.c.h.b16 %v295
    %v2628 = vunpack.c.l.b16 %v296
    %v2629 = vunpack.c.h.b16 %v296
    %v2630 = vunpack.c.l.b16 %v297
    %v2631 = vunpack.c.h.b16 %v297
    %v2632 = vunpack.c.l.b16 %v298
    %v2633 = vunpack.c.h.b16 %v298
    %v2634 = vunpack.c.l.b16 %v299
    %v2635 = vunpack.c.h.b16 %v299
    %v2636 = vunpack.c.l.b16 %v300
    %v2637 = vunpack.c.h.b16 %v300
    %v2638 = vunpack.c.l.b16 %v301
    %v2639 = vunpack.c.h.b16 %v301
    %v2640 = vunpack.c.l.b16 %v302
    %v2641 = vunpack.c.h.b16 %v302
    %v2642 = vunpack.c.l.b16 %v303
    %v2643 = vunpack.c.h.b16 %v303
    %v2644 = vunpack.c.l.b16 %v304
    %v2645 = vunpack.c.h.b16 %v304
    %v2646 = vunpack.c.l.b16 %v305
    %v2647 = vunpack.c.h.b16 %v305
    %v2648 = vunpack.c.l.b16 %v306
    %v2649 = vunpack.c.h.b16 %v306
    %v2650 = vunpack.c.l.b16 %v307
    %v2651 = vunpack.c.h.b16 %v307
    %v2652 = vunpack.c.l.b16 %v308
    %v2653 = vunpack.c.h.b16 %v308
    %v2654 = vunpack.c.l.b16 %v309
    %v2655 = vunpack.c.h.b16 %v309
    %v2656 = vunpack.c.l.b16 %v310
    %v2657 = vunpack.c.h.b16 %v310
    %v2658 = vunpack.c.l.b16 %v311
    %v2659 = vunpack.c.h.b16 %v311
    %v2660 = vunpack.c.l.b16 %v312
    %v2661 = vunpack.c.h.b16 %v312
    %v2662 = vunpack.c.l.b16 %v313
    %v2663 = vunpack.c.h.b16 %v313
    %v2664 = vunpack.c.l.b16 %v314
    %v2665 = vunpack.c.h.b16 %v314
    %v2666 = vunpack.c.l.b16 %v315
    %v2667 = vunpack.c.h.b16 %v315
    %v2668 = vunpack.c.l.b16 %v316
    %v2669 = vunpack.c.h.b16 %v316
    %v2670 = vunpack.c.l.b16 %v317
    %v2671 = vunpack.c.h.b16 %v317
    %v2672 = vunpack.c.l.b16 %v318
    %v2673 = vunpack.c.h.b16 %v318
    %v2674 = vunpack.c.l.b16 %v319
    %v2675 = vunpack.c.h.b16 %v319
    %v2676 = vunpack.c.l.b16 %v320
    %v2677 = vunpack.c.h.b16 %v320
    %v2678 = vunpack.c.l.b16 %v321
    %v2679 = vunpack.c.h.b16 %v321
    %v2680 = vunpack.c.l.b16 %v322
    %v2681 = vunpack.c.h.b16 %v322
    %v2682 = vunpack.c.l.b16 %v323
    %v2683 = vunpack.c.h.b16 %v323
    %v2684 = vunpack.c.l.b16 %v324
    %v2685 = vunpack.c.h.b16 %v324
    %v2686 = vunpack.c.l.b16 %v325
    %v2687 = vunpack.c.h.b16 %v325
    %v2688 = vunpack.c.l.b16 %v326
    %v2689 = vunpack.c.h.b16 %v326
    %v2690 = vunpack.c.l.b16 %v327
    %v2691 = vunpack.c.h.b16 %v327
    %v2692 = vunpack.c.l.b16 %v328
    %v2693 = vunpack.c.h.b16 %v328
    %v2694 = vunpack.c.l.b16 %v329
    %v2695 = vunpack.c.h.b16 %v329
    %v2696 = vunpack.c.l.b16 %v330
    %v2697 = vunpack.c.h.b16 %v330
    %v2698 = vunpack.c.l.b16 %v331
    %v2699 = vunpack.c.h.b16 %v331
    %v2700 = vunpack.c.l.b16 %v332
    %v2701 = vunpack.c.h.b16 %v332
    %v2702 = vunpack.c.l.b16 %v333
    %v2703 = vunpack.c.h.b16 %v333
    %v2704 = vunpack.c.l.b16 %v334
    %v2705 = vunpack.c.h.b16 %v334
    %v2706 = vunpack.c.l.b16 %v335
    %v2707 = vunpack.c.h.b16 %v335
    %v2708 = vunpack.c.l.b16 %v336
    %v2709 = vunpack.c.h.b16 %v336
    %v2710 = vunpack.c.l.b16 %v337
    %v2711 = vunpack.c.h.b16 %v337
    %v2712 = vunpack.c.l.b16 %v338
    %v2713 = vunpack.c.h.b16 %v338
    %v2714 = vunpack.c.l.b16 %v339
    %v2715 = vunpack.c.h.b16 %v339
    %v2716 = vunpack.c.l.b16 %v340
    %v2717 = vunpack.c.h.b16 %v340
    %v2718 = vunpack.c.l.b16 %v341
    %v2719 = vunpack.c.h.b16 %v341
    %v2720 = vunpack.c.l.b16 %v342
    %v2721 = vunpack.c.h.b16 %v342
    %v2722 = vunpack.c.l.b16 %v343
    %v2723 = vunpack.c.h.b16 %v343
    %v2724 = vunpack.c.l.b16 %v344
    %v2725 = vunpack.c.h.b16 %v344
    %v2726 = vunpack.c.l.b16 %v345
    %v2727 = vunpack.c.h.b16 %v345
    %v2728 = vunpack.c.l.b16 %v346
    %v2729 = vunpack.c.h.b16 %v346
    %v2730 = vunpack.c.l.b16 %v347
    %v2731 = vunpack.c.h.b16 %v347
    %v2732 = vunpack.c.l.b16 %v348
    %v2733 = vunpack.c.h.b16 %v348
    %v2734 = vunpack.c.l.b16 %v349
    %v2735 = vunpack.c.h.b16 %v349
    %v2736 = vunpack.c.l.b16 %v350
    %v2737 = vunpack.c.h.b16 %v350
    %v2738 = vunpack.c.l.b16 %v351
    %v2739 = vunpack.c.h.b16 %v351
    %v2740 = vunpack.c.l.b16 %v352
    %v2741 = vunpack.c.h.b16 %v352
    %v2742 = vunpack.c.l.b16 %v353
    %v2743 = vunpack.c.h.b16 %v353
    %v2744 = vunpack.c.l.b16 %v354
    %v2745 = vunpack.c.h.b16 %v354
    %v2746 = vunpack.c.l.b16 %v355
    %v2747 = vunpack.c.h.b16 %v355
    %v2748 = vunpack.c.l.b16 %v356
    %v2749 = vunpack.c.h.b16 %v356
    %v2750 = vunpack.c.l.b16 %v357
    %v2751 = vunpack.c.h.b16 %v357
    %v2752 = vunpack.c.l.b16 %v358
    %v2753 = vunpack.c.h.b16 %v358
    %v2754 = vunpack.c.l.b16 %v359
    %v2755 = vunpack.c.h.b16 %v359
    %v2756 = vunpack.c.l.b16 %v360
    %v2757 = vunpack.c.h.b16 %v360
    %v2758 = vunpack.c.l.b16 %v361
    %v2759 = vunpack.c.h.b16 %v361
    %v2760 = vunpack.c.l.b16 %v362
    %v2761 = vunpack.c.h.b16 %v362
    %v2762 = vunpack.c.l.b16 %v363
    %v2763 = vunpack.c.h.b16 %v363
    %v2764 = vunpack.c.l.b16 %v364
    %v2765 = vunpack.c.h.b16 %v364
    %v2766 = vunpack.c.l.b16 %v365
    %v2767 = vunpack.c.h.b16 %v365
    %v2768 = vunpack.c.l.b16 %v366
    %v2769 = vunpack.c.h.b16 %v366
    %v2770 = vunpack.c.l.b16 %v367
    %v2771 = vunpack.c.h.b16 %v367
    %v2772 = vunpack.c.l.b16 %v368
    %v2773 = vunpack.c.h.b16 %v368
    %v2774 = vunpack.c.l.b16 %v369
    %v2775 = vunpack.c.h.b16 %v369
    %v2776 = vunpack.c.l.b16 %v370
    %v2777 = vunpack.c.h.b16 %v370
    %v2778 = vunpack.c.l.b16 %v371
    %v2779 = vunpack.c.h.b16 %v371
    %v2780 = vunpack.c.l.b16 %v372
    %v2781 = vunpack.c.h.b16 %v372
    %v2782 = vunpack.c.l.b16 %v373
    %v2783 = vunpack.c.h.b16 %v373
    %v2784 = vunpack.c.l.b16 %v374
    %v2785 = vunpack.c.h.b16 %v374
    %v2786 = vunpack.c.l.b16 %v375
    %v2787 = vunpack.c.h.b16 %v375
    %v2788 = vunpack.c.l.b16 %v376
    %v2789 = vunpack.c.h.b16 %v376
    %v2790 = vunpack.c.l.b16 %v377
    %v2791 = vunpack.c.h.b16 %v377
    %v2792 = vunpack.c.l.b16 %v378
    %v2793 = vunpack.c.h.b16 %v378
    %v2794 = vunpack.c.l.b16 %v379
    %v2795 = vunpack.c.h.b16 %v379
    %v2796 = vunpack.c.l.b16 %v380
    %v2797 = vunpack.c.h.b16 %v380
    %v2798 = vunpack.c.l.b16 %v381
    %v2799 = vunpack.c.h.b16 %v381
    %v2800 = vunpack.c.l.b16 %v382
    %v2801 = vunpack.c.h.b16 %v382
    %v2802 = vunpack.c.l.b16 %v383
    %v2803 = vunpack.c.h.b16 %v383
    %v2804 = vunpack.c.l.b16 %v384
    %v2805 = vunpack.c.h.b16 %v384
    %v2806 = vunpack.c.l.b16 %v385
    %v2807 = vunpack.c.h.b16 %v385
    %v2808 = vunpack.c.l.b16 %v386
    %v2809 = vunpack.c.h.b16 %v386
    %v2810 = vunpack.c.l.b16 %v387
    %v2811 = vunpack.c.h.b16 %v387
    %v2812 = vunpack.c.l.b16 %v388
    %v2813 = vunpack.c.h.b16 %v388
    %v2814 = vunpack.c.l.b16 %v389
    %v2815 = vunpack.c.h.b16 %v389
    %v2816 = vunpack.c.l.b16 %v390
    %v2817 = vunpack.c.h.b16 %v390
    %v2818 = vunpack.c.l.b16 %v391
    %v2819 = vunpack.c.h.b16 %v391
    %v2820 = vunpack.c.l.b16 %v392
    %v2821 = vunpack.c.h.b16 %v392
    %v2822 = vunpack.c.l.b16 %v393
    %v2823 = vunpack.c.h.b16 %v393
    %v2824 = vunpack.c.l.b16 %v394
    %v2825 = vunpack.c.h.b16 %v394
    %v2826 = vunpack.c.l.b16 %v395
    %v2827 = vunpack.c.h.b16 %v395
    %v2828 = vunpack.c.l.b16 %v396
    %v2829 = vunpack.c.h.b16 %v396
    %v2830 = vunpack.c.l.b16 %v397
    %v2831 = vunpack.c.h.b16 %v397
    %v2832 = vunpack.c.l.b16 %v398
    %v2833 = vunpack.c.h.b16 %v398
    %v2834 = vunpack.c.l.b16 %v399
    %v2835 = vunpack.c.h.b16 %v399
    %v2836 = vunpack.c.l.b16 %v400
    %v2837 = vunpack.c.h.b16 %v400
    %v2838 = vunpack.c.l.b16 %v401
    %v2839 = vunpack.c.h.b16 %v401
    %v2840 = vunpack.c.l.b16 %v402
    %v2841 = vunpack.c.h.b16 %v402
    %v2842 = vunpack.c.l.b16 %v403
    %v2843 = vunpack.c.h.b16 %v403
    %v2844 = vunpack.c.l.b16 %v404
    %v2845 = vunpack.c.h.b16 %v404
    %v2846 = vunpack.c.l.b16 %v405
    %v2847 = vunpack.c.h.b16 %v405
    %v2848 = vunpack.c.l.b16 %v406
    %v2849 = vunpack.c.h.b16 %v406
    %v2850 = vunpack.c.l.b16 %v407
    %v2851 = vunpack.c.h.b16 %v407
    %v2852 = vunpack.c.l.b16 %v408
    %v2853 = vunpack.c.h.b16 %v408
    %v2854 = vunpack.c.l.b16 %v409
    %v2855 = vunpack.c.h.b16 %v409
    %v2856 = vunpack.c.l.b16 %v410
    %v2857 = vunpack.c.h.b16 %v410
    %v2858 = vunpack.c.l.b16 %v411
    %v2859 = vunpack.c.h.b16 %v411
    %v2860 = vunpack.c.l.b16 %v412
    %v2861 = vunpack.c.h.b16 %v412
    %v2862 = vunpack.c.l.b16 %v413
    %v2863 = vunpack.c.h.b16 %v413
    %v2864 = vunpack.c.l.b16 %v414
    %v2865 = vunpack.c.h.b16 %v414
    %v2866 = vunpack.c.l.b16 %v415
    %v2867 = vunpack.c.h.b16 %v415
    %v2868 = vunpack.c.l.b16 %v416
    %v2869 = vunpack.c.h.b16 %v416
    %v2870 = vunpack.c.l.b16 %v417
    %v2871 = vunpack.c.h.b16 %v417
    %v2872 = vunpack.c.l.b16 %v418
    %v2873 = vunpack.c.h.b16 %v418
    %v2874 = vunpack.c.l.b16 %v419
    %v2875 = vunpack.c.h.b16 %v419
    %v2876 = vunpack.c.l.b16 %v420
    %v2877 = vunpack.c.h.b16 %v420
    %v2878 = vunpack.c.l.b16 %v421
    %v2879 = vunpack.c.h.b16 %v421
    %v2880 = vunpack.c.l.b16 %v422
    %v2881 = vunpack.c.h.b16 %v422
    %v2882 = vunpack.c.l.b16 %v423
    %v2883 = vunpack.c.h.b16 %v423
    %v2884 = vunpack.c.l.b16 %v424
    %v2885 = vunpack.c.h.b16 %v424
    %v2886 = vunpack.c.l.b16 %v425
    %v2887 = vunpack.c.h.b16 %v425
    %v2888 = vunpack.c.l.b16 %v426
    %v2889 = vunpack.c.h.b16 %v426
    %v2890 = vunpack.c.l.b16 %v427
    %v2891 = vunpack.c.h.b16 %v427
    %v2892 = vunpack.c.l.b16 %v428
    %v2893 = vunpack.c.h.b16 %v428
    %v2894 = vunpack.c.l.b16 %v429
    %v2895 = vunpack.c.h.b16 %v429
    %v2896 = vunpack.c.l.b16 %v430
    %v2897 = vunpack.c.h.b16 %v430
    %v2898 = vunpack.c.l.b16 %v431
    %v2899 = vunpack.c.h.b16 %v431
    %v2900 = vunpack.c.l.b16 %v432
    %v2901 = vunpack.c.h.b16 %v432
    %v2902 = vunpack.c.l.b16 %v433
    %v2903 = vunpack.c.h.b16 %v433
    %v2904 = vunpack.c.l.b16 %v434
    %v2905 = vunpack.c.h.b16 %v434
    %v2906 = vunpack.c.l.b16 %v435
    %v2907 = vunpack.c.h.b16 %v435
    %v2908 = vunpack.c.l.b16 %v436
    %v2909 = vunpack.c.h.b16 %v436
    %v2910 = vunpack.c.l.b16 %v437
    %v2911 = vunpack.c.h.b16 %v437
    %v2912 = vunpack.c.l.b16 %v438
    %v2913 = vunpack.c.h.b16 %v438
    %v2914 = vunpack.c.l.b16 %v439
    %v2915 = vunpack.c.h.b16 %v439
    %v2916 = vunpack.c.l.b16 %v440
    %v2917 = vunpack.c.h.b16 %v440
    %v2918 = vunpack.c.l.b16 %v441
    %v2919 = vunpack.c.h.b16 %v441
    %v2920 = vunpack.c.l.b16 %v442
    %v2921 = vunpack.c.h.b16 %v442
    %v2922 = vunpack.c.l.b16 %v443
    %v2923 = vunpack.c.h.b16 %v443
    %v2924 = vunpack.c.l.b16 %v444
    %v2925 = vunpack.c.h.b16 %v444
    %v2926 = vunpack.c.l.b16 %v445
    %v2927 = vunpack.c.h.b16 %v445
    %v2928 = vunpack.c.l.b16 %v446
    %v2929 = vunpack.c.h.b16 %v446
    %v2930 = vunpack.c.l.b16 %v447
    %v2931 = vunpack.c.h.b16 %v447
    %v2932 = vunpack.c.l.b16 %v448
    %v2933 = vunpack.c.h.b16 %v448
    %v2934 = vunpack.c.l.b16 %v449
    %v2935 = vunpack.c.h.b16 %v449
    %v2936 = vunpack.c.l.b16 %v450
    %v2937 = vunpack.c.h.b16 %v450
    %v2938 = vunpack.c.l.b16 %v451
    %v2939 = vunpack.c.h.b16 %v451
    %v2940 = vunpack.c.l.b16 %v452
    %v2941 = vunpack.c.h.b16 %v452
    %v2942 = vunpack.c.l.b16 %v453
    %v2943 = vunpack.c.h.b16 %v453
    %v2944 = vunpack.c.l.b16 %v454
    %v2945 = vunpack.c.h.b16 %v454
    %v2946 = vunpack.c.l.b16 %v455
    %v2947 = vunpack.c.h.b16 %v455
    %v2948 = vunpack.c.l.b16 %v456
    %v2949 = vunpack.c.h.b16 %v456
    %v2950 = vunpack.c.l.b16 %v457
    %v2951 = vunpack.c.h.b16 %v457
    %v2952 = vunpack.c.l.b16 %v458
    %v2953 = vunpack.c.h.b16 %v458
    %v2954 = vunpack.c.l.b16 %v459
    %v2955 = vunpack.c.h.b16 %v459
    %v2956 = vunpack.c.l.b16 %v460
    %v2957 = vunpack.c.h.b16 %v460
    %v2958 = vunpack.c.l.b16 %v461
    %v2959 = vunpack.c.h.b16 %v461
    %v2960 = vunpack.c.l.b16 %v462
    %v2961 = vunpack.c.h.b16 %v462
    %v2962 = vunpack.c.l.b16 %v463
    %v2963 = vunpack.c.h.b16 %v463
    %v2964 = vunpack.c.l.b16 %v464
    %v2965 = vunpack.c.h.b16 %v464
    %v2966 = vunpack.c.l.b16 %v465
    %v2967 = vunpack.c.h.b16 %v465
    %v2968 = vunpack.c.l.b16 %v466
    %v2969 = vunpack.c.h.b16 %v466
    %v2970 = vunpack.c.l.b16 %v467
    %v2971 = vunpack.c.h.b16 %v467
    %v2972 = vunpack.c.l.b16 %v468
    %v2973 = vunpack.c.h.b16 %v468
    %v2974 = vunpack.c.l.b16 %v469
    %v2975 = vunpack.c.h.b16 %v469
    %v2976 = vunpack.c.l.b16 %v470
    %v2977 = vunpack.c.h.b16 %v470
    %v2978 = vunpack.c.l.b16 %v471
    %v2979 = vunpack.c.h.b16 %v471
    %v2980 = vunpack.c.l.b16 %v472
    %v2981 = vunpack.c.h.b16 %v472
    %v2982 = vunpack.c.l.b16 %v473
    %v2983 = vunpack.c.h.b16 %v473
    %v2984 = vunpack.c.l.b16 %v474
    %v2985 = vunpack.c.h.b16 %v474
    %v2986 = vunpack.c.l.b16 %v475
    %v2987 = vunpack.c.h.b16 %v475
    %v2988 = vunpack.c.l.b16 %v476
    %v2989 = vunpack.c.h.b16 %v476
    %v2990 = vunpack.c.l.b16 %v477
    %v2991 = vunpack.c.h.b16 %v477
    %v2992 = vunpack.c.l.b16 %v478
    %v2993 = vunpack.c.h.b16 %v478
    %v2994 = vunpack.c.l.b16 %v479
    %v2995 = vunpack.c.h.b16 %v479
    %v2996 = vunpack.c.l.b16 %v480
    %v2997 = vunpack.c.h.b16 %v480
    %v2998 = vunpack.c.l.b16 %v481
    %v2999 = vunpack.c.h.b16 %v481
    %v3000 = vunpack.c.l.b16 %v482
    %v3001 = vunpack.c.h.b16 %v482
    %v3002 = vunpack.c.l.b16 %v483
    %v3003 = vunpack.c.h.b16 %v483
    %v3004 = vunpack.c.l.b16 %v484
    %v3005 = vunpack.c.h.b16 %v484
    %v3006 = vunpack.c.l.b16 %v485
    %v3007 = vunpack.c.h.b16 %v485
    %v3008 = vunpack.c.l.b16 %v486
    %v3009 = vunpack.c.h.b16 %v486
    %v3010 = vunpack.c.l.b16 %v487
    %v3011 = vunpack.c.h.b16 %v487
    %v3012 = vunpack.c.l.b16 %v488
    %v3013 = vunpack.c.h.b16 %v488
    %v3014 = vunpack.c.l.b16 %v489
    %v3015 = vunpack.c.h.b16 %v489
    %v3016 = vunpack.c.l.b16 %v490
    %v3017 = vunpack.c.h.b16 %v490
    %v3018 = vunpack.c.l.b16 %v491
    %v3019 = vunpack.c.h.b16 %v491
    %v3020 = vunpack.c.l.b16 %v492
    %v3021 = vunpack.c.h.b16 %v492
    %v3022 = vunpack.c.l.b16 %v493
    %v3023 = vunpack.c.h.b16 %v493
    %v3024 = vunpack.c.l.b16 %v494
    %v3025 = vunpack.c.h.b16 %v494
    %v3026 = vunpack.c.l.b16 %v495
    %v3027 = vunpack.c.h.b16 %v495
    %v3028 = vunpack.c.l.b16 %v496
    %v3029 = vunpack.c.h.b16 %v496
    %v3030 = vunpack.c.l.b16 %v497
    %v3031 = vunpack.c.h.b16 %v497
    %v3032 = vunpack.c.l.b16 %v498
    %v3033 = vunpack.c.h.b16 %v498
    %v3034 = vunpack.c.l.b16 %v499
    %v3035 = vunpack.c.h.b16 %v499
    %v3036 = vunpack.c.l.b16 %v500
    %v3037 = vunpack.c.h.b16 %v500
    %v3038 = vunpack.c.l.b16 %v501
    %v3039 = vunpack.c.h.b16 %v501
    %v3040 = vunpack.c.l.b16 %v502
    %v3041 = vunpack.c.h.b16 %v502
    %v3042 = vunpack.c.l.b16 %v503
    %v3043 = vunpack.c.h.b16 %v503
    %v3044 = vunpack.c.l.b16 %v504
    %v3045 = vunpack.c.h.b16 %v504
    %v3046 = vunpack.c.l.b16 %v505
    %v3047 = vunpack.c.h.b16 %v505
    %v3048 = vunpack.c.l.b16 %v506
    %v3049 = vunpack.c.h.b16 %v506
    %v3050 = vunpack.c.l.b16 %v507
    %v3051 = vunpack.c.h.b16 %v507
    %v3052 = vunpack.c.l.b16 %v508
    %v3053 = vunpack.c.h.b16 %v508
    %v3054 = vunpack.c.l.b16 %v509
    %v3055 = vunpack.c.h.b16 %v509
    %v3056 = vunpack.c.l.b16 %v510
    %v3057 = vunpack.c.h.b16 %v510
    %v3058 = vunpack.c.l.b16 %v511
    %v3059 = vunpack.c.h.b16 %v511
    %v3060 = vunpack.c.l.b16 %v512
    %v3061 = vunpack.c.h.b16 %v512
    %v3062 = vunpack.c.l.b16 %v513
    %v3063 = vunpack.c.h.b16 %v513
    %v3064 = vunpack.c.l.b16 %v514
    %v3065 = vunpack.c.h.b16 %v514
    %v3066 = vunpack.c.l.b16 %v515
    %v3067 = vunpack.c.h.b16 %v515
    %v3068 = vunpack.c.l.b16 %v516
    %v3069 = vunpack.c.h.b16 %v516
    %v3070 = vunpack.c.l.b16 %v517
    %v3071 = vunpack.c.h.b16 %v517
    %v3072 = vunpack.c.l.b16 %v518
    %v3073 = vunpack.c.h.b16 %v518
    %v3074 = vunpack.c.l.b16 %v519
    %v3075 = vunpack.c.h.b16 %v519
    %v3076 = vunpack.c.l.b16 %v520
    %v3077 = vunpack.c.h.b16 %v520
    %v3078 = vunpack.c.l.b16 %v521
    %v3079 = vunpack.c.h.b16 %v521
    %v3080 = vunpack.c.l.b16 %v522
    %v3081 = vunpack.c.h.b16 %v522
    %v3082 = vunpack.c.l.b16 %v523
    %v3083 = vunpack.c.h.b16 %v523
    %v3084 = vunpack.c.l.b16 %v524
    %v3085 = vunpack.c.h.b16 %v524
    %v3086 = vunpack.c.l.b16 %v525
    %v3087 = vunpack.c.h.b16 %v525
    %v3088 = vunpack.c.l.b16 %v526
    %v3089 = vunpack.c.h.b16 %v526
    %v3090 = vunpack.c.l.b16 %v527
    %v3091 = vunpack.c.h.b16 %v527
    %v3092 = vunpack.c.l.b16 %v528
    %v3093 = vunpack.c.h.b16 %v528
    %v3094 = vunpack.c.l.b16 %v529
    %v3095 = vunpack.c.h.b16 %v529
    %v3096 = vunpack.c.l.b16 %v530
    %v3097 = vunpack.c.h.b16 %v530
    %v3098 = vunpack.c.l.b16 %v531
    %v3099 = vunpack.c.h.b16 %v531
    %v3100 = vunpack.c.l.b16 %v532
    %v3101 = vunpack.c.h.b16 %v532
    %v3102 = vunpack.c.l.b16 %v533
    %v3103 = vunpack.c.h.b16 %v533
    %v3104 = vunpack.c.l.b16 %v534
    %v3105 = vunpack.c.h.b16 %v534
    %v3106 = vunpack.c.l.b16 %v535
    %v3107 = vunpack.c.h.b16 %v535
    %v3108 = vunpack.c.l.b16 %v536
    %v3109 = vunpack.c.h.b16 %v536
    %v3110 = vunpack.c.l.b16 %v537
    %v3111 = vunpack.c.h.b16 %v537
    %v3112 = vunpack.c.l.b16 %v538
    %v3113 = vunpack.c.h.b16 %v538
    %v3114 = vunpack.c.l.b16 %v539
    %v3115 = vunpack.c.h.b16 %v539
    %v3116 = vunpack.c.l.b16 %v540
    %v3117 = vunpack.c.h.b16 %v540
    %v3118 = vunpack.c.l.b16 %v541
    %v3119 = vunpack.c.h.b16 %v541
    %v3120 = vunpack.c.l.b16 %v542
    %v3121 = vunpack.c.h.b16 %v542
    %v3122 = vunpack.c.l.b16 %v543
    %v3123 = vunpack.c.h.b16 %v543
    %v3124 = vunpack.c.l.b16 %v544
    %v3125 = vunpack.c.h.b16 %v544
    %v3126 = vunpack.c.l.b16 %v545
    %v3127 = vunpack.c.h.b16 %v545
    %v3128 = vunpack.c.l.b16 %v546
    %v3129 = vunpack.c.h.b16 %v546
    %v3130 = vunpack.c.l.b16 %v547
    %v3131 = vunpack.c.h.b16 %v547
    %v3132 = vunpack.c.l.b16 %v548
    %v3133 = vunpack.c.h.b16 %v548
    %v3134 = vunpack.c.l.b16 %v549
    %v3135 = vunpack.c.h.b16 %v549
    %v3136 = vunpack.c.l.b16 %v550
    %v3137 = vunpack.c.h.b16 %v550
    %v3138 = vunpack.c.l.b16 %v551
    %v3139 = vunpack.c.h.b16 %v551
    %v3140 = vunpack.c.l.b16 %v552
    %v3141 = vunpack.c.h.b16 %v552
    %v3142 = vunpack.c.l.b16 %v553
    %v3143 = vunpack.c.h.b16 %v553
    %v3144 = vunpack.c.l.b16 %v554
    %v3145 = vunpack.c.h.b16 %v554
    %v3146 = vunpack.c.l.b16 %v555
    %v3147 = vunpack.c.h.b16 %v555
    %v3148 = vunpack.c.l.b16 %v556
    %v3149 = vunpack.c.h.b16 %v556
    %v3150 = vunpack.c.l.b16 %v557
    %v3151 = vunpack.c.h.b16 %v557
    %v3152 = vunpack.c.l.b16 %v558
    %v3153 = vunpack.c.h.b16 %v558
    %v3154 = vunpack.c.l.b16 %v559
    %v3155 = vunpack.c.h.b16 %v559
    %v3156 = vunpack.c.l.b16 %v560
    %v3157 = vunpack.c.h.b16 %v560
    %v3158 = vunpack.c.l.b16 %v561
    %v3159 = vunpack.c.h.b16 %v561
    %v3160 = vunpack.c.l.b16 %v562
    %v3161 = vunpack.c.h.b16 %v562
    %v3162 = vunpack.c.l.b16 %v563
    %v3163 = vunpack.c.h.b16 %v563
    %v3164 = vunpack.c.l.b16 %v564
    %v3165 = vunpack.c.h.b16 %v564
    %v3166 = vunpack.c.l.b16 %v565
    %v3167 = vunpack.c.h.b16 %v565
    %v3168 = vunpack.c.l.b16 %v566
    %v3169 = vunpack.c.h.b16 %v566
    %v3170 = vunpack.c.l.b16 %v567
    %v3171 = vunpack.c.h.b16 %v567
    %v3172 = vunpack.c.l.b16 %v568
    %v3173 = vunpack.c.h.b16 %v568
    %v3174 = vunpack.c.l.b16 %v569
    %v3175 = vunpack.c.h.b16 %v569
    %v3176 = vunpack.c.l.b16 %v570
    %v3177 = vunpack.c.h.b16 %v570
    %v3178 = vunpack.c.l.b16 %v571
    %v3179 = vunpack.c.h.b16 %v571
    %v3180 = vunpack.c.l.b16 %v572
    %v3181 = vunpack.c.h.b16 %v572
    %v3182 = vunpack.c.l.b16 %v573
    %v3183 = vunpack.c.h.b16 %v573
    %v3184 = vunpack.c.l.b16 %v574
    %v3185 = vunpack.c.h.b16 %v574
    %v3186 = vunpack.c.l.b16 %v575
    %v3187 = vunpack.c.h.b16 %v575
    %v3188 = vunpack.c.l.b16 %v576
    %v3189 = vunpack.c.h.b16 %v576
    %v3190 = vunpack.c.l.b16 %v577
    %v3191 = vunpack.c.h.b16 %v577
    %v3192 = vunpack.c.l.b16 %v578
    %v3193 = vunpack.c.h.b16 %v578
    %v3194 = vunpack.c.l.b16 %v579
    %v3195 = vunpack.c.h.b16 %v579
    %v3196 = vunpack.c.l.b16 %v580
    %v3197 = vunpack.c.h.b16 %v580
    %v3198 = vunpack.c.l.b16 %v581
    %v3199 = vunpack.c.h.b16 %v581
    %v3200 = vunpack.c.l.b16 %v582
    %v3201 = vunpack.c.h.b16 %v582
    %v3202 = vunpack.c.l.b16 %v583
    %v3203 = vunpack.c.h.b16 %v583
    %v3204 = vunpack.c.l.b16 %v584
    %v3205 = vunpack.c.h.b16 %v584
    %v3206 = vunpack.c.l.b16 %v585
    %v3207 = vunpack.c.h.b16 %v585
    %v3208 = vunpack.c.l.b16 %v586
    %v3209 = vunpack.c.h.b16 %v586
    %v3210 = vunpack.c.l.b16 %v587
    %v3211 = vunpack.c.h.b16 %v587
    %v3212 = vunpack.c.l.b16 %v588
    %v3213 = vunpack.c.h.b16 %v588
    %v3214 = vunpack.c.l.b16 %v589
    %v3215 = vunpack.c.h.b16 %v589
    %v3216 = vunpack.c.l.b16 %v590
    %v3217 = vunpack.c.h.b16 %v590
    %v3218 = vunpack.c.l.b16 %v591
    %v3219 = vunpack.c.h.b16 %v591
    %v3220 = vunpack.c.l.b16 %v592
    %v3221 = vunpack.c.h.b16 %v592
    %v3222 = vunpack.c.l.b16 %v593
    %v3223 = vunpack.c.h.b16 %v593
    %v3224 = vunpack.c.l.b16 %v594
    %v3225 = vunpack.c.h.b16 %v594
    %v3226 = vunpack.c.l.b16 %v595
    %v3227 = vunpack.c.h.b16 %v595
    %v3228 = vunpack.c.l.b16 %v596
    %v3229 = vunpack.c.h.b16 %v596
    %v3230 = vunpack.c.l.b16 %v597
    %v3231 = vunpack.c.h.b16 %v597
    %v3232 = vunpack.c.l.b16 %v598
    %v3233 = vunpack.c.h.b16 %v598
    %v3234 = vunpack.c.l.b16 %v599
    %v3235 = vunpack.c.h.b16 %v599
    %v3236 = vunpack.c.l.b16 %v600
    %v3237 = vunpack.c.h.b16 %v600
    %v3238 = vunpack.c.l.b16 %v601
    %v3239 = vunpack.c.h.b16 %v601
    %v3240 = vunpack.c.l.b16 %v602
    %v3241 = vunpack.c.h.b16 %v602
    %v3242 = vunpack.c.l.b16 %v603
    %v3243 = vunpack.c.h.b16 %v603
    %v3244 = vunpack.c.l.b16 %v604
    %v3245 = vunpack.c.h.b16 %v604
    %v3246 = vunpack.c.l.b16 %v605
    %v3247 = vunpack.c.h.b16 %v605
    %v3248 = vunpack.c.l.b16 %v606
    %v3249 = vunpack.c.h.b16 %v606
    %v3250 = vunpack.c.l.b16 %v607
    %v3251 = vunpack.c.h.b16 %v607
    %v3252 = vunpack.c.l.b16 %v608
    %v3253 = vunpack.c.h.b16 %v608
    %v3254 = vunpack.c.l.b16 %v609
    %v3255 = vunpack.c.h.b16 %v609
    %v3256 = vunpack.c.l.b16 %v610
    %v3257 = vunpack.c.h.b16 %v610
    %v3258 = vunpack.c.l.b16 %v611
    %v3259 = vunpack.c.h.b16 %v611
    %v3260 = vunpack.c.l.b16 %v612
    %v3261 = vunpack.c.h.b16 %v612
    %v3262 = vunpack.c.l.b16 %v613
    %v3263 = vunpack.c.h.b16 %v613
    %v3264 = vunpack.c.l.b16 %v614
    %v3265 = vunpack.c.h.b16 %v614
    %v3266 = vunpack.c.l.b16 %v615
    %v3267 = vunpack.c.h.b16 %v615
    %v3268 = vunpack.c.l.b16 %v616
    %v3269 = vunpack.c.h.b16 %v616
    %v3270 = vunpack.c.l.b16 %v617
    %v3271 = vunpack.c.h.b16 %v617
    %v3272 = vunpack.c.l.b16 %v618
    %v3273 = vunpack.c.h.b16 %v618
    %v3274 = vunpack.c.l.b16 %v619
    %v3275 = vunpack.c.h.b16 %v619
    %v3276 = vunpack.c.l.b16 %v620
    %v3277 = vunpack.c.h.b16 %v620
    %v3278 = vunpack.c.l.b16 %v621
    %v3279 = vunpack.c.h.b16 %v621
    %v3280 = vunpack.c.l.b16 %v622
    %v3281 = vunpack.c.h.b16 %v622
    %v3282 = vunpack.c.l.b16 %v623
    %v3283 = vunpack.c.h.b16 %v623
    %v3284 = vunpack.c.l.b16 %v624
    %v3285 = vunpack.c.h.b16 %v624
    %v3286 = vunpack.c.l.b16 %v625
    %v3287 = vunpack.c.h.b16 %v625
    %v3288 = vunpack.c.l.b16 %v626
    %v3289 = vunpack.c.h.b16 %v626
    %v3290 = vunpack.c.l.b16 %v627
    %v3291 = vunpack.c.h.b16 %v627
    %v3292 = vunpack.c.l.b16 %v628
    %v3293 = vunpack.c.h.b16 %v628
    %v3294 = vunpack.c.l.b16 %v629
    %v3295 = vunpack.c.h.b16 %v629
    %v3296 = vunpack.c.l.b16 %v630
    %v3297 = vunpack.c.h.b16 %v630
    %v3298 = vunpack.c.l.b16 %v631
    %v3299 = vunpack.c.h.b16 %v631
    %v3300 = vunpack.c.l.b16 %v632
    %v3301 = vunpack.c.h.b16 %v632
    %v3302 = vunpack.c.l.b16 %v633
    %v3303 = vunpack.c.h.b16 %v633
    %v3304 = vunpack.c.l.b16 %v634
    %v3305 = vunpack.c.h.b16 %v634
    %v3306 = vunpack.c.l.b16 %v635
    %v3307 = vunpack.c.h.b16 %v635
    %v3308 = vunpack.c.l.b16 %v636
    %v3309 = vunpack.c.h.b16 %v636
    %v3310 = vunpack.c.l.b16 %v637
    %v3311 = vunpack.c.h.b16 %v637
    %v3312 = vunpack.c.l.b16 %v638
    %v3313 = vunpack.c.h.b16 %v638
    %v3314 = vunpack.c.l.b16 %v639
    %v3315 = vunpack.c.h.b16 %v639
    %v3316 = vunpack.c.l.b16 %v640
    %v3317 = vunpack.c.h.b16 %v640
    %v3318 = vunpack.c.l.b16 %v641
    %v3319 = vunpack.c.h.b16 %v641
    %v3320 = vunpack.c.l.b16 %v642
    %v3321 = vunpack.c.h.b16 %v642
    %v3322 = vunpack.c.l.b16 %v643
    %v3323 = vunpack.c.h.b16 %v643
    %v3324 = vunpack.c.l.b16 %v644
    %v3325 = vunpack.c.h.b16 %v644
    %v3326 = vunpack.c.l.b16 %v645
    %v3327 = vunpack.c.h.b16 %v645
    %v3328 = vunpack.c.l.b16 %v646
    %v3329 = vunpack.c.h.b16 %v646
    %v3330 = vunpack.c.l.b16 %v647
    %v3331 = vunpack.c.h.b16 %v647
    %v3332 = vunpack.c.l.b16 %v648
    %v3333 = vunpack.c.h.b16 %v648
    %v3334 = vunpack.c.l.b16 %v649
    %v3335 = vunpack.c.h.b16 %v649
    %v3336 = vunpack.c.l.b16 %v650
    %v3337 = vunpack.c.h.b16 %v650
    %v3338 = vunpack.c.l.b16 %v651
    %v3339 = vunpack.c.h.b16 %v651
    %v3340 = vunpack.c.l.b16 %v652
    %v3341 = vunpack.c.h.b16 %v652
    %v3342 = vunpack.c.l.b16 %v653
    %v3343 = vunpack.c.h.b16 %v653
    %v3344 = vunpack.c.l.b16 %v654
    %v3345 = vunpack.c.h.b16 %v654
    %v3346 = vunpack.c.l.b16 %v655
    %v3347 = vunpack.c.h.b16 %v655
    %v3348 = vunpack.c.l.b16 %v656
    %v3349 = vunpack.c.h.b16 %v656
    %v3350 = vunpack.c.l.b16 %v657
    %v3351 = vunpack.c.h.b16 %v657
    %v3352 = vunpack.c.l.b16 %v658
    %v3353 = vunpack.c.h.b16 %v658
    %v3354 = vunpack.c.l.b16 %v659
    %v3355 = vunpack.c.h.b16 %v659
    %v3356 = vunpack.c.l.b16 %v660
    %v3357 = vunpack.c.h.b16 %v660
    %v3358 = vunpack.c.l.b16 %v661
    %v3359 = vunpack.c.h.b16 %v661
    %v3360 = vunpack.c.l.b16 %v662
    %v3361 = vunpack.c.h.b16 %v662
    %v3362 = vunpack.c.l.b16 %v663
    %v3363 = vunpack.c.h.b16 %v663
    %v3364 = vunpack.c.l.b16 %v664
    %v3365 = vunpack.c.h.b16 %v664
    %v3366 = vunpack.c.l.b16 %v665
    %v3367 = vunpack.c.h.b16 %v665
    %v3368 = vunpack.c.l.b16 %v666
    %v3369 = vunpack.c.h.b16 %v666
    %v3370 = vunpack.c.l.b16 %v667
    %v3371 = vunpack.c.h.b16 %v667
    %v3372 = vunpack.c.l.b16 %v668
    %v3373 = vunpack.c.h.b16 %v668
    %v3374 = vunpack.c.l.b16 %v669
    %v3375 = vunpack.c.h.b16 %v669
    %v3376 = vunpack.c.l.b16 %v670
    %v3377 = vunpack.c.h.b16 %v670
    %v3378 = vunpack.c.l.b16 %v671
    %v3379 = vunpack.c.h.b16 %v671
    %v3380 = vunpack.c.l.b16 %v672
    %v3381 = vunpack.c.h.b16 %v672
    %v3382 = vunpack.c.l.b16 %v673
    %v3383 = vunpack.c.h.b16 %v673
    %v3384 = vunpack.c.l.b16 %v674
    %v3385 = vunpack.c.h.b16 %v674
    %v3386 = vunpack.c.l.b16 %v675
    %v3387 = vunpack.c.h.b16 %v675
    %v3388 = vunpack.c.l.b16 %v676
    %v3389 = vunpack.c.h.b16 %v676
    %v3390 = vunpack.c.l.b16 %v677
    %v3391 = vunpack.c.h.b16 %v677
    %v3392 = vunpack.c.l.b16 %v678
    %v3393 = vunpack.c.h.b16 %v678
    %v3394 = vunpack.c.l.b16 %v679
    %v3395 = vunpack.c.h.b16 %v679
    %v3396 = vunpack.c.l.b16 %v680
    %v3397 = vunpack.c.h.b16 %v680
    %v3398 = vunpack.c.l.b16 %v681
    %v3399 = vunpack.c.h.b16 %v681
    %v3400 = vunpack.c.l.b16 %v682
    %v3401 = vunpack.c.h.b16 %v682
    %v3402 = vunpack.c.l.b16 %v683
    %v3403 = vunpack.c.h.b16 %v683
    %v3404 = vunpack.c.l.b16 %v684
    %v3405 = vunpack.c.h.b16 %v684
    %v3406 = vunpack.c.l.b16 %v685
    %v3407 = vunpack.c.h.b16 %v685
    %v3408 = vunpack.c.l.b16 %v686
    %v3409 = vunpack.c.h.b16 %v686
    %v3410 = vunpack.c.l.b16 %v687
    %v3411 = vunpack.c.h.b16 %v687
    %v3412 = vunpack.c.l.b16 %v688
    %v3413 = vunpack.c.h.b16 %v688
    %v3414 = vunpack.c.l.b16 %v689
    %v3415 = vunpack.c.h.b16 %v689
    %v3416 = vunpack.c.l.b16 %v690
    %v3417 = vunpack.c.h.b16 %v690
    %v3418 = vunpack.c.l.b16 %v691
    %v3419 = vunpack.c.h.b16 %v691
    %v3420 = vunpack.c.l.b16 %v692
    %v3421 = vunpack.c.h.b16 %v692
    %v3422 = vunpack.c.l.b16 %v693
    %v3423 = vunpack.c.h.b16 %v693
    %v3424 = vunpack.c.l.b16 %v694
    %v3425 = vunpack.c.h.b16 %v694
    %v3426 = vunpack.c.l.b16 %v695
    %v3427 = vunpack.c.h.b16 %v695
    %v3428 = vunpack.c.l.b16 %v696
    %v3429 = vunpack.c.h.b16 %v696
    %v3430 = vunpack.c.l.b16 %v697
    %v3431 = vunpack.c.h.b16 %v697
    %v3432 = vunpack.c.l.b16 %v698
    %v3433 = vunpack.c.h.b16 %v698
    %v3434 = vunpack.c.l.b16 %v699
    %v3435 = vunpack.c.h.b16 %v699
    %v3436 = vunpack.c.l.b16 %v700
    %v3437 = vunpack.c.h.b16 %v700
    %v3438 = vunpack.c.l.b16 %v701
    %v3439 = vunpack.c.h.b16 %v701
    %v3440 = vunpack.c.l.b16 %v702
    %v3441 = vunpack.c.h.b16 %v702
    %v3442 = vunpack.c.l.b16 %v703
    %v3443 = vunpack.c.h.b16 %v703
    %v3444 = vunpack.c.l.b16 %v704
    %v3445 = vunpack.c.h.b16 %v704
    %v3446 = vunpack.c.l.b16 %v705
    %v3447 = vunpack.c.h.b16 %v705
    %v3448 = vunpack.c.l.b16 %v706
    %v3449 = vunpack.c.h.b16 %v706
    %v3450 = vunpack.c.l.b16 %v707
    %v3451 = vunpack.c.h.b16 %v707
    %v3452 = vunpack.c.l.b16 %v708
    %v3453 = vunpack.c.h.b16 %v708
    %v3454 = vunpack.c.l.b16 %v709
    %v3455 = vunpack.c.h.b16 %v709
    %v3456 = vunpack.c.l.b16 %v710
    %v3457 = vunpack.c.h.b16 %v710
    %v3458 = vunpack.c.l.b16 %v711
    %v3459 = vunpack.c.h.b16 %v711
    %v3460 = vunpack.c.l.b16 %v712
    %v3461 = vunpack.c.h.b16 %v712
    %v3462 = vunpack.c.l.b16 %v713
    %v3463 = vunpack.c.h.b16 %v713
    %v3464 = vunpack.c.l.b16 %v714
    %v3465 = vunpack.c.h.b16 %v714
    %v3466 = vunpack.c.l.b16 %v715
    %v3467 = vunpack.c.h.b16 %v715
    %v3468 = vunpack.c.l.b16 %v716
    %v3469 = vunpack.c.h.b16 %v716
    %v3470 = vunpack.c.l.b16 %v717
    %v3471 = vunpack.c.h.b16 %v717
    %v3472 = vunpack.c.l.b16 %v718
    %v3473 = vunpack.c.h.b16 %v718
    %v3474 = vunpack.c.l.b16 %v719
    %v3475 = vunpack.c.h.b16 %v719
    %v3476 = vunpack.c.l.b16 %v720
    %v3477 = vunpack.c.h.b16 %v720
    %v3478 = vunpack.c.l.b16 %v721
    %v3479 = vunpack.c.h.b16 %v721
    %v3480 = vunpack.c.l.b16 %v722
    %v3481 = vunpack.c.h.b16 %v722
    %v3482 = vunpack.c.l.b16 %v723
    %v3483 = vunpack.c.h.b16 %v723
    %v3484 = vunpack.c.l.b16 %v724
    %v3485 = vunpack.c.h.b16 %v724
    %v3486 = vunpack.c.l.b16 %v725
    %v3487 = vunpack.c.h.b16 %v725
    %v3488 = vunpack.c.l.b16 %v726
    %v3489 = vunpack.c.h.b16 %v726
    %v3490 = vunpack.c.l.b16 %v727
    %v3491 = vunpack.c.h.b16 %v727
    %v3492 = vunpack.c.l.b16 %v728
    %v3493 = vunpack.c.h.b16 %v728
    %v3494 = vunpack.c.l.b16 %v729
    %v3495 = vunpack.c.h.b16 %v729
    %v3496 = vunpack.c.l.b16 %v730
    %v3497 = vunpack.c.h.b16 %v730
    %v3498 = vunpack.c.l.b16 %v731
    %v3499 = vunpack.c.h.b16 %v731
    %v3500 = vunpack.c.l.b16 %v732
    %v3501 = vunpack.c.h.b16 %v732
    %v3502 = vunpack.c.l.b16 %v733
    %v3503 = vunpack.c.h.b16 %v733
    %v3504 = vunpack.c.l.b16 %v734
    %v3505 = vunpack.c.h.b16 %v734
    %v3506 = vunpack.c.l.b16 %v735
    %v3507 = vunpack.c.h.b16 %v735
    %v3508 = vunpack.c.l.b16 %v736
    %v3509 = vunpack.c.h.b16 %v736
    %v3510 = vunpack.c.l.b16 %v737
    %v3511 = vunpack.c.h.b16 %v737
    %v3512 = vunpack.c.l.b16 %v738
    %v3513 = vunpack.c.h.b16 %v738
    %v3514 = vunpack.c.l.b16 %v739
    %v3515 = vunpack.c.h.b16 %v739
    %v3516 = vunpack.c.l.b16 %v740
    %v3517 = vunpack.c.h.b16 %v740
    %v3518 = vunpack.c.l.b16 %v741
    %v3519 = vunpack.c.h.b16 %v741
    %v3520 = vunpack.c.l.b16 %v742
    %v3521 = vunpack.c.h.b16 %v742
    %v3522 = vunpack.c.l.b16 %v743
    %v3523 = vunpack.c.h.b16 %v743
    %v3524 = vunpack.c.l.b16 %v744
    %v3525 = vunpack.c.h.b16 %v744
    %v3526 = vunpack.c.l.b16 %v745
    %v3527 = vunpack.c.h.b16 %v745
    %v3528 = vunpack.c.l.b16 %v746
    %v3529 = vunpack.c.h.b16 %v746
    %v3530 = vunpack.c.l.b16 %v747
    %v3531 = vunpack.c.h.b16 %v747
    %v3532 = vunpack.c.l.b16 %v748
    %v3533 = vunpack.c.h.b16 %v748
    %v3534 = vunpack.c.l.b16 %v749
    %v3535 = vunpack.c.h.b16 %v749
    %v3536 = vunpack.c.l.b16 %v750
    %v3537 = vunpack.c.h.b16 %v750
    %v3538 = vunpack.c.l.b16 %v751
    %v3539 = vunpack.c.h.b16 %v751
    %v3540 = vunpack.c.l.b16 %v752
    %v3541 = vunpack.c.h.b16 %v752
    %v3542 = vunpack.c.l.b16 %v753
    %v3543 = vunpack.c.h.b16 %v753
    %v3544 = vunpack.c.l.b16 %v754
    %v3545 = vunpack.c.h.b16 %v754
    %v3546 = vunpack.c.l.b16 %v755
    %v3547 = vunpack.c.h.b16 %v755
    %v3548 = vunpack.c.l.b16 %v756
    %v3549 = vunpack.c.h.b16 %v756
    %v3550 = vunpack.c.l.b16 %v757
    %v3551 = vunpack.c.h.b16 %v757
    %v3552 = vunpack.c.l.b16 %v758
    %v3553 = vunpack.c.h.b16 %v758
    %v3554 = vunpack.c.l.b16 %v759
    %v3555 = vunpack.c.h.b16 %v759
    %v3556 = vunpack.c.l.b16 %v760
    %v3557 = vunpack.c.h.b16 %v760
    %v3558 = vunpack.c.l.b16 %v761
    %v3559 = vunpack.c.h.b16 %v761
    %v3560 = vunpack.c.l.b16 %v762
    %v3561 = vunpack.c.h.b16 %v762
    %v3562 = vunpack.c.l.b16 %v763
    %v3563 = vunpack.c.h.b16 %v763
    %v3564 = vunpack.c.l.b16 %v764
    %v3565 = vunpack.c.h.b16 %v764
    %v3566 = vunpack.c.l.b16 %v765
    %v3567 = vunpack.c.h.b16 %v765
    %v3568 = vunpack.c.l.b16 %v766
    %v3569 = vunpack.c.h.b16 %v766
    %v3570 = vunpack.c.l.b16 %v767
    %v3571 = vunpack.c.h.b16 %v767
    %v3572 = vunpack.c.l.b16 %v768
    %v3573 = vunpack.c.h.b16 %v768
    %v3574 = vunpack.c.l.b16 %v769
    %v3575 = vunpack.c.h.b16 %v769
    %v3576 = vunpack.c.l.b16 %v770
    %v3577 = vunpack.c.h.b16 %v770
    %v3578 = vunpack.c.l.b16 %v771
    %v3579 = vunpack.c.h.b16 %v771
    %v3580 = vunpack.c.l.b16 %v772
    %v3581 = vunpack.c.h.b16 %v772
    %v3582 = vunpack.c.l.b16 %v773
    %v3583 = vunpack.c.h.b16 %v773
    %v3584 = vunpack.c.l.b16 %v774
    %v3585 = vunpack.c.h.b16 %v774
    %v3586 = vunpack.c.l.b16 %v775
    %v3587 = vunpack.c.h.b16 %v775
    %v3588 = vunpack.c.l.b16 %v776
    %v3589 = vunpack.c.h.b16 %v776
    %v3590 = vunpack.c.l.b16 %v777
    %v3591 = vunpack.c.h.b16 %v777
    %v3592 = vunpack.c.l.b16 %v778
    %v3593 = vunpack.c.h.b16 %v778
    %v3594 = vunpack.c.l.b16 %v779
    %v3595 = vunpack.c.h.b16 %v779
    %v3596 = vunpack.c.l.b16 %v780
    %v3597 = vunpack.c.h.b16 %v780
    %v3598 = vunpack.c.l.b16 %v781
    %v3599 = vunpack.c.h.b16 %v781
    %v3600 = vunpack.c.l.b16 %v782
    %v3601 = vunpack.c.h.b16 %v782
    %v3602 = vunpack.c.l.b16 %v783
    %v3603 = vunpack.c.h.b16 %v783
    %v3604 = vunpack.c.l.b16 %v784
    %v3605 = vunpack.c.h.b16 %v784
    %v3606 = vunpack.c.l.b16 %v785
    %v3607 = vunpack.c.h.b16 %v785
    %v3608 = vunpack.c.l.b16 %v786
    %v3609 = vunpack.c.h.b16 %v786
    %v3610 = vunpack.c.l.b16 %v787
    %v3611 = vunpack.c.h.b16 %v787
    %v3612 = vunpack.c.l.b16 %v788
    %v3613 = vunpack.c.h.b16 %v788
    %v3614 = vunpack.c.l.b16 %v789
    %v3615 = vunpack.c.h.b16 %v789
    %v3616 = vunpack.c.l.b16 %v790
    %v3617 = vunpack.c.h.b16 %v790
    %v3618 = vunpack.c.l.b16 %v791
    %v3619 = vunpack.c.h.b16 %v791
    %v3620 = vunpack.c.l.b16 %v792
    %v3621 = vunpack.c.h.b16 %v792
    %v3622 = vunpack.c.l.b16 %v793
    %v3623 = vunpack.c.h.b16 %v793
    %v3624 = vunpack.c.l.b16 %v794
    %v3625 = vunpack.c.h.b16 %v794
    %v3626 = vunpack.c.l.b16 %v795
    %v3627 = vunpack.c.h.b16 %v795
    %v3628 = vunpack.c.l.b16 %v796
    %v3629 = vunpack.c.h.b16 %v796
    %v3630 = vunpack.c.l.b16 %v797
    %v3631 = vunpack.c.h.b16 %v797
    %v3632 = vunpack.c.l.b16 %v798
    %v3633 = vunpack.c.h.b16 %v798
    %v3634 = vunpack.c.l.b16 %v799
    %v3635 = vunpack.c.h.b16 %v799
    %v3636 = vunpack.c.l.b16 %v800
    %v3637 = vunpack.c.h.b16 %v800
    %v3638 = vunpack.c.l.b16 %v801
    %v3639 = vunpack.c.h.b16 %v801
    %v3640 = vunpack.c.l.b16 %v802
    %v3641 = vunpack.c.h.b16 %v802
    %v3642 = vunpack.c.l.b16 %v803
    %v3643 = vunpack.c.h.b16 %v803
    %v3644 = vunpack.c.l.b16 %v804
    %v3645 = vunpack.c.h.b16 %v804
    %v3646 = vunpack.c.l.b16 %v805
    %v3647 = vunpack.c.h.b16 %v805
    %v3648 = vunpack.c.l.b16 %v806
    %v3649 = vunpack.c.h.b16 %v806
    %v3650 = vunpack.c.l.b16 %v807
    %v3651 = vunpack.c.h.b16 %v807
    %v3652 = vunpack.c.l.b16 %v808
    %v3653 = vunpack.c.h.b16 %v808
    %v3654 = vunpack.c.l.b16 %v809
    %v3655 = vunpack.c.h.b16 %v809
    %v3656 = vunpack.c.l.b16 %v810
    %v3657 = vunpack.c.h.b16 %v810
    %v3658 = vunpack.c.l.b16 %v811
    %v3659 = vunpack.c.h.b16 %v811
    %v3660 = vunpack.c.l.b16 %v812
    %v3661 = vunpack.c.h.b16 %v812
    %v3662 = vunpack.c.l.b16 %v813
    %v3663 = vunpack.c.h.b16 %v813
    %v3664 = vunpack.c.l.b16 %v814
    %v3665 = vunpack.c.h.b16 %v814
    %v3666 = vunpack.c.l.b16 %v815
    %v3667 = vunpack.c.h.b16 %v815
    %v3668 = vunpack.c.l.b16 %v816
    %v3669 = vunpack.c.h.b16 %v816
    %v3670 = vunpack.c.l.b16 %v817
    %v3671 = vunpack.c.h.b16 %v817
    %v3672 = vunpack.c.l.b16 %v818
    %v3673 = vunpack.c.h.b16 %v818
    %v3674 = vunpack.c.l.b16 %v819
    %v3675 = vunpack.c.h.b16 %v819
    %v3676 = vunpack.c.l.b16 %v820
    %v3677 = vunpack.c.h.b16 %v820
    %v3678 = vunpack.c.l.b16 %v821
    %v3679 = vunpack.c.h.b16 %v821
    %v3680 = vunpack.c.l.b16 %v822
    %v3681 = vunpack.c.h.b16 %v822
    %v3682 = vunpack.c.l.b16 %v823
    %v3683 = vunpack.c.h.b16 %v823
    %v3684 = vunpack.c.l.b16 %v824
    %v3685 = vunpack.c.h.b16 %v824
    %v3686 = vunpack.c.l.b16 %v825
    %v3687 = vunpack.c.h.b16 %v825
    %v3688 = vunpack.c.l.b16 %v826
    %v3689 = vunpack.c.h.b16 %v826
    %v3690 = vunpack.c.l.b16 %v827
    %v3691 = vunpack.c.h.b16 %v827
    %v3692 = vunpack.c.l.b16 %v828
    %v3693 = vunpack.c.h.b16 %v828
    %v3694 = vunpack.c.l.b16 %v829
    %v3695 = vunpack.c.h.b16 %v829
    %v3696 = vunpack.c.l.b16 %v830
    %v3697 = vunpack.c.h.b16 %v830
    %v3698 = vunpack.c.l.b16 %v831
    %v3699 = vunpack.c.h.b16 %v831
    %v3700 = vunpack.c.l.b16 %v832
    %v3701 = vunpack.c.h.b16 %v832
    %v3702 = vunpack.c.l.b16 %v833
    %v3703 = vunpack.c.h.b16 %v833
    %v3704 = vunpack.c.l.b16 %v834
    %v3705 = vunpack.c.h.b16 %v834
    %v3706 = vunpack.c.l.b16 %v835
    %v3707 = vunpack.c.h.b16 %v835
    %v3708 = vunpack.c.l.b16 %v836
    %v3709 = vunpack.c.h.b16 %v836
    %v3710 = vunpack.c.l.b16 %v837
    %v3711 = vunpack.c.h.b16 %v837
    %v3712 = vunpack.c.l.b16 %v838
    %v3713 = vunpack.c.h.b16 %v838
    %v3714 = vunpack.c.l.b16 %v839
    %v3715 = vunpack.c.h.b16 %v839
    %v3716 = vunpack.c.l.b16 %v840
    %v3717 = vunpack.c.h.b16 %v840
    %v3718 = vunpack.c.l.b16 %v841
    %v3719 = vunpack.c.h.b16 %v841
    %v3720 = vunpack.c.l.b16 %v842
    %v3721 = vunpack.c.h.b16 %v842
    %v3722 = vunpack.c.l.b16 %v843
    %v3723 = vunpack.c.h.b16 %v843
    %v3724 = vunpack.c.l.b16 %v844
    %v3725 = vunpack.c.h.b16 %v844
    %v3726 = vunpack.c.l.b16 %v845
    %v3727 = vunpack.c.h.b16 %v845
    %v3728 = vunpack.c.l.b16 %v846
    %v3729 = vunpack.c.h.b16 %v846
    %v3730 = vunpack.c.l.b16 %v847
    %v3731 = vunpack.c.h.b16 %v847
    %v3732 = vunpack.c.l.b16 %v848
    %v3733 = vunpack.c.h.b16 %v848
    %v3734 = vunpack.c.l.b16 %v849
    %v3735 = vunpack.c.h.b16 %v849
    %v3736 = vunpack.c.l.b16 %v850
    %v3737 = vunpack.c.h.b16 %v850
    %v3738 = vunpack.c.l.b16 %v851
    %v3739 = vunpack.c.h.b16 %v851
    %v3740 = vunpack.c.l.b16 %v852
    %v3741 = vunpack.c.h.b16 %v852
    %v3742 = vunpack.c.l.b16 %v853
    %v3743 = vunpack.c.h.b16 %v853
    %v3744 = vunpack.c.l.b16 %v854
    %v3745 = vunpack.c.h.b16 %v854
    %v3746 = vunpack.c.l.b16 %v855
    %v3747 = vunpack.c.h.b16 %v855
    %v3748 = vunpack.c.l.b16 %v856
    %v3749 = vunpack.c.h.b16 %v856
    %v3750 = vunpack.c.l.b16 %v857
    %v3751 = vunpack.c.h.b16 %v857
    %v3752 = vunpack.c.l.b16 %v858
    %v3753 = vunpack.c.h.b16 %v858
    %v3754 = vunpack.c.l.b16 %v859
    %v3755 = vunpack.c.h.b16 %v859
    %v3756 = vunpack.c.l.b16 %v860
    %v3757 = vunpack.c.h.b16 %v860
    %v3758 = vunpack.c.l.b16 %v861
    %v3759 = vunpack.c.h.b16 %v861
    %v3760 = vunpack.c.l.b16 %v862
    %v3761 = vunpack.c.h.b16 %v862
    %v3762 = vunpack.c.l.b16 %v863
    %v3763 = vunpack.c.h.b16 %v863
    %v3764 = vunpack.c.l.b16 %v864
    %v3765 = vunpack.c.h.b16 %v864
    %v3766 = vunpack.c.l.b16 %v865
    %v3767 = vunpack.c.h.b16 %v865
    %v3768 = vunpack.c.l.b16 %v866
    %v3769 = vunpack.c.h.b16 %v866
    %v3770 = vunpack.c.l.b16 %v867
    %v3771 = vunpack.c.h.b16 %v867
    %v3772 = vunpack.c.l.b16 %v868
    %v3773 = vunpack.c.h.b16 %v868
    %v3774 = vunpack.c.l.b16 %v869
    %v3775 = vunpack.c.h.b16 %v869
    %v3776 = vunpack.c.l.b16 %v870
    %v3777 = vunpack.c.h.b16 %v870
    %v3778 = vunpack.c.l.b16 %v871
    %v3779 = vunpack.c.h.b16 %v871
    %v3780 = vunpack.c.l.b16 %v872
    %v3781 = vunpack.c.h.b16 %v872
    %v3782 = vunpack.c.l.b16 %v873
    %v3783 = vunpack.c.h.b16 %v873
    %v3784 = vunpack.c.l.b16 %v874
    %v3785 = vunpack.c.h.b16 %v874
    %v3786 = vunpack.c.l.b16 %v875
    %v3787 = vunpack.c.h.b16 %v875
    %v3788 = vunpack.c.l.b16 %v876
    %v3789 = vunpack.c.h.b16 %v876
    %v3790 = vunpack.c.l.b16 %v877
    %v3791 = vunpack.c.h.b16 %v877
    %v3792 = vunpack.c.l.b16 %v878
    %v3793 = vunpack.c.h.b16 %v878
    %v3794 = vunpack.c.l.b16 %v879
    %v3795 = vunpack.c.h.b16 %v879
    %v3796 = vunpack.c.l.b16 %v880
    %v3797 = vunpack.c.h.b16 %v880
    %v3798 = vunpack.c.l.b16 %v881
    %v3799 = vunpack.c.h.b16 %v881
    %v3800 = vunpack.c.l.b16 %v882
    %v3801 = vunpack.c.h.b16 %v882
    %v3802 = vunpack.c.l.b16 %v883
    %v3803 = vunpack.c.h.b16 %v883
    %v3804 = vunpack.c.l.b16 %v884
    %v3805 = vunpack.c.h.b16 %v884
    %v3806 = vunpack.c.l.b16 %v885
    %v3807 = vunpack.c.h.b16 %v885
    %v3808 = vunpack.c.l.b16 %v886
    %v3809 = vunpack.c.h.b16 %v886
    %v3810 = vunpack.c.l.b16 %v887
    %v3811 = vunpack.c.h.b16 %v887
    %v3812 = vunpack.c.l.b16 %v888
    %v3813 = vunpack.c.h.b16 %v888
    %v3814 = vunpack.c.l.b16 %v889
    %v3815 = vunpack.c.h.b16 %v889
    %v3816 = vunpack.c.l.b16 %v890
    %v3817 = vunpack.c.h.b16 %v890
    %v3818 = vunpack.c.l.b16 %v891
    %v3819 = vunpack.c.h.b16 %v891
    %v3820 = vunpack.c.l.b16 %v892
    %v3821 = vunpack.c.h.b16 %v892
    %v3822 = vunpack.c.l.b16 %v893
    %v3823 = vunpack.c.h.b16 %v893
    %v3824 = vunpack.c.l.b16 %v894
    %v3825 = vunpack.c.h.b16 %v894
    %v3826 = vunpack.c.l.b16 %v895
    %v3827 = vunpack.c.h.b16 %v895
    %v3828 = vunpack.c.l.b16 %v896
    %v3829 = vunpack.c.h.b16 %v896
    %v3830 = vunpack.c.l.b16 %v897
    %v3831 = vunpack.c.h.b16 %v897
    %v3832 = vunpack.c.l.b16 %v898
    %v3833 = vunpack.c.h.b16 %v898
    %v3834 = vunpack.c.l.b16 %v899
    %v3835 = vunpack.c.h.b16 %v899
    %v3836 = vunpack.c.l.b16 %v900
    %v3837 = vunpack.c.h.b16 %v900
    %v3838 = vunpack.c.l.b16 %v901
    %v3839 = vunpack.c.h.b16 %v901
    %v3840 = vunpack.c.l.b16 %v902
    %v3841 = vunpack.c.h.b16 %v902
    %v3842 = vunpack.c.l.b16 %v903
    %v3843 = vunpack.c.h.b16 %v903
    %v3844 = vunpack.c.l.b16 %v904
    %v3845 = vunpack.c.h.b16 %v904
    %v3846 = vunpack.c.l.b16 %v905
    %v3847 = vunpack.c.h.b16 %v905
    %v3848 = vunpack.c.l.b16 %v906
    %v3849 = vunpack.c.h.b16 %v906
    %v3850 = vunpack.c.l.b16 %v907
    %v3851 = vunpack.c.h.b16 %v907
    %v3852 = vunpack.c.l.b16 %v908
    %v3853 = vunpack.c.h.b16 %v908
    %v3854 = vunpack.c.l.b16 %v909
    %v3855 = vunpack.c.h.b16 %v909
    %v3856 = vunpack.c.l.b16 %v910
    %v3857 = vunpack.c.h.b16 %v910
    %v3858 = vunpack.c.l.b16 %v911
    %v3859 = vunpack.c.h.b16 %v911
    %v3860 = vunpack.c.l.b16 %v912
    %v3861 = vunpack.c.h.b16 %v912
    %v3862 = vunpack.c.l.b16 %v913
    %v3863 = vunpack.c.h.b16 %v913
    %v3864 = vunpack.c.l.b16 %v914
    %v3865 = vunpack.c.h.b16 %v914
    %v3866 = vunpack.c.l.b16 %v915
    %v3867 = vunpack.c.h.b16 %v915
    %v3868 = vunpack.c.l.b16 %v916
    %v3869 = vunpack.c.h.b16 %v916
    %v3870 = vunpack.c.l.b16 %v917
    %v3871 = vunpack.c.h.b16 %v917
    %v3872 = vunpack.c.l.b16 %v918
    %v3873 = vunpack.c.h.b16 %v918
    %v3874 = vunpack.c.l.b16 %v919
    %v3875 = vunpack.c.h.b16 %v919
    %v3876 = vunpack.c.l.b16 %v920
    %v3877 = vunpack.c.h.b16 %v920
    %v3878 = vunpack.c.l.b16 %v921
    %v3879 = vunpack.c.h.b16 %v921
    %v3880 = vunpack.c.l.b16 %v922
    %v3881 = vunpack.c.h.b16 %v922
    %v3882 = vunpack.c.l.b16 %v923
    %v3883 = vunpack.c.h.b16 %v923
    %v3884 = vunpack.c.l.b16 %v924
    %v3885 = vunpack.c.h.b16 %v924
    %v3886 = vunpack.c.l.b16 %v925
    %v3887 = vunpack.c.h.b16 %v925
    %v3888 = vunpack.c.l.b16 %v926
    %v3889 = vunpack.c.h.b16 %v926
    %v3890 = vunpack.c.l.b16 %v927
    %v3891 = vunpack.c.h.b16 %v927
    %v3892 = vunpack.c.l.b16 %v928
    %v3893 = vunpack.c.h.b16 %v928
    %v3894 = vunpack.c.l.b16 %v929
    %v3895 = vunpack.c.h.b16 %v929
    %v3896 = vunpack.c.l.b16 %v930
    %v3897 = vunpack.c.h.b16 %v930
    %v3898 = vunpack.c.l.b16 %v931
    %v3899 = vunpack.c.h.b16 %v931
    %v3900 = vunpack.c.l.b16 %v932
    %v3901 = vunpack.c.h.b16 %v932
    %v3902 = vunpack.c.l.b16 %v933
    %v3903 = vunpack.c.h.b16 %v933
    %v3904 = vunpack.c.l.b16 %v934
    %v3905 = vunpack.c.h.b16 %v934
    %v3906 = vunpack.c.l.b16 %v935
    %v3907 = vunpack.c.h.b16 %v935
    %v3908 = vunpack.c.l.b16 %v936
    %v3909 = vunpack.c.h.b16 %v936
    %v3910 = vunpack.c.l.b16 %v937
    %v3911 = vunpack.c.h.b16 %v937
    %v3912 = vunpack.c.l.b16 %v938
    %v3913 = vunpack.c.h.b16 %v938
    %v3914 = vunpack.c.l.b16 %v939
    %v3915 = vunpack.c.h.b16 %v939
    %v3916 = vunpack.c.l.b16 %v940
    %v3917 = vunpack.c.h.b16 %v940
    %v3918 = vunpack.c.l.b16 %v941
    %v3919 = vunpack.c.h.b16 %v941
    %v3920 = vunpack.c.l.b16 %v942
    %v3921 = vunpack.c.h.b16 %v942
    %v3922 = vunpack.c.l.b16 %v943
    %v3923 = vunpack.c.h.b16 %v943
    %v3924 = vunpack.c.l.b16 %v944
    %v3925 = vunpack.c.h.b16 %v944
    %v3926 = vunpack.c.l.b16 %v945
    %v3927 = vunpack.c.h.b16 %v945
    %v3928 = vunpack.c.l.b16 %v946
    %v3929 = vunpack.c.h.b16 %v946
    %v3930 = vunpack.c.l.b16 %v947
    %v3931 = vunpack.c.h.b16 %v947
    %v3932 = vunpack.c.l.b16 %v948
    %v3933 = vunpack.c.h.b16 %v948
    %v3934 = vunpack.c.l.b16 %v949
    %v3935 = vunpack.c.h.b16 %v949
    %v3936 = vunpack.c.l.b16 %v950
    %v3937 = vunpack.c.h.b16 %v950
    %v3938 = vunpack.c.l.b16 %v951
    %v3939 = vunpack.c.h.b16 %v951
    %v3940 = vunpack.c.l.b16 %v952
    %v3941 = vunpack.c.h.b16 %v952
    %v3942 = vunpack.c.l.b16 %v953
    %v3943 = vunpack.c.h.b16 %v953
    %v3944 = vunpack.c.l.b16 %v954
    %v3945 = vunpack.c.h.b16 %v954
    %v3946 = vunpack.c.l.b16 %v955
    %v3947 = vunpack.c.h.b16 %v955
    %v3948 = vunpack.c.l.b16 %v956
    %v3949 = vunpack.c.h.b16 %v956
    %v3950 = vunpack.c.l.b16 %v957
    %v3951 = vunpack.c.h.b16 %v957
    %v3952 = vunpack.c.l.b16 %v958
    %v3953 = vunpack.c.h.b16 %v958
    %v3954 = vunpack.c.l.b16 %v959
    %v3955 = vunpack.c.h.b16 %v959
    %v3956 = vunpack.c.l.b16 %v960
    %v3957 = vunpack.c.h.b16 %v960
    %v3958 = vunpack.c.l.b16 %v961
    %v3959 = vunpack.c.h.b16 %v961
    %v3960 = vunpack.c.l.b16 %v962
    %v3961 = vunpack.c.h.b16 %v962
    %v3962 = vunpack.c.l.b16 %v963
    %v3963 = vunpack.c.h.b16 %v963
    %v3964 = vunpack.c.l.b16 %v964
    %v3965 = vunpack.c.h.b16 %v964
    %v3966 = vunpack.c.l.b16 %v965
    %v3967 = vunpack.c.h.b16 %v965
    %v3968 = vunpack.c.l.b16 %v966
    %v3969 = vunpack.c.h.b16 %v966
    %v3970 = vunpack.c.l.b16 %v967
    %v3971 = vunpack.c.h.b16 %v967
    %v3972 = vunpack.c.l.b16 %v968
    %v3973 = vunpack.c.h.b16 %v968
    %v3974 = vunpack.c.l.b16 %v969
    %v3975 = vunpack.c.h.b16 %v969
    %v3976 = vunpack.c.l.b16 %v970
    %v3977 = vunpack.c.h.b16 %v970
    %v3978 = vunpack.c.l.b16 %v971
    %v3979 = vunpack.c.h.b16 %v971
    %v3980 = vunpack.c.l.b16 %v972
    %v3981 = vunpack.c.h.b16 %v972
    %v3982 = vunpack.c.l.b16 %v973
    %v3983 = vunpack.c.h.b16 %v973
    %v3984 = vunpack.c.l.b16 %v974
    %v3985 = vunpack.c.h.b16 %v974
    %v3986 = vunpack.c.l.b16 %v975
    %v3987 = vunpack.c.h.b16 %v975
    %v3988 = vunpack.c.l.b16 %v976
    %v3989 = vunpack.c.h.b16 %v976
    %v3990 = vunpack.c.l.b16 %v977
    %v3991 = vunpack.c.h.b16 %v977
    %v3992 = vunpack.c.l.b16 %v978
    %v3993 = vunpack.c.h.b16 %v978
    %v3994 = vunpack.c.l.b16 %v979
    %v3995 = vunpack.c.h.b16 %v979
    %v3996 = vunpack.c.l.b16 %v980
    %v3997 = vunpack.c.h.b16 %v980
    %v3998 = vunpack.c.l.b16 %v981
    %v3999 = vunpack.c.h.b16 %v981
    %v4000 = vunpack.c.l.b16 %v982
    %v4001 = vunpack.c.h.b16 %v982
    %v4002 = vunpack.c.l.b16 %v983
    %v4003 = vunpack.c.h.b16 %v983
    %v4004 = vunpack.c.l.b16 %v984
    %v4005 = vunpack.c.h.b16 %v984
    %v4006 = vunpack.c.l.b16 %v985
    %v4007 = vunpack.c.h.b16 %v985
    %v4008 = vunpack.c.l.b16 %v986
    %v4009 = vunpack.c.h.b16 %v986
    %v4010 = vunpack.c.l.b16 %v987
    %v4011 = vunpack.c.h.b16 %v987
    %v4012 = vunpack.c.l.b16 %v988
    %v4013 = vunpack.c.h.b16 %v988
    %v4014 = vunpack.c.l.b16 %v989
    %v4015 = vunpack.c.h.b16 %v989
    %v4016 = vunpack.c.l.b16 %v990
    %v4017 = vunpack.c.h.b16 %v990
    %v4018 = vunpack.c.l.b16 %v991
    %v4019 = vunpack.c.h.b16 %v991
    %v4020 = vunpack.c.l.b16 %v992
    %v4021 = vunpack.c.h.b16 %v992
    %v4022 = vunpack.c.l.b16 %v993
    %v4023 = vunpack.c.h.b16 %v993
    %v4024 = vunpack.c.l.b16 %v994
    %v4025 = vunpack.c.h.b16 %v994
    %v4026 = vunpack.c.l.b16 %v995
    %v4027 = vunpack.c.h.b16 %v995
    %v4028 = vunpack.c.l.b16 %v996
    %v4029 = vunpack.c.h.b16 %v996
    %v4030 = vunpack.c.l.b16 %v997
    %v4031 = vunpack.c.h.b16 %v997
    %v4032 = vunpack.c.l.b16 %v998
    %v4033 = vunpack.c.h.b16 %v998
    %v4034 = vunpack.c.l.b16 %v999
    %v4035 = vunpack.c.h.b16 %v999
    %v4036 = vunpack.c.l.b16 %v1000
    %v4037 = vunpack.c.h.b16 %v1000
    %v4038 = vunpack.c.l.b16 %v1001
    %v4039 = vunpack.c.h.b16 %v1001
    %v4040 = vunpack.c.l.b16 %v1002
    %v4041 = vunpack.c.h.b16 %v1002
    %v4042 = vunpack.c.l.b16 %v1003
    %v4043 = vunpack.c.h.b16 %v1003
    %v4044 = vunpack.c.l.b16 %v1004
    %v4045 = vunpack.c.h.b16 %v1004
    %v4046 = vunpack.c.l.b16 %v1005
    %v4047 = vunpack.c.h.b16 %v1005
    %v4048 = vunpack.c.l.b16 %v1006
    %v4049 = vunpack.c.h.b16 %v1006
    %v4050 = vunpack.c.l.b16 %v1007
    %v4051 = vunpack.c.h.b16 %v1007
    %v4052 = vunpack.c.l.b16 %v1008
    %v4053 = vunpack.c.h.b16 %v1008
    %v4054 = vunpack.c.l.b16 %v1009
    %v4055 = vunpack.c.h.b16 %v1009
    %v4056 = vunpack.c.l.b16 %v1010
    %v4057 = vunpack.c.h.b16 %v1010
    %v4058 = vunpack.c.l.b16 %v1011
    %v4059 = vunpack.c.h.b16 %v1011
    %v4060 = vunpack.c.l.b16 %v1012
    %v4061 = vunpack.c.h.b16 %v1012
    %v4062 = vunpack.c.l.b16 %v1013
    %v4063 = vunpack.c.h.b16 %v1013
    %v4064 = vunpack.c.l.b16 %v1014
    %v4065 = vunpack.c.h.b16 %v1014
    %v4066 = vunpack.c.l.b16 %v1015
    %v4067 = vunpack.c.h.b16 %v1015
    %v4068 = vunpack.c.l.b16 %v1016
    %v4069 = vunpack.c.h.b16 %v1016
    %v4070 = vunpack.c.l.b16 %v1017
    %v4071 = vunpack.c.h.b16 %v1017
    %v4072 = vunpack.c.l.b16 %v1018
    %v4073 = vunpack.c.h.b16 %v1018
    %v4074 = vunpack.c.l.b16 %v1019
    %v4075 = vunpack.c.h.b16 %v1019
    %v4076 = vunpack.c.l.b16 %v1020
    %v4077 = vunpack.c.h.b16 %v1020
    %v4078 = vunpack.c.l.b16 %v1021
    %v4079 = vunpack.c.h.b16 %v1021
    %v4080 = vunpack.c.l.b16 %v1022
    %v4081 = vunpack.c.h.b16 %v1022
    %v4082 = vunpack.c.l.b16 %v1023
    %v4083 = vunpack.c.h.b16 %v1023
    %v4084 = vunpack.c.l.b16 %v1024
    %v4085 = vunpack.c.h.b16 %v1024
    %v4086 = vunpack.c.l.b16 %v1025
    %v4087 = vunpack.c.h.b16 %v1025
    %v4088 = vunpack.c.l.b16 %v1026
    %v4089 = vunpack.c.h.b16 %v1026
    %v4090 = vunpack.c.l.b16 %v1027
    %v4091 = vunpack.c.h.b16 %v1027
    %v4092 = vunpack.c.l.b16 %v1028
    %v4093 = vunpack.c.h.b16 %v1028
    %v4094 = vunpack.c.l.b16 %v1029
    %v4095 = vunpack.c.h.b16 %v1029
    %v4096 = vunpack.c.l.b16 %v1030
    %v4097 = vunpack.c.h.b16 %v1030
    %v4098 = vunpack.c.l.b16 %v1031
    %v4099 = vunpack.c.h.b16 %v1031
    %v4100 = vunpack.c.l.b16 %v1032
    %v4101 = vunpack.c.h.b16 %v1032
    %v4102 = vunpack.c.l.b16 %v1033
    %v4103 = vunpack.c.h.b16 %v1033
    %v4104 = vunpack.c.l.b16 %v1034
    %v4105 = vunpack.c.h.b16 %v1034
    %v4106 = vunpack.c.l.b16 %v1035
    %v4107 = vunpack.c.h.b16 %v1035
    %v4108 = vunpack.c.l.b16 %v1036
    %v4109 = vunpack.c.h.b16 %v1036
    %v4110 = vunpack.c.l.b16 %v1037
    %v4111 = vunpack.c.h.b16 %v1037
    %v4112 = vunpack.c.l.b16 %v1038
    %v4113 = vunpack.c.h.b16 %v1038
    %v4114 = vunpack.c.l.b16 %v1039
    %v4115 = vunpack.c.h.b16 %v1039
    %v4116 = vunpack.c.l.b16 %v1040
    %v4117 = vunpack.c.h.b16 %v1040
    %v4118 = vunpack.c.l.b16 %v1041
    %v4119 = vunpack.c.h.b16 %v1041
    %v4120 = vunpack.c.l.b16 %v1042
    %v4121 = vunpack.c.h.b16 %v1042
    %v4122 = vunpack.c.l.b16 %v1043
    %v4123 = vunpack.c.h.b16 %v1043
    %v4124 = vunpack.c.l.b16 %v1044
    %v4125 = vunpack.c.h.b16 %v1044
    %v4126 = vunpack.c.l.b16 %v1045
    %v4127 = vunpack.c.h.b16 %v1045
    %v4128 = vunpack.c.l.b16 %v1046
    %v4129 = vunpack.c.h.b16 %v1046
    %v4130 = vunpack.c.l.b16 %v1047
    %v4131 = vunpack.c.h.b16 %v1047
    %v4132 = vunpack.c.l.b16 %v1048
    %v4133 = vunpack.c.h.b16 %v1048
    %v4134 = vunpack.c.l.b16 %v1049
    %v4135 = vunpack.c.h.b16 %v1049
    %v4136 = vunpack.c.l.b16 %v1050
    %v4137 = vunpack.c.h.b16 %v1050
    %v4138 = vunpack.c.l.b16 %v1051
    %v4139 = vunpack.c.h.b16 %v1051
    %v4140 = vunpack.c.l.b16 %v1052
    %v4141 = vunpack.c.h.b16 %v1052
    %v4142 = vunpack.c.l.b16 %v1053
    %v4143 = vunpack.c.h.b16 %v1053
    %v4144 = vunpack.c.l.b16 %v1054
    %v4145 = vunpack.c.h.b16 %v1054
    %v4146 = vunpack.c.l.b16 %v1055
    %v4147 = vunpack.c.h.b16 %v1055
    %v4148 = vunpack.c.l.b16 %v1056
    %v4149 = vunpack.c.h.b16 %v1056
    %v4150 = vunpack.c.l.b16 %v1057
    %v4151 = vunpack.c.h.b16 %v1057
    %v4152 = vunpack.c.l.b16 %v1058
    %v4153 = vunpack.c.h.b16 %v1058
    %v4154 = vunpack.c.l.b16 %v1059
    %v4155 = vunpack.c.h.b16 %v1059
    %v4156 = vunpack.c.l.b16 %v1060
    %v4157 = vunpack.c.h.b16 %v1060
    %v4158 = vunpack.c.l.b16 %v1061
    %v4159 = vunpack.c.h.b16 %v1061
    %v4160 = vunpack.c.l.b16 %v1062
    %v4161 = vunpack.c.h.b16 %v1062
    %v4162 = vunpack.c.l.b16 %v1063
    %v4163 = vunpack.c.h.b16 %v1063
    %v4164 = vunpack.c.l.b16 %v1064
    %v4165 = vunpack.c.h.b16 %v1064
    %v4166 = vunpack.c.l.b16 %v1065
    %v4167 = vunpack.c.h.b16 %v1065
    %v4168 = vunpack.c.l.b16 %v1066
    %v4169 = vunpack.c.h.b16 %v1066
    %v4170 = vunpack.c.l.b16 %v1067
    %v4171 = vunpack.c.h.b16 %v1067
    %v4172 = vunpack.c.l.b16 %v1068
    %v4173 = vunpack.c.h.b16 %v1068
    %v4174 = vunpack.c.l.b16 %v1069
    %v4175 = vunpack.c.h.b16 %v1069
    %v4176 = vunpack.c.l.b16 %v1070
    %v4177 = vunpack.c.h.b16 %v1070
    %v4178 = vunpack.c.l.b16 %v1071
    %v4179 = vunpack.c.h.b16 %v1071
    %v4180 = vunpack.c.l.b16 %v1072
    %v4181 = vunpack.c.h.b16 %v1072
    %v4182 = vunpack.c.l.b16 %v1073
    %v4183 = vunpack.c.h.b16 %v1073
    %v4184 = vunpack.c.l.b16 %v1074
    %v4185 = vunpack.c.h.b16 %v1074
    %v4186 = vunpack.c.l.b16 %v1075
    %v4187 = vunpack.c.h.b16 %v1075
    %v4188 = vunpack.c.l.b16 %v1076
    %v4189 = vunpack.c.h.b16 %v1076
    %v4190 = vunpack.c.l.b16 %v1077
    %v4191 = vunpack.c.h.b16 %v1077
    %v4192 = vunpack.c.l.b16 %v1078
    %v4193 = vunpack.c.h.b16 %v1078
    %v4194 = vunpack.c.l.b16 %v1079
    %v4195 = vunpack.c.h.b16 %v1079
    %v4196 = vunpack.c.l.b16 %v1080
    %v4197 = vunpack.c.h.b16 %v1080
    %v4198 = vunpack.c.l.b16 %v1081
    %v4199 = vunpack.c.h.b16 %v1081
    %v4200 = vunpack.c.l.b16 %v1082
    %v4201 = vunpack.c.h.b16 %v1082
    %v4202 = vunpack.c.l.b16 %v1083
    %v4203 = vunpack.c.h.b16 %v1083
    %v4204 = vunpack.c.l.b16 %v1084
    %v4205 = vunpack.c.h.b16 %v1084
    %v4206 = vunpack.c.l.b16 %v1085
    %v4207 = vunpack.c.h.b16 %v1085
    %v4208 = vunpack.c.l.b16 %v1086
    %v4209 = vunpack.c.h.b16 %v1086
    %v4210 = vunpack.c.l.b16 %v1087
    %v4211 = vunpack.c.h.b16 %v1087
    %v4212 = vunpack.c.l.b16 %v1088
    %v4213 = vunpack.c.h.b16 %v1088
    %v4214 = vunpack.c.l.b16 %v1089
    %v4215 = vunpack.c.h.b16 %v1089
    %v4216 = vunpack.c.l.b16 %v1090
    %v4217 = vunpack.c.h.b16 %v1090
    %v4218 = vunpack.c.l.b16 %v1091
    %v4219 = vunpack.c.h.b16 %v1091
    %v4220 = vunpack.c.l.b16 %v1092
    %v4221 = vunpack.c.h.b16 %v1092
    %v4222 = vunpack.c.l.b16 %v1093
    %v4223 = vunpack.c.h.b16 %v1093
    %v4224 = vunpack.c.l.b16 %v1094
    %v4225 = vunpack.c.h.b16 %v1094
    %v4226 = vunpack.c.l.b16 %v1095
    %v4227 = vunpack.c.h.b16 %v1095
    %v4228 = vunpack.c.l.b16 %v1096
    %v4229 = vunpack.c.h.b16 %v1096
    %v4230 = vunpack.c.l.b16 %v1097
    %v4231 = vunpack.c.h.b16 %v1097
    %v4232 = vunpack.c.l.b16 %v1098
    %v4233 = vunpack.c.h.b16 %v1098
    %v4234 = vunpack.c.l.b16 %v1099
    %v4235 = vunpack.c.h.b16 %v1099
    %v4236 = vunpack.c.l.b16 %v1100
    %v4237 = vunpack.c.h.b16 %v1100
    %v4238 = vunpack.c.l.b16 %v1101
    %v4239 = vunpack.c.h.b16 %v1101
    %v4240 = vunpack.c.l.b16 %v1102
    %v4241 = vunpack.c.h.b16 %v1102
    %v4242 = vunpack.c.l.b16 %v1103
    %v4243 = vunpack.c.h.b16 %v1103
    %v4244 = vunpack.c.l.b16 %v1104
    %v4245 = vunpack.c.h.b16 %v1104
    %v4246 = vunpack.c.l.b16 %v1105
    %v4247 = vunpack.c.h.b16 %v1105
    %v4248 = vunpack.c.l.b16 %v1106
    %v4249 = vunpack.c.h.b16 %v1106
    %v4250 = vunpack.c.l.b16 %v1107
    %v4251 = vunpack.c.h.b16 %v1107
    %v4252 = vunpack.c.l.b16 %v1108
    %v4253 = vunpack.c.h.b16 %v1108
    %v4254 = vunpack.c.l.b16 %v1109
    %v4255 = vunpack.c.h.b16 %v1109
    %v4256 = vunpack.c.l.b16 %v1110
    %v4257 = vunpack.c.h.b16 %v1110
    %v4258 = vunpack.c.l.b16 %v1111
    %v4259 = vunpack.c.h.b16 %v1111
    %v4260 = vunpack.c.l.b16 %v1112
    %v4261 = vunpack.c.h.b16 %v1112
    %v4262 = vunpack.c.l.b16 %v1113
    %v4263 = vunpack.c.h.b16 %v1113
    %v4264 = vunpack.c.l.b16 %v1114
    %v4265 = vunpack.c.h.b16 %v1114
    %v4266 = vunpack.c.l.b16 %v1115
    %v4267 = vunpack.c.h.b16 %v1115
    %v4268 = vunpack.c.l.b16 %v1116
    %v4269 = vunpack.c.h.b16 %v1116
    %v4270 = vunpack.c.l.b16 %v1117
    %v4271 = vunpack.c.h.b16 %v1117
    %v4272 = vunpack.c.l.b16 %v1118
    %v4273 = vunpack.c.h.b16 %v1118
    %v4274 = vunpack.c.l.b16 %v1119
    %v4275 = vunpack.c.h.b16 %v1119
    %v4276 = vunpack.c.l.b16 %v1120
    %v4277 = vunpack.c.h.b16 %v1120
    %v4278 = vunpack.c.l.b16 %v1121
    %v4279 = vunpack.c.h.b16 %v1121
    %v4280 = vunpack.c.l.b16 %v1122
    %v4281 = vunpack.c.h.b16 %v1122
    %v4282 = vunpack.c.l.b16 %v1123
    %v4283 = vunpack.c.h.b16 %v1123
    %v4284 = vunpack.c.l.b16 %v1124
    %v4285 = vunpack.c.h.b16 %v1124
    %v4286 = vunpack.c.l.b16 %v1125
    %v4287 = vunpack.c.h.b16 %v1125
    %v4288 = vunpack.c.l.b16 %v1126
    %v4289 = vunpack.c.h.b16 %v1126
    %v4290 = vunpack.c.l.b16 %v1127
    %v4291 = vunpack.c.h.b16 %v1127
    %v4292 = vunpack.c.l.b16 %v1128
    %v4293 = vunpack.c.h.b16 %v1128
    %v4294 = vunpack.c.l.b16 %v1129
    %v4295 = vunpack.c.h.b16 %v1129
    %v4296 = vunpack.c.l.b16 %v1130
    %v4297 = vunpack.c.h.b16 %v1130
    %v4298 = vunpack.c.l.b16 %v1131
    %v4299 = vunpack.c.h.b16 %v1131
    %v4300 = vunpack.c.l.b16 %v1132
    %v4301 = vunpack.c.h.b16 %v1132
    %v4302 = vunpack.c.l.b16 %v1133
    %v4303 = vunpack.c.h.b16 %v1133
    %v4304 = vpack.c.b16 %v2264, %v2256
    %v4305 = vpack.c.b16 %v2265, %v2257
    %v4306 = vpack.c.b16 %v2266, %v2258
    %v4307 = vpack.c.b16 %v2267, %v2259
    %v4308 = vpack.c.b16 %v2268, %v2260
    %v4309 = vpack.c.b16 %v2269, %v2261
    %v4310 = vpack.c.b16 %v2270, %v2262
    %v4311 = vpack.c.b16 %v2271, %v2263
    %v4312 = vpack.c.b16 %v2280, %v2272
    %v4313 = vpack.c.b16 %v2281, %v2273
    %v4314 = vpack.c.b16 %v2282, %v2274
    %v4315 = vpack.c.b16 %v2283, %v2275
    %v4316 = vpack.c.b16 %v2284, %v2276
    %v4317 = vpack.c.b16 %v2285, %v2277
    %v4318 = vpack.c.b16 %v2286, %v2278
    %v4319 = vpack.c.b16 %v2287, %v2279
    %v4320 = vpack.c.b16 %v2296, %v2288
    %v4321 = vpack.c.b16 %v2297, %v2289
    %v4322 = vpack.c.b16 %v2298, %v2290
    %v4323 = vpack.c.b16 %v2299, %v2291
    %v4324 = vpack.c.b16 %v2300, %v2292
    %v4325 = vpack.c.b16 %v2301, %v2293
    %v4326 = vpack.c.b16 %v2302, %v2294
    %v4327 = vpack.c.b16 %v2303, %v2295
    %v4328 = vpack.c.b16 %v2312, %v2304
    %v4329 = vpack.c.b16 %v2313, %v2305
    %v4330 = vpack.c.b16 %v2314, %v2306
    %v4331 = vpack.c.b16 %v2315, %v2307
    %v4332 = vpack.c.b16 %v2316, %v2308
    %v4333 = vpack.c.b16 %v2317, %v2309
    %v4334 = vpack.c.b16 %v2318, %v2310
    %v4335 = vpack.c.b16 %v2319, %v2311
    %v4336 = vpack.c.b16 %v2328, %v2320
    %v4337 = vpack.c.b16 %v2329, %v2321
    %v4338 = vpack.c.b16 %v2330, %v2322
    %v4339 = vpack.c.b16 %v2331, %v2323
    %v4340 = vpack.c.b16 %v2332, %v2324
    %v4341 = vpack.c.b16 %v2333, %v2325
    %v4342 = vpack.c.b16 %v2334, %v2326
    %v4343 = vpack.c.b16 %v2335, %v2327
    %v4344 = vpack.c.b16 %v2344, %v2336
    %v4345 = vpack.c.b16 %v2345, %v2337
    %v4346 = vpack.c.b16 %v2346, %v2338
    %v4347 = vpack.c.b16 %v2347, %v2339
    %v4348 = vpack.c.b16 %v2348, %v2340
    %v4349 = vpack.c.b16 %v2349, %v2341
    %v4350 = vpack.c.b16 %v2350, %v2342
    %v4351 = vpack.c.b16 %v2351, %v2343
    %v4352 = vpack.c.b16 %v2360, %v2352
    %v4353 = vpack.c.b16 %v2361, %v2353
    %v4354 = vpack.c.b16 %v2362, %v2354
    %v4355 = vpack.c.b16 %v2363, %v2355
    %v4356 = vpack.c.b16 %v2364, %v2356
    %v4357 = vpack.c.b16 %v2365, %v2357
    %v4358 = vpack.c.b16 %v2366, %v2358
    %v4359 = vpack.c.b16 %v2367, %v2359
    %v4360 = vpack.c.b16 %v2376, %v2368
    %v4361 = vpack.c.b16 %v2377, %v2369
    %v4362 = vpack.c.b16 %v2378, %v2370
    %v4363 = vpack.c.b16 %v2379, %v2371
    %v4364 = vpack.c.b16 %v2380, %v2372
    %v4365 = vpack.c.b16 %v2381, %v2373
    %v4366 = vpack.c.b16 %v2382, %v2374
    %v4367 = vpack.c.b16 %v2383, %v2375
    %v4368 = vpack.c.b16 %v2392, %v2384
    %v4369 = vpack.c.b16 %v2393, %v2385
    %v4370 = vpack.c.b16 %v2394, %v2386
    %v4371 = vpack.c.b16 %v2395, %v2387
    %v4372 = vpack.c.b16 %v2396, %v2388
    %v4373 = vpack.c.b16 %v2397, %v2389
    %v4374 = vpack.c.b16 %v2398, %v2390
    %v4375 = vpack.c.b16 %v2399, %v2391
    %v4376 = vpack.c.b16 %v2408, %v2400
    %v4377 = vpack.c.b16 %v2409, %v2401
    %v4378 = vpack.c.b16 %v2410, %v2402
    %v4379 = vpack.c.b16 %v2411, %v2403
    %v4380 = vpack.c.b16 %v2412, %v2404
    %v4381 = vpack.c.b16 %v2413, %v2405
    %v4382 = vpack.c.b16 %v2414, %v2406
    %v4383 = vpack.c.b16 %v2415, %v2407
    %v4384 = vpack.c.b16 %v2424, %v2416
    %v4385 = vpack.c.b16 %v2425, %v2417
    %v4386 = vpack.c.b16 %v2426, %v2418
    %v4387 = vpack.c.b16 %v2427, %v2419
    %v4388 = vpack.c.b16 %v2428, %v2420
    %v4389 = vpack.c.b16 %v2429, %v2421
    %v4390 = vpack.c.b16 %v2430, %v2422
    %v4391 = vpack.c.b16 %v2431, %v2423
    %v4392 = vpack.c.b16 %v2440, %v2432
    %v4393 = vpack.c.b16 %v2441, %v2433
    %v4394 = vpack.c.b16 %v2442, %v2434
    %v4395 = vpack.c.b16 %v2443, %v2435
    %v4396 = vpack.c.b16 %v2444, %v2436
    %v4397 = vpack.c.b16 %v2445, %v2437
    %v4398 = vpack.c.b16 %v2446, %v2438
    %v4399 = vpack.c.b16 %v2447, %v2439
    %v4400 = vpack.c.b16 %v2456, %v2448
    %v4401 = vpack.c.b16 %v2457, %v2449
    %v4402 = vpack.c.b16 %v2458, %v2450
    %v4403 = vpack.c.b16 %v2459, %v2451
    %v4404 = vpack.c.b16 %v2460, %v2452
    %v4405 = vpack.c.b16 %v2461, %v2453
    %v4406 = vpack.c.b16 %v2462, %v2454
    %v4407 = vpack.c.b16 %v2463, %v2455
    %v4408 = vpack.c.b16 %v2472, %v2464
    %v4409 = vpack.c.b16 %v2473, %v2465
    %v4410 = vpack.c.b16 %v2474, %v2466
    %v4411 = vpack.c.b16 %v2475, %v2467
    %v4412 = vpack.c.b16 %v2476, %v2468
    %v4413 = vpack.c.b16 %v2477, %v2469
    %v4414 = vpack.c.b16 %v2478, %v2470
    %v4415 = vpack.c.b16 %v2479, %v2471
    %v4416 = vpack.c.b16 %v2488, %v2480
    %v4417 = vpack.c.b16 %v2489, %v2481
    %v4418 = vpack.c.b16 %v2490, %v2482
    %v4419 = vpack.c.b16 %v2491, %v2483
    %v4420 = vpack.c.b16 %v2492, %v2484
    %v4421 = vpack.c.b16 %v2493, %v2485
    %v4422 = vpack.c.b16 %v2494, %v2486
    %v4423 = vpack.c.b16 %v2495, %v2487
    %v4424 = vpack.c.b16 %v2504, %v2496
    %v4425 = vpack.c.b16 %v2505, %v2497
    %v4426 = vpack.c.b16 %v2506, %v2498
    %v4427 = vpack.c.b16 %v2507, %v2499
    %v4428 = vpack.c.b16 %v2508, %v2500
    %v4429 = vpack.c.b16 %v2509, %v2501
    %v4430 = vpack.c.b16 %v2510, %v2502
    %v4431 = vpack.c.b16 %v2511, %v2503
    %v4432 = vpack.c.b16 %v2520, %v2512
    %v4433 = vpack.c.b16 %v2521, %v2513
    %v4434 = vpack.c.b16 %v2522, %v2514
    %v4435 = vpack.c.b16 %v2523, %v2515
    %v4436 = vpack.c.b16 %v2524, %v2516
    %v4437 = vpack.c.b16 %v2525, %v2517
    %v4438 = vpack.c.b16 %v2526, %v2518
    %v4439 = vpack.c.b16 %v2527, %v2519
    %v4440 = vpack.c.b16 %v2536, %v2528
    %v4441 = vpack.c.b16 %v2537, %v2529
    %v4442 = vpack.c.b16 %v2538, %v2530
    %v4443 = vpack.c.b16 %v2539, %v2531
    %v4444 = vpack.c.b16 %v2540, %v2532
    %v4445 = vpack.c.b16 %v2541, %v2533
    %v4446 = vpack.c.b16 %v2542, %v2534
    %v4447 = vpack.c.b16 %v2543, %v2535
    %v4448 = vpack.c.b16 %v2552, %v2544
    %v4449 = vpack.c.b16 %v2553, %v2545
    %v4450 = vpack.c.b16 %v2554, %v2546
    %v4451 = vpack.c.b16 %v2555, %v2547
    %v4452 = vpack.c.b16 %v2556, %v2548
    %v4453 = vpack.c.b16 %v2557, %v2549
    %v4454 = vpack.c.b16 %v2558, %v2550
    %v4455 = vpack.c.b16 %v2559, %v2551
    %v4456 = vpack.c.b16 %v2568, %v2560
    %v4457 = vpack.c.b16 %v2569, %v2561
    %v4458 = vpack.c.b16 %v2570, %v2562
    %v4459 = vpack.c.b16 %v2571, %v2563
    %v4460 = vpack.c.b16 %v2572, %v2564
    %v4461 = vpack.c.b16 %v2573, %v2565
    %v4462 = vpack.c.b16 %v2574, %v2566
    %v4463 = vpack.c.b16 %v2575, %v2567
    %v4464 = vpack.c.b16 %v2584, %v2576
    %v4465 = vpack.c.b16 %v2585, %v2577
    %v4466 = vpack.c.b16 %v2586, %v2578
    %v4467 = vpack.c.b16 %v2587, %v2579
    %v4468 = vpack.c.b16 %v2588, %v2580
    %v4469 = vpack.c.b16 %v2589, %v2581
    %v4470 = vpack.c.b16 %v2590, %v2582
    %v4471 = vpack.c.b16 %v2591, %v2583
    %v4472 = vpack.c.b16 %v2600, %v2592
    %v4473 = vpack.c.b16 %v2601, %v2593
    %v4474 = vpack.c.b16 %v2602, %v2594
    %v4475 = vpack.c.b16 %v2603, %v2595
    %v4476 = vpack.c.b16 %v2604, %v2596
    %v4477 = vpack.c.b16 %v2605, %v2597
    %v4478 = vpack.c.b16 %v2606, %v2598
    %v4479 = vpack.c.b16 %v2607, %v2599
    %v4480 = vpack.c.b16 %v2616, %v2608
    %v4481 = vpack.c.b16 %v2617, %v2609
    %v4482 = vpack.c.b16 %v2618, %v2610
    %v4483 = vpack.c.b16 %v2619, %v2611
    %v4484 = vpack.c.b16 %v2620, %v2612
    %v4485 = vpack.c.b16 %v2621, %v2613
    %v4486 = vpack.c.b16 %v2622, %v2614
    %v4487 = vpack.c.b16 %v2623, %v2615
    %v4488 = vpack.c.b16 %v2632, %v2624
    %v4489 = vpack.c.b16 %v2633, %v2625
    %v4490 = vpack.c.b16 %v2634, %v2626
    %v4491 = vpack.c.b16 %v2635, %v2627
    %v4492 = vpack.c.b16 %v2636, %v2628
    %v4493 = vpack.c.b16 %v2637, %v2629
    %v4494 = vpack.c.b16 %v2638, %v2630
    %v4495 = vpack.c.b16 %v2639, %v2631
    %v4496 = vpack.c.b16 %v2648, %v2640
    %v4497 = vpack.c.b16 %v2649, %v2641
    %v4498 = vpack.c.b16 %v2650, %v2642
    %v4499 = vpack.c.b16 %v2651, %v2643
    %v4500 = vpack.c.b16 %v2652, %v2644
    %v4501 = vpack.c.b16 %v2653, %v2645
    %v4502 = vpack.c.b16 %v2654, %v2646
    %v4503 = vpack.c.b16 %v2655, %v2647
    %v4504 = vpack.c.b16 %v2664, %v2656
    %v4505 = vpack.c.b16 %v2665, %v2657
    %v4506 = vpack.c.b16 %v2666, %v2658
    %v4507 = vpack.c.b16 %v2667, %v2659
    %v4508 = vpack.c.b16 %v2668, %v2660
    %v4509 = vpack.c.b16 %v2669, %v2661
    %v4510 = vpack.c.b16 %v2670, %v2662
    %v4511 = vpack.c.b16 %v2671, %v2663
    %v4512 = vpack.c.b16 %v2680, %v2672
    %v4513 = vpack.c.b16 %v2681, %v2673
    %v4514 = vpack.c.b16 %v2682, %v2674
    %v4515 = vpack.c.b16 %v2683, %v2675
    %v4516 = vpack.c.b16 %v2684, %v2676
    %v4517 = vpack.c.b16 %v2685, %v2677
    %v4518 = vpack.c.b16 %v2686, %v2678
    %v4519 = vpack.c.b16 %v2687, %v2679
    %v4520 = vpack.c.b16 %v2696, %v2688
    %v4521 = vpack.c.b16 %v2697, %v2689
    %v4522 = vpack.c.b16 %v2698, %v2690
    %v4523 = vpack.c.b16 %v2699, %v2691
    %v4524 = vpack.c.b16 %v2700, %v2692
    %v4525 = vpack.c.b16 %v2701, %v2693
    %v4526 = vpack.c.b16 %v2702, %v2694
    %v4527 = vpack.c.b16 %v2703, %v2695
    %v4528 = vpack.c.b16 %v2712, %v2704
    %v4529 = vpack.c.b16 %v2713, %v2705
    %v4530 = vpack.c.b16 %v2714, %v2706
    %v4531 = vpack.c.b16 %v2715, %v2707
    %v4532 = vpack.c.b16 %v2716, %v2708
    %v4533 = vpack.c.b16 %v2717, %v2709
    %v4534 = vpack.c.b16 %v2718, %v2710
    %v4535 = vpack.c.b16 %v2719, %v2711
    %v4536 = vpack.c.b16 %v2728, %v2720
    %v4537 = vpack.c.b16 %v2729, %v2721
    %v4538 = vpack.c.b16 %v2730, %v2722
    %v4539 = vpack.c.b16 %v2731, %v2723
    %v4540 = vpack.c.b16 %v2732, %v2724
    %v4541 = vpack.c.b16 %v2733, %v2725
    %v4542 = vpack.c.b16 %v2734, %v2726
    %v4543 = vpack.c.b16 %v2735, %v2727
    %v4544 = vpack.c.b16 %v2744, %v2736
    %v4545 = vpack.c.b16 %v2745, %v2737
    %v4546 = vpack.c.b16 %v2746, %v2738
    %v4547 = vpack.c.b16 %v2747, %v2739
    %v4548 = vpack.c.b16 %v2748, %v2740
    %v4549 = vpack.c.b16 %v2749, %v2741
    %v4550 = vpack.c.b16 %v2750, %v2742
    %v4551 = vpack.c.b16 %v2751, %v2743
    %v4552 = vpack.c.b16 %v2760, %v2752
    %v4553 = vpack.c.b16 %v2761, %v2753
    %v4554 = vpack.c.b16 %v2762, %v2754
    %v4555 = vpack.c.b16 %v2763, %v2755
    %v4556 = vpack.c.b16 %v2764, %v2756
    %v4557 = vpack.c.b16 %v2765, %v2757
    %v4558 = vpack.c.b16 %v2766, %v2758
    %v4559 = vpack.c.b16 %v2767, %v2759
    %v4560 = vpack.c.b16 %v2776, %v2768
    %v4561 = vpack.c.b16 %v2777, %v2769
    %v4562 = vpack.c.b16 %v2778, %v2770
    %v4563 = vpack.c.b16 %v2779, %v2771
    %v4564 = vpack.c.b16 %v2780, %v2772
    %v4565 = vpack.c.b16 %v2781, %v2773
    %v4566 = vpack.c.b16 %v2782, %v2774
    %v4567 = vpack.c.b16 %v2783, %v2775
    %v4568 = vpack.c.b16 %v2792, %v2784
    %v4569 = vpack.c.b16 %v2793, %v2785
    %v4570 = vpack.c.b16 %v2794, %v2786
    %v4571 = vpack.c.b16 %v2795, %v2787
    %v4572 = vpack.c.b16 %v2796, %v2788
    %v4573 = vpack.c.b16 %v2797, %v2789
    %v4574 = vpack.c.b16 %v2798, %v2790
    %v4575 = vpack.c.b16 %v2799, %v2791
    %v4576 = vpack.c.b16 %v2808, %v2800
    %v4577 = vpack.c.b16 %v2809, %v2801
    %v4578 = vpack.c.b16 %v2810, %v2802
    %v4579 = vpack.c.b16 %v2811, %v2803
    %v4580 = vpack.c.b16 %v2812, %v2804
    %v4581 = vpack.c.b16 %v2813, %v2805
    %v4582 = vpack.c.b16 %v2814, %v2806
    %v4583 = vpack.c.b16 %v2815, %v2807
    %v4584 = vpack.c.b16 %v2824, %v2816
    %v4585 = vpack.c.b16 %v2825, %v2817
    %v4586 = vpack.c.b16 %v2826, %v2818
    %v4587 = vpack.c.b16 %v2827, %v2819
    %v4588 = vpack.c.b16 %v2828, %v2820
    %v4589 = vpack.c.b16 %v2829, %v2821
    %v4590 = vpack.c.b16 %v2830, %v2822
    %v4591 = vpack.c.b16 %v2831, %v2823
    %v4592 = vpack.c.b16 %v2840, %v2832
    %v4593 = vpack.c.b16 %v2841, %v2833
    %v4594 = vpack.c.b16 %v2842, %v2834
    %v4595 = vpack.c.b16 %v2843, %v2835
    %v4596 = vpack.c.b16 %v2844, %v2836
    %v4597 = vpack.c.b16 %v2845, %v2837
    %v4598 = vpack.c.b16 %v2846, %v2838
    %v4599 = vpack.c.b16 %v2847, %v2839
    %v4600 = vpack.c.b16 %v2856, %v2848
    %v4601 = vpack.c.b16 %v2857, %v2849
    %v4602 = vpack.c.b16 %v2858, %v2850
    %v4603 = vpack.c.b16 %v2859, %v2851
    %v4604 = vpack.c.b16 %v2860, %v2852
    %v4605 = vpack.c.b16 %v2861, %v2853
    %v4606 = vpack.c.b16 %v2862, %v2854
    %v4607 = vpack.c.b16 %v2863, %v2855
    %v4608 = vpack.c.b16 %v2872, %v2864
    %v4609 = vpack.c.b16 %v2873, %v2865
    %v4610 = vpack.c.b16 %v2874, %v2866
    %v4611 = vpack.c.b16 %v2875, %v2867
    %v4612 = vpack.c.b16 %v2876, %v2868
    %v4613 = vpack.c.b16 %v2877, %v2869
    %v4614 = vpack.c.b16 %v2878, %v2870
    %v4615 = vpack.c.b16 %v2879, %v2871
    %v4616 = vpack.c.b16 %v2888, %v2880
    %v4617 = vpack.c.b16 %v2889, %v2881
    %v4618 = vpack.c.b16 %v2890, %v2882
    %v4619 = vpack.c.b16 %v2891, %v2883
    %v4620 = vpack.c.b16 %v2892, %v2884
    %v4621 = vpack.c.b16 %v2893, %v2885
    %v4622 = vpack.c.b16 %v2894, %v2886
    %v4623 = vpack.c.b16 %v2895, %v2887
    %v4624 = vpack.c.b16 %v2904, %v2896
    %v4625 = vpack.c.b16 %v2905, %v2897
    %v4626 = vpack.c.b16 %v2906, %v2898
    %v4627 = vpack.c.b16 %v2907, %v2899
    %v4628 = vpack.c.b16 %v2908, %v2900
    %v4629 = vpack.c.b16 %v2909, %v2901
    %v4630 = vpack.c.b16 %v2910, %v2902
    %v4631 = vpack.c.b16 %v2911, %v2903
    %v4632 = vpack.c.b16 %v2920, %v2912
    %v4633 = vpack.c.b16 %v2921, %v2913
    %v4634 = vpack.c.b16 %v2922, %v2914
    %v4635 = vpack.c.b16 %v2923, %v2915
    %v4636 = vpack.c.b16 %v2924, %v2916
    %v4637 = vpack.c.b16 %v2925, %v2917
    %v4638 = vpack.c.b16 %v2926, %v2918
    %v4639 = vpack.c.b16 %v2927, %v2919
    %v4640 = vpack.c.b16 %v2936, %v2928
    %v4641 = vpack.c.b16 %v2937, %v2929
    %v4642 = vpack.c.b16 %v2938, %v2930
    %v4643 = vpack.c.b16 %v2939, %v2931
    %v4644 = vpack.c.b16 %v2940, %v2932
    %v4645 = vpack.c.b16 %v2941, %v2933
    %v4646 = vpack.c.b16 %v2942, %v2934
    %v4647 = vpack.c.b16 %v2943, %v2935
    %v4648 = vpack.c.b16 %v2952, %v2944
    %v4649 = vpack.c.b16 %v2953, %v2945
    %v4650 = vpack.c.b16 %v2954, %v2946
    %v4651 = vpack.c.b16 %v2955, %v2947
    %v4652 = vpack.c.b16 %v2956, %v2948
    %v4653 = vpack.c.b16 %v2957, %v2949
    %v4654 = vpack.c.b16 %v2958, %v2950
    %v4655 = vpack.c.b16 %v2959, %v2951
    %v4656 = vpack.c.b16 %v2968, %v2960
    %v4657 = vpack.c.b16 %v2969, %v2961
    %v4658 = vpack.c.b16 %v2970, %v2962
    %v4659 = vpack.c.b16 %v2971, %v2963
    %v4660 = vpack.c.b16 %v2972, %v2964
    %v4661 = vpack.c.b16 %v2973, %v2965
    %v4662 = vpack.c.b16 %v2974, %v2966
    %v4663 = vpack.c.b16 %v2975, %v2967
    %v4664 = vpack.c.b16 %v2984, %v2976
    %v4665 = vpack.c.b16 %v2985, %v2977
    %v4666 = vpack.c.b16 %v2986, %v2978
    %v4667 = vpack.c.b16 %v2987, %v2979
    %v4668 = vpack.c.b16 %v2988, %v2980
    %v4669 = vpack.c.b16 %v2989, %v2981
    %v4670 = vpack.c.b16 %v2990, %v2982
    %v4671 = vpack.c.b16 %v2991, %v2983
    %v4672 = vpack.c.b16 %v3000, %v2992
    %v4673 = vpack.c.b16 %v3001, %v2993
    %v4674 = vpack.c.b16 %v3002, %v2994
    %v4675 = vpack.c.b16 %v3003, %v2995
    %v4676 = vpack.c.b16 %v3004, %v2996
    %v4677 = vpack.c.b16 %v3005, %v2997
    %v4678 = vpack.c.b16 %v3006, %v2998
    %v4679 = vpack.c.b16 %v3007, %v2999
    %v4680 = vpack.c.b16 %v3016, %v3008
    %v4681 = vpack.c.b16 %v3017, %v3009
    %v4682 = vpack.c.b16 %v3018, %v3010
    %v4683 = vpack.c.b16 %v3019, %v3011
    %v4684 = vpack.c.b16 %v3020, %v3012
    %v4685 = vpack.c.b16 %v3021, %v3013
    %v4686 = vpack.c.b16 %v3022, %v3014
    %v4687 = vpack.c.b16 %v3023, %v3015
    %v4688 = vpack.c.b16 %v3032, %v3024
    %v4689 = vpack.c.b16 %v3033, %v3025
    %v4690 = vpack.c.b16 %v3034, %v3026
    %v4691 = vpack.c.b16 %v3035, %v3027
    %v4692 = vpack.c.b16 %v3036, %v3028
    %v4693 = vpack.c.b16 %v3037, %v3029
    %v4694 = vpack.c.b16 %v3038, %v3030
    %v4695 = vpack.c.b16 %v3039, %v3031
    %v4696 = vpack.c.b16 %v3048, %v3040
    %v4697 = vpack.c.b16 %v3049, %v3041
    %v4698 = vpack.c.b16 %v3050, %v3042
    %v4699 = vpack.c.b16 %v3051, %v3043
    %v4700 = vpack.c.b16 %v3052, %v3044
    %v4701 = vpack.c.b16 %v3053, %v3045
    %v4702 = vpack.c.b16 %v3054, %v3046
    %v4703 = vpack.c.b16 %v3055, %v3047
    %v4704 = vpack.c.b16 %v3064, %v3056
    %v4705 = vpack.c.b16 %v3065, %v3057
    %v4706 = vpack.c.b16 %v3066, %v3058
    %v4707 = vpack.c.b16 %v3067, %v3059
    %v4708 = vpack.c.b16 %v3068, %v3060
    %v4709 = vpack.c.b16 %v3069, %v3061
    %v4710 = vpack.c.b16 %v3070, %v3062
    %v4711 = vpack.c.b16 %v3071, %v3063
    %v4712 = vpack.c.b16 %v3080, %v3072
    %v4713 = vpack.c.b16 %v3081, %v3073
    %v4714 = vpack.c.b16 %v3082, %v3074
    %v4715 = vpack.c.b16 %v3083, %v3075
    %v4716 = vpack.c.b16 %v3084, %v3076
    %v4717 = vpack.c.b16 %v3085, %v3077
    %v4718 = vpack.c.b16 %v3086, %v3078
    %v4719 = vpack.c.b16 %v3087, %v3079
    %v4720 = vpack.c.b16 %v3096, %v3088
    %v4721 = vpack.c.b16 %v3097, %v3089
    %v4722 = vpack.c.b16 %v3098, %v3090
    %v4723 = vpack.c.b16 %v3099, %v3091
    %v4724 = vpack.c.b16 %v3100, %v3092
    %v4725 = vpack.c.b16 %v3101, %v3093
    %v4726 = vpack.c.b16 %v3102, %v3094
    %v4727 = vpack.c.b16 %v3103, %v3095
    %v4728 = vpack.c.b16 %v3112, %v3104
    %v4729 = vpack.c.b16 %v3113, %v3105
    %v4730 = vpack.c.b16 %v3114, %v3106
    %v4731 = vpack.c.b16 %v3115, %v3107
    %v4732 = vpack.c.b16 %v3116, %v3108
    %v4733 = vpack.c.b16 %v3117, %v3109
    %v4734 = vpack.c.b16 %v3118, %v3110
    %v4735 = vpack.c.b16 %v3119, %v3111
    %v4736 = vpack.c.b16 %v3128, %v3120
    %v4737 = vpack.c.b16 %v3129, %v3121
    %v4738 = vpack.c.b16 %v3130, %v3122
    %v4739 = vpack.c.b16 %v3131, %v3123
    %v4740 = vpack.c.b16 %v3132, %v3124
    %v4741 = vpack.c.b16 %v3133, %v3125
    %v4742 = vpack.c.b16 %v3134, %v3126
    %v4743 = vpack.c.b16 %v3135, %v3127
    %v4744 = vpack.c.b16 %v3144, %v3136
    %v4745 = vpack.c.b16 %v3145, %v3137
    %v4746 = vpack.c.b16 %v3146, %v3138
    %v4747 = vpack.c.b16 %v3147, %v3139
    %v4748 = vpack.c.b16 %v3148, %v3140
    %v4749 = vpack.c.b16 %v3149, %v3141
    %v4750 = vpack.c.b16 %v3150, %v3142
    %v4751 = vpack.c.b16 %v3151, %v3143
    %v4752 = vpack.c.b16 %v3160, %v3152
    %v4753 = vpack.c.b16 %v3161, %v3153
    %v4754 = vpack.c.b16 %v3162, %v3154
    %v4755 = vpack.c.b16 %v3163, %v3155
    %v4756 = vpack.c.b16 %v3164, %v3156
    %v4757 = vpack.c.b16 %v3165, %v3157
    %v4758 = vpack.c.b16 %v3166, %v3158
    %v4759 = vpack.c.b16 %v3167, %v3159
    %v4760 = vpack.c.b16 %v3176, %v3168
    %v4761 = vpack.c.b16 %v3177, %v3169
    %v4762 = vpack.c.b16 %v3178, %v3170
    %v4763 = vpack.c.b16 %v3179, %v3171
    %v4764 = vpack.c.b16 %v3180, %v3172
    %v4765 = vpack.c.b16 %v3181, %v3173
    %v4766 = vpack.c.b16 %v3182, %v3174
    %v4767 = vpack.c.b16 %v3183, %v3175
    %v4768 = vpack.c.b16 %v3192, %v3184
    %v4769 = vpack.c.b16 %v3193, %v3185
    %v4770 = vpack.c.b16 %v3194, %v3186
    %v4771 = vpack.c.b16 %v3195, %v3187
    %v4772 = vpack.c.b16 %v3196, %v3188
    %v4773 = vpack.c.b16 %v3197, %v3189
    %v4774 = vpack.c.b16 %v3198, %v3190
    %v4775 = vpack.c.b16 %v3199, %v3191
    %v4776 = vpack.c.b16 %v3208, %v3200
    %v4777 = vpack.c.b16 %v3209, %v3201
    %v4778 = vpack.c.b16 %v3210, %v3202
    %v4779 = vpack.c.b16 %v3211, %v3203
    %v4780 = vpack.c.b16 %v3212, %v3204
    %v4781 = vpack.c.b16 %v3213, %v3205
    %v4782 = vpack.c.b16 %v3214, %v3206
    %v4783 = vpack.c.b16 %v3215, %v3207
    %v4784 = vpack.c.b16 %v3224, %v3216
    %v4785 = vpack.c.b16 %v3225, %v3217
    %v4786 = vpack.c.b16 %v3226, %v3218
    %v4787 = vpack.c.b16 %v3227, %v3219
    %v4788 = vpack.c.b16 %v3228, %v3220
    %v4789 = vpack.c.b16 %v3229, %v3221
    %v4790 = vpack.c.b16 %v3230, %v3222
    %v4791 = vpack.c.b16 %v3231, %v3223
    %v4792 = vpack.c.b16 %v3240, %v3232
    %v4793 = vpack.c.b16 %v3241, %v3233
    %v4794 = vpack.c.b16 %v3242, %v3234
    %v4795 = vpack.c.b16 %v3243, %v3235
    %v4796 = vpack.c.b16 %v3244, %v3236
    %v4797 = vpack.c.b16 %v3245, %v3237
    %v4798 = vpack.c.b16 %v3246, %v3238
    %v4799 = vpack.c.b16 %v3247, %v3239
    %v4800 = vpack.c.b16 %v3256, %v3248
    %v4801 = vpack.c.b16 %v3257, %v3249
    %v4802 = vpack.c.b16 %v3258, %v3250
    %v4803 = vpack.c.b16 %v3259, %v3251
    %v4804 = vpack.c.b16 %v3260, %v3252
    %v4805 = vpack.c.b16 %v3261, %v3253
    %v4806 = vpack.c.b16 %v3262, %v3254
    %v4807 = vpack.c.b16 %v3263, %v3255
    %v4808 = vpack.c.b16 %v3272, %v3264
    %v4809 = vpack.c.b16 %v3273, %v3265
    %v4810 = vpack.c.b16 %v3274, %v3266
    %v4811 = vpack.c.b16 %v3275, %v3267
    %v4812 = vpack.c.b16 %v3276, %v3268
    %v4813 = vpack.c.b16 %v3277, %v3269
    %v4814 = vpack.c.b16 %v3278, %v3270
    %v4815 = vpack.c.b16 %v3279, %v3271
    %v4816 = vpack.c.b16 %v3288, %v3280
    %v4817 = vpack.c.b16 %v3289, %v3281
    %v4818 = vpack.c.b16 %v3290, %v3282
    %v4819 = vpack.c.b16 %v3291, %v3283
    %v4820 = vpack.c.b16 %v3292, %v3284
    %v4821 = vpack.c.b16 %v3293, %v3285
    %v4822 = vpack.c.b16 %v3294, %v3286
    %v4823 = vpack.c.b16 %v3295, %v3287
    %v4824 = vpack.c.b16 %v3304, %v3296
    %v4825 = vpack.c.b16 %v3305, %v3297
    %v4826 = vpack.c.b16 %v3306, %v3298
    %v4827 = vpack.c.b16 %v3307, %v3299
    %v4828 = vpack.c.b16 %v3308, %v3300
    %v4829 = vpack.c.b16 %v3309, %v3301
    %v4830 = vpack.c.b16 %v3310, %v3302
    %v4831 = vpack.c.b16 %v3311, %v3303
    %v4832 = vpack.c.b16 %v3320, %v3312
    %v4833 = vpack.c.b16 %v3321, %v3313
    %v4834 = vpack.c.b16 %v3322, %v3314
    %v4835 = vpack.c.b16 %v3323, %v3315
    %v4836 = vpack.c.b16 %v3324, %v3316
    %v4837 = vpack.c.b16 %v3325, %v3317
    %v4838 = vpack.c.b16 %v3326, %v3318
    %v4839 = vpack.c.b16 %v3327, %v3319
    %v4840 = vpack.c.b16 %v3336, %v3328
    %v4841 = vpack.c.b16 %v3337, %v3329
    %v4842 = vpack.c.b16 %v3338, %v3330
    %v4843 = vpack.c.b16 %v3339, %v3331
    %v4844 = vpack.c.b16 %v3340, %v3332
    %v4845 = vpack.c.b16 %v3341, %v3333
    %v4846 = vpack.c.b16 %v3342, %v3334
    %v4847 = vpack.c.b16 %v3343, %v3335
    %v4848 = vpack.c.b16 %v3352, %v3344
    %v4849 = vpack.c.b16 %v3353, %v3345
    %v4850 = vpack.c.b16 %v3354, %v3346
    %v4851 = vpack.c.b16 %v3355, %v3347
    %v4852 = vpack.c.b16 %v3356, %v3348
    %v4853 = vpack.c.b16 %v3357, %v3349
    %v4854 = vpack.c.b16 %v3358, %v3350
    %v4855 = vpack.c.b16 %v3359, %v3351
    %v4856 = vpack.c.b16 %v3368, %v3360
    %v4857 = vpack.c.b16 %v3369, %v3361
    %v4858 = vpack.c.b16 %v3370, %v3362
    %v4859 = vpack.c.b16 %v3371, %v3363
    %v4860 = vpack.c.b16 %v3372, %v3364
    %v4861 = vpack.c.b16 %v3373, %v3365
    %v4862 = vpack.c.b16 %v3374, %v3366
    %v4863 = vpack.c.b16 %v3375, %v3367
    %v4864 = vpack.c.b16 %v3384, %v3376
    %v4865 = vpack.c.b16 %v3385, %v3377
    %v4866 = vpack.c.b16 %v3386, %v3378
    %v4867 = vpack.c.b16 %v3387, %v3379
    %v4868 = vpack.c.b16 %v3388, %v3380
    %v4869 = vpack.c.b16 %v3389, %v3381
    %v4870 = vpack.c.b16 %v3390, %v3382
    %v4871 = vpack.c.b16 %v3391, %v3383
    %v4872 = vpack.c.b16 %v3400, %v3392
    %v4873 = vpack.c.b16 %v3401, %v3393
    %v4874 = vpack.c.b16 %v3402, %v3394
    %v4875 = vpack.c.b16 %v3403, %v3395
    %v4876 = vpack.c.b16 %v3404, %v3396
    %v4877 = vpack.c.b16 %v3405, %v3397
    %v4878 = vpack.c.b16 %v3406, %v3398
    %v4879 = vpack.c.b16 %v3407, %v3399
    %v4880 = vpack.c.b16 %v3416, %v3408
    %v4881 = vpack.c.b16 %v3417, %v3409
    %v4882 = vpack.c.b16 %v3418, %v3410
    %v4883 = vpack.c.b16 %v3419, %v3411
    %v4884 = vpack.c.b16 %v3420, %v3412
    %v4885 = vpack.c.b16 %v3421, %v3413
    %v4886 = vpack.c.b16 %v3422, %v3414
    %v4887 = vpack.c.b16 %v3423, %v3415
    %v4888 = vpack.c.b16 %v3432, %v3424
    %v4889 = vpack.c.b16 %v3433, %v3425
    %v4890 = vpack.c.b16 %v3434, %v3426
    %v4891 = vpack.c.b16 %v3435, %v3427
    %v4892 = vpack.c.b16 %v3436, %v3428
    %v4893 = vpack.c.b16 %v3437, %v3429
    %v4894 = vpack.c.b16 %v3438, %v3430
    %v4895 = vpack.c.b16 %v3439, %v3431
    %v4896 = vpack.c.b16 %v3448, %v3440
    %v4897 = vpack.c.b16 %v3449, %v3441
    %v4898 = vpack.c.b16 %v3450, %v3442
    %v4899 = vpack.c.b16 %v3451, %v3443
    %v4900 = vpack.c.b16 %v3452, %v3444
    %v4901 = vpack.c.b16 %v3453, %v3445
    %v4902 = vpack.c.b16 %v3454, %v3446
    %v4903 = vpack.c.b16 %v3455, %v3447
    %v4904 = vpack.c.b16 %v3464, %v3456
    %v4905 = vpack.c.b16 %v3465, %v3457
    %v4906 = vpack.c.b16 %v3466, %v3458
    %v4907 = vpack.c.b16 %v3467, %v3459
    %v4908 = vpack.c.b16 %v3468, %v3460
    %v4909 = vpack.c.b16 %v3469, %v3461
    %v4910 = vpack.c.b16 %v3470, %v3462
    %v4911 = vpack.c.b16 %v3471, %v3463
    %v4912 = vpack.c.b16 %v3480, %v3472
    %v4913 = vpack.c.b16 %v3481, %v3473
    %v4914 = vpack.c.b16 %v3482, %v3474
    %v4915 = vpack.c.b16 %v3483, %v3475
    %v4916 = vpack.c.b16 %v3484, %v3476
    %v4917 = vpack.c.b16 %v3485, %v3477
    %v4918 = vpack.c.b16 %v3486, %v3478
    %v4919 = vpack.c.b16 %v3487, %v3479
    %v4920 = vpack.c.b16 %v3496, %v3488
    %v4921 = vpack.c.b16 %v3497, %v3489
    %v4922 = vpack.c.b16 %v3498, %v3490
    %v4923 = vpack.c.b16 %v3499, %v3491
    %v4924 = vpack.c.b16 %v3500, %v3492
    %v4925 = vpack.c.b16 %v3501, %v3493
    %v4926 = vpack.c.b16 %v3502, %v3494
    %v4927 = vpack.c.b16 %v3503, %v3495
    %v4928 = vpack.c.b16 %v3512, %v3504
    %v4929 = vpack.c.b16 %v3513, %v3505
    %v4930 = vpack.c.b16 %v3514, %v3506
    %v4931 = vpack.c.b16 %v3515, %v3507
    %v4932 = vpack.c.b16 %v3516, %v3508
    %v4933 = vpack.c.b16 %v3517, %v3509
    %v4934 = vpack.c.b16 %v3518, %v3510
    %v4935 = vpack.c.b16 %v3519, %v3511
    %v4936 = vpack.c.b16 %v3528, %v3520
    %v4937 = vpack.c.b16 %v3529, %v3521
    %v4938 = vpack.c.b16 %v3530, %v3522
    %v4939 = vpack.c.b16 %v3531, %v3523
    %v4940 = vpack.c.b16 %v3532, %v3524
    %v4941 = vpack.c.b16 %v3533, %v3525
    %v4942 = vpack.c.b16 %v3534, %v3526
    %v4943 = vpack.c.b16 %v3535, %v3527
    %v4944 = vpack.c.b16 %v3544, %v3536
    %v4945 = vpack.c.b16 %v3545, %v3537
    %v4946 = vpack.c.b16 %v3546, %v3538
    %v4947 = vpack.c.b16 %v3547, %v3539
    %v4948 = vpack.c.b16 %v3548, %v3540
    %v4949 = vpack.c.b16 %v3549, %v3541
    %v4950 = vpack.c.b16 %v3550, %v3542
    %v4951 = vpack.c.b16 %v3551, %v3543
    %v4952 = vpack.c.b16 %v3560, %v3552
    %v4953 = vpack.c.b16 %v3561, %v3553
    %v4954 = vpack.c.b16 %v3562, %v3554
    %v4955 = vpack.c.b16 %v3563, %v3555
    %v4956 = vpack.c.b16 %v3564, %v3556
    %v4957 = vpack.c.b16 %v3565, %v3557
    %v4958 = vpack.c.b16 %v3566, %v3558
    %v4959 = vpack.c.b16 %v3567, %v3559
    %v4960 = vpack.c.b16 %v3576, %v3568
    %v4961 = vpack.c.b16 %v3577, %v3569
    %v4962 = vpack.c.b16 %v3578, %v3570
    %v4963 = vpack.c.b16 %v3579, %v3571
    %v4964 = vpack.c.b16 %v3580, %v3572
    %v4965 = vpack.c.b16 %v3581, %v3573
    %v4966 = vpack.c.b16 %v3582, %v3574
    %v4967 = vpack.c.b16 %v3583, %v3575
    %v4968 = vpack.c.b16 %v3592, %v3584
    %v4969 = vpack.c.b16 %v3593, %v3585
    %v4970 = vpack.c.b16 %v3594, %v3586
    %v4971 = vpack.c.b16 %v3595, %v3587
    %v4972 = vpack.c.b16 %v3596, %v3588
    %v4973 = vpack.c.b16 %v3597, %v3589
    %v4974 = vpack.c.b16 %v3598, %v3590
    %v4975 = vpack.c.b16 %v3599, %v3591
    %v4976 = vpack.c.b16 %v3608, %v3600
    %v4977 = vpack.c.b16 %v3609, %v3601
    %v4978 = vpack.c.b16 %v3610, %v3602
    %v4979 = vpack.c.b16 %v3611, %v3603
    %v4980 = vpack.c.b16 %v3612, %v3604
    %v4981 = vpack.c.b16 %v3613, %v3605
    %v4982 = vpack.c.b16 %v3614, %v3606
    %v4983 = vpack.c.b16 %v3615, %v3607
    %v4984 = vpack.c.b16 %v3624, %v3616
    %v4985 = vpack.c.b16 %v3625, %v3617
    %v4986 = vpack.c.b16 %v3626, %v3618
    %v4987 = vpack.c.b16 %v3627, %v3619
    %v4988 = vpack.c.b16 %v3628, %v3620
    %v4989 = vpack.c.b16 %v3629, %v3621
    %v4990 = vpack.c.b16 %v3630, %v3622
    %v4991 = vpack.c.b16 %v3631, %v3623
    %v4992 = vpack.c.b16 %v3640, %v3632
    %v4993 = vpack.c.b16 %v3641, %v3633
    %v4994 = vpack.c.b16 %v3642, %v3634
    %v4995 = vpack.c.b16 %v3643, %v3635
    %v4996 = vpack.c.b16 %v3644, %v3636
    %v4997 = vpack.c.b16 %v3645, %v3637
    %v4998 = vpack.c.b16 %v3646, %v3638
    %v4999 = vpack.c.b16 %v3647, %v3639
    %v5000 = vpack.c.b16 %v3656, %v3648
    %v5001 = vpack.c.b16 %v3657, %v3649
    %v5002 = vpack.c.b16 %v3658, %v3650
    %v5003 = vpack.c.b16 %v3659, %v3651
    %v5004 = vpack.c.b16 %v3660, %v3652
    %v5005 = vpack.c.b16 %v3661, %v3653
    %v5006 = vpack.c.b16 %v3662, %v3654
    %v5007 = vpack.c.b16 %v3663, %v3655
    %v5008 = vpack.c.b16 %v3672, %v3664
    %v5009 = vpack.c.b16 %v3673, %v3665
    %v5010 = vpack.c.b16 %v3674, %v3666
    %v5011 = vpack.c.b16 %v3675, %v3667
    %v5012 = vpack.c.b16 %v3676, %v3668
    %v5013 = vpack.c.b16 %v3677, %v3669
    %v5014 = vpack.c.b16 %v3678, %v3670
    %v5015 = vpack.c.b16 %v3679, %v3671
    %v5016 = vpack.c.b16 %v3688, %v3680
    %v5017 = vpack.c.b16 %v3689, %v3681
    %v5018 = vpack.c.b16 %v3690, %v3682
    %v5019 = vpack.c.b16 %v3691, %v3683
    %v5020 = vpack.c.b16 %v3692, %v3684
    %v5021 = vpack.c.b16 %v3693, %v3685
    %v5022 = vpack.c.b16 %v3694, %v3686
    %v5023 = vpack.c.b16 %v3695, %v3687
    %v5024 = vpack.c.b16 %v3704, %v3696
    %v5025 = vpack.c.b16 %v3705, %v3697
    %v5026 = vpack.c.b16 %v3706, %v3698
    %v5027 = vpack.c.b16 %v3707, %v3699
    %v5028 = vpack.c.b16 %v3708, %v3700
    %v5029 = vpack.c.b16 %v3709, %v3701
    %v5030 = vpack.c.b16 %v3710, %v3702
    %v5031 = vpack.c.b16 %v3711, %v3703
    %v5032 = vpack.c.b16 %v3720, %v3712
    %v5033 = vpack.c.b16 %v3721, %v3713
    %v5034 = vpack.c.b16 %v3722, %v3714
    %v5035 = vpack.c.b16 %v3723, %v3715
    %v5036 = vpack.c.b16 %v3724, %v3716
    %v5037 = vpack.c.b16 %v3725, %v3717
    %v5038 = vpack.c.b16 %v3726, %v3718
    %v5039 = vpack.c.b16 %v3727, %v3719
    %v5040 = vpack.c.b16 %v3736, %v3728
    %v5041 = vpack.c.b16 %v3737, %v3729
    %v5042 = vpack.c.b16 %v3738, %v3730
    %v5043 = vpack.c.b16 %v3739, %v3731
    %v5044 = vpack.c.b16 %v3740, %v3732
    %v5045 = vpack.c.b16 %v3741, %v3733
    %v5046 = vpack.c.b16 %v3742, %v3734
    %v5047 = vpack.c.b16 %v3743, %v3735
    %v5048 = vpack.c.b16 %v3752, %v3744
    %v5049 = vpack.c.b16 %v3753, %v3745
    %v5050 = vpack.c.b16 %v3754, %v3746
    %v5051 = vpack.c.b16 %v3755, %v3747
    %v5052 = vpack.c.b16 %v3756, %v3748
    %v5053 = vpack.c.b16 %v3757, %v3749
    %v5054 = vpack.c.b16 %v3758, %v3750
    %v5055 = vpack.c.b16 %v3759, %v3751
    %v5056 = vpack.c.b16 %v3768, %v3760
    %v5057 = vpack.c.b16 %v3769, %v3761
    %v5058 = vpack.c.b16 %v3770, %v3762
    %v5059 = vpack.c.b16 %v3771, %v3763
    %v5060 = vpack.c.b16 %v3772, %v3764
    %v5061 = vpack.c.b16 %v3773, %v3765
    %v5062 = vpack.c.b16 %v3774, %v3766
    %v5063 = vpack.c.b16 %v3775, %v3767
    %v5064 = vpack.c.b16 %v3784, %v3776
    %v5065 = vpack.c.b16 %v3785, %v3777
    %v5066 = vpack.c.b16 %v3786, %v3778
    %v5067 = vpack.c.b16 %v3787, %v3779
    %v5068 = vpack.c.b16 %v3788, %v3780
    %v5069 = vpack.c.b16 %v3789, %v3781
    %v5070 = vpack.c.b16 %v3790, %v3782
    %v5071 = vpack.c.b16 %v3791, %v3783
    %v5072 = vpack.c.b16 %v3800, %v3792
    %v5073 = vpack.c.b16 %v3801, %v3793
    %v5074 = vpack.c.b16 %v3802, %v3794
    %v5075 = vpack.c.b16 %v3803, %v3795
    %v5076 = vpack.c.b16 %v3804, %v3796
    %v5077 = vpack.c.b16 %v3805, %v3797
    %v5078 = vpack.c.b16 %v3806, %v3798
    %v5079 = vpack.c.b16 %v3807, %v3799
    %v5080 = vpack.c.b16 %v3816, %v3808
    %v5081 = vpack.c.b16 %v3817, %v3809
    %v5082 = vpack.c.b16 %v3818, %v3810
    %v5083 = vpack.c.b16 %v3819, %v3811
    %v5084 = vpack.c.b16 %v3820, %v3812
    %v5085 = vpack.c.b16 %v3821, %v3813
    %v5086 = vpack.c.b16 %v3822, %v3814
    %v5087 = vpack.c.b16 %v3823, %v3815
    %v5088 = vpack.c.b16 %v3832, %v3824
    %v5089 = vpack.c.b16 %v3833, %v3825
    %v5090 = vpack.c.b16 %v3834, %v3826
    %v5091 = vpack.c.b16 %v3835, %v3827
    %v5092 = vpack.c.b16 %v3836, %v3828
    %v5093 = vpack.c.b16 %v3837, %v3829
    %v5094 = vpack.c.b16 %v3838, %v3830
    %v5095 = vpack.c.b16 %v3839, %v3831
    %v5096 = vpack.c.b16 %v3848, %v3840
    %v5097 = vpack.c.b16 %v3849, %v3841
    %v5098 = vpack.c.b16 %v3850, %v3842
    %v5099 = vpack.c.b16 %v3851, %v3843
    %v5100 = vpack.c.b16 %v3852, %v3844
    %v5101 = vpack.c.b16 %v3853, %v3845
    %v5102 = vpack.c.b16 %v3854, %v3846
    %v5103 = vpack.c.b16 %v3855, %v3847
    %v5104 = vpack.c.b16 %v3864, %v3856
    %v5105 = vpack.c.b16 %v3865, %v3857
    %v5106 = vpack.c.b16 %v3866, %v3858
    %v5107 = vpack.c.b16 %v3867, %v3859
    %v5108 = vpack.c.b16 %v3868, %v3860
    %v5109 = vpack.c.b16 %v3869, %v3861
    %v5110 = vpack.c.b16 %v3870, %v3862
    %v5111 = vpack.c.b16 %v3871, %v3863
    %v5112 = vpack.c.b16 %v3880, %v3872
    %v5113 = vpack.c.b16 %v3881, %v3873
    %v5114 = vpack.c.b16 %v3882, %v3874
    %v5115 = vpack.c.b16 %v3883, %v3875
    %v5116 = vpack.c.b16 %v3884, %v3876
    %v5117 = vpack.c.b16 %v3885, %v3877
    %v5118 = vpack.c.b16 %v3886, %v3878
    %v5119 = vpack.c.b16 %v3887, %v3879
    %v5120 = vpack.c.b16 %v3896, %v3888
    %v5121 = vpack.c.b16 %v3897, %v3889
    %v5122 = vpack.c.b16 %v3898, %v3890
    %v5123 = vpack.c.b16 %v3899, %v3891
    %v5124 = vpack.c.b16 %v3900, %v3892
    %v5125 = vpack.c.b16 %v3901, %v3893
    %v5126 = vpack.c.b16 %v3902, %v3894
    %v5127 = vpack.c.b16 %v3903, %v3895
    %v5128 = vpack.c.b16 %v3912, %v3904
    %v5129 = vpack.c.b16 %v3913, %v3905
    %v5130 = vpack.c.b16 %v3914, %v3906
    %v5131 = vpack.c.b16 %v3915, %v3907
    %v5132 = vpack.c.b16 %v3916, %v3908
    %v5133 = vpack.c.b16 %v3917, %v3909
    %v5134 = vpack.c.b16 %v3918, %v3910
    %v5135 = vpack.c.b16 %v3919, %v3911
    %v5136 = vpack.c.b16 %v3928, %v3920
    %v5137 = vpack.c.b16 %v3929, %v3921
    %v5138 = vpack.c.b16 %v3930, %v3922
    %v5139 = vpack.c.b16 %v3931, %v3923
    %v5140 = vpack.c.b16 %v3932, %v3924
    %v5141 = vpack.c.b16 %v3933, %v3925
    %v5142 = vpack.c.b16 %v3934, %v3926
    %v5143 = vpack.c.b16 %v3935, %v3927
    %v5144 = vpack.c.b16 %v3944, %v3936
    %v5145 = vpack.c.b16 %v3945, %v3937
    %v5146 = vpack.c.b16 %v3946, %v3938
    %v5147 = vpack.c.b16 %v3947, %v3939
    %v5148 = vpack.c.b16 %v3948, %v3940
    %v5149 = vpack.c.b16 %v3949, %v3941
    %v5150 = vpack.c.b16 %v3950, %v3942
    %v5151 = vpack.c.b16 %v3951, %v3943
    %v5152 = vpack.c.b16 %v3960, %v3952
    %v5153 = vpack.c.b16 %v3961, %v3953
    %v5154 = vpack.c.b16 %v3962, %v3954
    %v5155 = vpack.c.b16 %v3963, %v3955
    %v5156 = vpack.c.b16 %v3964, %v3956
    %v5157 = vpack.c.b16 %v3965, %v3957
    %v5158 = vpack.c.b16 %v3966, %v3958
    %v5159 = vpack.c.b16 %v3967, %v3959
    %v5160 = vpack.c.b16 %v3976, %v3968
    %v5161 = vpack.c.b16 %v3977, %v3969
    %v5162 = vpack.c.b16 %v3978, %v3970
    %v5163 = vpack.c.b16 %v3979, %v3971
    %v5164 = vpack.c.b16 %v3980, %v3972
    %v5165 = vpack.c.b16 %v3981, %v3973
    %v5166 = vpack.c.b16 %v3982, %v3974
    %v5167 = vpack.c.b16 %v3983, %v3975
    %v5168 = vpack.c.b16 %v3992, %v3984
    %v5169 = vpack.c.b16 %v3993, %v3985
    %v5170 = vpack.c.b16 %v3994, %v3986
    %v5171 = vpack.c.b16 %v3995, %v3987
    %v5172 = vpack.c.b16 %v3996, %v3988
    %v5173 = vpack.c.b16 %v3997, %v3989
    %v5174 = vpack.c.b16 %v3998, %v3990
    %v5175 = vpack.c.b16 %v3999, %v3991
    %v5176 = vpack.c.b16 %v4008, %v4000
    %v5177 = vpack.c.b16 %v4009, %v4001
    %v5178 = vpack.c.b16 %v4010, %v4002
    %v5179 = vpack.c.b16 %v4011, %v4003
    %v5180 = vpack.c.b16 %v4012, %v4004
    %v5181 = vpack.c.b16 %v4013, %v4005
    %v5182 = vpack.c.b16 %v4014, %v4006
    %v5183 = vpack.c.b16 %v4015, %v4007
    %v5184 = vpack.c.b16 %v4024, %v4016
    %v5185 = vpack.c.b16 %v4025, %v4017
    %v5186 = vpack.c.b16 %v4026, %v4018
    %v5187 = vpack.c.b16 %v4027, %v4019
    %v5188 = vpack.c.b16 %v4028, %v4020
    %v5189 = vpack.c.b16 %v4029, %v4021
    %v5190 = vpack.c.b16 %v4030, %v4022
    %v5191 = vpack.c.b16 %v4031, %v4023
    %v5192 = vpack.c.b16 %v4040, %v4032
    %v5193 = vpack.c.b16 %v4041, %v4033
    %v5194 = vpack.c.b16 %v4042, %v4034
    %v5195 = vpack.c.b16 %v4043, %v4035
    %v5196 = vpack.c.b16 %v4044, %v4036
    %v5197 = vpack.c.b16 %v4045, %v4037
    %v5198 = vpack.c.b16 %v4046, %v4038
    %v5199 = vpack.c.b16 %v4047, %v4039
    %v5200 = vpack.c.b16 %v4056, %v4048
    %v5201 = vpack.c.b16 %v4057, %v4049
    %v5202 = vpack.c.b16 %v4058, %v4050
    %v5203 = vpack.c.b16 %v4059, %v4051
    %v5204 = vpack.c.b16 %v4060, %v4052
    %v5205 = vpack.c.b16 %v4061, %v4053
    %v5206 = vpack.c.b16 %v4062, %v4054
    %v5207 = vpack.c.b16 %v4063, %v4055
    %v5208 = vpack.c.b16 %v4072, %v4064
    %v5209 = vpack.c.b16 %v4073, %v4065
    %v5210 = vpack.c.b16 %v4074, %v4066
    %v5211 = vpack.c.b16 %v4075, %v4067
    %v5212 = vpack.c.b16 %v4076, %v4068
    %v5213 = vpack.c.b16 %v4077, %v4069
    %v5214 = vpack.c.b16 %v4078, %v4070
    %v5215 = vpack.c.b16 %v4079, %v4071
    %v5216 = vpack.c.b16 %v4088, %v4080
    %v5217 = vpack.c.b16 %v4089, %v4081
    %v5218 = vpack.c.b16 %v4090, %v4082
    %v5219 = vpack.c.b16 %v4091, %v4083
    %v5220 = vpack.c.b16 %v4092, %v4084
    %v5221 = vpack.c.b16 %v4093, %v4085
    %v5222 = vpack.c.b16 %v4094, %v4086
    %v5223 = vpack.c.b16 %v4095, %v4087
    %v5224 = vpack.c.b16 %v4104, %v4096
    %v5225 = vpack.c.b16 %v4105, %v4097
    %v5226 = vpack.c.b16 %v4106, %v4098
    %v5227 = vpack.c.b16 %v4107, %v4099
    %v5228 = vpack.c.b16 %v4108, %v4100
    %v5229 = vpack.c.b16 %v4109, %v4101
    %v5230 = vpack.c.b16 %v4110, %v4102
    %v5231 = vpack.c.b16 %v4111, %v4103
    %v5232 = vpack.c.b16 %v4120, %v4112
    %v5233 = vpack.c.b16 %v4121, %v4113
    %v5234 = vpack.c.b16 %v4122, %v4114
    %v5235 = vpack.c.b16 %v4123, %v4115
    %v5236 = vpack.c.b16 %v4124, %v4116
    %v5237 = vpack.c.b16 %v4125, %v4117
    %v5238 = vpack.c.b16 %v4126, %v4118
    %v5239 = vpack.c.b16 %v4127, %v4119
    %v5240 = vpack.c.b16 %v4136, %v4128
    %v5241 = vpack.c.b16 %v4137, %v4129
    %v5242 = vpack.c.b16 %v4138, %v4130
    %v5243 = vpack.c.b16 %v4139, %v4131
    %v5244 = vpack.c.b16 %v4140, %v4132
    %v5245 = vpack.c.b16 %v4141, %v4133
    %v5246 = vpack.c.b16 %v4142, %v4134
    %v5247 = vpack.c.b16 %v4143, %v4135
    %v5248 = vpack.c.b16 %v4152, %v4144
    %v5249 = vpack.c.b16 %v4153, %v4145
    %v5250 = vpack.c.b16 %v4154, %v4146
    %v5251 = vpack.c.b16 %v4155, %v4147
    %v5252 = vpack.c.b16 %v4156, %v4148
    %v5253 = vpack.c.b16 %v4157, %v4149
    %v5254 = vpack.c.b16 %v4158, %v4150
    %v5255 = vpack.c.b16 %v4159, %v4151
    %v5256 = vpack.c.b16 %v4168, %v4160
    %v5257 = vpack.c.b16 %v4169, %v4161
    %v5258 = vpack.c.b16 %v4170, %v4162
    %v5259 = vpack.c.b16 %v4171, %v4163
    %v5260 = vpack.c.b16 %v4172, %v4164
    %v5261 = vpack.c.b16 %v4173, %v4165
    %v5262 = vpack.c.b16 %v4174, %v4166
    %v5263 = vpack.c.b16 %v4175, %v4167
    %v5264 = vpack.c.b16 %v4184, %v4176
    %v5265 = vpack.c.b16 %v4185, %v4177
    %v5266 = vpack.c.b16 %v4186, %v4178
    %v5267 = vpack.c.b16 %v4187, %v4179
    %v5268 = vpack.c.b16 %v4188, %v4180
    %v5269 = vpack.c.b16 %v4189, %v4181
    %v5270 = vpack.c.b16 %v4190, %v4182
    %v5271 = vpack.c.b16 %v4191, %v4183
    %v5272 = vpack.c.b16 %v4200, %v4192
    %v5273 = vpack.c.b16 %v4201, %v4193
    %v5274 = vpack.c.b16 %v4202, %v4194
    %v5275 = vpack.c.b16 %v4203, %v4195
    %v5276 = vpack.c.b16 %v4204, %v4196
    %v5277 = vpack.c.b16 %v4205, %v4197
    %v5278 = vpack.c.b16 %v4206, %v4198
    %v5279 = vpack.c.b16 %v4207, %v4199
    %v5280 = vpack.c.b16 %v4216, %v4208
    %v5281 = vpack.c.b16 %v4217, %v4209
    %v5282 = vpack.c.b16 %v4218, %v4210
    %v5283 = vpack.c.b16 %v4219, %v4211
    %v5284 = vpack.c.b16 %v4220, %v4212
    %v5285 = vpack.c.b16 %v4221, %v4213
    %v5286 = vpack.c.b16 %v4222, %v4214
    %v5287 = vpack.c.b16 %v4223, %v4215
    %v5288 = vpack.c.b16 %v4232, %v4224
    %v5289 = vpack.c.b16 %v4233, %v4225
    %v5290 = vpack.c.b16 %v4234, %v4226
    %v5291 = vpack.c.b16 %v4235, %v4227
    %v5292 = vpack.c.b16 %v4236, %v4228
    %v5293 = vpack.c.b16 %v4237, %v4229
    %v5294 = vpack.c.b16 %v4238, %v4230
    %v5295 = vpack.c.b16 %v4239, %v4231
    %v5296 = vpack.c.b16 %v4248, %v4240
    %v5297 = vpack.c.b16 %v4249, %v4241
    %v5298 = vpack.c.b16 %v4250, %v4242
    %v5299 = vpack.c.b16 %v4251, %v4243
    %v5300 = vpack.c.b16 %v4252, %v4244
    %v5301 = vpack.c.b16 %v4253, %v4245
    %v5302 = vpack.c.b16 %v4254, %v4246
    %v5303 = vpack.c.b16 %v4255, %v4247
    %v5304 = vpack.c.b16 %v4264, %v4256
    %v5305 = vpack.c.b16 %v4265, %v4257
    %v5306 = vpack.c.b16 %v4266, %v4258
    %v5307 = vpack.c.b16 %v4267, %v4259
    %v5308 = vpack.c.b16 %v4268, %v4260
    %v5309 = vpack.c.b16 %v4269, %v4261
    %v5310 = vpack.c.b16 %v4270, %v4262
    %v5311 = vpack.c.b16 %v4271, %v4263
    %v5312 = vpack.c.b16 %v4280, %v4272
    %v5313 = vpack.c.b16 %v4281, %v4273
    %v5314 = vpack.c.b16 %v4282, %v4274
    %v5315 = vpack.c.b16 %v4283, %v4275
    %v5316 = vpack.c.b16 %v4284, %v4276
    %v5317 = vpack.c.b16 %v4285, %v4277
    %v5318 = vpack.c.b16 %v4286, %v4278
    %v5319 = vpack.c.b16 %v4287, %v4279
    %v5320 = vpack.c.b16 %v4296, %v4288
    %v5321 = vpack.c.b16 %v4297, %v4289
    %v5322 = vpack.c.b16 %v4298, %v4290
    %v5323 = vpack.c.b16 %v4299, %v4291
    %v5324 = vpack.c.b16 %v4300, %v4292
    %v5325 = vpack.c.b16 %v4301, %v4293
    %v5326 = vpack.c.b16 %v4302, %v4294
    %v5327 = vpack.c.b16 %v4303, %v4295
    %6352 = vmatprep.subr.bf16.mxu0 %v4305
    %6353 = vmatpush1.bf16.msra.mxu0 %v4304
    %6354 = vmatprep.subr.bf16.mxu0 %v4313
    %6355 = vmatpush1.bf16.msra.mxu0 %v4312
    %6356 = vmatprep.subr.bf16.mxu0 %v4321
    %6357 = vmatpush1.bf16.msra.mxu0 %v4320
    %6358 = vmatprep.subr.bf16.mxu0 %v4329
    %6359 = vmatpush1.bf16.msra.mxu0 %v4328
    %6360 = vmatprep.subr.bf16.mxu0 %v4337
    %6361 = vmatpush1.bf16.msra.mxu0 %v4336
    %6362 = vmatprep.subr.bf16.mxu0 %v4345
    %6363 = vmatpush1.bf16.msra.mxu0 %v4344
    %6364 = vmatprep.subr.bf16.mxu0 %v4353
    %6365 = vmatpush1.bf16.msra.mxu0 %v4352
    %6366 = vmatprep.subr.bf16.mxu0 %v4361
    %6367 = vmatpush1.bf16.msra.mxu0 %v4360
    %6368 = vmatprep.subr.bf16.mxu0 %v4369
    %6369 = vmatpush1.bf16.msra.mxu0 %v4368
    %6370 = vmatprep.subr.bf16.mxu0 %v4377
    %6371 = vmatpush1.bf16.msra.mxu0 %v4376
    %6372 = vmatprep.subr.bf16.mxu0 %v4385
    %6373 = vmatpush1.bf16.msra.mxu0 %v4384
    %6374 = vmatprep.subr.bf16.mxu0 %v4393
    %6375 = vmatpush1.bf16.msra.mxu0 %v4392
    %6376 = vmatprep.subr.bf16.mxu0 %v4401
    %6377 = vmatpush1.bf16.msra.mxu0 %v4400
    %6378 = vmatprep.subr.bf16.mxu0 %v4409
    %6379 = vmatpush1.bf16.msra.mxu0 %v4408
    %6380 = vmatprep.subr.bf16.mxu0 %v4417
    %6381 = vmatpush1.bf16.msra.mxu0 %v4416
    %6382 = vmatprep.subr.bf16.mxu0 %v4425
    %6383 = vmatpush1.bf16.msra.mxu0 %v4424
    %6384 = vmatprep.mubr.bf16.mxu0 %v1201
    %6385 = vmatmul.mubr.bf16.gmra.mrb[0].mxu0 %v1200
    %v6386 = vpop.f32.mrb[0].mxu0
    %v6387 = vadd.f32 %v1139, %v6386
    %v6388 = vpop.f32.mrb[0].mxu0
    %v6389 = vadd.f32 %v1143, %v6388
    %v6390 = vpop.f32.mrb[0].mxu0
    %v6391 = vpop.f32.mrb[0].mxu0
    %6392 = vdwg.mxu0
    %6393 = vmatprep.subr.bf16.mxu0 %v4433
    %6394 = vmatpush1.bf16.msra.mxu0 %v4432
    %6395 = vmatprep.subr.bf16.mxu0 %v4441
    %6396 = vmatpush1.bf16.msra.mxu0 %v4440
    %6397 = vmatprep.subr.bf16.mxu0 %v4449
    %6398 = vmatpush1.bf16.msra.mxu0 %v4448
    %6399 = vmatprep.subr.bf16.mxu0 %v4457
    %6400 = vmatpush1.bf16.msra.mxu0 %v4456
    %6401 = vmatprep.subr.bf16.mxu0 %v4465
    %6402 = vmatpush1.bf16.msra.mxu0 %v4464
    %6403 = vmatprep.subr.bf16.mxu0 %v4473
    %6404 = vmatpush1.bf16.msra.mxu0 %v4472
    %6405 = vmatprep.subr.bf16.mxu0 %v4481
    %6406 = vmatpush1.bf16.msra.mxu0 %v4480
    %6407 = vmatprep.subr.bf16.mxu0 %v4489
    %6408 = vmatpush1.bf16.msra.mxu0 %v4488
    %6409 = vmatprep.subr.bf16.mxu0 %v4497
    %6410 = vmatpush1.bf16.msra.mxu0 %v4496
    %6411 = vmatprep.subr.bf16.mxu0 %v4505
    %6412 = vmatpush1.bf16.msra.mxu0 %v4504
    %6413 = vmatprep.subr.bf16.mxu0 %v4513
    %6414 = vmatpush1.bf16.msra.mxu0 %v4512
    %6415 = vmatprep.subr.bf16.mxu0 %v4521
    %6416 = vmatpush1.bf16.msra.mxu0 %v4520
    %6417 = vmatprep.subr.bf16.mxu0 %v4529
    %6418 = vmatpush1.bf16.msra.mxu0 %v4528
    %6419 = vmatprep.subr.bf16.mxu0 %v4537
    %6420 = vmatpush1.bf16.msra.mxu0 %v4536
    %6421 = vmatprep.subr.bf16.mxu0 %v4545
    %6422 = vmatpush1.bf16.msra.mxu0 %v4544
    %6423 = vmatprep.subr.bf16.mxu0 %v4553
    %6424 = vmatpush1.bf16.msra.mxu0 %v4552
    %6425 = vmatprep.mubr.bf16.mxu0 %v1203
    %6426 = vmatmul.mubr.bf16.gmra.mrb[0].mxu0 %v1202
    %v6427 = vpop.f32.mrb[0].mxu0
    %v6428 = vadd.f32 %v6387, %v6427
    %v6429 = vpop.f32.mrb[0].mxu0
    %v6430 = vadd.f32 %v6389, %v6429
    %v6431 = vpop.f32.mrb[0].mxu0
    %v6432 = vpop.f32.mrb[0].mxu0
    %6433 = vdwg.mxu0
    %6434 = vmatprep.subr.bf16.mxu0 %v4561
    %6435 = vmatpush1.bf16.msra.mxu0 %v4560
    %6436 = vmatprep.subr.bf16.mxu0 %v4569
    %6437 = vmatpush1.bf16.msra.mxu0 %v4568
    %6438 = vmatprep.subr.bf16.mxu0 %v4577
    %6439 = vmatpush1.bf16.msra.mxu0 %v4576
    %6440 = vmatprep.subr.bf16.mxu0 %v4585
    %6441 = vmatpush1.bf16.msra.mxu0 %v4584
    %6442 = vmatprep.subr.bf16.mxu0 %v4593
    %6443 = vmatpush1.bf16.msra.mxu0 %v4592
    %6444 = vmatprep.subr.bf16.mxu0 %v4601
    %6445 = vmatpush1.bf16.msra.mxu0 %v4600
    %6446 = vmatprep.subr.bf16.mxu0 %v4609
    %6447 = vmatpush1.bf16.msra.mxu0 %v4608
    %6448 = vmatprep.subr.bf16.mxu0 %v4617
    %6449 = vmatpush1.bf16.msra.mxu0 %v4616
    %6450 = vmatprep.subr.bf16.mxu0 %v4625
    %6451 = vmatpush1.bf16.msra.mxu0 %v4624
    %6452 = vmatprep.subr.bf16.mxu0 %v4633
    %6453 = vmatpush1.bf16.msra.mxu0 %v4632
    %6454 = vmatprep.subr.bf16.mxu0 %v4641
    %6455 = vmatpush1.bf16.msra.mxu0 %v4640
    %6456 = vmatprep.subr.bf16.mxu0 %v4649
    %6457 = vmatpush1.bf16.msra.mxu0 %v4648
    %6458 = vmatprep.subr.bf16.mxu0 %v4657
    %6459 = vmatpush1.bf16.msra.mxu0 %v4656
    %6460 = vmatprep.subr.bf16.mxu0 %v4665
    %6461 = vmatpush1.bf16.msra.mxu0 %v4664
    %6462 = vmatprep.subr.bf16.mxu0 %v4673
    %6463 = vmatpush1.bf16.msra.mxu0 %v4672
    %6464 = vmatprep.subr.bf16.mxu0 %v4681
    %6465 = vmatpush1.bf16.msra.mxu0 %v4680
    %6466 = vmatprep.mubr.bf16.mxu0 %v1205
    %6467 = vmatmul.mubr.bf16.gmra.mrb[0].mxu0 %v1204
    %v6468 = vpop.f32.mrb[0].mxu0
    %v6469 = vadd.f32 %v6428, %v6468
    %v6470 = vpop.f32.mrb[0].mxu0
    %v6471 = vadd.f32 %v6430, %v6470
    %v6472 = vpop.f32.mrb[0].mxu0
    %v6473 = vpop.f32.mrb[0].mxu0
    %6474 = vdwg.mxu0
    %6475 = vmatprep.subr.bf16.mxu0 %v4689
    %6476 = vmatpush1.bf16.msra.mxu0 %v4688
    %6477 = vmatprep.subr.bf16.mxu0 %v4697
    %6478 = vmatpush1.bf16.msra.mxu0 %v4696
    %6479 = vmatprep.subr.bf16.mxu0 %v4705
    %6480 = vmatpush1.bf16.msra.mxu0 %v4704
    %6481 = vmatprep.subr.bf16.mxu0 %v4713
    %6482 = vmatpush1.bf16.msra.mxu0 %v4712
    %6483 = vmatprep.subr.bf16.mxu0 %v4721
    %6484 = vmatpush1.bf16.msra.mxu0 %v4720
    %6485 = vmatprep.subr.bf16.mxu0 %v4729
    %6486 = vmatpush1.bf16.msra.mxu0 %v4728
    %6487 = vmatprep.subr.bf16.mxu0 %v4737
    %6488 = vmatpush1.bf16.msra.mxu0 %v4736
    %6489 = vmatprep.subr.bf16.mxu0 %v4745
    %6490 = vmatpush1.bf16.msra.mxu0 %v4744
    %6491 = vmatprep.subr.bf16.mxu0 %v4753
    %6492 = vmatpush1.bf16.msra.mxu0 %v4752
    %6493 = vmatprep.subr.bf16.mxu0 %v4761
    %6494 = vmatpush1.bf16.msra.mxu0 %v4760
    %6495 = vmatprep.subr.bf16.mxu0 %v4769
    %6496 = vmatpush1.bf16.msra.mxu0 %v4768
    %6497 = vmatprep.subr.bf16.mxu0 %v4777
    %6498 = vmatpush1.bf16.msra.mxu0 %v4776
    %6499 = vmatprep.subr.bf16.mxu0 %v4785
    %6500 = vmatpush1.bf16.msra.mxu0 %v4784
    %6501 = vmatprep.subr.bf16.mxu0 %v4793
    %6502 = vmatpush1.bf16.msra.mxu0 %v4792
    %6503 = vmatprep.subr.bf16.mxu0 %v4801
    %6504 = vmatpush1.bf16.msra.mxu0 %v4800
    %6505 = vmatprep.subr.bf16.mxu0 %v4809
    %6506 = vmatpush1.bf16.msra.mxu0 %v4808
    %6507 = vmatprep.mubr.bf16.mxu0 %v1207
    %6508 = vmatmul.mubr.bf16.gmra.mrb[0].mxu0 %v1206
    %v6509 = vpop.f32.mrb[0].mxu0
    %v6510 = vadd.f32 %v6469, %v6509
    %v6511 = vpop.f32.mrb[0].mxu0
    %v6512 = vadd.f32 %v6471, %v6511
    %v6513 = vpop.f32.mrb[0].mxu0
    %v6514 = vpop.f32.mrb[0].mxu0
    %6515 = vdwg.mxu0
    %6516 = vmatprep.subr.bf16.mxu0 %v4817
    %6517 = vmatpush1.bf16.msra.mxu0 %v4816
    %6518 = vmatprep.subr.bf16.mxu0 %v4825
    %6519 = vmatpush1.bf16.msra.mxu0 %v4824
    %6520 = vmatprep.subr.bf16.mxu0 %v4833
    %6521 = vmatpush1.bf16.msra.mxu0 %v4832
    %6522 = vmatprep.subr.bf16.mxu0 %v4841
    %6523 = vmatpush1.bf16.msra.mxu0 %v4840
    %6524 = vmatprep.subr.bf16.mxu0 %v4849
    %6525 = vmatpush1.bf16.msra.mxu0 %v4848
    %6526 = vmatprep.subr.bf16.mxu0 %v4857
    %6527 = vmatpush1.bf16.msra.mxu0 %v4856
    %6528 = vmatprep.subr.bf16.mxu0 %v4865
    %6529 = vmatpush1.bf16.msra.mxu0 %v4864
    %6530 = vmatprep.subr.bf16.mxu0 %v4873
    %6531 = vmatpush1.bf16.msra.mxu0 %v4872
    %6532 = vmatprep.subr.bf16.mxu0 %v4881
    %6533 = vmatpush1.bf16.msra.mxu0 %v4880
    %6534 = vmatprep.subr.bf16.mxu0 %v4889
    %6535 = vmatpush1.bf16.msra.mxu0 %v4888
    %6536 = vmatprep.subr.bf16.mxu0 %v4897
    %6537 = vmatpush1.bf16.msra.mxu0 %v4896
    %6538 = vmatprep.subr.bf16.mxu0 %v4905
    %6539 = vmatpush1.bf16.msra.mxu0 %v4904
    %6540 = vmatprep.subr.bf16.mxu0 %v4913
    %6541 = vmatpush1.bf16.msra.mxu0 %v4912
    %6542 = vmatprep.subr.bf16.mxu0 %v4921
    %6543 = vmatpush1.bf16.msra.mxu0 %v4920
    %6544 = vmatprep.subr.bf16.mxu0 %v4929
    %6545 = vmatpush1.bf16.msra.mxu0 %v4928
    %6546 = vmatprep.subr.bf16.mxu0 %v4937
    %6547 = vmatpush1.bf16.msra.mxu0 %v4936
    %6548 = vmatprep.mubr.bf16.mxu0 %v1209
    %6549 = vmatmul.mubr.bf16.gmra.mrb[0].mxu0 %v1208
    %v6550 = vpop.f32.mrb[0].mxu0
    %v6551 = vadd.f32 %v6510, %v6550
    %v6552 = vpop.f32.mrb[0].mxu0
    %v6553 = vadd.f32 %v6512, %v6552
    %v6554 = vpop.f32.mrb[0].mxu0
    %v6555 = vpop.f32.mrb[0].mxu0
    %6556 = vdwg.mxu0
    %6557 = vmatprep.subr.bf16.mxu0 %v4945
    %6558 = vmatpush1.bf16.msra.mxu0 %v4944
    %6559 = vmatprep.subr.bf16.mxu0 %v4953
    %6560 = vmatpush1.bf16.msra.mxu0 %v4952
    %6561 = vmatprep.subr.bf16.mxu0 %v4961
    %6562 = vmatpush1.bf16.msra.mxu0 %v4960
    %6563 = vmatprep.subr.bf16.mxu0 %v4969
    %6564 = vmatpush1.bf16.msra.mxu0 %v4968
    %6565 = vmatprep.subr.bf16.mxu0 %v4977
    %6566 = vmatpush1.bf16.msra.mxu0 %v4976
    %6567 = vmatprep.subr.bf16.mxu0 %v4985
    %6568 = vmatpush1.bf16.msra.mxu0 %v4984
    %6569 = vmatprep.subr.bf16.mxu0 %v4993
    %6570 = vmatpush1.bf16.msra.mxu0 %v4992
    %6571 = vmatprep.subr.bf16.mxu0 %v5001
    %6572 = vmatpush1.bf16.msra.mxu0 %v5000
    %6573 = vmatprep.subr.bf16.mxu0 %v5009
    %6574 = vmatpush1.bf16.msra.mxu0 %v5008
    %6575 = vmatprep.subr.bf16.mxu0 %v5017
    %6576 = vmatpush1.bf16.msra.mxu0 %v5016
    %6577 = vmatprep.subr.bf16.mxu0 %v5025
    %6578 = vmatpush1.bf16.msra.mxu0 %v5024
    %6579 = vmatprep.subr.bf16.mxu0 %v5033
    %6580 = vmatpush1.bf16.msra.mxu0 %v5032
    %6581 = vmatprep.subr.bf16.mxu0 %v5041
    %6582 = vmatpush1.bf16.msra.mxu0 %v5040
    %6583 = vmatprep.subr.bf16.mxu0 %v5049
    %6584 = vmatpush1.bf16.msra.mxu0 %v5048
    %6585 = vmatprep.subr.bf16.mxu0 %v5057
    %6586 = vmatpush1.bf16.msra.mxu0 %v5056
    %6587 = vmatprep.subr.bf16.mxu0 %v5065
    %6588 = vmatpush1.bf16.msra.mxu0 %v5064
    %6589 = vmatprep.mubr.bf16.mxu0 %v1211
    %6590 = vmatmul.mubr.bf16.gmra.mrb[0].mxu0 %v1210
    %v6591 = vpop.f32.mrb[0].mxu0
    %v6592 = vadd.f32 %v6551, %v6591
    %v6593 = vpop.f32.mrb[0].mxu0
    %v6594 = vadd.f32 %v6553, %v6593
    %v6595 = vpop.f32.mrb[0].mxu0
    %v6596 = vpop.f32.mrb[0].mxu0
    %6597 = vdwg.mxu0
    %6598 = vmatprep.subr.bf16.mxu0 %v5073
    %6599 = vmatpush1.bf16.msra.mxu0 %v5072
    %6600 = vmatprep.subr.bf16.mxu0 %v5081
    %6601 = vmatpush1.bf16.msra.mxu0 %v5080
    %6602 = vmatprep.subr.bf16.mxu0 %v5089
    %6603 = vmatpush1.bf16.msra.mxu0 %v5088
    %6604 = vmatprep.subr.bf16.mxu0 %v5097
    %6605 = vmatpush1.bf16.msra.mxu0 %v5096
    %6606 = vmatprep.subr.bf16.mxu0 %v5105
    %6607 = vmatpush1.bf16.msra.mxu0 %v5104
    %6608 = vmatprep.subr.bf16.mxu0 %v5113
    %6609 = vmatpush1.bf16.msra.mxu0 %v5112
    %6610 = vmatprep.subr.bf16.mxu0 %v5121
    %6611 = vmatpush1.bf16.msra.mxu0 %v5120
    %6612 = vmatprep.subr.bf16.mxu0 %v5129
    %6613 = vmatpush1.bf16.msra.mxu0 %v5128
    %6614 = vmatprep.subr.bf16.mxu0 %v5137
    %6615 = vmatpush1.bf16.msra.mxu0 %v5136
    %6616 = vmatprep.subr.bf16.mxu0 %v5145
    %6617 = vmatpush1.bf16.msra.mxu0 %v5144
    %6618 = vmatprep.subr.bf16.mxu0 %v5153
    %6619 = vmatpush1.bf16.msra.mxu0 %v5152
    %6620 = vmatprep.subr.bf16.mxu0 %v5161
    %6621 = vmatpush1.bf16.msra.mxu0 %v5160
    %6622 = vmatprep.subr.bf16.mxu0 %v5169
    %6623 = vmatpush1.bf16.msra.mxu0 %v5168
    %6624 = vmatprep.subr.bf16.mxu0 %v5177
    %6625 = vmatpush1.bf16.msra.mxu0 %v5176
    %6626 = vmatprep.subr.bf16.mxu0 %v5185
    %6627 = vmatpush1.bf16.msra.mxu0 %v5184
    %6628 = vmatprep.subr.bf16.mxu0 %v5193
    %6629 = vmatpush1.bf16.msra.mxu0 %v5192
    %6630 = vmatprep.mubr.bf16.mxu0 %v1213
    %6631 = vmatmul.mubr.bf16.gmra.mrb[0].mxu0 %v1212
    %v6632 = vpop.f32.mrb[0].mxu0
    %v6633 = vadd.f32 %v6592, %v6632
    %v6634 = vpop.f32.mrb[0].mxu0
    %v6635 = vadd.f32 %v6594, %v6634
    %v6636 = vpop.f32.mrb[0].mxu0
    %v6637 = vpop.f32.mrb[0].mxu0
    %6638 = vdwg.mxu0
    %6639 = vmatprep.subr.bf16.mxu0 %v5201
    %6640 = vmatpush1.bf16.msra.mxu0 %v5200
    %6641 = vmatprep.subr.bf16.mxu0 %v5209
    %6642 = vmatpush1.bf16.msra.mxu0 %v5208
    %6643 = vmatprep.subr.bf16.mxu0 %v5217
    %6644 = vmatpush1.bf16.msra.mxu0 %v5216
    %6645 = vmatprep.subr.bf16.mxu0 %v5225
    %6646 = vmatpush1.bf16.msra.mxu0 %v5224
    %6647 = vmatprep.subr.bf16.mxu0 %v5233
    %6648 = vmatpush1.bf16.msra.mxu0 %v5232
    %6649 = vmatprep.subr.bf16.mxu0 %v5241
    %6650 = vmatpush1.bf16.msra.mxu0 %v5240
    %6651 = vmatprep.subr.bf16.mxu0 %v5249
    %6652 = vmatpush1.bf16.msra.mxu0 %v5248
    %6653 = vmatprep.subr.bf16.mxu0 %v5257
    %6654 = vmatpush1.bf16.msra.mxu0 %v5256
    %6655 = vmatprep.subr.bf16.mxu0 %v5265
    %6656 = vmatpush1.bf16.msra.mxu0 %v5264
    %6657 = vmatprep.subr.bf16.mxu0 %v5273
    %6658 = vmatpush1.bf16.msra.mxu0 %v5272
    %6659 = vmatprep.subr.bf16.mxu0 %v5281
    %6660 = vmatpush1.bf16.msra.mxu0 %v5280
    %6661 = vmatprep.subr.bf16.mxu0 %v5289
    %6662 = vmatpush1.bf16.msra.mxu0 %v5288
    %6663 = vmatprep.subr.bf16.mxu0 %v5297
    %6664 = vmatpush1.bf16.msra.mxu0 %v5296
    %6665 = vmatprep.subr.bf16.mxu0 %v5305
    %6666 = vmatpush1.bf16.msra.mxu0 %v5304
    %6667 = vmatprep.subr.bf16.mxu0 %v5313
    %6668 = vmatpush1.bf16.msra.mxu0 %v5312
    %6669 = vmatprep.subr.bf16.mxu0 %v5321
    %6670 = vmatpush1.bf16.msra.mxu0 %v5320
    %6671 = vmatprep.mubr.bf16.mxu0 %v1215
    %6672 = vmatmul.mubr.bf16.gmra.mrb[0].mxu0 %v1214
    %v6673 = vpop.f32.mrb[0].mxu0
    %v6674 = vadd.f32 %v6633, %v6673
    %v6675 = vpop.f32.mrb[0].mxu0
    %v6676 = vadd.f32 %v6635, %v6675
    %v6677 = vpop.f32.mrb[0].mxu0
    %v6678 = vpop.f32.mrb[0].mxu0
    %6679 = vdwg.mxu0
    %6680 = vmatprep.subr.bf16.mxu0 %v4307
    %6681 = vmatpush1.bf16.msra.mxu0 %v4306
    %6682 = vmatprep.subr.bf16.mxu0 %v4315
    %6683 = vmatpush1.bf16.msra.mxu0 %v4314
    %6684 = vmatprep.subr.bf16.mxu0 %v4323
    %6685 = vmatpush1.bf16.msra.mxu0 %v4322
    %6686 = vmatprep.subr.bf16.mxu0 %v4331
    %6687 = vmatpush1.bf16.msra.mxu0 %v4330
    %6688 = vmatprep.subr.bf16.mxu0 %v4339
    %6689 = vmatpush1.bf16.msra.mxu0 %v4338
    %6690 = vmatprep.subr.bf16.mxu0 %v4347
    %6691 = vmatpush1.bf16.msra.mxu0 %v4346
    %6692 = vmatprep.subr.bf16.mxu0 %v4355
    %6693 = vmatpush1.bf16.msra.mxu0 %v4354
    %6694 = vmatprep.subr.bf16.mxu0 %v4363
    %6695 = vmatpush1.bf16.msra.mxu0 %v4362
    %6696 = vmatprep.subr.bf16.mxu0 %v4371
    %6697 = vmatpush1.bf16.msra.mxu0 %v4370
    %6698 = vmatprep.subr.bf16.mxu0 %v4379
    %6699 = vmatpush1.bf16.msra.mxu0 %v4378
    %6700 = vmatprep.subr.bf16.mxu0 %v4387
    %6701 = vmatpush1.bf16.msra.mxu0 %v4386
    %6702 = vmatprep.subr.bf16.mxu0 %v4395
    %6703 = vmatpush1.bf16.msra.mxu0 %v4394
    %6704 = vmatprep.subr.bf16.mxu0 %v4403
    %6705 = vmatpush1.bf16.msra.mxu0 %v4402
    %6706 = vmatprep.subr.bf16.mxu0 %v4411
    %6707 = vmatpush1.bf16.msra.mxu0 %v4410
    %6708 = vmatprep.subr.bf16.mxu0 %v4419
    %6709 = vmatpush1.bf16.msra.mxu0 %v4418
    %6710 = vmatprep.subr.bf16.mxu0 %v4427
    %6711 = vmatpush1.bf16.msra.mxu0 %v4426
    %6712 = vmatprep.mubr.bf16.mxu0 %v1201
    %6713 = vmatmul.mubr.bf16.gmra.mrb[0].mxu0 %v1200
    %v6714 = vpop.f32.mrb[0].mxu0
    %v6715 = vadd.f32 %v1147, %v6714
    %v6716 = vpop.f32.mrb[0].mxu0
    %v6717 = vadd.f32 %v1151, %v6716
    %v6718 = vpop.f32.mrb[0].mxu0
    %v6719 = vpop.f32.mrb[0].mxu0
    %6720 = vdwg.mxu0
    %6721 = vmatprep.subr.bf16.mxu0 %v4435
    %6722 = vmatpush1.bf16.msra.mxu0 %v4434
    %6723 = vmatprep.subr.bf16.mxu0 %v4443
    %6724 = vmatpush1.bf16.msra.mxu0 %v4442
    %6725 = vmatprep.subr.bf16.mxu0 %v4451
    %6726 = vmatpush1.bf16.msra.mxu0 %v4450
    %6727 = vmatprep.subr.bf16.mxu0 %v4459
    %6728 = vmatpush1.bf16.msra.mxu0 %v4458
    %6729 = vmatprep.subr.bf16.mxu0 %v4467
    %6730 = vmatpush1.bf16.msra.mxu0 %v4466
    %6731 = vmatprep.subr.bf16.mxu0 %v4475
    %6732 = vmatpush1.bf16.msra.mxu0 %v4474
    %6733 = vmatprep.subr.bf16.mxu0 %v4483
    %6734 = vmatpush1.bf16.msra.mxu0 %v4482
    %6735 = vmatprep.subr.bf16.mxu0 %v4491
    %6736 = vmatpush1.bf16.msra.mxu0 %v4490
    %6737 = vmatprep.subr.bf16.mxu0 %v4499
    %6738 = vmatpush1.bf16.msra.mxu0 %v4498
    %6739 = vmatprep.subr.bf16.mxu0 %v4507
    %6740 = vmatpush1.bf16.msra.mxu0 %v4506
    %6741 = vmatprep.subr.bf16.mxu0 %v4515
    %6742 = vmatpush1.bf16.msra.mxu0 %v4514
    %6743 = vmatprep.subr.bf16.mxu0 %v4523
    %6744 = vmatpush1.bf16.msra.mxu0 %v4522
    %6745 = vmatprep.subr.bf16.mxu0 %v4531
    %6746 = vmatpush1.bf16.msra.mxu0 %v4530
    %6747 = vmatprep.subr.bf16.mxu0 %v4539
    %6748 = vmatpush1.bf16.msra.mxu0 %v4538
    %6749 = vmatprep.subr.bf16.mxu0 %v4547
    %6750 = vmatpush1.bf16.msra.mxu0 %v4546
    %6751 = vmatprep.subr.bf16.mxu0 %v4555
    %6752 = vmatpush1.bf16.msra.mxu0 %v4554
    %6753 = vmatprep.mubr.bf16.mxu0 %v1203
    %6754 = vmatmul.mubr.bf16.gmra.mrb[0].mxu0 %v1202
    %v6755 = vpop.f32.mrb[0].mxu0
    %v6756 = vadd.f32 %v6715, %v6755
    %v6757 = vpop.f32.mrb[0].mxu0
    %v6758 = vadd.f32 %v6717, %v6757
    %v6759 = vpop.f32.mrb[0].mxu0
    %v6760 = vpop.f32.mrb[0].mxu0
    %6761 = vdwg.mxu0
    %6762 = vmatprep.subr.bf16.mxu0 %v4563
    %6763 = vmatpush1.bf16.msra.mxu0 %v4562
    %6764 = vmatprep.subr.bf16.mxu0 %v4571
    %6765 = vmatpush1.bf16.msra.mxu0 %v4570
    %6766 = vmatprep.subr.bf16.mxu0 %v4579
    %6767 = vmatpush1.bf16.msra.mxu0 %v4578
    %6768 = vmatprep.subr.bf16.mxu0 %v4587
    %6769 = vmatpush1.bf16.msra.mxu0 %v4586
    %6770 = vmatprep.subr.bf16.mxu0 %v4595
    %6771 = vmatpush1.bf16.msra.mxu0 %v4594
    %6772 = vmatprep.subr.bf16.mxu0 %v4603
    %6773 = vmatpush1.bf16.msra.mxu0 %v4602
    %6774 = vmatprep.subr.bf16.mxu0 %v4611
    %6775 = vmatpush1.bf16.msra.mxu0 %v4610
    %6776 = vmatprep.subr.bf16.mxu0 %v4619
    %6777 = vmatpush1.bf16.msra.mxu0 %v4618
    %6778 = vmatprep.subr.bf16.mxu0 %v4627
    %6779 = vmatpush1.bf16.msra.mxu0 %v4626
    %6780 = vmatprep.subr.bf16.mxu0 %v4635
    %6781 = vmatpush1.bf16.msra.mxu0 %v4634
    %6782 = vmatprep.subr.bf16.mxu0 %v4643
    %6783 = vmatpush1.bf16.msra.mxu0 %v4642
    %6784 = vmatprep.subr.bf16.mxu0 %v4651
    %6785 = vmatpush1.bf16.msra.mxu0 %v4650
    %6786 = vmatprep.subr.bf16.mxu0 %v4659
    %6787 = vmatpush1.bf16.msra.mxu0 %v4658
    %6788 = vmatprep.subr.bf16.mxu0 %v4667
    %6789 = vmatpush1.bf16.msra.mxu0 %v4666
    %6790 = vmatprep.subr.bf16.mxu0 %v4675
    %6791 = vmatpush1.bf16.msra.mxu0 %v4674
    %6792 = vmatprep.subr.bf16.mxu0 %v4683
    %6793 = vmatpush1.bf16.msra.mxu0 %v4682
    %6794 = vmatprep.mubr.bf16.mxu0 %v1205
    %6795 = vmatmul.mubr.bf16.gmra.mrb[0].mxu0 %v1204
    %v6796 = vpop.f32.mrb[0].mxu0
    %v6797 = vadd.f32 %v6756, %v6796
    %v6798 = vpop.f32.mrb[0].mxu0
    %v6799 = vadd.f32 %v6758, %v6798
    %v6800 = vpop.f32.mrb[0].mxu0
    %v6801 = vpop.f32.mrb[0].mxu0
    %6802 = vdwg.mxu0
    %6803 = vmatprep.subr.bf16.mxu0 %v4691
    %6804 = vmatpush1.bf16.msra.mxu0 %v4690
    %6805 = vmatprep.subr.bf16.mxu0 %v4699
    %6806 = vmatpush1.bf16.msra.mxu0 %v4698
    %6807 = vmatprep.subr.bf16.mxu0 %v4707
    %6808 = vmatpush1.bf16.msra.mxu0 %v4706
    %6809 = vmatprep.subr.bf16.mxu0 %v4715
    %6810 = vmatpush1.bf16.msra.mxu0 %v4714
    %6811 = vmatprep.subr.bf16.mxu0 %v4723
    %6812 = vmatpush1.bf16.msra.mxu0 %v4722
    %6813 = vmatprep.subr.bf16.mxu0 %v4731
    %6814 = vmatpush1.bf16.msra.mxu0 %v4730
    %6815 = vmatprep.subr.bf16.mxu0 %v4739
    %6816 = vmatpush1.bf16.msra.mxu0 %v4738
    %6817 = vmatprep.subr.bf16.mxu0 %v4747
    %6818 = vmatpush1.bf16.msra.mxu0 %v4746
    %6819 = vmatprep.subr.bf16.mxu0 %v4755
    %6820 = vmatpush1.bf16.msra.mxu0 %v4754
    %6821 = vmatprep.subr.bf16.mxu0 %v4763
    %6822 = vmatpush1.bf16.msra.mxu0 %v4762
    %6823 = vmatprep.subr.bf16.mxu0 %v4771
    %6824 = vmatpush1.bf16.msra.mxu0 %v4770
    %6825 = vmatprep.subr.bf16.mxu0 %v4779
    %6826 = vmatpush1.bf16.msra.mxu0 %v4778
    %6827 = vmatprep.subr.bf16.mxu0 %v4787
    %6828 = vmatpush1.bf16.msra.mxu0 %v4786
    %6829 = vmatprep.subr.bf16.mxu0 %v4795
    %6830 = vmatpush1.bf16.msra.mxu0 %v4794
    %6831 = vmatprep.subr.bf16.mxu0 %v4803
    %6832 = vmatpush1.bf16.msra.mxu0 %v4802
    %6833 = vmatprep.subr.bf16.mxu0 %v4811
    %6834 = vmatpush1.bf16.msra.mxu0 %v4810
    %6835 = vmatprep.mubr.bf16.mxu0 %v1207
    %6836 = vmatmul.mubr.bf16.gmra.mrb[0].mxu0 %v1206
    %v6837 = vpop.f32.mrb[0].mxu0
    %v6838 = vadd.f32 %v6797, %v6837
    %v6839 = vpop.f32.mrb[0].mxu0
    %v6840 = vadd.f32 %v6799, %v6839
    %v6841 = vpop.f32.mrb[0].mxu0
    %v6842 = vpop.f32.mrb[0].mxu0
    %6843 = vdwg.mxu0
    %6844 = vmatprep.subr.bf16.mxu0 %v4819
    %6845 = vmatpush1.bf16.msra.mxu0 %v4818
    %6846 = vmatprep.subr.bf16.mxu0 %v4827
    %6847 = vmatpush1.bf16.msra.mxu0 %v4826
    %6848 = vmatprep.subr.bf16.mxu0 %v4835
    %6849 = vmatpush1.bf16.msra.mxu0 %v4834
    %6850 = vmatprep.subr.bf16.mxu0 %v4843
    %6851 = vmatpush1.bf16.msra.mxu0 %v4842
    %6852 = vmatprep.subr.bf16.mxu0 %v4851
    %6853 = vmatpush1.bf16.msra.mxu0 %v4850
    %6854 = vmatprep.subr.bf16.mxu0 %v4859
    %6855 = vmatpush1.bf16.msra.mxu0 %v4858
    %6856 = vmatprep.subr.bf16.mxu0 %v4867
    %6857 = vmatpush1.bf16.msra.mxu0 %v4866
    %6858 = vmatprep.subr.bf16.mxu0 %v4875
    %6859 = vmatpush1.bf16.msra.mxu0 %v4874
    %6860 = vmatprep.subr.bf16.mxu0 %v4883
    %6861 = vmatpush1.bf16.msra.mxu0 %v4882
    %6862 = vmatprep.subr.bf16.mxu0 %v4891
    %6863 = vmatpush1.bf16.msra.mxu0 %v4890
    %6864 = vmatprep.subr.bf16.mxu0 %v4899
    %6865 = vmatpush1.bf16.msra.mxu0 %v4898
    %6866 = vmatprep.subr.bf16.mxu0 %v4907
    %6867 = vmatpush1.bf16.msra.mxu0 %v4906
    %6868 = vmatprep.subr.bf16.mxu0 %v4915
    %6869 = vmatpush1.bf16.msra.mxu0 %v4914
    %6870 = vmatprep.subr.bf16.mxu0 %v4923
    %6871 = vmatpush1.bf16.msra.mxu0 %v4922
    %6872 = vmatprep.subr.bf16.mxu0 %v4931
    %6873 = vmatpush1.bf16.msra.mxu0 %v4930
    %6874 = vmatprep.subr.bf16.mxu0 %v4939
    %6875 = vmatpush1.bf16.msra.mxu0 %v4938
    %6876 = vmatprep.mubr.bf16.mxu0 %v1209
    %6877 = vmatmul.mubr.bf16.gmra.mrb[0].mxu0 %v1208
    %v6878 = vpop.f32.mrb[0].mxu0
    %v6879 = vadd.f32 %v6838, %v6878
    %v6880 = vpop.f32.mrb[0].mxu0
    %v6881 = vadd.f32 %v6840, %v6880
    %v6882 = vpop.f32.mrb[0].mxu0
    %v6883 = vpop.f32.mrb[0].mxu0
    %6884 = vdwg.mxu0
    %6885 = vmatprep.subr.bf16.mxu0 %v4947
    %6886 = vmatpush1.bf16.msra.mxu0 %v4946
    %6887 = vmatprep.subr.bf16.mxu0 %v4955
    %6888 = vmatpush1.bf16.msra.mxu0 %v4954
    %6889 = vmatprep.subr.bf16.mxu0 %v4963
    %6890 = vmatpush1.bf16.msra.mxu0 %v4962
    %6891 = vmatprep.subr.bf16.mxu0 %v4971
    %6892 = vmatpush1.bf16.msra.mxu0 %v4970
    %6893 = vmatprep.subr.bf16.mxu0 %v4979
    %6894 = vmatpush1.bf16.msra.mxu0 %v4978
    %6895 = vmatprep.subr.bf16.mxu0 %v4987
    %6896 = vmatpush1.bf16.msra.mxu0 %v4986
    %6897 = vmatprep.subr.bf16.mxu0 %v4995
    %6898 = vmatpush1.bf16.msra.mxu0 %v4994
    %6899 = vmatprep.subr.bf16.mxu0 %v5003
    %6900 = vmatpush1.bf16.msra.mxu0 %v5002
    %6901 = vmatprep.subr.bf16.mxu0 %v5011
    %6902 = vmatpush1.bf16.msra.mxu0 %v5010
    %6903 = vmatprep.subr.bf16.mxu0 %v5019
    %6904 = vmatpush1.bf16.msra.mxu0 %v5018
    %6905 = vmatprep.subr.bf16.mxu0 %v5027
    %6906 = vmatpush1.bf16.msra.mxu0 %v5026
    %6907 = vmatprep.subr.bf16.mxu0 %v5035
    %6908 = vmatpush1.bf16.msra.mxu0 %v5034
    %6909 = vmatprep.subr.bf16.mxu0 %v5043
    %6910 = vmatpush1.bf16.msra.mxu0 %v5042
    %6911 = vmatprep.subr.bf16.mxu0 %v5051
    %6912 = vmatpush1.bf16.msra.mxu0 %v5050
    %6913 = vmatprep.subr.bf16.mxu0 %v5059
    %6914 = vmatpush1.bf16.msra.mxu0 %v5058
    %6915 = vmatprep.subr.bf16.mxu0 %v5067
    %6916 = vmatpush1.bf16.msra.mxu0 %v5066
    %6917 = vmatprep.mubr.bf16.mxu0 %v1211
    %6918 = vmatmul.mubr.bf16.gmra.mrb[0].mxu0 %v1210
    %v6919 = vpop.f32.mrb[0].mxu0
    %v6920 = vadd.f32 %v6879, %v6919
    %v6921 = vpop.f32.mrb[0].mxu0
    %v6922 = vadd.f32 %v6881, %v6921
    %v6923 = vpop.f32.mrb[0].mxu0
    %v6924 = vpop.f32.mrb[0].mxu0
    %6925 = vdwg.mxu0
    %6926 = vmatprep.subr.bf16.mxu0 %v5075
    %6927 = vmatpush1.bf16.msra.mxu0 %v5074
    %6928 = vmatprep.subr.bf16.mxu0 %v5083
    %6929 = vmatpush1.bf16.msra.mxu0 %v5082
    %6930 = vmatprep.subr.bf16.mxu0 %v5091
    %6931 = vmatpush1.bf16.msra.mxu0 %v5090
    %6932 = vmatprep.subr.bf16.mxu0 %v5099
    %6933 = vmatpush1.bf16.msra.mxu0 %v5098
    %6934 = vmatprep.subr.bf16.mxu0 %v5107
    %6935 = vmatpush1.bf16.msra.mxu0 %v5106
    %6936 = vmatprep.subr.bf16.mxu0 %v5115
    %6937 = vmatpush1.bf16.msra.mxu0 %v5114
    %6938 = vmatprep.subr.bf16.mxu0 %v5123
    %6939 = vmatpush1.bf16.msra.mxu0 %v5122
    %6940 = vmatprep.subr.bf16.mxu0 %v5131
    %6941 = vmatpush1.bf16.msra.mxu0 %v5130
    %6942 = vmatprep.subr.bf16.mxu0 %v5139
    %6943 = vmatpush1.bf16.msra.mxu0 %v5138
    %6944 = vmatprep.subr.bf16.mxu0 %v5147
    %6945 = vmatpush1.bf16.msra.mxu0 %v5146
    %6946 = vmatprep.subr.bf16.mxu0 %v5155
    %6947 = vmatpush1.bf16.msra.mxu0 %v5154
    %6948 = vmatprep.subr.bf16.mxu0 %v5163
    %6949 = vmatpush1.bf16.msra.mxu0 %v5162
    %6950 = vmatprep.subr.bf16.mxu0 %v5171
    %6951 = vmatpush1.bf16.msra.mxu0 %v5170
    %6952 = vmatprep.subr.bf16.mxu0 %v5179
    %6953 = vmatpush1.bf16.msra.mxu0 %v5178
    %6954 = vmatprep.subr.bf16.mxu0 %v5187
    %6955 = vmatpush1.bf16.msra.mxu0 %v5186
    %6956 = vmatprep.subr.bf16.mxu0 %v5195
    %6957 = vmatpush1.bf16.msra.mxu0 %v5194
    %6958 = vmatprep.mubr.bf16.mxu0 %v1213
    %6959 = vmatmul.mubr.bf16.gmra.mrb[0].mxu0 %v1212
    %v6960 = vpop.f32.mrb[0].mxu0
    %v6961 = vadd.f32 %v6920, %v6960
    %v6962 = vpop.f32.mrb[0].mxu0
    %v6963 = vadd.f32 %v6922, %v6962
    %v6964 = vpop.f32.mrb[0].mxu0
    %v6965 = vpop.f32.mrb[0].mxu0
    %6966 = vdwg.mxu0
    %6967 = vmatprep.subr.bf16.mxu0 %v5203
    %6968 = vmatpush1.bf16.msra.mxu0 %v5202
    %6969 = vmatprep.subr.bf16.mxu0 %v5211
    %6970 = vmatpush1.bf16.msra.mxu0 %v5210
    %6971 = vmatprep.subr.bf16.mxu0 %v5219
    %6972 = vmatpush1.bf16.msra.mxu0 %v5218
    %6973 = vmatprep.subr.bf16.mxu0 %v5227
    %6974 = vmatpush1.bf16.msra.mxu0 %v5226
    %6975 = vmatprep.subr.bf16.mxu0 %v5235
    %6976 = vmatpush1.bf16.msra.mxu0 %v5234
    %6977 = vmatprep.subr.bf16.mxu0 %v5243
    %6978 = vmatpush1.bf16.msra.mxu0 %v5242
    %6979 = vmatprep.subr.bf16.mxu0 %v5251
    %6980 = vmatpush1.bf16.msra.mxu0 %v5250
    %6981 = vmatprep.subr.bf16.mxu0 %v5259
    %6982 = vmatpush1.bf16.msra.mxu0 %v5258
    %6983 = vmatprep.subr.bf16.mxu0 %v5267
    %6984 = vmatpush1.bf16.msra.mxu0 %v5266
    %6985 = vmatprep.subr.bf16.mxu0 %v5275
    %6986 = vmatpush1.bf16.msra.mxu0 %v5274
    %6987 = vmatprep.subr.bf16.mxu0 %v5283
    %6988 = vmatpush1.bf16.msra.mxu0 %v5282
    %6989 = vmatprep.subr.bf16.mxu0 %v5291
    %6990 = vmatpush1.bf16.msra.mxu0 %v5290
    %6991 = vmatprep.subr.bf16.mxu0 %v5299
    %6992 = vmatpush1.bf16.msra.mxu0 %v5298
    %6993 = vmatprep.subr.bf16.mxu0 %v5307
    %6994 = vmatpush1.bf16.msra.mxu0 %v5306
    %6995 = vmatprep.subr.bf16.mxu0 %v5315
    %6996 = vmatpush1.bf16.msra.mxu0 %v5314
    %6997 = vmatprep.subr.bf16.mxu0 %v5323
    %6998 = vmatpush1.bf16.msra.mxu0 %v5322
    %6999 = vmatprep.mubr.bf16.mxu0 %v1215
    %7000 = vmatmul.mubr.bf16.gmra.mrb[0].mxu0 %v1214
    %v7001 = vpop.f32.mrb[0].mxu0
    %v7002 = vadd.f32 %v6961, %v7001
    %v7003 = vpop.f32.mrb[0].mxu0
    %v7004 = vadd.f32 %v6963, %v7003
    %v7005 = vpop.f32.mrb[0].mxu0
    %v7006 = vpop.f32.mrb[0].mxu0
    %7007 = vdwg.mxu0
    %7008 = vmatprep.subr.bf16.mxu0 %v4309
    %7009 = vmatpush1.bf16.msra.mxu0 %v4308
    %7010 = vmatprep.subr.bf16.mxu0 %v4317
    %7011 = vmatpush1.bf16.msra.mxu0 %v4316
    %7012 = vmatprep.subr.bf16.mxu0 %v4325
    %7013 = vmatpush1.bf16.msra.mxu0 %v4324
    %7014 = vmatprep.subr.bf16.mxu0 %v4333
    %7015 = vmatpush1.bf16.msra.mxu0 %v4332
    %7016 = vmatprep.subr.bf16.mxu0 %v4341
    %7017 = vmatpush1.bf16.msra.mxu0 %v4340
    %7018 = vmatprep.subr.bf16.mxu0 %v4349
    %7019 = vmatpush1.bf16.msra.mxu0 %v4348
    %7020 = vmatprep.subr.bf16.mxu0 %v4357
    %7021 = vmatpush1.bf16.msra.mxu0 %v4356
    %7022 = vmatprep.subr.bf16.mxu0 %v4365
    %7023 = vmatpush1.bf16.msra.mxu0 %v4364
    %7024 = vmatprep.subr.bf16.mxu0 %v4373
    %7025 = vmatpush1.bf16.msra.mxu0 %v4372
    %7026 = vmatprep.subr.bf16.mxu0 %v4381
    %7027 = vmatpush1.bf16.msra.mxu0 %v4380
    %7028 = vmatprep.subr.bf16.mxu0 %v4389
    %7029 = vmatpush1.bf16.msra.mxu0 %v4388
    %7030 = vmatprep.subr.bf16.mxu0 %v4397
    %7031 = vmatpush1.bf16.msra.mxu0 %v4396
    %7032 = vmatprep.subr.bf16.mxu0 %v4405
    %7033 = vmatpush1.bf16.msra.mxu0 %v4404
    %7034 = vmatprep.subr.bf16.mxu0 %v4413
    %7035 = vmatpush1.bf16.msra.mxu0 %v4412
    %7036 = vmatprep.subr.bf16.mxu0 %v4421
    %7037 = vmatpush1.bf16.msra.mxu0 %v4420
    %7038 = vmatprep.subr.bf16.mxu0 %v4429
    %7039 = vmatpush1.bf16.msra.mxu0 %v4428
    %7040 = vmatprep.mubr.bf16.mxu0 %v1201
    %7041 = vmatmul.mubr.bf16.gmra.mrb[0].mxu0 %v1200
    %v7042 = vpop.f32.mrb[0].mxu0
    %v7043 = vadd.f32 %v1155, %v7042
    %v7044 = vpop.f32.mrb[0].mxu0
    %v7045 = vadd.f32 %v1159, %v7044
    %v7046 = vpop.f32.mrb[0].mxu0
    %v7047 = vpop.f32.mrb[0].mxu0
    %7048 = vdwg.mxu0
    %7049 = vmatprep.subr.bf16.mxu0 %v4437
    %7050 = vmatpush1.bf16.msra.mxu0 %v4436
    %7051 = vmatprep.subr.bf16.mxu0 %v4445
    %7052 = vmatpush1.bf16.msra.mxu0 %v4444
    %7053 = vmatprep.subr.bf16.mxu0 %v4453
    %7054 = vmatpush1.bf16.msra.mxu0 %v4452
    %7055 = vmatprep.subr.bf16.mxu0 %v4461
    %7056 = vmatpush1.bf16.msra.mxu0 %v4460
    %7057 = vmatprep.subr.bf16.mxu0 %v4469
    %7058 = vmatpush1.bf16.msra.mxu0 %v4468
    %7059 = vmatprep.subr.bf16.mxu0 %v4477
    %7060 = vmatpush1.bf16.msra.mxu0 %v4476
    %7061 = vmatprep.subr.bf16.mxu0 %v4485
    %7062 = vmatpush1.bf16.msra.mxu0 %v4484
    %7063 = vmatprep.subr.bf16.mxu0 %v4493
    %7064 = vmatpush1.bf16.msra.mxu0 %v4492
    %7065 = vmatprep.subr.bf16.mxu0 %v4501
    %7066 = vmatpush1.bf16.msra.mxu0 %v4500
    %7067 = vmatprep.subr.bf16.mxu0 %v4509
    %7068 = vmatpush1.bf16.msra.mxu0 %v4508
    %7069 = vmatprep.subr.bf16.mxu0 %v4517
    %7070 = vmatpush1.bf16.msra.mxu0 %v4516
    %7071 = vmatprep.subr.bf16.mxu0 %v4525
    %7072 = vmatpush1.bf16.msra.mxu0 %v4524
    %7073 = vmatprep.subr.bf16.mxu0 %v4533
    %7074 = vmatpush1.bf16.msra.mxu0 %v4532
    %7075 = vmatprep.subr.bf16.mxu0 %v4541
    %7076 = vmatpush1.bf16.msra.mxu0 %v4540
    %7077 = vmatprep.subr.bf16.mxu0 %v4549
    %7078 = vmatpush1.bf16.msra.mxu0 %v4548
    %7079 = vmatprep.subr.bf16.mxu0 %v4557
    %7080 = vmatpush1.bf16.msra.mxu0 %v4556
    %7081 = vmatprep.mubr.bf16.mxu0 %v1203
    %7082 = vmatmul.mubr.bf16.gmra.mrb[0].mxu0 %v1202
    %v7083 = vpop.f32.mrb[0].mxu0
    %v7084 = vadd.f32 %v7043, %v7083
    %v7085 = vpop.f32.mrb[0].mxu0
    %v7086 = vadd.f32 %v7045, %v7085
    %v7087 = vpop.f32.mrb[0].mxu0
    %v7088 = vpop.f32.mrb[0].mxu0
    %7089 = vdwg.mxu0
    %7090 = vmatprep.subr.bf16.mxu0 %v4565
    %7091 = vmatpush1.bf16.msra.mxu0 %v4564
    %7092 = vmatprep.subr.bf16.mxu0 %v4573
    %7093 = vmatpush1.bf16.msra.mxu0 %v4572
    %7094 = vmatprep.subr.bf16.mxu0 %v4581
    %7095 = vmatpush1.bf16.msra.mxu0 %v4580
    %7096 = vmatprep.subr.bf16.mxu0 %v4589
    %7097 = vmatpush1.bf16.msra.mxu0 %v4588
    %7098 = vmatprep.subr.bf16.mxu0 %v4597
    %7099 = vmatpush1.bf16.msra.mxu0 %v4596
    %7100 = vmatprep.subr.bf16.mxu0 %v4605
    %7101 = vmatpush1.bf16.msra.mxu0 %v4604
    %7102 = vmatprep.subr.bf16.mxu0 %v4613
    %7103 = vmatpush1.bf16.msra.mxu0 %v4612
    %7104 = vmatprep.subr.bf16.mxu0 %v4621
    %7105 = vmatpush1.bf16.msra.mxu0 %v4620
    %7106 = vmatprep.subr.bf16.mxu0 %v4629
    %7107 = vmatpush1.bf16.msra.mxu0 %v4628
    %7108 = vmatprep.subr.bf16.mxu0 %v4637
    %7109 = vmatpush1.bf16.msra.mxu0 %v4636
    %7110 = vmatprep.subr.bf16.mxu0 %v4645
    %7111 = vmatpush1.bf16.msra.mxu0 %v4644
    %7112 = vmatprep.subr.bf16.mxu0 %v4653
    %7113 = vmatpush1.bf16.msra.mxu0 %v4652
    %7114 = vmatprep.subr.bf16.mxu0 %v4661
    %7115 = vmatpush1.bf16.msra.mxu0 %v4660
    %7116 = vmatprep.subr.bf16.mxu0 %v4669
    %7117 = vmatpush1.bf16.msra.mxu0 %v4668
    %7118 = vmatprep.subr.bf16.mxu0 %v4677
    %7119 = vmatpush1.bf16.msra.mxu0 %v4676
    %7120 = vmatprep.subr.bf16.mxu0 %v4685
    %7121 = vmatpush1.bf16.msra.mxu0 %v4684
    %7122 = vmatprep.mubr.bf16.mxu0 %v1205
    %7123 = vmatmul.mubr.bf16.gmra.mrb[0].mxu0 %v1204
    %v7124 = vpop.f32.mrb[0].mxu0
    %v7125 = vadd.f32 %v7084, %v7124
    %v7126 = vpop.f32.mrb[0].mxu0
    %v7127 = vadd.f32 %v7086, %v7126
    %v7128 = vpop.f32.mrb[0].mxu0
    %v7129 = vpop.f32.mrb[0].mxu0
    %7130 = vdwg.mxu0
    %7131 = vmatprep.subr.bf16.mxu0 %v4693
    %7132 = vmatpush1.bf16.msra.mxu0 %v4692
    %7133 = vmatprep.subr.bf16.mxu0 %v4701
    %7134 = vmatpush1.bf16.msra.mxu0 %v4700
    %7135 = vmatprep.subr.bf16.mxu0 %v4709
    %7136 = vmatpush1.bf16.msra.mxu0 %v4708
    %7137 = vmatprep.subr.bf16.mxu0 %v4717
    %7138 = vmatpush1.bf16.msra.mxu0 %v4716
    %7139 = vmatprep.subr.bf16.mxu0 %v4725
    %7140 = vmatpush1.bf16.msra.mxu0 %v4724
    %7141 = vmatprep.subr.bf16.mxu0 %v4733
    %7142 = vmatpush1.bf16.msra.mxu0 %v4732
    %7143 = vmatprep.subr.bf16.mxu0 %v4741
    %7144 = vmatpush1.bf16.msra.mxu0 %v4740
    %7145 = vmatprep.subr.bf16.mxu0 %v4749
    %7146 = vmatpush1.bf16.msra.mxu0 %v4748
    %7147 = vmatprep.subr.bf16.mxu0 %v4757
    %7148 = vmatpush1.bf16.msra.mxu0 %v4756
    %7149 = vmatprep.subr.bf16.mxu0 %v4765
    %7150 = vmatpush1.bf16.msra.mxu0 %v4764
    %7151 = vmatprep.subr.bf16.mxu0 %v4773
    %7152 = vmatpush1.bf16.msra.mxu0 %v4772
    %7153 = vmatprep.subr.bf16.mxu0 %v4781
    %7154 = vmatpush1.bf16.msra.mxu0 %v4780
    %7155 = vmatprep.subr.bf16.mxu0 %v4789
    %7156 = vmatpush1.bf16.msra.mxu0 %v4788
    %7157 = vmatprep.subr.bf16.mxu0 %v4797
    %7158 = vmatpush1.bf16.msra.mxu0 %v4796
    %7159 = vmatprep.subr.bf16.mxu0 %v4805
    %7160 = vmatpush1.bf16.msra.mxu0 %v4804
    %7161 = vmatprep.subr.bf16.mxu0 %v4813
    %7162 = vmatpush1.bf16.msra.mxu0 %v4812
    %7163 = vmatprep.mubr.bf16.mxu0 %v1207
    %7164 = vmatmul.mubr.bf16.gmra.mrb[0].mxu0 %v1206
    %v7165 = vpop.f32.mrb[0].mxu0
    %v7166 = vadd.f32 %v7125, %v7165
    %v7167 = vpop.f32.mrb[0].mxu0
    %v7168 = vadd.f32 %v7127, %v7167
    %v7169 = vpop.f32.mrb[0].mxu0
    %v7170 = vpop.f32.mrb[0].mxu0
    %7171 = vdwg.mxu0
    %7172 = vmatprep.subr.bf16.mxu0 %v4821
    %7173 = vmatpush1.bf16.msra.mxu0 %v4820
    %7174 = vmatprep.subr.bf16.mxu0 %v4829
    %7175 = vmatpush1.bf16.msra.mxu0 %v4828
    %7176 = vmatprep.subr.bf16.mxu0 %v4837
    %7177 = vmatpush1.bf16.msra.mxu0 %v4836
    %7178 = vmatprep.subr.bf16.mxu0 %v4845
    %7179 = vmatpush1.bf16.msra.mxu0 %v4844
    %7180 = vmatprep.subr.bf16.mxu0 %v4853
    %7181 = vmatpush1.bf16.msra.mxu0 %v4852
    %7182 = vmatprep.subr.bf16.mxu0 %v4861
    %7183 = vmatpush1.bf16.msra.mxu0 %v4860
    %7184 = vmatprep.subr.bf16.mxu0 %v4869
    %7185 = vmatpush1.bf16.msra.mxu0 %v4868
    %7186 = vmatprep.subr.bf16.mxu0 %v4877
    %7187 = vmatpush1.bf16.msra.mxu0 %v4876
    %7188 = vmatprep.subr.bf16.mxu0 %v4885
    %7189 = vmatpush1.bf16.msra.mxu0 %v4884
    %7190 = vmatprep.subr.bf16.mxu0 %v4893
    %7191 = vmatpush1.bf16.msra.mxu0 %v4892
    %7192 = vmatprep.subr.bf16.mxu0 %v4901
    %7193 = vmatpush1.bf16.msra.mxu0 %v4900
    %7194 = vmatprep.subr.bf16.mxu0 %v4909
    %7195 = vmatpush1.bf16.msra.mxu0 %v4908
    %7196 = vmatprep.subr.bf16.mxu0 %v4917
    %7197 = vmatpush1.bf16.msra.mxu0 %v4916
    %7198 = vmatprep.subr.bf16.mxu0 %v4925
    %7199 = vmatpush1.bf16.msra.mxu0 %v4924
    %7200 = vmatprep.subr.bf16.mxu0 %v4933
    %7201 = vmatpush1.bf16.msra.mxu0 %v4932
    %7202 = vmatprep.subr.bf16.mxu0 %v4941
    %7203 = vmatpush1.bf16.msra.mxu0 %v4940
    %7204 = vmatprep.mubr.bf16.mxu0 %v1209
    %7205 = vmatmul.mubr.bf16.gmra.mrb[0].mxu0 %v1208
    %v7206 = vpop.f32.mrb[0].mxu0
    %v7207 = vadd.f32 %v7166, %v7206
    %v7208 = vpop.f32.mrb[0].mxu0
    %v7209 = vadd.f32 %v7168, %v7208
    %v7210 = vpop.f32.mrb[0].mxu0
    %v7211 = vpop.f32.mrb[0].mxu0
    %7212 = vdwg.mxu0
    %7213 = vmatprep.subr.bf16.mxu0 %v4949
    %7214 = vmatpush1.bf16.msra.mxu0 %v4948
    %7215 = vmatprep.subr.bf16.mxu0 %v4957
    %7216 = vmatpush1.bf16.msra.mxu0 %v4956
    %7217 = vmatprep.subr.bf16.mxu0 %v4965
    %7218 = vmatpush1.bf16.msra.mxu0 %v4964
    %7219 = vmatprep.subr.bf16.mxu0 %v4973
    %7220 = vmatpush1.bf16.msra.mxu0 %v4972
    %7221 = vmatprep.subr.bf16.mxu0 %v4981
    %7222 = vmatpush1.bf16.msra.mxu0 %v4980
    %7223 = vmatprep.subr.bf16.mxu0 %v4989
    %7224 = vmatpush1.bf16.msra.mxu0 %v4988
    %7225 = vmatprep.subr.bf16.mxu0 %v4997
    %7226 = vmatpush1.bf16.msra.mxu0 %v4996
    %7227 = vmatprep.subr.bf16.mxu0 %v5005
    %7228 = vmatpush1.bf16.msra.mxu0 %v5004
    %7229 = vmatprep.subr.bf16.mxu0 %v5013
    %7230 = vmatpush1.bf16.msra.mxu0 %v5012
    %7231 = vmatprep.subr.bf16.mxu0 %v5021
    %7232 = vmatpush1.bf16.msra.mxu0 %v5020
    %7233 = vmatprep.subr.bf16.mxu0 %v5029
    %7234 = vmatpush1.bf16.msra.mxu0 %v5028
    %7235 = vmatprep.subr.bf16.mxu0 %v5037
    %7236 = vmatpush1.bf16.msra.mxu0 %v5036
    %7237 = vmatprep.subr.bf16.mxu0 %v5045
    %7238 = vmatpush1.bf16.msra.mxu0 %v5044
    %7239 = vmatprep.subr.bf16.mxu0 %v5053
    %7240 = vmatpush1.bf16.msra.mxu0 %v5052
    %7241 = vmatprep.subr.bf16.mxu0 %v5061
    %7242 = vmatpush1.bf16.msra.mxu0 %v5060
    %7243 = vmatprep.subr.bf16.mxu0 %v5069
    %7244 = vmatpush1.bf16.msra.mxu0 %v5068
    %7245 = vmatprep.mubr.bf16.mxu0 %v1211
    %7246 = vmatmul.mubr.bf16.gmra.mrb[0].mxu0 %v1210
    %v7247 = vpop.f32.mrb[0].mxu0
    %v7248 = vadd.f32 %v7207, %v7247
    %v7249 = vpop.f32.mrb[0].mxu0
    %v7250 = vadd.f32 %v7209, %v7249
    %v7251 = vpop.f32.mrb[0].mxu0
    %v7252 = vpop.f32.mrb[0].mxu0
    %7253 = vdwg.mxu0
    %7254 = vmatprep.subr.bf16.mxu0 %v5077
    %7255 = vmatpush1.bf16.msra.mxu0 %v5076
    %7256 = vmatprep.subr.bf16.mxu0 %v5085
    %7257 = vmatpush1.bf16.msra.mxu0 %v5084
    %7258 = vmatprep.subr.bf16.mxu0 %v5093
    %7259 = vmatpush1.bf16.msra.mxu0 %v5092
    %7260 = vmatprep.subr.bf16.mxu0 %v5101
    %7261 = vmatpush1.bf16.msra.mxu0 %v5100
    %7262 = vmatprep.subr.bf16.mxu0 %v5109
    %7263 = vmatpush1.bf16.msra.mxu0 %v5108
    %7264 = vmatprep.subr.bf16.mxu0 %v5117
    %7265 = vmatpush1.bf16.msra.mxu0 %v5116
    %7266 = vmatprep.subr.bf16.mxu0 %v5125
    %7267 = vmatpush1.bf16.msra.mxu0 %v5124
    %7268 = vmatprep.subr.bf16.mxu0 %v5133
    %7269 = vmatpush1.bf16.msra.mxu0 %v5132
    %7270 = vmatprep.subr.bf16.mxu0 %v5141
    %7271 = vmatpush1.bf16.msra.mxu0 %v5140
    %7272 = vmatprep.subr.bf16.mxu0 %v5149
    %7273 = vmatpush1.bf16.msra.mxu0 %v5148
    %7274 = vmatprep.subr.bf16.mxu0 %v5157
    %7275 = vmatpush1.bf16.msra.mxu0 %v5156
    %7276 = vmatprep.subr.bf16.mxu0 %v5165
    %7277 = vmatpush1.bf16.msra.mxu0 %v5164
    %7278 = vmatprep.subr.bf16.mxu0 %v5173
    %7279 = vmatpush1.bf16.msra.mxu0 %v5172
    %7280 = vmatprep.subr.bf16.mxu0 %v5181
    %7281 = vmatpush1.bf16.msra.mxu0 %v5180
    %7282 = vmatprep.subr.bf16.mxu0 %v5189
    %7283 = vmatpush1.bf16.msra.mxu0 %v5188
    %7284 = vmatprep.subr.bf16.mxu0 %v5197
    %7285 = vmatpush1.bf16.msra.mxu0 %v5196
    %7286 = vmatprep.mubr.bf16.mxu0 %v1213
    %7287 = vmatmul.mubr.bf16.gmra.mrb[0].mxu0 %v1212
    %v7288 = vpop.f32.mrb[0].mxu0
    %v7289 = vadd.f32 %v7248, %v7288
    %v7290 = vpop.f32.mrb[0].mxu0
    %v7291 = vadd.f32 %v7250, %v7290
    %v7292 = vpop.f32.mrb[0].mxu0
    %v7293 = vpop.f32.mrb[0].mxu0
    %7294 = vdwg.mxu0
    %7295 = vmatprep.subr.bf16.mxu0 %v5205
    %7296 = vmatpush1.bf16.msra.mxu0 %v5204
    %7297 = vmatprep.subr.bf16.mxu0 %v5213
    %7298 = vmatpush1.bf16.msra.mxu0 %v5212
    %7299 = vmatprep.subr.bf16.mxu0 %v5221
    %7300 = vmatpush1.bf16.msra.mxu0 %v5220
    %7301 = vmatprep.subr.bf16.mxu0 %v5229
    %7302 = vmatpush1.bf16.msra.mxu0 %v5228
    %7303 = vmatprep.subr.bf16.mxu0 %v5237
    %7304 = vmatpush1.bf16.msra.mxu0 %v5236
    %7305 = vmatprep.subr.bf16.mxu0 %v5245
    %7306 = vmatpush1.bf16.msra.mxu0 %v5244
    %7307 = vmatprep.subr.bf16.mxu0 %v5253
    %7308 = vmatpush1.bf16.msra.mxu0 %v5252
    %7309 = vmatprep.subr.bf16.mxu0 %v5261
    %7310 = vmatpush1.bf16.msra.mxu0 %v5260
    %7311 = vmatprep.subr.bf16.mxu0 %v5269
    %7312 = vmatpush1.bf16.msra.mxu0 %v5268
    %7313 = vmatprep.subr.bf16.mxu0 %v5277
    %7314 = vmatpush1.bf16.msra.mxu0 %v5276
    %7315 = vmatprep.subr.bf16.mxu0 %v5285
    %7316 = vmatpush1.bf16.msra.mxu0 %v5284
    %7317 = vmatprep.subr.bf16.mxu0 %v5293
    %7318 = vmatpush1.bf16.msra.mxu0 %v5292
    %7319 = vmatprep.subr.bf16.mxu0 %v5301
    %7320 = vmatpush1.bf16.msra.mxu0 %v5300
    %7321 = vmatprep.subr.bf16.mxu0 %v5309
    %7322 = vmatpush1.bf16.msra.mxu0 %v5308
    %7323 = vmatprep.subr.bf16.mxu0 %v5317
    %7324 = vmatpush1.bf16.msra.mxu0 %v5316
    %7325 = vmatprep.subr.bf16.mxu0 %v5325
    %7326 = vmatpush1.bf16.msra.mxu0 %v5324
    %7327 = vmatprep.mubr.bf16.mxu0 %v1215
    %7328 = vmatmul.mubr.bf16.gmra.mrb[0].mxu0 %v1214
    %v7329 = vpop.f32.mrb[0].mxu0
    %v7330 = vadd.f32 %v7289, %v7329
    %v7331 = vpop.f32.mrb[0].mxu0
    %v7332 = vadd.f32 %v7291, %v7331
    %v7333 = vpop.f32.mrb[0].mxu0
    %v7334 = vpop.f32.mrb[0].mxu0
    %7335 = vdwg.mxu0
    %7336 = vmatprep.subr.bf16.mxu0 %v4311
    %7337 = vmatpush1.bf16.msra.mxu0 %v4310
    %7338 = vmatprep.subr.bf16.mxu0 %v4319
    %7339 = vmatpush1.bf16.msra.mxu0 %v4318
    %7340 = vmatprep.subr.bf16.mxu0 %v4327
    %7341 = vmatpush1.bf16.msra.mxu0 %v4326
    %7342 = vmatprep.subr.bf16.mxu0 %v4335
    %7343 = vmatpush1.bf16.msra.mxu0 %v4334
    %7344 = vmatprep.subr.bf16.mxu0 %v4343
    %7345 = vmatpush1.bf16.msra.mxu0 %v4342
    %7346 = vmatprep.subr.bf16.mxu0 %v4351
    %7347 = vmatpush1.bf16.msra.mxu0 %v4350
    %7348 = vmatprep.subr.bf16.mxu0 %v4359
    %7349 = vmatpush1.bf16.msra.mxu0 %v4358
    %7350 = vmatprep.subr.bf16.mxu0 %v4367
    %7351 = vmatpush1.bf16.msra.mxu0 %v4366
    %7352 = vmatprep.subr.bf16.mxu0 %v4375
    %7353 = vmatpush1.bf16.msra.mxu0 %v4374
    %7354 = vmatprep.subr.bf16.mxu0 %v4383
    %7355 = vmatpush1.bf16.msra.mxu0 %v4382
    %7356 = vmatprep.subr.bf16.mxu0 %v4391
    %7357 = vmatpush1.bf16.msra.mxu0 %v4390
    %7358 = vmatprep.subr.bf16.mxu0 %v4399
    %7359 = vmatpush1.bf16.msra.mxu0 %v4398
    %7360 = vmatprep.subr.bf16.mxu0 %v4407
    %7361 = vmatpush1.bf16.msra.mxu0 %v4406
    %7362 = vmatprep.subr.bf16.mxu0 %v4415
    %7363 = vmatpush1.bf16.msra.mxu0 %v4414
    %7364 = vmatprep.subr.bf16.mxu0 %v4423
    %7365 = vmatpush1.bf16.msra.mxu0 %v4422
    %7366 = vmatprep.subr.bf16.mxu0 %v4431
    %7367 = vmatpush1.bf16.msra.mxu0 %v4430
    %7368 = vmatprep.mubr.bf16.mxu0 %v1201
    %7369 = vmatmul.mubr.bf16.gmra.mrb[0].mxu0 %v1200
    %v7370 = vpop.f32.mrb[0].mxu0
    %v7371 = vadd.f32 %v1163, %v7370
    %v7372 = vpop.f32.mrb[0].mxu0
    %v7373 = vadd.f32 %v1167, %v7372
    %v7374 = vpop.f32.mrb[0].mxu0
    %v7375 = vpop.f32.mrb[0].mxu0
    %7376 = vdwg.mxu0
    %7377 = vmatprep.subr.bf16.mxu0 %v4439
    %7378 = vmatpush1.bf16.msra.mxu0 %v4438
    %7379 = vmatprep.subr.bf16.mxu0 %v4447
    %7380 = vmatpush1.bf16.msra.mxu0 %v4446
    %7381 = vmatprep.subr.bf16.mxu0 %v4455
    %7382 = vmatpush1.bf16.msra.mxu0 %v4454
    %7383 = vmatprep.subr.bf16.mxu0 %v4463
    %7384 = vmatpush1.bf16.msra.mxu0 %v4462
    %7385 = vmatprep.subr.bf16.mxu0 %v4471
    %7386 = vmatpush1.bf16.msra.mxu0 %v4470
    %7387 = vmatprep.subr.bf16.mxu0 %v4479
    %7388 = vmatpush1.bf16.msra.mxu0 %v4478
    %7389 = vmatprep.subr.bf16.mxu0 %v4487
    %7390 = vmatpush1.bf16.msra.mxu0 %v4486
    %7391 = vmatprep.subr.bf16.mxu0 %v4495
    %7392 = vmatpush1.bf16.msra.mxu0 %v4494
    %7393 = vmatprep.subr.bf16.mxu0 %v4503
    %7394 = vmatpush1.bf16.msra.mxu0 %v4502
    %7395 = vmatprep.subr.bf16.mxu0 %v4511
    %7396 = vmatpush1.bf16.msra.mxu0 %v4510
    %7397 = vmatprep.subr.bf16.mxu0 %v4519
    %7398 = vmatpush1.bf16.msra.mxu0 %v4518
    %7399 = vmatprep.subr.bf16.mxu0 %v4527
    %7400 = vmatpush1.bf16.msra.mxu0 %v4526
    %7401 = vmatprep.subr.bf16.mxu0 %v4535
    %7402 = vmatpush1.bf16.msra.mxu0 %v4534
    %7403 = vmatprep.subr.bf16.mxu0 %v4543
    %7404 = vmatpush1.bf16.msra.mxu0 %v4542
    %7405 = vmatprep.subr.bf16.mxu0 %v4551
    %7406 = vmatpush1.bf16.msra.mxu0 %v4550
    %7407 = vmatprep.subr.bf16.mxu0 %v4559
    %7408 = vmatpush1.bf16.msra.mxu0 %v4558
    %7409 = vmatprep.mubr.bf16.mxu0 %v1203
    %7410 = vmatmul.mubr.bf16.gmra.mrb[0].mxu0 %v1202
    %v7411 = vpop.f32.mrb[0].mxu0
    %v7412 = vadd.f32 %v7371, %v7411
    %v7413 = vpop.f32.mrb[0].mxu0
    %v7414 = vadd.f32 %v7373, %v7413
    %v7415 = vpop.f32.mrb[0].mxu0
    %v7416 = vpop.f32.mrb[0].mxu0
    %7417 = vdwg.mxu0
    %7418 = vmatprep.subr.bf16.mxu0 %v4567
    %7419 = vmatpush1.bf16.msra.mxu0 %v4566
    %7420 = vmatprep.subr.bf16.mxu0 %v4575
    %7421 = vmatpush1.bf16.msra.mxu0 %v4574
    %7422 = vmatprep.subr.bf16.mxu0 %v4583
    %7423 = vmatpush1.bf16.msra.mxu0 %v4582
    %7424 = vmatprep.subr.bf16.mxu0 %v4591
    %7425 = vmatpush1.bf16.msra.mxu0 %v4590
    %7426 = vmatprep.subr.bf16.mxu0 %v4599
    %7427 = vmatpush1.bf16.msra.mxu0 %v4598
    %7428 = vmatprep.subr.bf16.mxu0 %v4607
    %7429 = vmatpush1.bf16.msra.mxu0 %v4606
    %7430 = vmatprep.subr.bf16.mxu0 %v4615
    %7431 = vmatpush1.bf16.msra.mxu0 %v4614
    %7432 = vmatprep.subr.bf16.mxu0 %v4623
    %7433 = vmatpush1.bf16.msra.mxu0 %v4622
    %7434 = vmatprep.subr.bf16.mxu0 %v4631
    %7435 = vmatpush1.bf16.msra.mxu0 %v4630
    %7436 = vmatprep.subr.bf16.mxu0 %v4639
    %7437 = vmatpush1.bf16.msra.mxu0 %v4638
    %7438 = vmatprep.subr.bf16.mxu0 %v4647
    %7439 = vmatpush1.bf16.msra.mxu0 %v4646
    %7440 = vmatprep.subr.bf16.mxu0 %v4655
    %7441 = vmatpush1.bf16.msra.mxu0 %v4654
    %7442 = vmatprep.subr.bf16.mxu0 %v4663
    %7443 = vmatpush1.bf16.msra.mxu0 %v4662
    %7444 = vmatprep.subr.bf16.mxu0 %v4671
    %7445 = vmatpush1.bf16.msra.mxu0 %v4670
    %7446 = vmatprep.subr.bf16.mxu0 %v4679
    %7447 = vmatpush1.bf16.msra.mxu0 %v4678
    %7448 = vmatprep.subr.bf16.mxu0 %v4687
    %7449 = vmatpush1.bf16.msra.mxu0 %v4686
    %7450 = vmatprep.mubr.bf16.mxu0 %v1205
    %7451 = vmatmul.mubr.bf16.gmra.mrb[0].mxu0 %v1204
    %v7452 = vpop.f32.mrb[0].mxu0
    %v7453 = vadd.f32 %v7412, %v7452
    %v7454 = vpop.f32.mrb[0].mxu0
    %v7455 = vadd.f32 %v7414, %v7454
    %v7456 = vpop.f32.mrb[0].mxu0
    %v7457 = vpop.f32.mrb[0].mxu0
    %7458 = vdwg.mxu0
    %7459 = vmatprep.subr.bf16.mxu0 %v4695
    %7460 = vmatpush1.bf16.msra.mxu0 %v4694
    %7461 = vmatprep.subr.bf16.mxu0 %v4703
    %7462 = vmatpush1.bf16.msra.mxu0 %v4702
    %7463 = vmatprep.subr.bf16.mxu0 %v4711
    %7464 = vmatpush1.bf16.msra.mxu0 %v4710
    %7465 = vmatprep.subr.bf16.mxu0 %v4719
    %7466 = vmatpush1.bf16.msra.mxu0 %v4718
    %7467 = vmatprep.subr.bf16.mxu0 %v4727
    %7468 = vmatpush1.bf16.msra.mxu0 %v4726
    %7469 = vmatprep.subr.bf16.mxu0 %v4735
    %7470 = vmatpush1.bf16.msra.mxu0 %v4734
    %7471 = vmatprep.subr.bf16.mxu0 %v4743
    %7472 = vmatpush1.bf16.msra.mxu0 %v4742
    %7473 = vmatprep.subr.bf16.mxu0 %v4751
    %7474 = vmatpush1.bf16.msra.mxu0 %v4750
    %7475 = vmatprep.subr.bf16.mxu0 %v4759
    %7476 = vmatpush1.bf16.msra.mxu0 %v4758
    %7477 = vmatprep.subr.bf16.mxu0 %v4767
    %7478 = vmatpush1.bf16.msra.mxu0 %v4766
    %7479 = vmatprep.subr.bf16.mxu0 %v4775
    %7480 = vmatpush1.bf16.msra.mxu0 %v4774
    %7481 = vmatprep.subr.bf16.mxu0 %v4783
    %7482 = vmatpush1.bf16.msra.mxu0 %v4782
    %7483 = vmatprep.subr.bf16.mxu0 %v4791
    %7484 = vmatpush1.bf16.msra.mxu0 %v4790
    %7485 = vmatprep.subr.bf16.mxu0 %v4799
    %7486 = vmatpush1.bf16.msra.mxu0 %v4798
    %7487 = vmatprep.subr.bf16.mxu0 %v4807
    %7488 = vmatpush1.bf16.msra.mxu0 %v4806
    %7489 = vmatprep.subr.bf16.mxu0 %v4815
    %7490 = vmatpush1.bf16.msra.mxu0 %v4814
    %7491 = vmatprep.mubr.bf16.mxu0 %v1207
    %7492 = vmatmul.mubr.bf16.gmra.mrb[0].mxu0 %v1206
    %v7493 = vpop.f32.mrb[0].mxu0
    %v7494 = vadd.f32 %v7453, %v7493
    %v7495 = vpop.f32.mrb[0].mxu0
    %v7496 = vadd.f32 %v7455, %v7495
    %v7497 = vpop.f32.mrb[0].mxu0
    %v7498 = vpop.f32.mrb[0].mxu0
    %7499 = vdwg.mxu0
    %7500 = vmatprep.subr.bf16.mxu0 %v4823
    %7501 = vmatpush1.bf16.msra.mxu0 %v4822
    %7502 = vmatprep.subr.bf16.mxu0 %v4831
    %7503 = vmatpush1.bf16.msra.mxu0 %v4830
    %7504 = vmatprep.subr.bf16.mxu0 %v4839
    %7505 = vmatpush1.bf16.msra.mxu0 %v4838
    %7506 = vmatprep.subr.bf16.mxu0 %v4847
    %7507 = vmatpush1.bf16.msra.mxu0 %v4846
    %7508 = vmatprep.subr.bf16.mxu0 %v4855
    %7509 = vmatpush1.bf16.msra.mxu0 %v4854
    %7510 = vmatprep.subr.bf16.mxu0 %v4863
    %7511 = vmatpush1.bf16.msra.mxu0 %v4862
    %7512 = vmatprep.subr.bf16.mxu0 %v4871
    %7513 = vmatpush1.bf16.msra.mxu0 %v4870
    %7514 = vmatprep.subr.bf16.mxu0 %v4879
    %7515 = vmatpush1.bf16.msra.mxu0 %v4878
    %7516 = vmatprep.subr.bf16.mxu0 %v4887
    %7517 = vmatpush1.bf16.msra.mxu0 %v4886
    %7518 = vmatprep.subr.bf16.mxu0 %v4895
    %7519 = vmatpush1.bf16.msra.mxu0 %v4894
    %7520 = vmatprep.subr.bf16.mxu0 %v4903
    %7521 = vmatpush1.bf16.msra.mxu0 %v4902
    %7522 = vmatprep.subr.bf16.mxu0 %v4911
    %7523 = vmatpush1.bf16.msra.mxu0 %v4910
    %7524 = vmatprep.subr.bf16.mxu0 %v4919
    %7525 = vmatpush1.bf16.msra.mxu0 %v4918
    %7526 = vmatprep.subr.bf16.mxu0 %v4927
    %7527 = vmatpush1.bf16.msra.mxu0 %v4926
    %7528 = vmatprep.subr.bf16.mxu0 %v4935
    %7529 = vmatpush1.bf16.msra.mxu0 %v4934
    %7530 = vmatprep.subr.bf16.mxu0 %v4943
    %7531 = vmatpush1.bf16.msra.mxu0 %v4942
    %7532 = vmatprep.mubr.bf16.mxu0 %v1209
    %7533 = vmatmul.mubr.bf16.gmra.mrb[0].mxu0 %v1208
    %v7534 = vpop.f32.mrb[0].mxu0
    %v7535 = vadd.f32 %v7494, %v7534
    %v7536 = vpop.f32.mrb[0].mxu0
    %v7537 = vadd.f32 %v7496, %v7536
    %v7538 = vpop.f32.mrb[0].mxu0
    %v7539 = vpop.f32.mrb[0].mxu0
    %7540 = vdwg.mxu0
    %7541 = vmatprep.subr.bf16.mxu0 %v4951
    %7542 = vmatpush1.bf16.msra.mxu0 %v4950
    %7543 = vmatprep.subr.bf16.mxu0 %v4959
    %7544 = vmatpush1.bf16.msra.mxu0 %v4958
    %7545 = vmatprep.subr.bf16.mxu0 %v4967
    %7546 = vmatpush1.bf16.msra.mxu0 %v4966
    %7547 = vmatprep.subr.bf16.mxu0 %v4975
    %7548 = vmatpush1.bf16.msra.mxu0 %v4974
    %7549 = vmatprep.subr.bf16.mxu0 %v4983
    %7550 = vmatpush1.bf16.msra.mxu0 %v4982
    %7551 = vmatprep.subr.bf16.mxu0 %v4991
    %7552 = vmatpush1.bf16.msra.mxu0 %v4990
    %7553 = vmatprep.subr.bf16.mxu0 %v4999
    %7554 = vmatpush1.bf16.msra.mxu0 %v4998
    %7555 = vmatprep.subr.bf16.mxu0 %v5007
    %7556 = vmatpush1.bf16.msra.mxu0 %v5006
    %7557 = vmatprep.subr.bf16.mxu0 %v5015
    %7558 = vmatpush1.bf16.msra.mxu0 %v5014
    %7559 = vmatprep.subr.bf16.mxu0 %v5023
    %7560 = vmatpush1.bf16.msra.mxu0 %v5022
    %7561 = vmatprep.subr.bf16.mxu0 %v5031
    %7562 = vmatpush1.bf16.msra.mxu0 %v5030
    %7563 = vmatprep.subr.bf16.mxu0 %v5039
    %7564 = vmatpush1.bf16.msra.mxu0 %v5038
    %7565 = vmatprep.subr.bf16.mxu0 %v5047
    %7566 = vmatpush1.bf16.msra.mxu0 %v5046
    %7567 = vmatprep.subr.bf16.mxu0 %v5055
    %7568 = vmatpush1.bf16.msra.mxu0 %v5054
    %7569 = vmatprep.subr.bf16.mxu0 %v5063
    %7570 = vmatpush1.bf16.msra.mxu0 %v5062
    %7571 = vmatprep.subr.bf16.mxu0 %v5071
    %7572 = vmatpush1.bf16.msra.mxu0 %v5070
    %7573 = vmatprep.mubr.bf16.mxu0 %v1211
    %7574 = vmatmul.mubr.bf16.gmra.mrb[0].mxu0 %v1210
    %v7575 = vpop.f32.mrb[0].mxu0
    %v7576 = vadd.f32 %v7535, %v7575
    %v7577 = vpop.f32.mrb[0].mxu0
    %v7578 = vadd.f32 %v7537, %v7577
    %v7579 = vpop.f32.mrb[0].mxu0
    %v7580 = vpop.f32.mrb[0].mxu0
    %7581 = vdwg.mxu0
    %7582 = vmatprep.subr.bf16.mxu0 %v5079
    %7583 = vmatpush1.bf16.msra.mxu0 %v5078
    %7584 = vmatprep.subr.bf16.mxu0 %v5087
    %7585 = vmatpush1.bf16.msra.mxu0 %v5086
    %7586 = vmatprep.subr.bf16.mxu0 %v5095
    %7587 = vmatpush1.bf16.msra.mxu0 %v5094
    %7588 = vmatprep.subr.bf16.mxu0 %v5103
    %7589 = vmatpush1.bf16.msra.mxu0 %v5102
    %7590 = vmatprep.subr.bf16.mxu0 %v5111
    %7591 = vmatpush1.bf16.msra.mxu0 %v5110
    %7592 = vmatprep.subr.bf16.mxu0 %v5119
    %7593 = vmatpush1.bf16.msra.mxu0 %v5118
    %7594 = vmatprep.subr.bf16.mxu0 %v5127
    %7595 = vmatpush1.bf16.msra.mxu0 %v5126
    %7596 = vmatprep.subr.bf16.mxu0 %v5135
    %7597 = vmatpush1.bf16.msra.mxu0 %v5134
    %7598 = vmatprep.subr.bf16.mxu0 %v5143
    %7599 = vmatpush1.bf16.msra.mxu0 %v5142
    %7600 = vmatprep.subr.bf16.mxu0 %v5151
    %7601 = vmatpush1.bf16.msra.mxu0 %v5150
    %7602 = vmatprep.subr.bf16.mxu0 %v5159
    %7603 = vmatpush1.bf16.msra.mxu0 %v5158
    %7604 = vmatprep.subr.bf16.mxu0 %v5167
    %7605 = vmatpush1.bf16.msra.mxu0 %v5166
    %7606 = vmatprep.subr.bf16.mxu0 %v5175
    %7607 = vmatpush1.bf16.msra.mxu0 %v5174
    %7608 = vmatprep.subr.bf16.mxu0 %v5183
    %7609 = vmatpush1.bf16.msra.mxu0 %v5182
    %7610 = vmatprep.subr.bf16.mxu0 %v5191
    %7611 = vmatpush1.bf16.msra.mxu0 %v5190
    %7612 = vmatprep.subr.bf16.mxu0 %v5199
    %7613 = vmatpush1.bf16.msra.mxu0 %v5198
    %7614 = vmatprep.mubr.bf16.mxu0 %v1213
    %7615 = vmatmul.mubr.bf16.gmra.mrb[0].mxu0 %v1212
    %v7616 = vpop.f32.mrb[0].mxu0
    %v7617 = vadd.f32 %v7576, %v7616
    %v7618 = vpop.f32.mrb[0].mxu0
    %v7619 = vadd.f32 %v7578, %v7618
    %v7620 = vpop.f32.mrb[0].mxu0
    %v7621 = vpop.f32.mrb[0].mxu0
    %7622 = vdwg.mxu0
    %7623 = vmatprep.subr.bf16.mxu0 %v5207
    %7624 = vmatpush1.bf16.msra.mxu0 %v5206
    %7625 = vmatprep.subr.bf16.mxu0 %v5215
    %7626 = vmatpush1.bf16.msra.mxu0 %v5214
    %7627 = vmatprep.subr.bf16.mxu0 %v5223
    %7628 = vmatpush1.bf16.msra.mxu0 %v5222
    %7629 = vmatprep.subr.bf16.mxu0 %v5231
    %7630 = vmatpush1.bf16.msra.mxu0 %v5230
    %7631 = vmatprep.subr.bf16.mxu0 %v5239
    %7632 = vmatpush1.bf16.msra.mxu0 %v5238
    %7633 = vmatprep.subr.bf16.mxu0 %v5247
    %7634 = vmatpush1.bf16.msra.mxu0 %v5246
    %7635 = vmatprep.subr.bf16.mxu0 %v5255
    %7636 = vmatpush1.bf16.msra.mxu0 %v5254
    %7637 = vmatprep.subr.bf16.mxu0 %v5263
    %7638 = vmatpush1.bf16.msra.mxu0 %v5262
    %7639 = vmatprep.subr.bf16.mxu0 %v5271
    %7640 = vmatpush1.bf16.msra.mxu0 %v5270
    %7641 = vmatprep.subr.bf16.mxu0 %v5279
    %7642 = vmatpush1.bf16.msra.mxu0 %v5278
    %7643 = vmatprep.subr.bf16.mxu0 %v5287
    %7644 = vmatpush1.bf16.msra.mxu0 %v5286
    %7645 = vmatprep.subr.bf16.mxu0 %v5295
    %7646 = vmatpush1.bf16.msra.mxu0 %v5294
    %7647 = vmatprep.subr.bf16.mxu0 %v5303
    %7648 = vmatpush1.bf16.msra.mxu0 %v5302
    %7649 = vmatprep.subr.bf16.mxu0 %v5311
    %7650 = vmatpush1.bf16.msra.mxu0 %v5310
    %7651 = vmatprep.subr.bf16.mxu0 %v5319
    %7652 = vmatpush1.bf16.msra.mxu0 %v5318
    %7653 = vmatprep.subr.bf16.mxu0 %v5327
    %7654 = vmatpush1.bf16.msra.mxu0 %v5326
    %7655 = vmatprep.mubr.bf16.mxu0 %v1215
    %7656 = vmatmul.mubr.bf16.gmra.mrb[0].mxu0 %v1214
    %v7657 = vpop.f32.mrb[0].mxu0
    %v7658 = vadd.f32 %v7617, %v7657
    %v7659 = vpop.f32.mrb[0].mxu0
    %v7660 = vadd.f32 %v7619, %v7659
    %v7661 = vpop.f32.mrb[0].mxu0
    %v7662 = vpop.f32.mrb[0].mxu0
    %7663 = vdwg.mxu0
    %v7664 = vmax.f32 %v6674, 0.0
    %v7665 = vmax.f32 %v6676, 0.0
    %v7666 = vmax.f32 %v7002, 0.0
    %v7667 = vmax.f32 %v7004, 0.0
    %v7668 = vmax.f32 %v7330, 0.0
    %v7669 = vmax.f32 %v7332, 0.0
    %v7670 = vmax.f32 %v7658, 0.0
    %v7671 = vmax.f32 %v7660, 0.0
    %v7672 = vpack.c.bf16 %v7664, %v7664
    %v7673 = vpack.c.bf16 %v7665, %v7665
    %v7674 = vpack.c.bf16 %v7666, %v7666
    %v7675 = vpack.c.bf16 %v7667, %v7667
    %v7676 = vpack.c.bf16 %v7668, %v7668
    %v7677 = vpack.c.bf16 %v7669, %v7669
    %v7678 = vpack.c.bf16 %v7670, %v7670
    %v7679 = vpack.c.bf16 %v7671, %v7671
    %v7680 = vld [vmem:[#allocation8] sm:$0xff]
    %v7681 = vld [vmem:[#allocation8 + $0x8] sm:$0xff]
    %v7682 = vld [vmem:[#allocation8 + $0x10] sm:$0xff]
    %v7683 = vld [vmem:[#allocation8 + $0x18] sm:$0xff]
    %v7684 = vld [vmem:[#allocation8 + $0x20] sm:$0xff]
    %v7685 = vld [vmem:[#allocation8 + $0x28] sm:$0xff]
    %v7686 = vld [vmem:[#allocation8 + $0x30] sm:$0xff]
    %v7687 = vld [vmem:[#allocation8 + $0x38] sm:$0xff]
    %v7688 = vld [vmem:[#allocation8 + $0x40] sm:$0xff]
    %v7689 = vld [vmem:[#allocation8 + $0x48] sm:$0xff]
    %v7690 = vld [vmem:[#allocation8 + $0x50] sm:$0xff]
    %v7691 = vld [vmem:[#allocation8 + $0x58] sm:$0xff]
    %v7692 = vld [vmem:[#allocation8 + $0x60] sm:$0xff]
    %v7693 = vld [vmem:[#allocation8 + $0x68] sm:$0xff]
    %v7694 = vld [vmem:[#allocation8 + $0x70] sm:$0xff]
    %v7695 = vld [vmem:[#allocation8 + $0x78] sm:$0xff]
    %v7696 = vld [vmem:[#allocation8 + $0x80] sm:$0xff]
    %v7697 = vld [vmem:[#allocation8 + $0x88] sm:$0xff]
    %v7698 = vld [vmem:[#allocation8 + $0x90] sm:$0xff]
    %v7699 = vld [vmem:[#allocation8 + $0x98] sm:$0xff]
    %v7700 = vld [vmem:[#allocation8 + $0xa0] sm:$0xff]
    %v7701 = vld [vmem:[#allocation8 + $0xa8] sm:$0xff]
    %v7702 = vld [vmem:[#allocation8 + $0xb0] sm:$0xff]
    %v7703 = vld [vmem:[#allocation8 + $0xb8] sm:$0xff]
    %v7704 = vld [vmem:[#allocation8 + $0xc0] sm:$0xff]
    %v7705 = vld [vmem:[#allocation8 + $0xc8] sm:$0xff]
    %v7706 = vld [vmem:[#allocation8 + $0xd0] sm:$0xff]
    %v7707 = vld [vmem:[#allocation8 + $0xd8] sm:$0xff]
    %v7708 = vld [vmem:[#allocation8 + $0xe0] sm:$0xff]
    %v7709 = vld [vmem:[#allocation8 + $0xe8] sm:$0xff]
    %v7710 = vld [vmem:[#allocation8 + $0xf0] sm:$0xff]
    %v7711 = vld [vmem:[#allocation8 + $0xf8] sm:$0xff]
    %v7712 = vld [vmem:[#allocation8 + $0x100] sm:$0xff]
    %v7713 = vld [vmem:[#allocation8 + $0x108] sm:$0xff]
    %v7714 = vld [vmem:[#allocation8 + $0x110] sm:$0xff]
    %v7715 = vld [vmem:[#allocation8 + $0x118] sm:$0xff]
    %v7716 = vld [vmem:[#allocation8 + $0x120] sm:$0xff]
    %v7717 = vld [vmem:[#allocation8 + $0x128] sm:$0xff]
    %v7718 = vld [vmem:[#allocation8 + $0x130] sm:$0xff]
    %v7719 = vld [vmem:[#allocation8 + $0x138] sm:$0xff]
    %v7720 = vld [vmem:[#allocation8 + $0x140] sm:$0xff]
    %v7721 = vld [vmem:[#allocation8 + $0x148] sm:$0xff]
    %v7722 = vld [vmem:[#allocation8 + $0x150] sm:$0xff]
    %v7723 = vld [vmem:[#allocation8 + $0x158] sm:$0xff]
    %v7724 = vld [vmem:[#allocation8 + $0x160] sm:$0xff]
    %v7725 = vld [vmem:[#allocation8 + $0x168] sm:$0xff]
    %v7726 = vld [vmem:[#allocation8 + $0x170] sm:$0xff]
    %v7727 = vld [vmem:[#allocation8 + $0x178] sm:$0xff]
    %v7728 = vld [vmem:[#allocation8 + $0x180] sm:$0xff]
    %v7729 = vld [vmem:[#allocation8 + $0x188] sm:$0xff]
    %v7730 = vld [vmem:[#allocation8 + $0x190] sm:$0xff]
    %v7731 = vld [vmem:[#allocation8 + $0x198] sm:$0xff]
    %v7732 = vld [vmem:[#allocation8 + $0x1a0] sm:$0xff]
    %v7733 = vld [vmem:[#allocation8 + $0x1a8] sm:$0xff]
    %v7734 = vld [vmem:[#allocation8 + $0x1b0] sm:$0xff]
    %v7735 = vld [vmem:[#allocation8 + $0x1b8] sm:$0xff]
    %v7736 = vld [vmem:[#allocation8 + $0x1c0] sm:$0xff]
    %v7737 = vld [vmem:[#allocation8 + $0x1c8] sm:$0xff]
    %v7738 = vld [vmem:[#allocation8 + $0x1d0] sm:$0xff]
    %v7739 = vld [vmem:[#allocation8 + $0x1d8] sm:$0xff]
    %v7740 = vld [vmem:[#allocation8 + $0x1e0] sm:$0xff]
    %v7741 = vld [vmem:[#allocation8 + $0x1e8] sm:$0xff]
    %v7742 = vld [vmem:[#allocation8 + $0x1f0] sm:$0xff]
    %v7743 = vld [vmem:[#allocation8 + $0x1f8] sm:$0xff]
    %v7744 = vld [vmem:[#allocation8 + $0x200] sm:$0xff]
    %v7745 = vld [vmem:[#allocation8 + $0x208] sm:$0xff]
    %v7746 = vld [vmem:[#allocation8 + $0x210] sm:$0xff]
    %v7747 = vld [vmem:[#allocation8 + $0x218] sm:$0xff]
    %v7748 = vld [vmem:[#allocation8 + $0x220] sm:$0xff]
    %v7749 = vld [vmem:[#allocation8 + $0x228] sm:$0xff]
    %v7750 = vld [vmem:[#allocation8 + $0x230] sm:$0xff]
    %v7751 = vld [vmem:[#allocation8 + $0x238] sm:$0xff]
    %v7752 = vld [vmem:[#allocation8 + $0x240] sm:$0xff]
    %v7753 = vld [vmem:[#allocation8 + $0x248] sm:$0xff]
    %v7754 = vld [vmem:[#allocation8 + $0x250] sm:$0xff]
    %v7755 = vld [vmem:[#allocation8 + $0x258] sm:$0xff]
    %v7756 = vld [vmem:[#allocation8 + $0x260] sm:$0xff]
    %v7757 = vld [vmem:[#allocation8 + $0x268] sm:$0xff]
    %v7758 = vld [vmem:[#allocation8 + $0x270] sm:$0xff]
    %v7759 = vld [vmem:[#allocation8 + $0x278] sm:$0xff]
    %v7760 = vld [vmem:[#allocation8 + $0x280] sm:$0xff]
    %v7761 = vld [vmem:[#allocation8 + $0x288] sm:$0xff]
    %v7762 = vld [vmem:[#allocation8 + $0x290] sm:$0xff]
    %v7763 = vld [vmem:[#allocation8 + $0x298] sm:$0xff]
    %v7764 = vld [vmem:[#allocation8 + $0x2a0] sm:$0xff]
    %v7765 = vld [vmem:[#allocation8 + $0x2a8] sm:$0xff]
    %v7766 = vld [vmem:[#allocation8 + $0x2b0] sm:$0xff]
    %v7767 = vld [vmem:[#allocation8 + $0x2b8] sm:$0xff]
    %v7768 = vld [vmem:[#allocation8 + $0x2c0] sm:$0xff]
    %v7769 = vld [vmem:[#allocation8 + $0x2c8] sm:$0xff]
    %v7770 = vld [vmem:[#allocation8 + $0x2d0] sm:$0xff]
    %v7771 = vld [vmem:[#allocation8 + $0x2d8] sm:$0xff]
    %v7772 = vld [vmem:[#allocation8 + $0x2e0] sm:$0xff]
    %v7773 = vld [vmem:[#allocation8 + $0x2e8] sm:$0xff]
    %v7774 = vld [vmem:[#allocation8 + $0x2f0] sm:$0xff]
    %v7775 = vld [vmem:[#allocation8 + $0x2f8] sm:$0xff]
    %v7776 = vld [vmem:[#allocation8 + $0x300] sm:$0xff]
    %v7777 = vld [vmem:[#allocation8 + $0x308] sm:$0xff]
    %v7778 = vld [vmem:[#allocation8 + $0x310] sm:$0xff]
    %v7779 = vld [vmem:[#allocation8 + $0x318] sm:$0xff]
    %v7780 = vld [vmem:[#allocation8 + $0x320] sm:$0xff]
    %v7781 = vld [vmem:[#allocation8 + $0x328] sm:$0xff]
    %v7782 = vld [vmem:[#allocation8 + $0x330] sm:$0xff]
    %v7783 = vld [vmem:[#allocation8 + $0x338] sm:$0xff]
    %v7784 = vld [vmem:[#allocation8 + $0x340] sm:$0xff]
    %v7785 = vld [vmem:[#allocation8 + $0x348] sm:$0xff]
    %v7786 = vld [vmem:[#allocation8 + $0x350] sm:$0xff]
    %v7787 = vld [vmem:[#allocation8 + $0x358] sm:$0xff]
    %v7788 = vld [vmem:[#allocation8 + $0x360] sm:$0xff]
    %v7789 = vld [vmem:[#allocation8 + $0x368] sm:$0xff]
    %v7790 = vld [vmem:[#allocation8 + $0x370] sm:$0xff]
    %v7791 = vld [vmem:[#allocation8 + $0x378] sm:$0xff]
    %v7792 = vld [vmem:[#allocation8 + $0x380] sm:$0xff]
    %v7793 = vld [vmem:[#allocation8 + $0x388] sm:$0xff]
    %v7794 = vld [vmem:[#allocation8 + $0x390] sm:$0xff]
    %v7795 = vld [vmem:[#allocation8 + $0x398] sm:$0xff]
    %v7796 = vld [vmem:[#allocation8 + $0x3a0] sm:$0xff]
    %v7797 = vld [vmem:[#allocation8 + $0x3a8] sm:$0xff]
    %v7798 = vld [vmem:[#allocation8 + $0x3b0] sm:$0xff]
    %v7799 = vld [vmem:[#allocation8 + $0x3b8] sm:$0xff]
    %v7800 = vld [vmem:[#allocation8 + $0x3c0] sm:$0xff]
    %v7801 = vld [vmem:[#allocation8 + $0x3c8] sm:$0xff]
    %v7802 = vld [vmem:[#allocation8 + $0x3d0] sm:$0xff]
    %v7803 = vld [vmem:[#allocation8 + $0x3d8] sm:$0xff]
    %v7804 = vld [vmem:[#allocation8 + $0x3e0] sm:$0xff]
    %v7805 = vld [vmem:[#allocation8 + $0x3e8] sm:$0xff]
    %v7806 = vld [vmem:[#allocation8 + $0x3f0] sm:$0xff]
    %v7807 = vld [vmem:[#allocation8 + $0x3f8] sm:$0xff]
    %v7808 = vld [vmem:[#allocation8 + $0x400] sm:$0xff]
    %v7809 = vld [vmem:[#allocation8 + $0x408] sm:$0xff]
    %v7810 = vld [vmem:[#allocation8 + $0x410] sm:$0xff]
    %v7811 = vld [vmem:[#allocation8 + $0x418] sm:$0xff]
    %v7812 = vld [vmem:[#allocation8 + $0x420] sm:$0xff]
    %v7813 = vld [vmem:[#allocation8 + $0x428] sm:$0xff]
    %v7814 = vld [vmem:[#allocation8 + $0x430] sm:$0xff]
    %v7815 = vld [vmem:[#allocation8 + $0x438] sm:$0xff]
    %v7816 = vld [vmem:[#allocation8 + $0x440] sm:$0xff]
    %v7817 = vld [vmem:[#allocation8 + $0x448] sm:$0xff]
    %v7818 = vld [vmem:[#allocation8 + $0x450] sm:$0xff]
    %v7819 = vld [vmem:[#allocation8 + $0x458] sm:$0xff]
    %v7820 = vld [vmem:[#allocation8 + $0x460] sm:$0xff]
    %v7821 = vld [vmem:[#allocation8 + $0x468] sm:$0xff]
    %v7822 = vld [vmem:[#allocation8 + $0x470] sm:$0xff]
    %v7823 = vld [vmem:[#allocation8 + $0x478] sm:$0xff]
    %v7824 = vld [vmem:[#allocation8 + $0x480] sm:$0xff]
    %v7825 = vld [vmem:[#allocation8 + $0x488] sm:$0xff]
    %v7826 = vld [vmem:[#allocation8 + $0x490] sm:$0xff]
    %v7827 = vld [vmem:[#allocation8 + $0x498] sm:$0xff]
    %v7828 = vld [vmem:[#allocation8 + $0x4a0] sm:$0xff]
    %v7829 = vld [vmem:[#allocation8 + $0x4a8] sm:$0xff]
    %v7830 = vld [vmem:[#allocation8 + $0x4b0] sm:$0xff]
    %v7831 = vld [vmem:[#allocation8 + $0x4b8] sm:$0xff]
    %v7832 = vld [vmem:[#allocation8 + $0x4c0] sm:$0xff]
    %v7833 = vld [vmem:[#allocation8 + $0x4c8] sm:$0xff]
    %v7834 = vld [vmem:[#allocation8 + $0x4d0] sm:$0xff]
    %v7835 = vld [vmem:[#allocation8 + $0x4d8] sm:$0xff]
    %v7836 = vld [vmem:[#allocation8 + $0x4e0] sm:$0xff]
    %v7837 = vld [vmem:[#allocation8 + $0x4e8] sm:$0xff]
    %v7838 = vld [vmem:[#allocation8 + $0x4f0] sm:$0xff]
    %v7839 = vld [vmem:[#allocation8 + $0x4f8] sm:$0xff]
    %v7840 = vld [vmem:[#allocation8 + $0x500] sm:$0xff]
    %v7841 = vld [vmem:[#allocation8 + $0x508] sm:$0xff]
    %v7842 = vld [vmem:[#allocation8 + $0x510] sm:$0xff]
    %v7843 = vld [vmem:[#allocation8 + $0x518] sm:$0xff]
    %v7844 = vld [vmem:[#allocation8 + $0x520] sm:$0xff]
    %v7845 = vld [vmem:[#allocation8 + $0x528] sm:$0xff]
    %v7846 = vld [vmem:[#allocation8 + $0x530] sm:$0xff]
    %v7847 = vld [vmem:[#allocation8 + $0x538] sm:$0xff]
    %v7848 = vld [vmem:[#allocation8 + $0x540] sm:$0xff]
    %v7849 = vld [vmem:[#allocation8 + $0x548] sm:$0xff]
    %v7850 = vld [vmem:[#allocation8 + $0x550] sm:$0xff]
    %v7851 = vld [vmem:[#allocation8 + $0x558] sm:$0xff]
    %v7852 = vld [vmem:[#allocation8 + $0x560] sm:$0xff]
    %v7853 = vld [vmem:[#allocation8 + $0x568] sm:$0xff]
    %v7854 = vld [vmem:[#allocation8 + $0x570] sm:$0xff]
    %v7855 = vld [vmem:[#allocation8 + $0x578] sm:$0xff]
    %v7856 = vld [vmem:[#allocation8 + $0x580] sm:$0xff]
    %v7857 = vld [vmem:[#allocation8 + $0x588] sm:$0xff]
    %v7858 = vld [vmem:[#allocation8 + $0x590] sm:$0xff]
    %v7859 = vld [vmem:[#allocation8 + $0x598] sm:$0xff]
    %v7860 = vld [vmem:[#allocation8 + $0x5a0] sm:$0xff]
    %v7861 = vld [vmem:[#allocation8 + $0x5a8] sm:$0xff]
    %v7862 = vld [vmem:[#allocation8 + $0x5b0] sm:$0xff]
    %v7863 = vld [vmem:[#allocation8 + $0x5b8] sm:$0xff]
    %v7864 = vld [vmem:[#allocation8 + $0x5c0] sm:$0xff]
    %v7865 = vld [vmem:[#allocation8 + $0x5c8] sm:$0xff]
    %v7866 = vld [vmem:[#allocation8 + $0x5d0] sm:$0xff]
    %v7867 = vld [vmem:[#allocation8 + $0x5d8] sm:$0xff]
    %v7868 = vld [vmem:[#allocation8 + $0x5e0] sm:$0xff]
    %v7869 = vld [vmem:[#allocation8 + $0x5e8] sm:$0xff]
    %v7870 = vld [vmem:[#allocation8 + $0x5f0] sm:$0xff]
    %v7871 = vld [vmem:[#allocation8 + $0x5f8] sm:$0xff]
    %v7872 = vld [vmem:[#allocation8 + $0x600] sm:$0xff]
    %v7873 = vld [vmem:[#allocation8 + $0x608] sm:$0xff]
    %v7874 = vld [vmem:[#allocation8 + $0x610] sm:$0xff]
    %v7875 = vld [vmem:[#allocation8 + $0x618] sm:$0xff]
    %v7876 = vld [vmem:[#allocation8 + $0x620] sm:$0xff]
    %v7877 = vld [vmem:[#allocation8 + $0x628] sm:$0xff]
    %v7878 = vld [vmem:[#allocation8 + $0x630] sm:$0xff]
    %v7879 = vld [vmem:[#allocation8 + $0x638] sm:$0xff]
    %v7880 = vld [vmem:[#allocation8 + $0x640] sm:$0xff]
    %v7881 = vld [vmem:[#allocation8 + $0x648] sm:$0xff]
    %v7882 = vld [vmem:[#allocation8 + $0x650] sm:$0xff]
    %v7883 = vld [vmem:[#allocation8 + $0x658] sm:$0xff]
    %v7884 = vld [vmem:[#allocation8 + $0x660] sm:$0xff]
    %v7885 = vld [vmem:[#allocation8 + $0x668] sm:$0xff]
    %v7886 = vld [vmem:[#allocation8 + $0x670] sm:$0xff]
    %v7887 = vld [vmem:[#allocation8 + $0x678] sm:$0xff]
    %v7888 = vld [vmem:[#allocation8 + $0x680] sm:$0xff]
    %v7889 = vld [vmem:[#allocation8 + $0x688] sm:$0xff]
    %v7890 = vld [vmem:[#allocation8 + $0x690] sm:$0xff]
    %v7891 = vld [vmem:[#allocation8 + $0x698] sm:$0xff]
    %v7892 = vld [vmem:[#allocation8 + $0x6a0] sm:$0xff]
    %v7893 = vld [vmem:[#allocation8 + $0x6a8] sm:$0xff]
    %v7894 = vld [vmem:[#allocation8 + $0x6b0] sm:$0xff]
    %v7895 = vld [vmem:[#allocation8 + $0x6b8] sm:$0xff]
    %v7896 = vld [vmem:[#allocation8 + $0x6c0] sm:$0xff]
    %v7897 = vld [vmem:[#allocation8 + $0x6c8] sm:$0xff]
    %v7898 = vld [vmem:[#allocation8 + $0x6d0] sm:$0xff]
    %v7899 = vld [vmem:[#allocation8 + $0x6d8] sm:$0xff]
    %v7900 = vld [vmem:[#allocation8 + $0x6e0] sm:$0xff]
    %v7901 = vld [vmem:[#allocation8 + $0x6e8] sm:$0xff]
    %v7902 = vld [vmem:[#allocation8 + $0x6f0] sm:$0xff]
    %v7903 = vld [vmem:[#allocation8 + $0x6f8] sm:$0xff]
    %v7904 = vld [vmem:[#allocation8 + $0x700] sm:$0xff]
    %v7905 = vld [vmem:[#allocation8 + $0x708] sm:$0xff]
    %v7906 = vld [vmem:[#allocation8 + $0x710] sm:$0xff]
    %v7907 = vld [vmem:[#allocation8 + $0x718] sm:$0xff]
    %v7908 = vld [vmem:[#allocation8 + $0x720] sm:$0xff]
    %v7909 = vld [vmem:[#allocation8 + $0x728] sm:$0xff]
    %v7910 = vld [vmem:[#allocation8 + $0x730] sm:$0xff]
    %v7911 = vld [vmem:[#allocation8 + $0x738] sm:$0xff]
    %v7912 = vld [vmem:[#allocation8 + $0x740] sm:$0xff]
    %v7913 = vld [vmem:[#allocation8 + $0x748] sm:$0xff]
    %v7914 = vld [vmem:[#allocation8 + $0x750] sm:$0xff]
    %v7915 = vld [vmem:[#allocation8 + $0x758] sm:$0xff]
    %v7916 = vld [vmem:[#allocation8 + $0x760] sm:$0xff]
    %v7917 = vld [vmem:[#allocation8 + $0x768] sm:$0xff]
    %v7918 = vld [vmem:[#allocation8 + $0x770] sm:$0xff]
    %v7919 = vld [vmem:[#allocation8 + $0x778] sm:$0xff]
    %v7920 = vld [vmem:[#allocation8 + $0x780] sm:$0xff]
    %v7921 = vld [vmem:[#allocation8 + $0x788] sm:$0xff]
    %v7922 = vld [vmem:[#allocation8 + $0x790] sm:$0xff]
    %v7923 = vld [vmem:[#allocation8 + $0x798] sm:$0xff]
    %v7924 = vld [vmem:[#allocation8 + $0x7a0] sm:$0xff]
    %v7925 = vld [vmem:[#allocation8 + $0x7a8] sm:$0xff]
    %v7926 = vld [vmem:[#allocation8 + $0x7b0] sm:$0xff]
    %v7927 = vld [vmem:[#allocation8 + $0x7b8] sm:$0xff]
    %v7928 = vld [vmem:[#allocation8 + $0x7c0] sm:$0xff]
    %v7929 = vld [vmem:[#allocation8 + $0x7c8] sm:$0xff]
    %v7930 = vld [vmem:[#allocation8 + $0x7d0] sm:$0xff]
    %v7931 = vld [vmem:[#allocation8 + $0x7d8] sm:$0xff]
    %v7932 = vld [vmem:[#allocation8 + $0x7e0] sm:$0xff]
    %v7933 = vld [vmem:[#allocation8 + $0x7e8] sm:$0xff]
    %v7934 = vld [vmem:[#allocation8 + $0x7f0] sm:$0xff]
    %v7935 = vld [vmem:[#allocation8 + $0x7f8] sm:$0xff]
    %v7936 = vld [vmem:[#allocation10] sm:$0xf]
    %v7938 = vlaneseq
    %v7939 = vshrl.u32 %v7938, 7
    %v7940 = vsub.s32 0, %v7939
    %v7941 = vrot.slane %v7936, %v7940
    %v7942 = vlaneseq
    %v7943 = vshrl.u32 %v7942, 7
    %v7944 = vsub.s32 1, %v7943
    %v7945 = vrot.slane %v7936, %v7944
    %v7946 = vlaneseq
    %v7947 = vshrl.u32 %v7946, 7
    %v7948 = vsub.s32 2, %v7947
    %v7949 = vrot.slane %v7936, %v7948
    %v7950 = vlaneseq
    %v7951 = vshrl.u32 %v7950, 7
    %v7952 = vsub.s32 3, %v7951
    %v7953 = vrot.slane %v7936, %v7952
    %v8214 = vunpack.c.l.b16 %v7680
    %v8215 = vunpack.c.h.b16 %v7680
    %v8216 = vunpack.c.l.b16 %v7681
    %v8217 = vunpack.c.h.b16 %v7681
    %v8218 = vunpack.c.l.b16 %v7682
    %v8219 = vunpack.c.h.b16 %v7682
    %v8220 = vunpack.c.l.b16 %v7683
    %v8221 = vunpack.c.h.b16 %v7683
    %v8222 = vunpack.c.l.b16 %v7684
    %v8223 = vunpack.c.h.b16 %v7684
    %v8224 = vunpack.c.l.b16 %v7685
    %v8225 = vunpack.c.h.b16 %v7685
    %v8226 = vunpack.c.l.b16 %v7686
    %v8227 = vunpack.c.h.b16 %v7686
    %v8228 = vunpack.c.l.b16 %v7687
    %v8229 = vunpack.c.h.b16 %v7687
    %v8230 = vunpack.c.l.b16 %v7688
    %v8231 = vunpack.c.h.b16 %v7688
    %v8232 = vunpack.c.l.b16 %v7689
    %v8233 = vunpack.c.h.b16 %v7689
    %v8234 = vunpack.c.l.b16 %v7690
    %v8235 = vunpack.c.h.b16 %v7690
    %v8236 = vunpack.c.l.b16 %v7691
    %v8237 = vunpack.c.h.b16 %v7691
    %v8238 = vunpack.c.l.b16 %v7692
    %v8239 = vunpack.c.h.b16 %v7692
    %v8240 = vunpack.c.l.b16 %v7693
    %v8241 = vunpack.c.h.b16 %v7693
    %v8242 = vunpack.c.l.b16 %v7694
    %v8243 = vunpack.c.h.b16 %v7694
    %v8244 = vunpack.c.l.b16 %v7695
    %v8245 = vunpack.c.h.b16 %v7695
    %v8246 = vunpack.c.l.b16 %v7696
    %v8247 = vunpack.c.h.b16 %v7696
    %v8248 = vunpack.c.l.b16 %v7697
    %v8249 = vunpack.c.h.b16 %v7697
    %v8250 = vunpack.c.l.b16 %v7698
    %v8251 = vunpack.c.h.b16 %v7698
    %v8252 = vunpack.c.l.b16 %v7699
    %v8253 = vunpack.c.h.b16 %v7699
    %v8254 = vunpack.c.l.b16 %v7700
    %v8255 = vunpack.c.h.b16 %v7700
    %v8256 = vunpack.c.l.b16 %v7701
    %v8257 = vunpack.c.h.b16 %v7701
    %v8258 = vunpack.c.l.b16 %v7702
    %v8259 = vunpack.c.h.b16 %v7702
    %v8260 = vunpack.c.l.b16 %v7703
    %v8261 = vunpack.c.h.b16 %v7703
    %v8262 = vunpack.c.l.b16 %v7704
    %v8263 = vunpack.c.h.b16 %v7704
    %v8264 = vunpack.c.l.b16 %v7705
    %v8265 = vunpack.c.h.b16 %v7705
    %v8266 = vunpack.c.l.b16 %v7706
    %v8267 = vunpack.c.h.b16 %v7706
    %v8268 = vunpack.c.l.b16 %v7707
    %v8269 = vunpack.c.h.b16 %v7707
    %v8270 = vunpack.c.l.b16 %v7708
    %v8271 = vunpack.c.h.b16 %v7708
    %v8272 = vunpack.c.l.b16 %v7709
    %v8273 = vunpack.c.h.b16 %v7709
    %v8274 = vunpack.c.l.b16 %v7710
    %v8275 = vunpack.c.h.b16 %v7710
    %v8276 = vunpack.c.l.b16 %v7711
    %v8277 = vunpack.c.h.b16 %v7711
    %v8278 = vunpack.c.l.b16 %v7712
    %v8279 = vunpack.c.h.b16 %v7712
    %v8280 = vunpack.c.l.b16 %v7713
    %v8281 = vunpack.c.h.b16 %v7713
    %v8282 = vunpack.c.l.b16 %v7714
    %v8283 = vunpack.c.h.b16 %v7714
    %v8284 = vunpack.c.l.b16 %v7715
    %v8285 = vunpack.c.h.b16 %v7715
    %v8286 = vunpack.c.l.b16 %v7716
    %v8287 = vunpack.c.h.b16 %v7716
    %v8288 = vunpack.c.l.b16 %v7717
    %v8289 = vunpack.c.h.b16 %v7717
    %v8290 = vunpack.c.l.b16 %v7718
    %v8291 = vunpack.c.h.b16 %v7718
    %v8292 = vunpack.c.l.b16 %v7719
    %v8293 = vunpack.c.h.b16 %v7719
    %v8294 = vunpack.c.l.b16 %v7720
    %v8295 = vunpack.c.h.b16 %v7720
    %v8296 = vunpack.c.l.b16 %v7721
    %v8297 = vunpack.c.h.b16 %v7721
    %v8298 = vunpack.c.l.b16 %v7722
    %v8299 = vunpack.c.h.b16 %v7722
    %v8300 = vunpack.c.l.b16 %v7723
    %v8301 = vunpack.c.h.b16 %v7723
    %v8302 = vunpack.c.l.b16 %v7724
    %v8303 = vunpack.c.h.b16 %v7724
    %v8304 = vunpack.c.l.b16 %v7725
    %v8305 = vunpack.c.h.b16 %v7725
    %v8306 = vunpack.c.l.b16 %v7726
    %v8307 = vunpack.c.h.b16 %v7726
    %v8308 = vunpack.c.l.b16 %v7727
    %v8309 = vunpack.c.h.b16 %v7727
    %v8310 = vunpack.c.l.b16 %v7728
    %v8311 = vunpack.c.h.b16 %v7728
    %v8312 = vunpack.c.l.b16 %v7729
    %v8313 = vunpack.c.h.b16 %v7729
    %v8314 = vunpack.c.l.b16 %v7730
    %v8315 = vunpack.c.h.b16 %v7730
    %v8316 = vunpack.c.l.b16 %v7731
    %v8317 = vunpack.c.h.b16 %v7731
    %v8318 = vunpack.c.l.b16 %v7732
    %v8319 = vunpack.c.h.b16 %v7732
    %v8320 = vunpack.c.l.b16 %v7733
    %v8321 = vunpack.c.h.b16 %v7733
    %v8322 = vunpack.c.l.b16 %v7734
    %v8323 = vunpack.c.h.b16 %v7734
    %v8324 = vunpack.c.l.b16 %v7735
    %v8325 = vunpack.c.h.b16 %v7735
    %v8326 = vunpack.c.l.b16 %v7736
    %v8327 = vunpack.c.h.b16 %v7736
    %v8328 = vunpack.c.l.b16 %v7737
    %v8329 = vunpack.c.h.b16 %v7737
    %v8330 = vunpack.c.l.b16 %v7738
    %v8331 = vunpack.c.h.b16 %v7738
    %v8332 = vunpack.c.l.b16 %v7739
    %v8333 = vunpack.c.h.b16 %v7739
    %v8334 = vunpack.c.l.b16 %v7740
    %v8335 = vunpack.c.h.b16 %v7740
    %v8336 = vunpack.c.l.b16 %v7741
    %v8337 = vunpack.c.h.b16 %v7741
    %v8338 = vunpack.c.l.b16 %v7742
    %v8339 = vunpack.c.h.b16 %v7742
    %v8340 = vunpack.c.l.b16 %v7743
    %v8341 = vunpack.c.h.b16 %v7743
    %v8342 = vunpack.c.l.b16 %v7744
    %v8343 = vunpack.c.h.b16 %v7744
    %v8344 = vunpack.c.l.b16 %v7745
    %v8345 = vunpack.c.h.b16 %v7745
    %v8346 = vunpack.c.l.b16 %v7746
    %v8347 = vunpack.c.h.b16 %v7746
    %v8348 = vunpack.c.l.b16 %v7747
    %v8349 = vunpack.c.h.b16 %v7747
    %v8350 = vunpack.c.l.b16 %v7748
    %v8351 = vunpack.c.h.b16 %v7748
    %v8352 = vunpack.c.l.b16 %v7749
    %v8353 = vunpack.c.h.b16 %v7749
    %v8354 = vunpack.c.l.b16 %v7750
    %v8355 = vunpack.c.h.b16 %v7750
    %v8356 = vunpack.c.l.b16 %v7751
    %v8357 = vunpack.c.h.b16 %v7751
    %v8358 = vunpack.c.l.b16 %v7752
    %v8359 = vunpack.c.h.b16 %v7752
    %v8360 = vunpack.c.l.b16 %v7753
    %v8361 = vunpack.c.h.b16 %v7753
    %v8362 = vunpack.c.l.b16 %v7754
    %v8363 = vunpack.c.h.b16 %v7754
    %v8364 = vunpack.c.l.b16 %v7755
    %v8365 = vunpack.c.h.b16 %v7755
    %v8366 = vunpack.c.l.b16 %v7756
    %v8367 = vunpack.c.h.b16 %v7756
    %v8368 = vunpack.c.l.b16 %v7757
    %v8369 = vunpack.c.h.b16 %v7757
    %v8370 = vunpack.c.l.b16 %v7758
    %v8371 = vunpack.c.h.b16 %v7758
    %v8372 = vunpack.c.l.b16 %v7759
    %v8373 = vunpack.c.h.b16 %v7759
    %v8374 = vunpack.c.l.b16 %v7760
    %v8375 = vunpack.c.h.b16 %v7760
    %v8376 = vunpack.c.l.b16 %v7761
    %v8377 = vunpack.c.h.b16 %v7761
    %v8378 = vunpack.c.l.b16 %v7762
    %v8379 = vunpack.c.h.b16 %v7762
    %v8380 = vunpack.c.l.b16 %v7763
    %v8381 = vunpack.c.h.b16 %v7763
    %v8382 = vunpack.c.l.b16 %v7764
    %v8383 = vunpack.c.h.b16 %v7764
    %v8384 = vunpack.c.l.b16 %v7765
    %v8385 = vunpack.c.h.b16 %v7765
    %v8386 = vunpack.c.l.b16 %v7766
    %v8387 = vunpack.c.h.b16 %v7766
    %v8388 = vunpack.c.l.b16 %v7767
    %v8389 = vunpack.c.h.b16 %v7767
    %v8390 = vunpack.c.l.b16 %v7768
    %v8391 = vunpack.c.h.b16 %v7768
    %v8392 = vunpack.c.l.b16 %v7769
    %v8393 = vunpack.c.h.b16 %v7769
    %v8394 = vunpack.c.l.b16 %v7770
    %v8395 = vunpack.c.h.b16 %v7770
    %v8396 = vunpack.c.l.b16 %v7771
    %v8397 = vunpack.c.h.b16 %v7771
    %v8398 = vunpack.c.l.b16 %v7772
    %v8399 = vunpack.c.h.b16 %v7772
    %v8400 = vunpack.c.l.b16 %v7773
    %v8401 = vunpack.c.h.b16 %v7773
    %v8402 = vunpack.c.l.b16 %v7774
    %v8403 = vunpack.c.h.b16 %v7774
    %v8404 = vunpack.c.l.b16 %v7775
    %v8405 = vunpack.c.h.b16 %v7775
    %v8406 = vunpack.c.l.b16 %v7776
    %v8407 = vunpack.c.h.b16 %v7776
    %v8408 = vunpack.c.l.b16 %v7777
    %v8409 = vunpack.c.h.b16 %v7777
    %v8410 = vunpack.c.l.b16 %v7778
    %v8411 = vunpack.c.h.b16 %v7778
    %v8412 = vunpack.c.l.b16 %v7779
    %v8413 = vunpack.c.h.b16 %v7779
    %v8414 = vunpack.c.l.b16 %v7780
    %v8415 = vunpack.c.h.b16 %v7780
    %v8416 = vunpack.c.l.b16 %v7781
    %v8417 = vunpack.c.h.b16 %v7781
    %v8418 = vunpack.c.l.b16 %v7782
    %v8419 = vunpack.c.h.b16 %v7782
    %v8420 = vunpack.c.l.b16 %v7783
    %v8421 = vunpack.c.h.b16 %v7783
    %v8422 = vunpack.c.l.b16 %v7784
    %v8423 = vunpack.c.h.b16 %v7784
    %v8424 = vunpack.c.l.b16 %v7785
    %v8425 = vunpack.c.h.b16 %v7785
    %v8426 = vunpack.c.l.b16 %v7786
    %v8427 = vunpack.c.h.b16 %v7786
    %v8428 = vunpack.c.l.b16 %v7787
    %v8429 = vunpack.c.h.b16 %v7787
    %v8430 = vunpack.c.l.b16 %v7788
    %v8431 = vunpack.c.h.b16 %v7788
    %v8432 = vunpack.c.l.b16 %v7789
    %v8433 = vunpack.c.h.b16 %v7789
    %v8434 = vunpack.c.l.b16 %v7790
    %v8435 = vunpack.c.h.b16 %v7790
    %v8436 = vunpack.c.l.b16 %v7791
    %v8437 = vunpack.c.h.b16 %v7791
    %v8438 = vunpack.c.l.b16 %v7792
    %v8439 = vunpack.c.h.b16 %v7792
    %v8440 = vunpack.c.l.b16 %v7793
    %v8441 = vunpack.c.h.b16 %v7793
    %v8442 = vunpack.c.l.b16 %v7794
    %v8443 = vunpack.c.h.b16 %v7794
    %v8444 = vunpack.c.l.b16 %v7795
    %v8445 = vunpack.c.h.b16 %v7795
    %v8446 = vunpack.c.l.b16 %v7796
    %v8447 = vunpack.c.h.b16 %v7796
    %v8448 = vunpack.c.l.b16 %v7797
    %v8449 = vunpack.c.h.b16 %v7797
    %v8450 = vunpack.c.l.b16 %v7798
    %v8451 = vunpack.c.h.b16 %v7798
    %v8452 = vunpack.c.l.b16 %v7799
    %v8453 = vunpack.c.h.b16 %v7799
    %v8454 = vunpack.c.l.b16 %v7800
    %v8455 = vunpack.c.h.b16 %v7800
    %v8456 = vunpack.c.l.b16 %v7801
    %v8457 = vunpack.c.h.b16 %v7801
    %v8458 = vunpack.c.l.b16 %v7802
    %v8459 = vunpack.c.h.b16 %v7802
    %v8460 = vunpack.c.l.b16 %v7803
    %v8461 = vunpack.c.h.b16 %v7803
    %v8462 = vunpack.c.l.b16 %v7804
    %v8463 = vunpack.c.h.b16 %v7804
    %v8464 = vunpack.c.l.b16 %v7805
    %v8465 = vunpack.c.h.b16 %v7805
    %v8466 = vunpack.c.l.b16 %v7806
    %v8467 = vunpack.c.h.b16 %v7806
    %v8468 = vunpack.c.l.b16 %v7807
    %v8469 = vunpack.c.h.b16 %v7807
    %v8470 = vunpack.c.l.b16 %v7808
    %v8471 = vunpack.c.h.b16 %v7808
    %v8472 = vunpack.c.l.b16 %v7809
    %v8473 = vunpack.c.h.b16 %v7809
    %v8474 = vunpack.c.l.b16 %v7810
    %v8475 = vunpack.c.h.b16 %v7810
    %v8476 = vunpack.c.l.b16 %v7811
    %v8477 = vunpack.c.h.b16 %v7811
    %v8478 = vunpack.c.l.b16 %v7812
    %v8479 = vunpack.c.h.b16 %v7812
    %v8480 = vunpack.c.l.b16 %v7813
    %v8481 = vunpack.c.h.b16 %v7813
    %v8482 = vunpack.c.l.b16 %v7814
    %v8483 = vunpack.c.h.b16 %v7814
    %v8484 = vunpack.c.l.b16 %v7815
    %v8485 = vunpack.c.h.b16 %v7815
    %v8486 = vunpack.c.l.b16 %v7816
    %v8487 = vunpack.c.h.b16 %v7816
    %v8488 = vunpack.c.l.b16 %v7817
    %v8489 = vunpack.c.h.b16 %v7817
    %v8490 = vunpack.c.l.b16 %v7818
    %v8491 = vunpack.c.h.b16 %v7818
    %v8492 = vunpack.c.l.b16 %v7819
    %v8493 = vunpack.c.h.b16 %v7819
    %v8494 = vunpack.c.l.b16 %v7820
    %v8495 = vunpack.c.h.b16 %v7820
    %v8496 = vunpack.c.l.b16 %v7821
    %v8497 = vunpack.c.h.b16 %v7821
    %v8498 = vunpack.c.l.b16 %v7822
    %v8499 = vunpack.c.h.b16 %v7822
    %v8500 = vunpack.c.l.b16 %v7823
    %v8501 = vunpack.c.h.b16 %v7823
    %v8502 = vunpack.c.l.b16 %v7824
    %v8503 = vunpack.c.h.b16 %v7824
    %v8504 = vunpack.c.l.b16 %v7825
    %v8505 = vunpack.c.h.b16 %v7825
    %v8506 = vunpack.c.l.b16 %v7826
    %v8507 = vunpack.c.h.b16 %v7826
    %v8508 = vunpack.c.l.b16 %v7827
    %v8509 = vunpack.c.h.b16 %v7827
    %v8510 = vunpack.c.l.b16 %v7828
    %v8511 = vunpack.c.h.b16 %v7828
    %v8512 = vunpack.c.l.b16 %v7829
    %v8513 = vunpack.c.h.b16 %v7829
    %v8514 = vunpack.c.l.b16 %v7830
    %v8515 = vunpack.c.h.b16 %v7830
    %v8516 = vunpack.c.l.b16 %v7831
    %v8517 = vunpack.c.h.b16 %v7831
    %v8518 = vunpack.c.l.b16 %v7832
    %v8519 = vunpack.c.h.b16 %v7832
    %v8520 = vunpack.c.l.b16 %v7833
    %v8521 = vunpack.c.h.b16 %v7833
    %v8522 = vunpack.c.l.b16 %v7834
    %v8523 = vunpack.c.h.b16 %v7834
    %v8524 = vunpack.c.l.b16 %v7835
    %v8525 = vunpack.c.h.b16 %v7835
    %v8526 = vunpack.c.l.b16 %v7836
    %v8527 = vunpack.c.h.b16 %v7836
    %v8528 = vunpack.c.l.b16 %v7837
    %v8529 = vunpack.c.h.b16 %v7837
    %v8530 = vunpack.c.l.b16 %v7838
    %v8531 = vunpack.c.h.b16 %v7838
    %v8532 = vunpack.c.l.b16 %v7839
    %v8533 = vunpack.c.h.b16 %v7839
    %v8534 = vunpack.c.l.b16 %v7840
    %v8535 = vunpack.c.h.b16 %v7840
    %v8536 = vunpack.c.l.b16 %v7841
    %v8537 = vunpack.c.h.b16 %v7841
    %v8538 = vunpack.c.l.b16 %v7842
    %v8539 = vunpack.c.h.b16 %v7842
    %v8540 = vunpack.c.l.b16 %v7843
    %v8541 = vunpack.c.h.b16 %v7843
    %v8542 = vunpack.c.l.b16 %v7844
    %v8543 = vunpack.c.h.b16 %v7844
    %v8544 = vunpack.c.l.b16 %v7845
    %v8545 = vunpack.c.h.b16 %v7845
    %v8546 = vunpack.c.l.b16 %v7846
    %v8547 = vunpack.c.h.b16 %v7846
    %v8548 = vunpack.c.l.b16 %v7847
    %v8549 = vunpack.c.h.b16 %v7847
    %v8550 = vunpack.c.l.b16 %v7848
    %v8551 = vunpack.c.h.b16 %v7848
    %v8552 = vunpack.c.l.b16 %v7849
    %v8553 = vunpack.c.h.b16 %v7849
    %v8554 = vunpack.c.l.b16 %v7850
    %v8555 = vunpack.c.h.b16 %v7850
    %v8556 = vunpack.c.l.b16 %v7851
    %v8557 = vunpack.c.h.b16 %v7851
    %v8558 = vunpack.c.l.b16 %v7852
    %v8559 = vunpack.c.h.b16 %v7852
    %v8560 = vunpack.c.l.b16 %v7853
    %v8561 = vunpack.c.h.b16 %v7853
    %v8562 = vunpack.c.l.b16 %v7854
    %v8563 = vunpack.c.h.b16 %v7854
    %v8564 = vunpack.c.l.b16 %v7855
    %v8565 = vunpack.c.h.b16 %v7855
    %v8566 = vunpack.c.l.b16 %v7856
    %v8567 = vunpack.c.h.b16 %v7856
    %v8568 = vunpack.c.l.b16 %v7857
    %v8569 = vunpack.c.h.b16 %v7857
    %v8570 = vunpack.c.l.b16 %v7858
    %v8571 = vunpack.c.h.b16 %v7858
    %v8572 = vunpack.c.l.b16 %v7859
    %v8573 = vunpack.c.h.b16 %v7859
    %v8574 = vunpack.c.l.b16 %v7860
    %v8575 = vunpack.c.h.b16 %v7860
    %v8576 = vunpack.c.l.b16 %v7861
    %v8577 = vunpack.c.h.b16 %v7861
    %v8578 = vunpack.c.l.b16 %v7862
    %v8579 = vunpack.c.h.b16 %v7862
    %v8580 = vunpack.c.l.b16 %v7863
    %v8581 = vunpack.c.h.b16 %v7863
    %v8582 = vunpack.c.l.b16 %v7864
    %v8583 = vunpack.c.h.b16 %v7864
    %v8584 = vunpack.c.l.b16 %v7865
    %v8585 = vunpack.c.h.b16 %v7865
    %v8586 = vunpack.c.l.b16 %v7866
    %v8587 = vunpack.c.h.b16 %v7866
    %v8588 = vunpack.c.l.b16 %v7867
    %v8589 = vunpack.c.h.b16 %v7867
    %v8590 = vunpack.c.l.b16 %v7868
    %v8591 = vunpack.c.h.b16 %v7868
    %v8592 = vunpack.c.l.b16 %v7869
    %v8593 = vunpack.c.h.b16 %v7869
    %v8594 = vunpack.c.l.b16 %v7870
    %v8595 = vunpack.c.h.b16 %v7870
    %v8596 = vunpack.c.l.b16 %v7871
    %v8597 = vunpack.c.h.b16 %v7871
    %v8598 = vunpack.c.l.b16 %v7872
    %v8599 = vunpack.c.h.b16 %v7872
    %v8600 = vunpack.c.l.b16 %v7873
    %v8601 = vunpack.c.h.b16 %v7873
    %v8602 = vunpack.c.l.b16 %v7874
    %v8603 = vunpack.c.h.b16 %v7874
    %v8604 = vunpack.c.l.b16 %v7875
    %v8605 = vunpack.c.h.b16 %v7875
    %v8606 = vunpack.c.l.b16 %v7876
    %v8607 = vunpack.c.h.b16 %v7876
    %v8608 = vunpack.c.l.b16 %v7877
    %v8609 = vunpack.c.h.b16 %v7877
    %v8610 = vunpack.c.l.b16 %v7878
    %v8611 = vunpack.c.h.b16 %v7878
    %v8612 = vunpack.c.l.b16 %v7879
    %v8613 = vunpack.c.h.b16 %v7879
    %v8614 = vunpack.c.l.b16 %v7880
    %v8615 = vunpack.c.h.b16 %v7880
    %v8616 = vunpack.c.l.b16 %v7881
    %v8617 = vunpack.c.h.b16 %v7881
    %v8618 = vunpack.c.l.b16 %v7882
    %v8619 = vunpack.c.h.b16 %v7882
    %v8620 = vunpack.c.l.b16 %v7883
    %v8621 = vunpack.c.h.b16 %v7883
    %v8622 = vunpack.c.l.b16 %v7884
    %v8623 = vunpack.c.h.b16 %v7884
    %v8624 = vunpack.c.l.b16 %v7885
    %v8625 = vunpack.c.h.b16 %v7885
    %v8626 = vunpack.c.l.b16 %v7886
    %v8627 = vunpack.c.h.b16 %v7886
    %v8628 = vunpack.c.l.b16 %v7887
    %v8629 = vunpack.c.h.b16 %v7887
    %v8630 = vunpack.c.l.b16 %v7888
    %v8631 = vunpack.c.h.b16 %v7888
    %v8632 = vunpack.c.l.b16 %v7889
    %v8633 = vunpack.c.h.b16 %v7889
    %v8634 = vunpack.c.l.b16 %v7890
    %v8635 = vunpack.c.h.b16 %v7890
    %v8636 = vunpack.c.l.b16 %v7891
    %v8637 = vunpack.c.h.b16 %v7891
    %v8638 = vunpack.c.l.b16 %v7892
    %v8639 = vunpack.c.h.b16 %v7892
    %v8640 = vunpack.c.l.b16 %v7893
    %v8641 = vunpack.c.h.b16 %v7893
    %v8642 = vunpack.c.l.b16 %v7894
    %v8643 = vunpack.c.h.b16 %v7894
    %v8644 = vunpack.c.l.b16 %v7895
    %v8645 = vunpack.c.h.b16 %v7895
    %v8646 = vunpack.c.l.b16 %v7896
    %v8647 = vunpack.c.h.b16 %v7896
    %v8648 = vunpack.c.l.b16 %v7897
    %v8649 = vunpack.c.h.b16 %v7897
    %v8650 = vunpack.c.l.b16 %v7898
    %v8651 = vunpack.c.h.b16 %v7898
    %v8652 = vunpack.c.l.b16 %v7899
    %v8653 = vunpack.c.h.b16 %v7899
    %v8654 = vunpack.c.l.b16 %v7900
    %v8655 = vunpack.c.h.b16 %v7900
    %v8656 = vunpack.c.l.b16 %v7901
    %v8657 = vunpack.c.h.b16 %v7901
    %v8658 = vunpack.c.l.b16 %v7902
    %v8659 = vunpack.c.h.b16 %v7902
    %v8660 = vunpack.c.l.b16 %v7903
    %v8661 = vunpack.c.h.b16 %v7903
    %v8662 = vunpack.c.l.b16 %v7904
    %v8663 = vunpack.c.h.b16 %v7904
    %v8664 = vunpack.c.l.b16 %v7905
    %v8665 = vunpack.c.h.b16 %v7905
    %v8666 = vunpack.c.l.b16 %v7906
    %v8667 = vunpack.c.h.b16 %v7906
    %v8668 = vunpack.c.l.b16 %v7907
    %v8669 = vunpack.c.h.b16 %v7907
    %v8670 = vunpack.c.l.b16 %v7908
    %v8671 = vunpack.c.h.b16 %v7908
    %v8672 = vunpack.c.l.b16 %v7909
    %v8673 = vunpack.c.h.b16 %v7909
    %v8674 = vunpack.c.l.b16 %v7910
    %v8675 = vunpack.c.h.b16 %v7910
    %v8676 = vunpack.c.l.b16 %v7911
    %v8677 = vunpack.c.h.b16 %v7911
    %v8678 = vunpack.c.l.b16 %v7912
    %v8679 = vunpack.c.h.b16 %v7912
    %v8680 = vunpack.c.l.b16 %v7913
    %v8681 = vunpack.c.h.b16 %v7913
    %v8682 = vunpack.c.l.b16 %v7914
    %v8683 = vunpack.c.h.b16 %v7914
    %v8684 = vunpack.c.l.b16 %v7915
    %v8685 = vunpack.c.h.b16 %v7915
    %v8686 = vunpack.c.l.b16 %v7916
    %v8687 = vunpack.c.h.b16 %v7916
    %v8688 = vunpack.c.l.b16 %v7917
    %v8689 = vunpack.c.h.b16 %v7917
    %v8690 = vunpack.c.l.b16 %v7918
    %v8691 = vunpack.c.h.b16 %v7918
    %v8692 = vunpack.c.l.b16 %v7919
    %v8693 = vunpack.c.h.b16 %v7919
    %v8694 = vunpack.c.l.b16 %v7920
    %v8695 = vunpack.c.h.b16 %v7920
    %v8696 = vunpack.c.l.b16 %v7921
    %v8697 = vunpack.c.h.b16 %v7921
    %v8698 = vunpack.c.l.b16 %v7922
    %v8699 = vunpack.c.h.b16 %v7922
    %v8700 = vunpack.c.l.b16 %v7923
    %v8701 = vunpack.c.h.b16 %v7923
    %v8702 = vunpack.c.l.b16 %v7924
    %v8703 = vunpack.c.h.b16 %v7924
    %v8704 = vunpack.c.l.b16 %v7925
    %v8705 = vunpack.c.h.b16 %v7925
    %v8706 = vunpack.c.l.b16 %v7926
    %v8707 = vunpack.c.h.b16 %v7926
    %v8708 = vunpack.c.l.b16 %v7927
    %v8709 = vunpack.c.h.b16 %v7927
    %v8710 = vunpack.c.l.b16 %v7928
    %v8711 = vunpack.c.h.b16 %v7928
    %v8712 = vunpack.c.l.b16 %v7929
    %v8713 = vunpack.c.h.b16 %v7929
    %v8714 = vunpack.c.l.b16 %v7930
    %v8715 = vunpack.c.h.b16 %v7930
    %v8716 = vunpack.c.l.b16 %v7931
    %v8717 = vunpack.c.h.b16 %v7931
    %v8718 = vunpack.c.l.b16 %v7932
    %v8719 = vunpack.c.h.b16 %v7932
    %v8720 = vunpack.c.l.b16 %v7933
    %v8721 = vunpack.c.h.b16 %v7933
    %v8722 = vunpack.c.l.b16 %v7934
    %v8723 = vunpack.c.h.b16 %v7934
    %v8724 = vunpack.c.l.b16 %v7935
    %v8725 = vunpack.c.h.b16 %v7935
    %v8726 = vpack.c.b16 %v8218, %v8214
    %v8727 = vpack.c.b16 %v8219, %v8215
    %v8728 = vpack.c.b16 %v8220, %v8216
    %v8729 = vpack.c.b16 %v8221, %v8217
    %v8730 = vpack.c.b16 %v8226, %v8222
    %v8731 = vpack.c.b16 %v8227, %v8223
    %v8732 = vpack.c.b16 %v8228, %v8224
    %v8733 = vpack.c.b16 %v8229, %v8225
    %v8734 = vpack.c.b16 %v8234, %v8230
    %v8735 = vpack.c.b16 %v8235, %v8231
    %v8736 = vpack.c.b16 %v8236, %v8232
    %v8737 = vpack.c.b16 %v8237, %v8233
    %v8738 = vpack.c.b16 %v8242, %v8238
    %v8739 = vpack.c.b16 %v8243, %v8239
    %v8740 = vpack.c.b16 %v8244, %v8240
    %v8741 = vpack.c.b16 %v8245, %v8241
    %v8742 = vpack.c.b16 %v8250, %v8246
    %v8743 = vpack.c.b16 %v8251, %v8247
    %v8744 = vpack.c.b16 %v8252, %v8248
    %v8745 = vpack.c.b16 %v8253, %v8249
    %v8746 = vpack.c.b16 %v8258, %v8254
    %v8747 = vpack.c.b16 %v8259, %v8255
    %v8748 = vpack.c.b16 %v8260, %v8256
    %v8749 = vpack.c.b16 %v8261, %v8257
    %v8750 = vpack.c.b16 %v8266, %v8262
    %v8751 = vpack.c.b16 %v8267, %v8263
    %v8752 = vpack.c.b16 %v8268, %v8264
    %v8753 = vpack.c.b16 %v8269, %v8265
    %v8754 = vpack.c.b16 %v8274, %v8270
    %v8755 = vpack.c.b16 %v8275, %v8271
    %v8756 = vpack.c.b16 %v8276, %v8272
    %v8757 = vpack.c.b16 %v8277, %v8273
    %v8758 = vpack.c.b16 %v8282, %v8278
    %v8759 = vpack.c.b16 %v8283, %v8279
    %v8760 = vpack.c.b16 %v8284, %v8280
    %v8761 = vpack.c.b16 %v8285, %v8281
    %v8762 = vpack.c.b16 %v8290, %v8286
    %v8763 = vpack.c.b16 %v8291, %v8287
    %v8764 = vpack.c.b16 %v8292, %v8288
    %v8765 = vpack.c.b16 %v8293, %v8289
    %v8766 = vpack.c.b16 %v8298, %v8294
    %v8767 = vpack.c.b16 %v8299, %v8295
    %v8768 = vpack.c.b16 %v8300, %v8296
    %v8769 = vpack.c.b16 %v8301, %v8297
    %v8770 = vpack.c.b16 %v8306, %v8302
    %v8771 = vpack.c.b16 %v8307, %v8303
    %v8772 = vpack.c.b16 %v8308, %v8304
    %v8773 = vpack.c.b16 %v8309, %v8305
    %v8774 = vpack.c.b16 %v8314, %v8310
    %v8775 = vpack.c.b16 %v8315, %v8311
    %v8776 = vpack.c.b16 %v8316, %v8312
    %v8777 = vpack.c.b16 %v8317, %v8313
    %v8778 = vpack.c.b16 %v8322, %v8318
    %v8779 = vpack.c.b16 %v8323, %v8319
    %v8780 = vpack.c.b16 %v8324, %v8320
    %v8781 = vpack.c.b16 %v8325, %v8321
    %v8782 = vpack.c.b16 %v8330, %v8326
    %v8783 = vpack.c.b16 %v8331, %v8327
    %v8784 = vpack.c.b16 %v8332, %v8328
    %v8785 = vpack.c.b16 %v8333, %v8329
    %v8786 = vpack.c.b16 %v8338, %v8334
    %v8787 = vpack.c.b16 %v8339, %v8335
    %v8788 = vpack.c.b16 %v8340, %v8336
    %v8789 = vpack.c.b16 %v8341, %v8337
    %v8790 = vpack.c.b16 %v8346, %v8342
    %v8791 = vpack.c.b16 %v8347, %v8343
    %v8792 = vpack.c.b16 %v8348, %v8344
    %v8793 = vpack.c.b16 %v8349, %v8345
    %v8794 = vpack.c.b16 %v8354, %v8350
    %v8795 = vpack.c.b16 %v8355, %v8351
    %v8796 = vpack.c.b16 %v8356, %v8352
    %v8797 = vpack.c.b16 %v8357, %v8353
    %v8798 = vpack.c.b16 %v8362, %v8358
    %v8799 = vpack.c.b16 %v8363, %v8359
    %v8800 = vpack.c.b16 %v8364, %v8360
    %v8801 = vpack.c.b16 %v8365, %v8361
    %v8802 = vpack.c.b16 %v8370, %v8366
    %v8803 = vpack.c.b16 %v8371, %v8367
    %v8804 = vpack.c.b16 %v8372, %v8368
    %v8805 = vpack.c.b16 %v8373, %v8369
    %v8806 = vpack.c.b16 %v8378, %v8374
    %v8807 = vpack.c.b16 %v8379, %v8375
    %v8808 = vpack.c.b16 %v8380, %v8376
    %v8809 = vpack.c.b16 %v8381, %v8377
    %v8810 = vpack.c.b16 %v8386, %v8382
    %v8811 = vpack.c.b16 %v8387, %v8383
    %v8812 = vpack.c.b16 %v8388, %v8384
    %v8813 = vpack.c.b16 %v8389, %v8385
    %v8814 = vpack.c.b16 %v8394, %v8390
    %v8815 = vpack.c.b16 %v8395, %v8391
    %v8816 = vpack.c.b16 %v8396, %v8392
    %v8817 = vpack.c.b16 %v8397, %v8393
    %v8818 = vpack.c.b16 %v8402, %v8398
    %v8819 = vpack.c.b16 %v8403, %v8399
    %v8820 = vpack.c.b16 %v8404, %v8400
    %v8821 = vpack.c.b16 %v8405, %v8401
    %v8822 = vpack.c.b16 %v8410, %v8406
    %v8823 = vpack.c.b16 %v8411, %v8407
    %v8824 = vpack.c.b16 %v8412, %v8408
    %v8825 = vpack.c.b16 %v8413, %v8409
    %v8826 = vpack.c.b16 %v8418, %v8414
    %v8827 = vpack.c.b16 %v8419, %v8415
    %v8828 = vpack.c.b16 %v8420, %v8416
    %v8829 = vpack.c.b16 %v8421, %v8417
    %v8830 = vpack.c.b16 %v8426, %v8422
    %v8831 = vpack.c.b16 %v8427, %v8423
    %v8832 = vpack.c.b16 %v8428, %v8424
    %v8833 = vpack.c.b16 %v8429, %v8425
    %v8834 = vpack.c.b16 %v8434, %v8430
    %v8835 = vpack.c.b16 %v8435, %v8431
    %v8836 = vpack.c.b16 %v8436, %v8432
    %v8837 = vpack.c.b16 %v8437, %v8433
    %v8838 = vpack.c.b16 %v8442, %v8438
    %v8839 = vpack.c.b16 %v8443, %v8439
    %v8840 = vpack.c.b16 %v8444, %v8440
    %v8841 = vpack.c.b16 %v8445, %v8441
    %v8842 = vpack.c.b16 %v8450, %v8446
    %v8843 = vpack.c.b16 %v8451, %v8447
    %v8844 = vpack.c.b16 %v8452, %v8448
    %v8845 = vpack.c.b16 %v8453, %v8449
    %v8846 = vpack.c.b16 %v8458, %v8454
    %v8847 = vpack.c.b16 %v8459, %v8455
    %v8848 = vpack.c.b16 %v8460, %v8456
    %v8849 = vpack.c.b16 %v8461, %v8457
    %v8850 = vpack.c.b16 %v8466, %v8462
    %v8851 = vpack.c.b16 %v8467, %v8463
    %v8852 = vpack.c.b16 %v8468, %v8464
    %v8853 = vpack.c.b16 %v8469, %v8465
    %v8854 = vpack.c.b16 %v8474, %v8470
    %v8855 = vpack.c.b16 %v8475, %v8471
    %v8856 = vpack.c.b16 %v8476, %v8472
    %v8857 = vpack.c.b16 %v8477, %v8473
    %v8858 = vpack.c.b16 %v8482, %v8478
    %v8859 = vpack.c.b16 %v8483, %v8479
    %v8860 = vpack.c.b16 %v8484, %v8480
    %v8861 = vpack.c.b16 %v8485, %v8481
    %v8862 = vpack.c.b16 %v8490, %v8486
    %v8863 = vpack.c.b16 %v8491, %v8487
    %v8864 = vpack.c.b16 %v8492, %v8488
    %v8865 = vpack.c.b16 %v8493, %v8489
    %v8866 = vpack.c.b16 %v8498, %v8494
    %v8867 = vpack.c.b16 %v8499, %v8495
    %v8868 = vpack.c.b16 %v8500, %v8496
    %v8869 = vpack.c.b16 %v8501, %v8497
    %v8870 = vpack.c.b16 %v8506, %v8502
    %v8871 = vpack.c.b16 %v8507, %v8503
    %v8872 = vpack.c.b16 %v8508, %v8504
    %v8873 = vpack.c.b16 %v8509, %v8505
    %v8874 = vpack.c.b16 %v8514, %v8510
    %v8875 = vpack.c.b16 %v8515, %v8511
    %v8876 = vpack.c.b16 %v8516, %v8512
    %v8877 = vpack.c.b16 %v8517, %v8513
    %v8878 = vpack.c.b16 %v8522, %v8518
    %v8879 = vpack.c.b16 %v8523, %v8519
    %v8880 = vpack.c.b16 %v8524, %v8520
    %v8881 = vpack.c.b16 %v8525, %v8521
    %v8882 = vpack.c.b16 %v8530, %v8526
    %v8883 = vpack.c.b16 %v8531, %v8527
    %v8884 = vpack.c.b16 %v8532, %v8528
    %v8885 = vpack.c.b16 %v8533, %v8529
    %v8886 = vpack.c.b16 %v8538, %v8534
    %v8887 = vpack.c.b16 %v8539, %v8535
    %v8888 = vpack.c.b16 %v8540, %v8536
    %v8889 = vpack.c.b16 %v8541, %v8537
    %v8890 = vpack.c.b16 %v8546, %v8542
    %v8891 = vpack.c.b16 %v8547, %v8543
    %v8892 = vpack.c.b16 %v8548, %v8544
    %v8893 = vpack.c.b16 %v8549, %v8545
    %v8894 = vpack.c.b16 %v8554, %v8550
    %v8895 = vpack.c.b16 %v8555, %v8551
    %v8896 = vpack.c.b16 %v8556, %v8552
    %v8897 = vpack.c.b16 %v8557, %v8553
    %v8898 = vpack.c.b16 %v8562, %v8558
    %v8899 = vpack.c.b16 %v8563, %v8559
    %v8900 = vpack.c.b16 %v8564, %v8560
    %v8901 = vpack.c.b16 %v8565, %v8561
    %v8902 = vpack.c.b16 %v8570, %v8566
    %v8903 = vpack.c.b16 %v8571, %v8567
    %v8904 = vpack.c.b16 %v8572, %v8568
    %v8905 = vpack.c.b16 %v8573, %v8569
    %v8906 = vpack.c.b16 %v8578, %v8574
    %v8907 = vpack.c.b16 %v8579, %v8575
    %v8908 = vpack.c.b16 %v8580, %v8576
    %v8909 = vpack.c.b16 %v8581, %v8577
    %v8910 = vpack.c.b16 %v8586, %v8582
    %v8911 = vpack.c.b16 %v8587, %v8583
    %v8912 = vpack.c.b16 %v8588, %v8584
    %v8913 = vpack.c.b16 %v8589, %v8585
    %v8914 = vpack.c.b16 %v8594, %v8590
    %v8915 = vpack.c.b16 %v8595, %v8591
    %v8916 = vpack.c.b16 %v8596, %v8592
    %v8917 = vpack.c.b16 %v8597, %v8593
    %v8918 = vpack.c.b16 %v8602, %v8598
    %v8919 = vpack.c.b16 %v8603, %v8599
    %v8920 = vpack.c.b16 %v8604, %v8600
    %v8921 = vpack.c.b16 %v8605, %v8601
    %v8922 = vpack.c.b16 %v8610, %v8606
    %v8923 = vpack.c.b16 %v8611, %v8607
    %v8924 = vpack.c.b16 %v8612, %v8608
    %v8925 = vpack.c.b16 %v8613, %v8609
    %v8926 = vpack.c.b16 %v8618, %v8614
    %v8927 = vpack.c.b16 %v8619, %v8615
    %v8928 = vpack.c.b16 %v8620, %v8616
    %v8929 = vpack.c.b16 %v8621, %v8617
    %v8930 = vpack.c.b16 %v8626, %v8622
    %v8931 = vpack.c.b16 %v8627, %v8623
    %v8932 = vpack.c.b16 %v8628, %v8624
    %v8933 = vpack.c.b16 %v8629, %v8625
    %v8934 = vpack.c.b16 %v8634, %v8630
    %v8935 = vpack.c.b16 %v8635, %v8631
    %v8936 = vpack.c.b16 %v8636, %v8632
    %v8937 = vpack.c.b16 %v8637, %v8633
    %v8938 = vpack.c.b16 %v8642, %v8638
    %v8939 = vpack.c.b16 %v8643, %v8639
    %v8940 = vpack.c.b16 %v8644, %v8640
    %v8941 = vpack.c.b16 %v8645, %v8641
    %v8942 = vpack.c.b16 %v8650, %v8646
    %v8943 = vpack.c.b16 %v8651, %v8647
    %v8944 = vpack.c.b16 %v8652, %v8648
    %v8945 = vpack.c.b16 %v8653, %v8649
    %v8946 = vpack.c.b16 %v8658, %v8654
    %v8947 = vpack.c.b16 %v8659, %v8655
    %v8948 = vpack.c.b16 %v8660, %v8656
    %v8949 = vpack.c.b16 %v8661, %v8657
    %v8950 = vpack.c.b16 %v8666, %v8662
    %v8951 = vpack.c.b16 %v8667, %v8663
    %v8952 = vpack.c.b16 %v8668, %v8664
    %v8953 = vpack.c.b16 %v8669, %v8665
    %v8954 = vpack.c.b16 %v8674, %v8670
    %v8955 = vpack.c.b16 %v8675, %v8671
    %v8956 = vpack.c.b16 %v8676, %v8672
    %v8957 = vpack.c.b16 %v8677, %v8673
    %v8958 = vpack.c.b16 %v8682, %v8678
    %v8959 = vpack.c.b16 %v8683, %v8679
    %v8960 = vpack.c.b16 %v8684, %v8680
    %v8961 = vpack.c.b16 %v8685, %v8681
    %v8962 = vpack.c.b16 %v8690, %v8686
    %v8963 = vpack.c.b16 %v8691, %v8687
    %v8964 = vpack.c.b16 %v8692, %v8688
    %v8965 = vpack.c.b16 %v8693, %v8689
    %v8966 = vpack.c.b16 %v8698, %v8694
    %v8967 = vpack.c.b16 %v8699, %v8695
    %v8968 = vpack.c.b16 %v8700, %v8696
    %v8969 = vpack.c.b16 %v8701, %v8697
    %v8970 = vpack.c.b16 %v8706, %v8702
    %v8971 = vpack.c.b16 %v8707, %v8703
    %v8972 = vpack.c.b16 %v8708, %v8704
    %v8973 = vpack.c.b16 %v8709, %v8705
    %v8974 = vpack.c.b16 %v8714, %v8710
    %v8975 = vpack.c.b16 %v8715, %v8711
    %v8976 = vpack.c.b16 %v8716, %v8712
    %v8977 = vpack.c.b16 %v8717, %v8713
    %v8978 = vpack.c.b16 %v8722, %v8718
    %v8979 = vpack.c.b16 %v8723, %v8719
    %v8980 = vpack.c.b16 %v8724, %v8720
    %v8981 = vpack.c.b16 %v8725, %v8721
    %9238 = vmatprep.subr.bf16.mxu0 %v8727
    %9239 = vmatpush1.bf16.msra.mxu0 %v8726
    %9240 = vmatprep.subr.bf16.mxu0 %v8731
    %9241 = vmatpush1.bf16.msra.mxu0 %v8730
    %9242 = vmatprep.subr.bf16.mxu0 %v8735
    %9243 = vmatpush1.bf16.msra.mxu0 %v8734
    %9244 = vmatprep.subr.bf16.mxu0 %v8739
    %9245 = vmatpush1.bf16.msra.mxu0 %v8738
    %9246 = vmatprep.subr.bf16.mxu0 %v8743
    %9247 = vmatpush1.bf16.msra.mxu0 %v8742
    %9248 = vmatprep.subr.bf16.mxu0 %v8747
    %9249 = vmatpush1.bf16.msra.mxu0 %v8746
    %9250 = vmatprep.subr.bf16.mxu0 %v8751
    %9251 = vmatpush1.bf16.msra.mxu0 %v8750
    %9252 = vmatprep.subr.bf16.mxu0 %v8755
    %9253 = vmatpush1.bf16.msra.mxu0 %v8754
    %9254 = vmatprep.subr.bf16.mxu0 %v8759
    %9255 = vmatpush1.bf16.msra.mxu0 %v8758
    %9256 = vmatprep.subr.bf16.mxu0 %v8763
    %9257 = vmatpush1.bf16.msra.mxu0 %v8762
    %9258 = vmatprep.subr.bf16.mxu0 %v8767
    %9259 = vmatpush1.bf16.msra.mxu0 %v8766
    %9260 = vmatprep.subr.bf16.mxu0 %v8771
    %9261 = vmatpush1.bf16.msra.mxu0 %v8770
    %9262 = vmatprep.subr.bf16.mxu0 %v8775
    %9263 = vmatpush1.bf16.msra.mxu0 %v8774
    %9264 = vmatprep.subr.bf16.mxu0 %v8779
    %9265 = vmatpush1.bf16.msra.mxu0 %v8778
    %9266 = vmatprep.subr.bf16.mxu0 %v8783
    %9267 = vmatpush1.bf16.msra.mxu0 %v8782
    %9268 = vmatprep.subr.bf16.mxu0 %v8787
    %9269 = vmatpush1.bf16.msra.mxu0 %v8786
    %9270 = vmatprep.mubr.bf16.mxu0 %v7673
    %9271 = vmatmul.mubr.bf16.gmra.mrb[0].mxu0 %v7672
    %v9272 = vpop.f32.mrb[0].mxu0
    %v9273 = vadd.f32 %v7941, %v9272
    %v9274 = vpop.f32.mrb[0].mxu0
    %v9275 = vadd.f32 %v7945, %v9274
    %v9276 = vpop.f32.mrb[0].mxu0
    %v9277 = vpop.f32.mrb[0].mxu0
    %9278 = vdwg.mxu0
    %9279 = vmatprep.subr.bf16.mxu0 %v8791
    %9280 = vmatpush1.bf16.msra.mxu0 %v8790
    %9281 = vmatprep.subr.bf16.mxu0 %v8795
    %9282 = vmatpush1.bf16.msra.mxu0 %v8794
    %9283 = vmatprep.subr.bf16.mxu0 %v8799
    %9284 = vmatpush1.bf16.msra.mxu0 %v8798
    %9285 = vmatprep.subr.bf16.mxu0 %v8803
    %9286 = vmatpush1.bf16.msra.mxu0 %v8802
    %9287 = vmatprep.subr.bf16.mxu0 %v8807
    %9288 = vmatpush1.bf16.msra.mxu0 %v8806
    %9289 = vmatprep.subr.bf16.mxu0 %v8811
    %9290 = vmatpush1.bf16.msra.mxu0 %v8810
    %9291 = vmatprep.subr.bf16.mxu0 %v8815
    %9292 = vmatpush1.bf16.msra.mxu0 %v8814
    %9293 = vmatprep.subr.bf16.mxu0 %v8819
    %9294 = vmatpush1.bf16.msra.mxu0 %v8818
    %9295 = vmatprep.subr.bf16.mxu0 %v8823
    %9296 = vmatpush1.bf16.msra.mxu0 %v8822
    %9297 = vmatprep.subr.bf16.mxu0 %v8827
    %9298 = vmatpush1.bf16.msra.mxu0 %v8826
    %9299 = vmatprep.subr.bf16.mxu0 %v8831
    %9300 = vmatpush1.bf16.msra.mxu0 %v8830
    %9301 = vmatprep.subr.bf16.mxu0 %v8835
    %9302 = vmatpush1.bf16.msra.mxu0 %v8834
    %9303 = vmatprep.subr.bf16.mxu0 %v8839
    %9304 = vmatpush1.bf16.msra.mxu0 %v8838
    %9305 = vmatprep.subr.bf16.mxu0 %v8843
    %9306 = vmatpush1.bf16.msra.mxu0 %v8842
    %9307 = vmatprep.subr.bf16.mxu0 %v8847
    %9308 = vmatpush1.bf16.msra.mxu0 %v8846
    %9309 = vmatprep.subr.bf16.mxu0 %v8851
    %9310 = vmatpush1.bf16.msra.mxu0 %v8850
    %9311 = vmatprep.mubr.bf16.mxu0 %v7675
    %9312 = vmatmul.mubr.bf16.gmra.mrb[0].mxu0 %v7674
    %v9313 = vpop.f32.mrb[0].mxu0
    %v9314 = vadd.f32 %v9273, %v9313
    %v9315 = vpop.f32.mrb[0].mxu0
    %v9316 = vadd.f32 %v9275, %v9315
    %v9317 = vpop.f32.mrb[0].mxu0
    %v9318 = vpop.f32.mrb[0].mxu0
    %9319 = vdwg.mxu0
    %9320 = vmatprep.subr.bf16.mxu0 %v8855
    %9321 = vmatpush1.bf16.msra.mxu0 %v8854
    %9322 = vmatprep.subr.bf16.mxu0 %v8859
    %9323 = vmatpush1.bf16.msra.mxu0 %v8858
    %9324 = vmatprep.subr.bf16.mxu0 %v8863
    %9325 = vmatpush1.bf16.msra.mxu0 %v8862
    %9326 = vmatprep.subr.bf16.mxu0 %v8867
    %9327 = vmatpush1.bf16.msra.mxu0 %v8866
    %9328 = vmatprep.subr.bf16.mxu0 %v8871
    %9329 = vmatpush1.bf16.msra.mxu0 %v8870
    %9330 = vmatprep.subr.bf16.mxu0 %v8875
    %9331 = vmatpush1.bf16.msra.mxu0 %v8874
    %9332 = vmatprep.subr.bf16.mxu0 %v8879
    %9333 = vmatpush1.bf16.msra.mxu0 %v8878
    %9334 = vmatprep.subr.bf16.mxu0 %v8883
    %9335 = vmatpush1.bf16.msra.mxu0 %v8882
    %9336 = vmatprep.subr.bf16.mxu0 %v8887
    %9337 = vmatpush1.bf16.msra.mxu0 %v8886
    %9338 = vmatprep.subr.bf16.mxu0 %v8891
    %9339 = vmatpush1.bf16.msra.mxu0 %v8890
    %9340 = vmatprep.subr.bf16.mxu0 %v8895
    %9341 = vmatpush1.bf16.msra.mxu0 %v8894
    %9342 = vmatprep.subr.bf16.mxu0 %v8899
    %9343 = vmatpush1.bf16.msra.mxu0 %v8898
    %9344 = vmatprep.subr.bf16.mxu0 %v8903
    %9345 = vmatpush1.bf16.msra.mxu0 %v8902
    %9346 = vmatprep.subr.bf16.mxu0 %v8907
    %9347 = vmatpush1.bf16.msra.mxu0 %v8906
    %9348 = vmatprep.subr.bf16.mxu0 %v8911
    %9349 = vmatpush1.bf16.msra.mxu0 %v8910
    %9350 = vmatprep.subr.bf16.mxu0 %v8915
    %9351 = vmatpush1.bf16.msra.mxu0 %v8914
    %9352 = vmatprep.mubr.bf16.mxu0 %v7677
    %9353 = vmatmul.mubr.bf16.gmra.mrb[0].mxu0 %v7676
    %v9354 = vpop.f32.mrb[0].mxu0
    %v9355 = vadd.f32 %v9314, %v9354
    %v9356 = vpop.f32.mrb[0].mxu0
    %v9357 = vadd.f32 %v9316, %v9356
    %v9358 = vpop.f32.mrb[0].mxu0
    %v9359 = vpop.f32.mrb[0].mxu0
    %9360 = vdwg.mxu0
    %9361 = vmatprep.subr.bf16.mxu0 %v8919
    %9362 = vmatpush1.bf16.msra.mxu0 %v8918
    %9363 = vmatprep.subr.bf16.mxu0 %v8923
    %9364 = vmatpush1.bf16.msra.mxu0 %v8922
    %9365 = vmatprep.subr.bf16.mxu0 %v8927
    %9366 = vmatpush1.bf16.msra.mxu0 %v8926
    %9367 = vmatprep.subr.bf16.mxu0 %v8931
    %9368 = vmatpush1.bf16.msra.mxu0 %v8930
    %9369 = vmatprep.subr.bf16.mxu0 %v8935
    %9370 = vmatpush1.bf16.msra.mxu0 %v8934
    %9371 = vmatprep.subr.bf16.mxu0 %v8939
    %9372 = vmatpush1.bf16.msra.mxu0 %v8938
    %9373 = vmatprep.subr.bf16.mxu0 %v8943
    %9374 = vmatpush1.bf16.msra.mxu0 %v8942
    %9375 = vmatprep.subr.bf16.mxu0 %v8947
    %9376 = vmatpush1.bf16.msra.mxu0 %v8946
    %9377 = vmatprep.subr.bf16.mxu0 %v8951
    %9378 = vmatpush1.bf16.msra.mxu0 %v8950
    %9379 = vmatprep.subr.bf16.mxu0 %v8955
    %9380 = vmatpush1.bf16.msra.mxu0 %v8954
    %9381 = vmatprep.subr.bf16.mxu0 %v8959
    %9382 = vmatpush1.bf16.msra.mxu0 %v8958
    %9383 = vmatprep.subr.bf16.mxu0 %v8963
    %9384 = vmatpush1.bf16.msra.mxu0 %v8962
    %9385 = vmatprep.subr.bf16.mxu0 %v8967
    %9386 = vmatpush1.bf16.msra.mxu0 %v8966
    %9387 = vmatprep.subr.bf16.mxu0 %v8971
    %9388 = vmatpush1.bf16.msra.mxu0 %v8970
    %9389 = vmatprep.subr.bf16.mxu0 %v8975
    %9390 = vmatpush1.bf16.msra.mxu0 %v8974
    %9391 = vmatprep.subr.bf16.mxu0 %v8979
    %9392 = vmatpush1.bf16.msra.mxu0 %v8978
    %9393 = vmatprep.mubr.bf16.mxu0 %v7679
    %9394 = vmatmul.mubr.bf16.gmra.mrb[0].mxu0 %v7678
    %v9395 = vpop.f32.mrb[0].mxu0
    %v9396 = vadd.f32 %v9355, %v9395
    %v9397 = vpop.f32.mrb[0].mxu0
    %v9398 = vadd.f32 %v9357, %v9397
    %v9399 = vpop.f32.mrb[0].mxu0
    %v9400 = vpop.f32.mrb[0].mxu0
    %9401 = vdwg.mxu0
    %9402 = vmatprep.subr.bf16.mxu0 %v8729
    %9403 = vmatpush1.bf16.msra.mxu0 %v8728
    %9404 = vmatprep.subr.bf16.mxu0 %v8733
    %9405 = vmatpush1.bf16.msra.mxu0 %v8732
    %9406 = vmatprep.subr.bf16.mxu0 %v8737
    %9407 = vmatpush1.bf16.msra.mxu0 %v8736
    %9408 = vmatprep.subr.bf16.mxu0 %v8741
    %9409 = vmatpush1.bf16.msra.mxu0 %v8740
    %9410 = vmatprep.subr.bf16.mxu0 %v8745
    %9411 = vmatpush1.bf16.msra.mxu0 %v8744
    %9412 = vmatprep.subr.bf16.mxu0 %v8749
    %9413 = vmatpush1.bf16.msra.mxu0 %v8748
    %9414 = vmatprep.subr.bf16.mxu0 %v8753
    %9415 = vmatpush1.bf16.msra.mxu0 %v8752
    %9416 = vmatprep.subr.bf16.mxu0 %v8757
    %9417 = vmatpush1.bf16.msra.mxu0 %v8756
    %9418 = vmatprep.subr.bf16.mxu0 %v8761
    %9419 = vmatpush1.bf16.msra.mxu0 %v8760
    %9420 = vmatprep.subr.bf16.mxu0 %v8765
    %9421 = vmatpush1.bf16.msra.mxu0 %v8764
    %9422 = vmatprep.subr.bf16.mxu0 %v8769
    %9423 = vmatpush1.bf16.msra.mxu0 %v8768
    %9424 = vmatprep.subr.bf16.mxu0 %v8773
    %9425 = vmatpush1.bf16.msra.mxu0 %v8772
    %9426 = vmatprep.subr.bf16.mxu0 %v8777
    %9427 = vmatpush1.bf16.msra.mxu0 %v8776
    %9428 = vmatprep.subr.bf16.mxu0 %v8781
    %9429 = vmatpush1.bf16.msra.mxu0 %v8780
    %9430 = vmatprep.subr.bf16.mxu0 %v8785
    %9431 = vmatpush1.bf16.msra.mxu0 %v8784
    %9432 = vmatprep.subr.bf16.mxu0 %v8789
    %9433 = vmatpush1.bf16.msra.mxu0 %v8788
    %9434 = vmatprep.mubr.bf16.mxu0 %v7673
    %9435 = vmatmul.mubr.bf16.gmra.mrb[0].mxu0 %v7672
    %v9436 = vpop.f32.mrb[0].mxu0
    %v9437 = vadd.f32 %v7949, %v9436
    %v9438 = vpop.f32.mrb[0].mxu0
    %v9439 = vadd.f32 %v7953, %v9438
    %v9440 = vpop.f32.mrb[0].mxu0
    %v9441 = vpop.f32.mrb[0].mxu0
    %9442 = vdwg.mxu0
    %9443 = vmatprep.subr.bf16.mxu0 %v8793
    %9444 = vmatpush1.bf16.msra.mxu0 %v8792
    %9445 = vmatprep.subr.bf16.mxu0 %v8797
    %9446 = vmatpush1.bf16.msra.mxu0 %v8796
    %9447 = vmatprep.subr.bf16.mxu0 %v8801
    %9448 = vmatpush1.bf16.msra.mxu0 %v8800
    %9449 = vmatprep.subr.bf16.mxu0 %v8805
    %9450 = vmatpush1.bf16.msra.mxu0 %v8804
    %9451 = vmatprep.subr.bf16.mxu0 %v8809
    %9452 = vmatpush1.bf16.msra.mxu0 %v8808
    %9453 = vmatprep.subr.bf16.mxu0 %v8813
    %9454 = vmatpush1.bf16.msra.mxu0 %v8812
    %9455 = vmatprep.subr.bf16.mxu0 %v8817
    %9456 = vmatpush1.bf16.msra.mxu0 %v8816
    %9457 = vmatprep.subr.bf16.mxu0 %v8821
    %9458 = vmatpush1.bf16.msra.mxu0 %v8820
    %9459 = vmatprep.subr.bf16.mxu0 %v8825
    %9460 = vmatpush1.bf16.msra.mxu0 %v8824
    %9461 = vmatprep.subr.bf16.mxu0 %v8829
    %9462 = vmatpush1.bf16.msra.mxu0 %v8828
    %9463 = vmatprep.subr.bf16.mxu0 %v8833
    %9464 = vmatpush1.bf16.msra.mxu0 %v8832
    %9465 = vmatprep.subr.bf16.mxu0 %v8837
    %9466 = vmatpush1.bf16.msra.mxu0 %v8836
    %9467 = vmatprep.subr.bf16.mxu0 %v8841
    %9468 = vmatpush1.bf16.msra.mxu0 %v8840
    %9469 = vmatprep.subr.bf16.mxu0 %v8845
    %9470 = vmatpush1.bf16.msra.mxu0 %v8844
    %9471 = vmatprep.subr.bf16.mxu0 %v8849
    %9472 = vmatpush1.bf16.msra.mxu0 %v8848
    %9473 = vmatprep.subr.bf16.mxu0 %v8853
    %9474 = vmatpush1.bf16.msra.mxu0 %v8852
    %9475 = vmatprep.mubr.bf16.mxu0 %v7675
    %9476 = vmatmul.mubr.bf16.gmra.mrb[0].mxu0 %v7674
    %v9477 = vpop.f32.mrb[0].mxu0
    %v9478 = vadd.f32 %v9437, %v9477
    %v9479 = vpop.f32.mrb[0].mxu0
    %v9480 = vadd.f32 %v9439, %v9479
    %v9481 = vpop.f32.mrb[0].mxu0
    %v9482 = vpop.f32.mrb[0].mxu0
    %9483 = vdwg.mxu0
    %9484 = vmatprep.subr.bf16.mxu0 %v8857
    %9485 = vmatpush1.bf16.msra.mxu0 %v8856
    %9486 = vmatprep.subr.bf16.mxu0 %v8861
    %9487 = vmatpush1.bf16.msra.mxu0 %v8860
    %9488 = vmatprep.subr.bf16.mxu0 %v8865
    %9489 = vmatpush1.bf16.msra.mxu0 %v8864
    %9490 = vmatprep.subr.bf16.mxu0 %v8869
    %9491 = vmatpush1.bf16.msra.mxu0 %v8868
    %9492 = vmatprep.subr.bf16.mxu0 %v8873
    %9493 = vmatpush1.bf16.msra.mxu0 %v8872
    %9494 = vmatprep.subr.bf16.mxu0 %v8877
    %9495 = vmatpush1.bf16.msra.mxu0 %v8876
    %9496 = vmatprep.subr.bf16.mxu0 %v8881
    %9497 = vmatpush1.bf16.msra.mxu0 %v8880
    %9498 = vmatprep.subr.bf16.mxu0 %v8885
    %9499 = vmatpush1.bf16.msra.mxu0 %v8884
    %9500 = vmatprep.subr.bf16.mxu0 %v8889
    %9501 = vmatpush1.bf16.msra.mxu0 %v8888
    %9502 = vmatprep.subr.bf16.mxu0 %v8893
    %9503 = vmatpush1.bf16.msra.mxu0 %v8892
    %9504 = vmatprep.subr.bf16.mxu0 %v8897
    %9505 = vmatpush1.bf16.msra.mxu0 %v8896
    %9506 = vmatprep.subr.bf16.mxu0 %v8901
    %9507 = vmatpush1.bf16.msra.mxu0 %v8900
    %9508 = vmatprep.subr.bf16.mxu0 %v8905
    %9509 = vmatpush1.bf16.msra.mxu0 %v8904
    %9510 = vmatprep.subr.bf16.mxu0 %v8909
    %9511 = vmatpush1.bf16.msra.mxu0 %v8908
    %9512 = vmatprep.subr.bf16.mxu0 %v8913
    %9513 = vmatpush1.bf16.msra.mxu0 %v8912
    %9514 = vmatprep.subr.bf16.mxu0 %v8917
    %9515 = vmatpush1.bf16.msra.mxu0 %v8916
    %9516 = vmatprep.mubr.bf16.mxu0 %v7677
    %9517 = vmatmul.mubr.bf16.gmra.mrb[0].mxu0 %v7676
    %v9518 = vpop.f32.mrb[0].mxu0
    %v9519 = vadd.f32 %v9478, %v9518
    %v9520 = vpop.f32.mrb[0].mxu0
    %v9521 = vadd.f32 %v9480, %v9520
    %v9522 = vpop.f32.mrb[0].mxu0
    %v9523 = vpop.f32.mrb[0].mxu0
    %9524 = vdwg.mxu0
    %9525 = vmatprep.subr.bf16.mxu0 %v8921
    %9526 = vmatpush1.bf16.msra.mxu0 %v8920
    %9527 = vmatprep.subr.bf16.mxu0 %v8925
    %9528 = vmatpush1.bf16.msra.mxu0 %v8924
    %9529 = vmatprep.subr.bf16.mxu0 %v8929
    %9530 = vmatpush1.bf16.msra.mxu0 %v8928
    %9531 = vmatprep.subr.bf16.mxu0 %v8933
    %9532 = vmatpush1.bf16.msra.mxu0 %v8932
    %9533 = vmatprep.subr.bf16.mxu0 %v8937
    %9534 = vmatpush1.bf16.msra.mxu0 %v8936
    %9535 = vmatprep.subr.bf16.mxu0 %v8941
    %9536 = vmatpush1.bf16.msra.mxu0 %v8940
    %9537 = vmatprep.subr.bf16.mxu0 %v8945
    %9538 = vmatpush1.bf16.msra.mxu0 %v8944
    %9539 = vmatprep.subr.bf16.mxu0 %v8949
    %9540 = vmatpush1.bf16.msra.mxu0 %v8948
    %9541 = vmatprep.subr.bf16.mxu0 %v8953
    %9542 = vmatpush1.bf16.msra.mxu0 %v8952
    %9543 = vmatprep.subr.bf16.mxu0 %v8957
    %9544 = vmatpush1.bf16.msra.mxu0 %v8956
    %9545 = vmatprep.subr.bf16.mxu0 %v8961
    %9546 = vmatpush1.bf16.msra.mxu0 %v8960
    %9547 = vmatprep.subr.bf16.mxu0 %v8965
    %9548 = vmatpush1.bf16.msra.mxu0 %v8964
    %9549 = vmatprep.subr.bf16.mxu0 %v8969
    %9550 = vmatpush1.bf16.msra.mxu0 %v8968
    %9551 = vmatprep.subr.bf16.mxu0 %v8973
    %9552 = vmatpush1.bf16.msra.mxu0 %v8972
    %9553 = vmatprep.subr.bf16.mxu0 %v8977
    %9554 = vmatpush1.bf16.msra.mxu0 %v8976
    %9555 = vmatprep.subr.bf16.mxu0 %v8981
    %9556 = vmatpush1.bf16.msra.mxu0 %v8980
    %9557 = vmatprep.mubr.bf16.mxu0 %v7679
    %9558 = vmatmul.mubr.bf16.gmra.mrb[0].mxu0 %v7678
    %v9559 = vpop.f32.mrb[0].mxu0
    %v9560 = vadd.f32 %v9519, %v9559
    %v9561 = vpop.f32.mrb[0].mxu0
    %v9562 = vadd.f32 %v9521, %v9561
    %v9563 = vpop.f32.mrb[0].mxu0
    %v9564 = vpop.f32.mrb[0].mxu0
    %9565 = vdwg.mxu0
    %v9566 = vmax.f32 %v9396, 0.0
    %v9567 = vmax.f32 %v9398, 0.0
    %v9568 = vmax.f32 %v9560, 0.0
    %v9569 = vmax.f32 %v9562, 0.0
    %v9570 = vpack.c.bf16 %v9566, %v9566
    %v9571 = vpack.c.bf16 %v9567, %v9567
    %v9572 = vpack.c.bf16 %v9568, %v9568
    %v9573 = vpack.c.bf16 %v9569, %v9569
    %v9574 = vld [vmem:[%s5] sm:$0xf]
    %v9575 = vld [vmem:[%s5 + $0x4] sm:$0xf]
    %v9576 = vld [vmem:[%s5 + $0x8] sm:$0xf]
    %v9577 = vld [vmem:[%s5 + $0xc] sm:$0xf]
    %v9578 = vld [vmem:[%s5 + $0x10] sm:$0xf]
    %v9579 = vld [vmem:[%s5 + $0x14] sm:$0xf]
    %v9580 = vld [vmem:[%s5 + $0x18] sm:$0xf]
    %v9581 = vld [vmem:[%s5 + $0x1c] sm:$0xf]
    %v9582 = vld [vmem:[%s5 + $0x20] sm:$0xf]
    %v9583 = vld [vmem:[%s5 + $0x24] sm:$0xf]
    %v9584 = vld [vmem:[%s5 + $0x28] sm:$0xf]
    %v9585 = vld [vmem:[%s5 + $0x2c] sm:$0xf]
    %v9586 = vld [vmem:[%s5 + $0x30] sm:$0xf]
    %v9587 = vld [vmem:[%s5 + $0x34] sm:$0xf]
    %v9588 = vld [vmem:[%s5 + $0x38] sm:$0xf]
    %v9589 = vld [vmem:[%s5 + $0x3c] sm:$0xf]
    %v9590 = vld [vmem:[%s5 + $0x40] sm:$0xf]
    %v9591 = vld [vmem:[%s5 + $0x44] sm:$0xf]
    %v9592 = vld [vmem:[%s5 + $0x48] sm:$0xf]
    %v9593 = vld [vmem:[%s5 + $0x4c] sm:$0xf]
    %v9594 = vld [vmem:[%s5 + $0x50] sm:$0xf]
    %v9595 = vld [vmem:[%s5 + $0x54] sm:$0xf]
    %v9596 = vld [vmem:[%s5 + $0x58] sm:$0xf]
    %v9597 = vld [vmem:[%s5 + $0x5c] sm:$0xf]
    %v9598 = vld [vmem:[%s5 + $0x60] sm:$0xf]
    %v9599 = vld [vmem:[%s5 + $0x64] sm:$0xf]
    %v9600 = vld [vmem:[%s5 + $0x68] sm:$0xf]
    %v9601 = vld [vmem:[%s5 + $0x6c] sm:$0xf]
    %v9602 = vld [vmem:[%s5 + $0x70] sm:$0xf]
    %v9603 = vld [vmem:[%s5 + $0x74] sm:$0xf]
    %v9604 = vld [vmem:[%s5 + $0x78] sm:$0xf]
    %v9605 = vld [vmem:[%s5 + $0x7c] sm:$0xf]
    %v9606 = vld [vmem:[%s5 + $0x80] sm:$0xf]
    %v9607 = vld [vmem:[%s5 + $0x84] sm:$0xf]
    %v9608 = vld [vmem:[%s5 + $0x88] sm:$0xf]
    %v9609 = vld [vmem:[%s5 + $0x8c] sm:$0xf]
    %v9610 = vld [vmem:[%s5 + $0x90] sm:$0xf]
    %v9611 = vld [vmem:[%s5 + $0x94] sm:$0xf]
    %v9612 = vld [vmem:[%s5 + $0x98] sm:$0xf]
    %v9613 = vld [vmem:[%s5 + $0x9c] sm:$0xf]
    %v9614 = vld [vmem:[%s5 + $0xa0] sm:$0xf]
    %v9615 = vld [vmem:[%s5 + $0xa4] sm:$0xf]
    %v9616 = vld [vmem:[%s5 + $0xa8] sm:$0xf]
    %v9617 = vld [vmem:[%s5 + $0xac] sm:$0xf]
    %v9618 = vld [vmem:[%s5 + $0xb0] sm:$0xf]
    %v9619 = vld [vmem:[%s5 + $0xb4] sm:$0xf]
    %v9620 = vld [vmem:[%s5 + $0xb8] sm:$0xf]
    %v9621 = vld [vmem:[%s5 + $0xbc] sm:$0xf]
    %v9622 = vld [vmem:[%s5 + $0xc0] sm:$0xf]
    %v9623 = vld [vmem:[%s5 + $0xc4] sm:$0xf]
    %v9624 = vld [vmem:[%s5 + $0xc8] sm:$0xf]
    %v9625 = vld [vmem:[%s5 + $0xcc] sm:$0xf]
    %v9626 = vld [vmem:[%s5 + $0xd0] sm:$0xf]
    %v9627 = vld [vmem:[%s5 + $0xd4] sm:$0xf]
    %v9628 = vld [vmem:[%s5 + $0xd8] sm:$0xf]
    %v9629 = vld [vmem:[%s5 + $0xdc] sm:$0xf]
    %v9630 = vld [vmem:[%s5 + $0xe0] sm:$0xf]
    %v9631 = vld [vmem:[%s5 + $0xe4] sm:$0xf]
    %v9632 = vld [vmem:[%s5 + $0xe8] sm:$0xf]
    %v9633 = vld [vmem:[%s5 + $0xec] sm:$0xf]
    %v9634 = vld [vmem:[%s5 + $0xf0] sm:$0xf]
    %v9635 = vld [vmem:[%s5 + $0xf4] sm:$0xf]
    %v9636 = vld [vmem:[%s5 + $0xf8] sm:$0xf]
    %v9637 = vld [vmem:[%s5 + $0xfc] sm:$0xf]
    %v9638 = vld [vmem:[#allocation11] sm:$0x1]
    %v9640 = vlaneseq
    %v9641 = vshrl.u32 %v9640, 7
    %v9642 = vsub.s32 0, %v9641
    %v9643 = vrot.slane %v9638, %v9642
    %v9709 = vunpack.c.l.b16 %v9574
    %v9710 = vunpack.c.l.b16 %v9575
    %v9711 = vunpack.c.l.b16 %v9576
    %v9712 = vunpack.c.l.b16 %v9577
    %v9713 = vunpack.c.l.b16 %v9578
    %v9714 = vunpack.c.l.b16 %v9579
    %v9715 = vunpack.c.l.b16 %v9580
    %v9716 = vunpack.c.l.b16 %v9581
    %v9717 = vunpack.c.l.b16 %v9582
    %v9718 = vunpack.c.l.b16 %v9583
    %v9719 = vunpack.c.l.b16 %v9584
    %v9720 = vunpack.c.l.b16 %v9585
    %v9721 = vunpack.c.l.b16 %v9586
    %v9722 = vunpack.c.l.b16 %v9587
    %v9723 = vunpack.c.l.b16 %v9588
    %v9724 = vunpack.c.l.b16 %v9589
    %v9725 = vunpack.c.l.b16 %v9590
    %v9726 = vunpack.c.l.b16 %v9591
    %v9727 = vunpack.c.l.b16 %v9592
    %v9728 = vunpack.c.l.b16 %v9593
    %v9729 = vunpack.c.l.b16 %v9594
    %v9730 = vunpack.c.l.b16 %v9595
    %v9731 = vunpack.c.l.b16 %v9596
    %v9732 = vunpack.c.l.b16 %v9597
    %v9733 = vunpack.c.l.b16 %v9598
    %v9734 = vunpack.c.l.b16 %v9599
    %v9735 = vunpack.c.l.b16 %v9600
    %v9736 = vunpack.c.l.b16 %v9601
    %v9737 = vunpack.c.l.b16 %v9602
    %v9738 = vunpack.c.l.b16 %v9603
    %v9739 = vunpack.c.l.b16 %v9604
    %v9740 = vunpack.c.l.b16 %v9605
    %v9741 = vunpack.c.l.b16 %v9606
    %v9742 = vunpack.c.l.b16 %v9607
    %v9743 = vunpack.c.l.b16 %v9608
    %v9744 = vunpack.c.l.b16 %v9609
    %v9745 = vunpack.c.l.b16 %v9610
    %v9746 = vunpack.c.l.b16 %v9611
    %v9747 = vunpack.c.l.b16 %v9612
    %v9748 = vunpack.c.l.b16 %v9613
    %v9749 = vunpack.c.l.b16 %v9614
    %v9750 = vunpack.c.l.b16 %v9615
    %v9751 = vunpack.c.l.b16 %v9616
    %v9752 = vunpack.c.l.b16 %v9617
    %v9753 = vunpack.c.l.b16 %v9618
    %v9754 = vunpack.c.l.b16 %v9619
    %v9755 = vunpack.c.l.b16 %v9620
    %v9756 = vunpack.c.l.b16 %v9621
    %v9757 = vunpack.c.l.b16 %v9622
    %v9758 = vunpack.c.l.b16 %v9623
    %v9759 = vunpack.c.l.b16 %v9624
    %v9760 = vunpack.c.l.b16 %v9625
    %v9761 = vunpack.c.l.b16 %v9626
    %v9762 = vunpack.c.l.b16 %v9627
    %v9763 = vunpack.c.l.b16 %v9628
    %v9764 = vunpack.c.l.b16 %v9629
    %v9765 = vunpack.c.l.b16 %v9630
    %v9766 = vunpack.c.l.b16 %v9631
    %v9767 = vunpack.c.l.b16 %v9632
    %v9768 = vunpack.c.l.b16 %v9633
    %v9769 = vunpack.c.l.b16 %v9634
    %v9770 = vunpack.c.l.b16 %v9635
    %v9771 = vunpack.c.l.b16 %v9636
    %v9772 = vunpack.c.l.b16 %v9637
    %v9773 = vpack.c.b16 %v9710, %v9709
    %v9774 = vpack.c.b16 %v9712, %v9711
    %v9775 = vpack.c.b16 %v9714, %v9713
    %v9776 = vpack.c.b16 %v9716, %v9715
    %v9777 = vpack.c.b16 %v9718, %v9717
    %v9778 = vpack.c.b16 %v9720, %v9719
    %v9779 = vpack.c.b16 %v9722, %v9721
    %v9780 = vpack.c.b16 %v9724, %v9723
    %v9781 = vpack.c.b16 %v9726, %v9725
    %v9782 = vpack.c.b16 %v9728, %v9727
    %v9783 = vpack.c.b16 %v9730, %v9729
    %v9784 = vpack.c.b16 %v9732, %v9731
    %v9785 = vpack.c.b16 %v9734, %v9733
    %v9786 = vpack.c.b16 %v9736, %v9735
    %v9787 = vpack.c.b16 %v9738, %v9737
    %v9788 = vpack.c.b16 %v9740, %v9739
    %v9789 = vpack.c.b16 %v9742, %v9741
    %v9790 = vpack.c.b16 %v9744, %v9743
    %v9791 = vpack.c.b16 %v9746, %v9745
    %v9792 = vpack.c.b16 %v9748, %v9747
    %v9793 = vpack.c.b16 %v9750, %v9749
    %v9794 = vpack.c.b16 %v9752, %v9751
    %v9795 = vpack.c.b16 %v9754, %v9753
    %v9796 = vpack.c.b16 %v9756, %v9755
    %v9797 = vpack.c.b16 %v9758, %v9757
    %v9798 = vpack.c.b16 %v9760, %v9759
    %v9799 = vpack.c.b16 %v9762, %v9761
    %v9800 = vpack.c.b16 %v9764, %v9763
    %v9801 = vpack.c.b16 %v9766, %v9765
    %v9802 = vpack.c.b16 %v9768, %v9767
    %v9803 = vpack.c.b16 %v9770, %v9769
    %v9804 = vpack.c.b16 %v9772, %v9771
    %9837 = vmatprep.subr.bf16.mxu0 0
    %9838 = vmatpush1.bf16.msra.mxu0 %v9773
    %9839 = vmatprep.subr.bf16.mxu0 0
    %9840 = vmatpush1.bf16.msra.mxu0 %v9774
    %9841 = vmatprep.subr.bf16.mxu0 0
    %9842 = vmatpush1.bf16.msra.mxu0 %v9775
    %9843 = vmatprep.subr.bf16.mxu0 0
    %9844 = vmatpush1.bf16.msra.mxu0 %v9776
    %9845 = vmatprep.subr.bf16.mxu0 0
    %9846 = vmatpush1.bf16.msra.mxu0 %v9777
    %9847 = vmatprep.subr.bf16.mxu0 0
    %9848 = vmatpush1.bf16.msra.mxu0 %v9778
    %9849 = vmatprep.subr.bf16.mxu0 0
    %9850 = vmatpush1.bf16.msra.mxu0 %v9779
    %9851 = vmatprep.subr.bf16.mxu0 0
    %9852 = vmatpush1.bf16.msra.mxu0 %v9780
    %9853 = vmatprep.subr.bf16.mxu0 0
    %9854 = vmatpush1.bf16.msra.mxu0 %v9781
    %9855 = vmatprep.subr.bf16.mxu0 0
    %9856 = vmatpush1.bf16.msra.mxu0 %v9782
    %9857 = vmatprep.subr.bf16.mxu0 0
    %9858 = vmatpush1.bf16.msra.mxu0 %v9783
    %9859 = vmatprep.subr.bf16.mxu0 0
    %9860 = vmatpush1.bf16.msra.mxu0 %v9784
    %9861 = vmatprep.subr.bf16.mxu0 0
    %9862 = vmatpush1.bf16.msra.mxu0 %v9785
    %9863 = vmatprep.subr.bf16.mxu0 0
    %9864 = vmatpush1.bf16.msra.mxu0 %v9786
    %9865 = vmatprep.subr.bf16.mxu0 0
    %9866 = vmatpush1.bf16.msra.mxu0 %v9787
    %9867 = vmatprep.subr.bf16.mxu0 0
    %9868 = vmatpush1.bf16.msra.mxu0 %v9788
    %9869 = vmatprep.mubr.bf16.mxu0 %v9571
    %9870 = vmatmul.mubr.bf16.gmra.mrb[0].mxu0 %v9570
    %v9871 = vpop.f32.mrb[0].mxu0
    %v9872 = vadd.f32 %v9643, %v9871
    %v9873 = vpop.f32.mrb[0].mxu0
    %v9874 = vpop.f32.mrb[0].mxu0
    %v9875 = vpop.f32.mrb[0].mxu0
    %9876 = vdwg.mxu0
    %9877 = vmatprep.subr.bf16.mxu0 0
    %9878 = vmatpush1.bf16.msra.mxu0 %v9789
    %9879 = vmatprep.subr.bf16.mxu0 0
    %9880 = vmatpush1.bf16.msra.mxu0 %v9790
    %9881 = vmatprep.subr.bf16.mxu0 0
    %9882 = vmatpush1.bf16.msra.mxu0 %v9791
    %9883 = vmatprep.subr.bf16.mxu0 0
    %9884 = vmatpush1.bf16.msra.mxu0 %v9792
    %9885 = vmatprep.subr.bf16.mxu0 0
    %9886 = vmatpush1.bf16.msra.mxu0 %v9793
    %9887 = vmatprep.subr.bf16.mxu0 0
    %9888 = vmatpush1.bf16.msra.mxu0 %v9794
    %9889 = vmatprep.subr.bf16.mxu0 0
    %9890 = vmatpush1.bf16.msra.mxu0 %v9795
    %9891 = vmatprep.subr.bf16.mxu0 0
    %9892 = vmatpush1.bf16.msra.mxu0 %v9796
    %9893 = vmatprep.subr.bf16.mxu0 0
    %9894 = vmatpush1.bf16.msra.mxu0 %v9797
    %9895 = vmatprep.subr.bf16.mxu0 0
    %9896 = vmatpush1.bf16.msra.mxu0 %v9798
    %9897 = vmatprep.subr.bf16.mxu0 0
    %9898 = vmatpush1.bf16.msra.mxu0 %v9799
    %9899 = vmatprep.subr.bf16.mxu0 0
    %9900 = vmatpush1.bf16.msra.mxu0 %v9800
    %9901 = vmatprep.subr.bf16.mxu0 0
    %9902 = vmatpush1.bf16.msra.mxu0 %v9801
    %9903 = vmatprep.subr.bf16.mxu0 0
    %9904 = vmatpush1.bf16.msra.mxu0 %v9802
    %9905 = vmatprep.subr.bf16.mxu0 0
    %9906 = vmatpush1.bf16.msra.mxu0 %v9803
    %9907 = vmatprep.subr.bf16.mxu0 0
    %9908 = vmatpush1.bf16.msra.mxu0 %v9804
    %9909 = vmatprep.mubr.bf16.mxu0 %v9573
    %9910 = vmatmul.mubr.bf16.gmra.mrb[0].mxu0 %v9572
    %v9911 = vpop.f32.mrb[0].mxu0
    %v9912 = vadd.f32 %v9872, %v9911
    %v9913 = vpop.f32.mrb[0].mxu0
    %v9914 = vpop.f32.mrb[0].mxu0
    %v9915 = vpop.f32.mrb[0].mxu0
    %9916 = vdwg.mxu0
    %v9917 = vmax.f32 %v9912, 0.0
    %vm9918 = vcmask 80896
    %v9919 = vsel %vm9918, %v9917, -inf
    %9920 = vmax.xlane.f32.xlu0 %v9919
    %v9921 = vpop.xlane.xlu0 %9920
    %v9922 = vsub.f32 %v9917, %v9921
    %v9923 = vmul.f32 %v9922, 1.442695
    %v9924 = vpow.pop %v9923
    %v9925 = vsel %vm9918, %v9924, 0.0
    %9926 = vadd.xlane.f32.xlu0 %v9925
    %v9927 = vpop.xlane.xlu0 %9926
    %v9928 = vrcp.pop %v9927
    %v9929 = vmul.f32 %v9924, %v9928
    %9930 = vst.msk [vmem:[#allocation13] sm:$0xff] %vm9918, %v9929
    // Predicated region
    $region54: #{tpu_custom_call.1} parent=1 // pred_check
      _
    $region55: #{tpu_custom_call.1} parent=1 // pred_check_branch
      %9932 = sbr.rel (0) target = $region57
    $region56: #{tpu_custom_call.1} parent=1 // pred_region
      %s9934 = ssub.s32 128, 128
      %9935 = vsyncadd [#allocation4], %s9934
      %s9937 = sshll.u32 [#allocation13], 4
      %s9938 = int_to_ptr.vmem [resolvable:$true] %s9937
      %9940 = dma.vmem_to_hbm [thread:$0]  %s9938, 128, %s7, [#allocation4]
    $region57: #{tpu_custom_call.1} parent=1 // pred_fallthru
      _
    // Predicated region
    $region58: #{tpu_custom_call.1} parent=1 // pred_check
      _
    $region59: #{tpu_custom_call.1} parent=1 // pred_check_branch
      %9942 = sbr.rel (0) target = $region61
    $region60: #{tpu_custom_call.1} parent=1 // pred_region
      %9943 = dma.done [#allocation4], 128
    $region61: #{tpu_custom_call.1} parent=1 // pred_fallthru
      _
    %9944 = vsyncpa [#allocation3], 1
    %9945 = vsyncpa [#allocation6], 1
    %9946 = vsyncpa [#allocation9], 1
    %9947 = vsyncpa [#allocation12], 1
    %9948 = vsyncpa [#allocation4], 1

</llo_original>
